<compile_context>
chip_gen: v7x
topology: tpu7x:2x2x1
jax: 0.10.0
libtpu: 0.0.40
codegen_flags: <defaults>
</compile_context>

<pallas_src>
import functools

import numpy as np
import jax
import jax.numpy as jnp
from jax.experimental import pallas as pl
from jax.experimental.pallas import tpu as pltpu


def _inception_kernel(x_ref, hidx_ref, widx_ref,
                      s1_ref, b1_ref, w1_ref,
                      s2_ref, b2_ref, w2_ref,
                      s3_ref, b3_ref, w3_ref,
                      out_ref,
                      *, H, W, O):
    """One grid step: `B` images, all three branches, fused lane-dense output.

    x_ref      : (B, C, H*W)   f32 VMEM  channel-major, spatial on lanes
    hidx/widx  : (C, H*W)      i32 VMEM  spatial row/col index of each lane
    s*/b*      : (C, 1)        f32 VMEM  folded BatchNorm scale / shift per branch
    w*         : (O*C*K*K,)    f32 SMEM  conv weights, PyTorch OIHW order, flattened
    out_ref    : (B, 3*O, H*W) f32 VMEM  rows [slot*O:(slot+1)*O] = branch `slot`
    """
    B, C, HW = x_ref.shape
    h_idx = hidx_ref[...]
    w_idx = widx_ref[...]

    branches = ((1, s1_ref, b1_ref, w1_ref),
                (3, s2_ref, b2_ref, w2_ref),
                (5, s3_ref, b3_ref, w3_ref))

    for b in range(B):
        x = x_ref[b]                                            # (C, HW) f32
        for slot, (ksize, scale_ref, shift_ref, w_ref) in enumerate(branches):
            # Folded BatchNorm (eval) affine + ReLU; (C,1) broadcast along lanes.
            y = jnp.maximum(x * scale_ref[...] + shift_ref[...], 0.0)

            p = (ksize - 1) // 2
            accs = [None] * O
            for i in range(ksize):
                for j in range(ksize):
                    di, dj = i - p, j - p
                    off = di * W + dj
                    # shifted[h, w] == y[h + di, w + dj]; wrapped lanes are masked below.
                    sh = y if off == 0 else pltpu.roll(y, shift=(-off) % HW, axis=1)
                    conds = []
                    if di > 0:
                        conds.append(h_idx < H - di)
                    elif di < 0:
                        conds.append(h_idx >= -di)
                    if dj > 0:
                        conds.append(w_idx < W - dj)
                    elif dj < 0:
                        conds.append(w_idx >= -dj)
                    if conds:
                        m = conds[0]
                        for extra in conds[1:]:
                            m = m & extra
                        sh = jnp.where(m, sh, 0.0)
                    rows = [sh[c] for c in range(C)]            # C x (HW,) f32
                    # Scalar-weight FMAs; weights read from SMEM on the scalar slots.
                    for o in range(O):
                        term = None
                        for c in range(C):
                            wv = w_ref[((o * C + c) * ksize + i) * ksize + j]
                            t = wv * rows[c]
                            term = t if term is None else term + t
                        accs[o] = term if accs[o] is None else accs[o] + term
            for o in range(O):
                out_ref[b, slot * O + o, :] = accs[o].astype(out_ref.dtype)


def inception_block(x_nchw, params, *, images_per_step=1):
    """PyTorch-layout entry point: (N, C, H, W) -> (N, 3*O, H, W).

    Only free reshapes outside the kernel (no transposes, no XLA concat)."""
    N, C, H, W = x_nchw.shape
    HW = H * W                                # 256 here: a multiple of 128 -> lane-dense
    O = params["w1"].shape[0] // C
    assert N % images_per_step == 0
    B = images_per_step

    x_flat = x_nchw.reshape(N, C, HW)         # free reshape from NCHW

    # Precomputed spatial row/col index of each flattened lane (avoids in-kernel div/mod).
    hh = np.repeat(np.arange(H, dtype=np.int32), W)
    ww = np.tile(np.arange(W, dtype=np.int32), H)
    h_idx = jnp.asarray(np.broadcast_to(hh[None, :], (C, HW)))
    w_idx = jnp.asarray(np.broadcast_to(ww[None, :], (C, HW)))

    idx_spec = pl.BlockSpec((C, HW), lambda n: (0, 0))
    vec_spec = pl.BlockSpec((C, 1), lambda n: (0, 0))
    smem_spec = pl.BlockSpec(memory_space=pltpu.MemorySpace.SMEM)

    out_flat = pl.pallas_call(
        functools.partial(_inception_kernel, H=H, W=W, O=O),
        out_shape=jax.ShapeDtypeStruct((N, 3 * O, HW), jnp.float32),
        grid_spec=pltpu.PrefetchScalarGridSpec(
            num_scalar_prefetch=0,
            grid=(N // B,),
            in_specs=[pl.BlockSpec((B, C, HW), lambda n: (n, 0, 0)),
                      idx_spec, idx_spec,
                      vec_spec, vec_spec, smem_spec,
                      vec_spec, vec_spec, smem_spec,
                      vec_spec, vec_spec, smem_spec],
            out_specs=pl.BlockSpec((B, 3 * O, HW), lambda n: (n, 0, 0)),
        ),
        compiler_params=pltpu.CompilerParams(
            dimension_semantics=("parallel",),          # shard batch over 2 TCs on v7x
            vmem_limit_bytes=32 * 1024 * 1024),
    )(x_flat, h_idx, w_idx,
      params["s1"], params["b1"], params["w1"],
      params["s2"], params["b2"], params["w2"],
      params["s3"], params["b3"], params["w3"])

    return out_flat.reshape(N, 3 * O, H, W)             # channel concat == free reshape


def make_params(key, C, O):
    """Deterministic synthetic parameters for the three branches (all f32)."""
    eps = 1e-5
    params, ref_params = {}, {}
    keys = jax.random.split(key, 12)
    ki = 0
    for idx, ksize in enumerate((1, 3, 5), start=1):
        gamma = 1.0 + 0.1 * jax.random.normal(keys[ki], (C,), jnp.float32); ki += 1
        beta = 0.1 * jax.random.normal(keys[ki], (C,), jnp.float32); ki += 1
        r_mean = 0.1 * jax.random.normal(keys[ki], (C,), jnp.float32); ki += 1
        r_var = jnp.abs(1.0 + 0.1 * jax.random.normal(keys[ki], (C,), jnp.float32)); ki += 1
        w_oihw = 0.1 * jax.random.normal(jax.random.fold_in(key, 100 + idx),
                                         (O, C, ksize, ksize), jnp.float32)
        scale = gamma / jnp.sqrt(r_var + eps)
        shift = beta - r_mean * scale
        params[f"s{idx}"] = scale.reshape(C, 1)
        params[f"b{idx}"] = shift.reshape(C, 1)
        params[f"w{idx}"] = w_oihw.reshape(-1)           # OIHW flattened -> SMEM scalars
        ref_params[f"scale{idx}"] = scale
        ref_params[f"shift{idx}"] = shift
        ref_params[f"w{idx}"] = w_oihw
    return params, ref_params


def reference(x_nchw, ref_params):
    """Pure-JAX (XLA conv, f32) reference of the PyTorch forward pass."""
    outs = []
    for idx, ksize in enumerate((1, 3, 5), start=1):
        scale = ref_params[f"scale{idx}"]
        shift = ref_params[f"shift{idx}"]
        w = ref_params[f"w{idx}"]
        y = jnp.maximum(x_nchw * scale[None, :, None, None]
                        + shift[None, :, None, None], 0.0)
        p = (ksize - 1) // 2
        o = jax.lax.conv_general_dilated(
            y, w, window_strides=(1, 1), padding=((p, p), (p, p)),
            dimension_numbers=("NCHW", "OIHW", "NCHW"),
            precision=jax.lax.Precision.HIGHEST)
        outs.append(o)
    return jnp.concatenate(outs, axis=1)


if __name__ == "__main__":
    N, C, H, W = 2, 4, 16, 16
    O = 4

    key = jax.random.PRNGKey(0)
    k_x, k_p = jax.random.split(key)
    x = jax.random.normal(k_x, (N, C, H, W), jnp.float32)
    params, ref_params = make_params(k_p, C, O)

    out = inception_block(x, params)
    out = jax.block_until_ready(out)

    ref = reference(x, ref_params)
    assert out.shape == (N, 3 * O, H, W), out.shape
    max_err = float(jnp.max(jnp.abs(out - ref)))
    # Pure-f32 kernel -> much tighter tolerance than the previous bf16-MXU version.
    assert jnp.allclose(out, ref, atol=2e-4, rtol=2e-4), max_err

    print("KERNEL_OK")
</pallas_src>

<mosaic_0001>
module attributes {stable_mosaic.version = 11 : i64} {
  func.func @_inception_kernel(%arg0: i32, %arg1: memref<1x4x256xf32, #tpu.memory_space<vmem>>, %arg2: memref<4x256xi32, #tpu.memory_space<vmem>>, %arg3: memref<4x256xi32, #tpu.memory_space<vmem>>, %arg4: memref<4x1xf32, #tpu.memory_space<vmem>>, %arg5: memref<4x1xf32, #tpu.memory_space<vmem>>, %arg6: memref<16xf32, #tpu.memory_space<smem>>, %arg7: memref<4x1xf32, #tpu.memory_space<vmem>>, %arg8: memref<4x1xf32, #tpu.memory_space<vmem>>, %arg9: memref<144xf32, #tpu.memory_space<smem>>, %arg10: memref<4x1xf32, #tpu.memory_space<vmem>>, %arg11: memref<4x1xf32, #tpu.memory_space<vmem>>, %arg12: memref<400xf32, #tpu.memory_space<smem>>, %arg13: memref<1x12x256xf32, #tpu.memory_space<vmem>>) attributes {dimension_semantics = [#tpu.dimension_semantics<parallel>], iteration_bounds = array<i64: 2>, scalar_prefetch = 0 : i64, scratch_operands = 0 : i64, tpu.core_type = #tpu.core_type<tc>, window_params = [{transform_indices = @transform_0, window_bounds = array<i64: 1, 4, 256>}, {pipeline_mode = #tpu.pipeline_mode<synchronous>, transform_indices = @transform_1, window_bounds = array<i64: 4, 256>}, {pipeline_mode = #tpu.pipeline_mode<synchronous>, transform_indices = @transform_2, window_bounds = array<i64: 4, 256>}, {pipeline_mode = #tpu.pipeline_mode<synchronous>, transform_indices = @transform_3, window_bounds = array<i64: 4, 1>}, {pipeline_mode = #tpu.pipeline_mode<synchronous>, transform_indices = @transform_4, window_bounds = array<i64: 4, 1>}, {transform_indices = @transform_5, window_bounds = array<i64: 16>}, {pipeline_mode = #tpu.pipeline_mode<synchronous>, transform_indices = @transform_6, window_bounds = array<i64: 4, 1>}, {pipeline_mode = #tpu.pipeline_mode<synchronous>, transform_indices = @transform_7, window_bounds = array<i64: 4, 1>}, {transform_indices = @transform_8, window_bounds = array<i64: 144>}, {pipeline_mode = #tpu.pipeline_mode<synchronous>, transform_indices = @transform_9, window_bounds = array<i64: 4, 1>}, {pipeline_mode = #tpu.pipeline_mode<synchronous>, transform_indices = @transform_10, window_bounds = array<i64: 4, 1>}, {transform_indices = @transform_11, window_bounds = array<i64: 400>}, {transform_indices = @transform_12, window_bounds = array<i64: 1, 12, 256>}]} {
    %c0 = arith.constant 0 : index
    %c0_0 = arith.constant 0 : index
    %0 = vector.load %arg2[%c0, %c0_0] : memref<4x256xi32, #tpu.memory_space<vmem>>, vector<4x256xi32>
    %c0_1 = arith.constant 0 : index
    %c0_2 = arith.constant 0 : index
    %1 = vector.load %arg3[%c0_1, %c0_2] : memref<4x256xi32, #tpu.memory_space<vmem>>, vector<4x256xi32>
    %c0_3 = arith.constant 0 : index
    %c0_4 = arith.constant 0 : index
    %c0_5 = arith.constant 0 : index
    %2 = vector.load %arg1[%c0_3, %c0_4, %c0_5] : memref<1x4x256xf32, #tpu.memory_space<vmem>>, vector<1x4x256xf32>
    %3 = vector.shape_cast %2 : vector<1x4x256xf32> to vector<4x256xf32>
    %c0_6 = arith.constant 0 : index
    %c0_7 = arith.constant 0 : index
    %4 = vector.load %arg4[%c0_6, %c0_7] : memref<4x1xf32, #tpu.memory_space<vmem>>, vector<4x1xf32>
    %5 = vector.broadcast %4 : vector<4x1xf32> to vector<4x256xf32>
    %6 = arith.mulf %3, %5 : vector<4x256xf32>
    %c0_8 = arith.constant 0 : index
    %c0_9 = arith.constant 0 : index
    %7 = vector.load %arg5[%c0_8, %c0_9] : memref<4x1xf32, #tpu.memory_space<vmem>>, vector<4x1xf32>
    %8 = vector.broadcast %7 : vector<4x1xf32> to vector<4x256xf32>
    %9 = arith.addf %6, %8 : vector<4x256xf32>
    %cst = arith.constant 0.000000e+00 : f32
    %10 = vector.broadcast %cst : f32 to vector<4x256xf32>
    %11 = arith.maximumf %9, %10 : vector<4x256xf32>
    %12 = vector.extract_strided_slice %11 {offsets = [0, 0], sizes = [1, 256], strides = [1, 1]} : vector<4x256xf32> to vector<1x256xf32>
    %13 = vector.shape_cast %12 : vector<1x256xf32> to vector<256xf32>
    %14 = vector.extract_strided_slice %11 {offsets = [1, 0], sizes = [1, 256], strides = [1, 1]} : vector<4x256xf32> to vector<1x256xf32>
    %15 = vector.shape_cast %14 : vector<1x256xf32> to vector<256xf32>
    %16 = vector.extract_strided_slice %11 {offsets = [2, 0], sizes = [1, 256], strides = [1, 1]} : vector<4x256xf32> to vector<1x256xf32>
    %17 = vector.shape_cast %16 : vector<1x256xf32> to vector<256xf32>
    %18 = vector.extract_strided_slice %11 {offsets = [3, 0], sizes = [1, 256], strides = [1, 1]} : vector<4x256xf32> to vector<1x256xf32>
    %19 = vector.shape_cast %18 : vector<1x256xf32> to vector<256xf32>
    %c0_10 = arith.constant 0 : index
    %20 = memref.load %arg6[%c0_10] : memref<16xf32, #tpu.memory_space<smem>>
    %21 = vector.broadcast %20 : f32 to vector<256xf32>
    %22 = arith.mulf %21, %13 : vector<256xf32>
    %c1 = arith.constant 1 : index
    %23 = memref.load %arg6[%c1] : memref<16xf32, #tpu.memory_space<smem>>
    %24 = vector.broadcast %23 : f32 to vector<256xf32>
    %25 = arith.mulf %24, %15 : vector<256xf32>
    %26 = arith.addf %22, %25 : vector<256xf32>
    %c2 = arith.constant 2 : index
    %27 = memref.load %arg6[%c2] : memref<16xf32, #tpu.memory_space<smem>>
    %28 = vector.broadcast %27 : f32 to vector<256xf32>
    %29 = arith.mulf %28, %17 : vector<256xf32>
    %30 = arith.addf %26, %29 : vector<256xf32>
    %c3 = arith.constant 3 : index
    %31 = memref.load %arg6[%c3] : memref<16xf32, #tpu.memory_space<smem>>
    %32 = vector.broadcast %31 : f32 to vector<256xf32>
    %33 = arith.mulf %32, %19 : vector<256xf32>
    %34 = arith.addf %30, %33 : vector<256xf32>
    %c4 = arith.constant 4 : index
    %35 = memref.load %arg6[%c4] : memref<16xf32, #tpu.memory_space<smem>>
    %36 = vector.broadcast %35 : f32 to vector<256xf32>
    %37 = arith.mulf %36, %13 : vector<256xf32>
    %c5 = arith.constant 5 : index
    %38 = memref.load %arg6[%c5] : memref<16xf32, #tpu.memory_space<smem>>
    %39 = vector.broadcast %38 : f32 to vector<256xf32>
    %40 = arith.mulf %39, %15 : vector<256xf32>
    %41 = arith.addf %37, %40 : vector<256xf32>
    %c6 = arith.constant 6 : index
    %42 = memref.load %arg6[%c6] : memref<16xf32, #tpu.memory_space<smem>>
    %43 = vector.broadcast %42 : f32 to vector<256xf32>
    %44 = arith.mulf %43, %17 : vector<256xf32>
    %45 = arith.addf %41, %44 : vector<256xf32>
    %c7 = arith.constant 7 : index
    %46 = memref.load %arg6[%c7] : memref<16xf32, #tpu.memory_space<smem>>
    %47 = vector.broadcast %46 : f32 to vector<256xf32>
    %48 = arith.mulf %47, %19 : vector<256xf32>
    %49 = arith.addf %45, %48 : vector<256xf32>
    %c8 = arith.constant 8 : index
    %50 = memref.load %arg6[%c8] : memref<16xf32, #tpu.memory_space<smem>>
    %51 = vector.broadcast %50 : f32 to vector<256xf32>
    %52 = arith.mulf %51, %13 : vector<256xf32>
    %c9 = arith.constant 9 : index
    %53 = memref.load %arg6[%c9] : memref<16xf32, #tpu.memory_space<smem>>
    %54 = vector.broadcast %53 : f32 to vector<256xf32>
    %55 = arith.mulf %54, %15 : vector<256xf32>
    %56 = arith.addf %52, %55 : vector<256xf32>
    %c10 = arith.constant 10 : index
    %57 = memref.load %arg6[%c10] : memref<16xf32, #tpu.memory_space<smem>>
    %58 = vector.broadcast %57 : f32 to vector<256xf32>
    %59 = arith.mulf %58, %17 : vector<256xf32>
    %60 = arith.addf %56, %59 : vector<256xf32>
    %c11 = arith.constant 11 : index
    %61 = memref.load %arg6[%c11] : memref<16xf32, #tpu.memory_space<smem>>
    %62 = vector.broadcast %61 : f32 to vector<256xf32>
    %63 = arith.mulf %62, %19 : vector<256xf32>
    %64 = arith.addf %60, %63 : vector<256xf32>
    %c12 = arith.constant 12 : index
    %65 = memref.load %arg6[%c12] : memref<16xf32, #tpu.memory_space<smem>>
    %66 = vector.broadcast %65 : f32 to vector<256xf32>
    %67 = arith.mulf %66, %13 : vector<256xf32>
    %c13 = arith.constant 13 : index
    %68 = memref.load %arg6[%c13] : memref<16xf32, #tpu.memory_space<smem>>
    %69 = vector.broadcast %68 : f32 to vector<256xf32>
    %70 = arith.mulf %69, %15 : vector<256xf32>
    %71 = arith.addf %67, %70 : vector<256xf32>
    %c14 = arith.constant 14 : index
    %72 = memref.load %arg6[%c14] : memref<16xf32, #tpu.memory_space<smem>>
    %73 = vector.broadcast %72 : f32 to vector<256xf32>
    %74 = arith.mulf %73, %17 : vector<256xf32>
    %75 = arith.addf %71, %74 : vector<256xf32>
    %c15 = arith.constant 15 : index
    %76 = memref.load %arg6[%c15] : memref<16xf32, #tpu.memory_space<smem>>
    %77 = vector.broadcast %76 : f32 to vector<256xf32>
    %78 = arith.mulf %77, %19 : vector<256xf32>
    %79 = arith.addf %75, %78 : vector<256xf32>
    %c0_11 = arith.constant 0 : index
    %c0_12 = arith.constant 0 : index
    %c0_13 = arith.constant 0 : index
    %80 = vector.load %arg13[%c0_11, %c0_12, %c0_13] : memref<1x12x256xf32, #tpu.memory_space<vmem>>, vector<1x1x256xf32>
    %81 = vector.shape_cast %80 : vector<1x1x256xf32> to vector<256xf32>
    %82 = vector.shape_cast %34 : vector<256xf32> to vector<1x1x256xf32>
    tpu.vector_store %arg13[%c0_11, %c0_12, %c0_13], %82 {strides = array<i32>} : memref<1x12x256xf32, #tpu.memory_space<vmem>>, vector<1x1x256xf32>,
    %c0_14 = arith.constant 0 : index
    %c1_15 = arith.constant 1 : index
    %c0_16 = arith.constant 0 : index
    %83 = vector.load %arg13[%c0_14, %c1_15, %c0_16] : memref<1x12x256xf32, #tpu.memory_space<vmem>>, vector<1x1x256xf32>
    %84 = vector.shape_cast %83 : vector<1x1x256xf32> to vector<256xf32>
    %85 = vector.shape_cast %49 : vector<256xf32> to vector<1x1x256xf32>
    tpu.vector_store %arg13[%c0_14, %c1_15, %c0_16], %85 {strides = array<i32>} : memref<1x12x256xf32, #tpu.memory_space<vmem>>, vector<1x1x256xf32>,
    %c0_17 = arith.constant 0 : index
    %c2_18 = arith.constant 2 : index
    %c0_19 = arith.constant 0 : index
    %86 = vector.load %arg13[%c0_17, %c2_18, %c0_19] : memref<1x12x256xf32, #tpu.memory_space<vmem>>, vector<1x1x256xf32>
    %87 = vector.shape_cast %86 : vector<1x1x256xf32> to vector<256xf32>
    %88 = vector.shape_cast %64 : vector<256xf32> to vector<1x1x256xf32>
    tpu.vector_store %arg13[%c0_17, %c2_18, %c0_19], %88 {strides = array<i32>} : memref<1x12x256xf32, #tpu.memory_space<vmem>>, vector<1x1x256xf32>,
    %c0_20 = arith.constant 0 : index
    %c3_21 = arith.constant 3 : index
    %c0_22 = arith.constant 0 : index
    %89 = vector.load %arg13[%c0_20, %c3_21, %c0_22] : memref<1x12x256xf32, #tpu.memory_space<vmem>>, vector<1x1x256xf32>
    %90 = vector.shape_cast %89 : vector<1x1x256xf32> to vector<256xf32>
    %91 = vector.shape_cast %79 : vector<256xf32> to vector<1x1x256xf32>
    tpu.vector_store %arg13[%c0_20, %c3_21, %c0_22], %91 {strides = array<i32>} : memref<1x12x256xf32, #tpu.memory_space<vmem>>, vector<1x1x256xf32>,
    %c0_23 = arith.constant 0 : index
    %c0_24 = arith.constant 0 : index
    %92 = vector.load %arg7[%c0_23, %c0_24] : memref<4x1xf32, #tpu.memory_space<vmem>>, vector<4x1xf32>
    %93 = vector.broadcast %92 : vector<4x1xf32> to vector<4x256xf32>
    %94 = arith.mulf %3, %93 : vector<4x256xf32>
    %c0_25 = arith.constant 0 : index
    %c0_26 = arith.constant 0 : index
    %95 = vector.load %arg8[%c0_25, %c0_26] : memref<4x1xf32, #tpu.memory_space<vmem>>, vector<4x1xf32>
    %96 = vector.broadcast %95 : vector<4x1xf32> to vector<4x256xf32>
    %97 = arith.addf %94, %96 : vector<4x256xf32>
    %cst_27 = arith.constant 0.000000e+00 : f32
    %98 = vector.broadcast %cst_27 : f32 to vector<4x256xf32>
    %99 = arith.maximumf %97, %98 : vector<4x256xf32>
    %c17_i32 = arith.constant 17 : i32
    %100 = tpu.dynamic_rotate %99 by %c17_i32 dim 1 : vector<4x256xf32>, i32 -> vector<4x256xf32>
    %c1_i32 = arith.constant 1 : i32
    %101 = vector.broadcast %c1_i32 : i32 to vector<4x256xi32>
    %102 = arith.cmpi sge, %0, %101 : vector<4x256xi32>
    %c1_i32_28 = arith.constant 1 : i32
    %103 = vector.broadcast %c1_i32_28 : i32 to vector<4x256xi32>
    %104 = arith.cmpi sge, %1, %103 : vector<4x256xi32>
    %105 = arith.andi %102, %104 : vector<4x256xi1>
    %cst_29 = arith.constant 0.000000e+00 : f32
    %106 = vector.broadcast %cst_29 : f32 to vector<4x256xf32>
    %107 = arith.select %105, %100, %106 : vector<4x256xi1>, vector<4x256xf32>
    %108 = vector.extract_strided_slice %107 {offsets = [0, 0], sizes = [1, 256], strides = [1, 1]} : vector<4x256xf32> to vector<1x256xf32>
    %109 = vector.shape_cast %108 : vector<1x256xf32> to vector<256xf32>
    %110 = vector.extract_strided_slice %107 {offsets = [1, 0], sizes = [1, 256], strides = [1, 1]} : vector<4x256xf32> to vector<1x256xf32>
    %111 = vector.shape_cast %110 : vector<1x256xf32> to vector<256xf32>
    %112 = vector.extract_strided_slice %107 {offsets = [2, 0], sizes = [1, 256], strides = [1, 1]} : vector<4x256xf32> to vector<1x256xf32>
    %113 = vector.shape_cast %112 : vector<1x256xf32> to vector<256xf32>
    %114 = vector.extract_strided_slice %107 {offsets = [3, 0], sizes = [1, 256], strides = [1, 1]} : vector<4x256xf32> to vector<1x256xf32>
    %115 = vector.shape_cast %114 : vector<1x256xf32> to vector<256xf32>
    %c0_30 = arith.constant 0 : index
    %116 = memref.load %arg9[%c0_30] : memref<144xf32, #tpu.memory_space<smem>>
    %117 = vector.broadcast %116 : f32 to vector<256xf32>
    %118 = arith.mulf %117, %109 : vector<256xf32>
    %c9_31 = arith.constant 9 : index
    %119 = memref.load %arg9[%c9_31] : memref<144xf32, #tpu.memory_space<smem>>
    %120 = vector.broadcast %119 : f32 to vector<256xf32>
    %121 = arith.mulf %120, %111 : vector<256xf32>
    %122 = arith.addf %118, %121 : vector<256xf32>
    %c18 = arith.constant 18 : index
    %123 = memref.load %arg9[%c18] : memref<144xf32, #tpu.memory_space<smem>>
    %124 = vector.broadcast %123 : f32 to vector<256xf32>
    %125 = arith.mulf %124, %113 : vector<256xf32>
    %126 = arith.addf %122, %125 : vector<256xf32>
    %c27 = arith.constant 27 : index
    %127 = memref.load %arg9[%c27] : memref<144xf32, #tpu.memory_space<smem>>
    %128 = vector.broadcast %127 : f32 to vector<256xf32>
    %129 = arith.mulf %128, %115 : vector<256xf32>
    %130 = arith.addf %126, %129 : vector<256xf32>
    %c36 = arith.constant 36 : index
    %131 = memref.load %arg9[%c36] : memref<144xf32, #tpu.memory_space<smem>>
    %132 = vector.broadcast %131 : f32 to vector<256xf32>
    %133 = arith.mulf %132, %109 : vector<256xf32>
    %c45 = arith.constant 45 : index
    %134 = memref.load %arg9[%c45] : memref<144xf32, #tpu.memory_space<smem>>
    %135 = vector.broadcast %134 : f32 to vector<256xf32>
    %136 = arith.mulf %135, %111 : vector<256xf32>
    %137 = arith.addf %133, %136 : vector<256xf32>
    %c54 = arith.constant 54 : index
    %138 = memref.load %arg9[%c54] : memref<144xf32, #tpu.memory_space<smem>>
    %139 = vector.broadcast %138 : f32 to vector<256xf32>
    %140 = arith.mulf %139, %113 : vector<256xf32>
    %141 = arith.addf %137, %140 : vector<256xf32>
    %c63 = arith.constant 63 : index
    %142 = memref.load %arg9[%c63] : memref<144xf32, #tpu.memory_space<smem>>
    %143 = vector.broadcast %142 : f32 to vector<256xf32>
    %144 = arith.mulf %143, %115 : vector<256xf32>
    %145 = arith.addf %141, %144 : vector<256xf32>
    %c72 = arith.constant 72 : index
    %146 = memref.load %arg9[%c72] : memref<144xf32, #tpu.memory_space<smem>>
    %147 = vector.broadcast %146 : f32 to vector<256xf32>
    %148 = arith.mulf %147, %109 : vector<256xf32>
    %c81 = arith.constant 81 : index
    %149 = memref.load %arg9[%c81] : memref<144xf32, #tpu.memory_space<smem>>
    %150 = vector.broadcast %149 : f32 to vector<256xf32>
    %151 = arith.mulf %150, %111 : vector<256xf32>
    %152 = arith.addf %148, %151 : vector<256xf32>
    %c90 = arith.constant 90 : index
    %153 = memref.load %arg9[%c90] : memref<144xf32, #tpu.memory_space<smem>>
    %154 = vector.broadcast %153 : f32 to vector<256xf32>
    %155 = arith.mulf %154, %113 : vector<256xf32>
    %156 = arith.addf %152, %155 : vector<256xf32>
    %c99 = arith.constant 99 : index
    %157 = memref.load %arg9[%c99] : memref<144xf32, #tpu.memory_space<smem>>
    %158 = vector.broadcast %157 : f32 to vector<256xf32>
    %159 = arith.mulf %158, %115 : vector<256xf32>
    %160 = arith.addf %156, %159 : vector<256xf32>
    %c108 = arith.constant 108 : index
    %161 = memref.load %arg9[%c108] : memref<144xf32, #tpu.memory_space<smem>>
    %162 = vector.broadcast %161 : f32 to vector<256xf32>
    %163 = arith.mulf %162, %109 : vector<256xf32>
    %c117 = arith.constant 117 : index
    %164 = memref.load %arg9[%c117] : memref<144xf32, #tpu.memory_space<smem>>
    %165 = vector.broadcast %164 : f32 to vector<256xf32>
    %166 = arith.mulf %165, %111 : vector<256xf32>
    %167 = arith.addf %163, %166 : vector<256xf32>
    %c126 = arith.constant 126 : index
    %168 = memref.load %arg9[%c126] : memref<144xf32, #tpu.memory_space<smem>>
    %169 = vector.broadcast %168 : f32 to vector<256xf32>
    %170 = arith.mulf %169, %113 : vector<256xf32>
    %171 = arith.addf %167, %170 : vector<256xf32>
    %c135 = arith.constant 135 : index
    %172 = memref.load %arg9[%c135] : memref<144xf32, #tpu.memory_space<smem>>
    %173 = vector.broadcast %172 : f32 to vector<256xf32>
    %174 = arith.mulf %173, %115 : vector<256xf32>
    %175 = arith.addf %171, %174 : vector<256xf32>
    %c16_i32 = arith.constant 16 : i32
    %176 = tpu.dynamic_rotate %99 by %c16_i32 dim 1 : vector<4x256xf32>, i32 -> vector<4x256xf32>
    %c1_i32_32 = arith.constant 1 : i32
    %177 = vector.broadcast %c1_i32_32 : i32 to vector<4x256xi32>
    %178 = arith.cmpi sge, %0, %177 : vector<4x256xi32>
    %cst_33 = arith.constant 0.000000e+00 : f32
    %179 = vector.broadcast %cst_33 : f32 to vector<4x256xf32>
    %180 = arith.select %178, %176, %179 : vector<4x256xi1>, vector<4x256xf32>
    %181 = vector.extract_strided_slice %180 {offsets = [0, 0], sizes = [1, 256], strides = [1, 1]} : vector<4x256xf32> to vector<1x256xf32>
    %182 = vector.shape_cast %181 : vector<1x256xf32> to vector<256xf32>
    %183 = vector.extract_strided_slice %180 {offsets = [1, 0], sizes = [1, 256], strides = [1, 1]} : vector<4x256xf32> to vector<1x256xf32>
    %184 = vector.shape_cast %183 : vector<1x256xf32> to vector<256xf32>
    %185 = vector.extract_strided_slice %180 {offsets = [2, 0], sizes = [1, 256], strides = [1, 1]} : vector<4x256xf32> to vector<1x256xf32>
    %186 = vector.shape_cast %185 : vector<1x256xf32> to vector<256xf32>
    %187 = vector.extract_strided_slice %180 {offsets = [3, 0], sizes = [1, 256], strides = [1, 1]} : vector<4x256xf32> to vector<1x256xf32>
    %188 = vector.shape_cast %187 : vector<1x256xf32> to vector<256xf32>
    %c1_34 = arith.constant 1 : index
    %189 = memref.load %arg9[%c1_34] : memref<144xf32, #tpu.memory_space<smem>>
    %190 = vector.broadcast %189 : f32 to vector<256xf32>
    %191 = arith.mulf %190, %182 : vector<256xf32>
    %c10_35 = arith.constant 10 : index
    %192 = memref.load %arg9[%c10_35] : memref<144xf32, #tpu.memory_space<smem>>
    %193 = vector.broadcast %192 : f32 to vector<256xf32>
    %194 = arith.mulf %193, %184 : vector<256xf32>
    %195 = arith.addf %191, %194 : vector<256xf32>
    %c19 = arith.constant 19 : index
    %196 = memref.load %arg9[%c19] : memref<144xf32, #tpu.memory_space<smem>>
    %197 = vector.broadcast %196 : f32 to vector<256xf32>
    %198 = arith.mulf %197, %186 : vector<256xf32>
    %199 = arith.addf %195, %198 : vector<256xf32>
    %c28 = arith.constant 28 : index
    %200 = memref.load %arg9[%c28] : memref<144xf32, #tpu.memory_space<smem>>
    %201 = vector.broadcast %200 : f32 to vector<256xf32>
    %202 = arith.mulf %201, %188 : vector<256xf32>
    %203 = arith.addf %199, %202 : vector<256xf32>
    %204 = arith.addf %130, %203 : vector<256xf32>
    %c37 = arith.constant 37 : index
    %205 = memref.load %arg9[%c37] : memref<144xf32, #tpu.memory_space<smem>>
    %206 = vector.broadcast %205 : f32 to vector<256xf32>
    %207 = arith.mulf %206, %182 : vector<256xf32>
    %c46 = arith.constant 46 : index
    %208 = memref.load %arg9[%c46] : memref<144xf32, #tpu.memory_space<smem>>
    %209 = vector.broadcast %208 : f32 to vector<256xf32>
    %210 = arith.mulf %209, %184 : vector<256xf32>
    %211 = arith.addf %207, %210 : vector<256xf32>
    %c55 = arith.constant 55 : index
    %212 = memref.load %arg9[%c55] : memref<144xf32, #tpu.memory_space<smem>>
    %213 = vector.broadcast %212 : f32 to vector<256xf32>
    %214 = arith.mulf %213, %186 : vector<256xf32>
    %215 = arith.addf %211, %214 : vector<256xf32>
    %c64 = arith.constant 64 : index
    %216 = memref.load %arg9[%c64] : memref<144xf32, #tpu.memory_space<smem>>
    %217 = vector.broadcast %216 : f32 to vector<256xf32>
    %218 = arith.mulf %217, %188 : vector<256xf32>
    %219 = arith.addf %215, %218 : vector<256xf32>
    %220 = arith.addf %145, %219 : vector<256xf32>
    %c73 = arith.constant 73 : index
    %221 = memref.load %arg9[%c73] : memref<144xf32, #tpu.memory_space<smem>>
    %222 = vector.broadcast %221 : f32 to vector<256xf32>
    %223 = arith.mulf %222, %182 : vector<256xf32>
    %c82 = arith.constant 82 : index
    %224 = memref.load %arg9[%c82] : memref<144xf32, #tpu.memory_space<smem>>
    %225 = vector.broadcast %224 : f32 to vector<256xf32>
    %226 = arith.mulf %225, %184 : vector<256xf32>
    %227 = arith.addf %223, %226 : vector<256xf32>
    %c91 = arith.constant 91 : index
    %228 = memref.load %arg9[%c91] : memref<144xf32, #tpu.memory_space<smem>>
    %229 = vector.broadcast %228 : f32 to vector<256xf32>
    %230 = arith.mulf %229, %186 : vector<256xf32>
    %231 = arith.addf %227, %230 : vector<256xf32>
    %c100 = arith.constant 100 : index
    %232 = memref.load %arg9[%c100] : memref<144xf32, #tpu.memory_space<smem>>
    %233 = vector.broadcast %232 : f32 to vector<256xf32>
    %234 = arith.mulf %233, %188 : vector<256xf32>
    %235 = arith.addf %231, %234 : vector<256xf32>
    %236 = arith.addf %160, %235 : vector<256xf32>
    %c109 = arith.constant 109 : index
    %237 = memref.load %arg9[%c109] : memref<144xf32, #tpu.memory_space<smem>>
    %238 = vector.broadcast %237 : f32 to vector<256xf32>
    %239 = arith.mulf %238, %182 : vector<256xf32>
    %c118 = arith.constant 118 : index
    %240 = memref.load %arg9[%c118] : memref<144xf32, #tpu.memory_space<smem>>
    %241 = vector.broadcast %240 : f32 to vector<256xf32>
    %242 = arith.mulf %241, %184 : vector<256xf32>
    %243 = arith.addf %239, %242 : vector<256xf32>
    %c127 = arith.constant 127 : index
    %244 = memref.load %arg9[%c127] : memref<144xf32, #tpu.memory_space<smem>>
    %245 = vector.broadcast %244 : f32 to vector<256xf32>
    %246 = arith.mulf %245, %186 : vector<256xf32>
    %247 = arith.addf %243, %246 : vector<256xf32>
    %c136 = arith.constant 136 : index
    %248 = memref.load %arg9[%c136] : memref<144xf32, #tpu.memory_space<smem>>
    %249 = vector.broadcast %248 : f32 to vector<256xf32>
    %250 = arith.mulf %249, %188 : vector<256xf32>
    %251 = arith.addf %247, %250 : vector<256xf32>
    %252 = arith.addf %175, %251 : vector<256xf32>
    %c15_i32 = arith.constant 15 : i32
    %253 = tpu.dynamic_rotate %99 by %c15_i32 dim 1 : vector<4x256xf32>, i32 -> vector<4x256xf32>
    %c1_i32_36 = arith.constant 1 : i32
    %254 = vector.broadcast %c1_i32_36 : i32 to vector<4x256xi32>
    %255 = arith.cmpi sge, %0, %254 : vector<4x256xi32>
    %c15_i32_37 = arith.constant 15 : i32
    %256 = vector.broadcast %c15_i32_37 : i32 to vector<4x256xi32>
    %257 = arith.cmpi slt, %1, %256 : vector<4x256xi32>
    %258 = arith.andi %255, %257 : vector<4x256xi1>
    %cst_38 = arith.constant 0.000000e+00 : f32
    %259 = vector.broadcast %cst_38 : f32 to vector<4x256xf32>
    %260 = arith.select %258, %253, %259 : vector<4x256xi1>, vector<4x256xf32>
    %261 = vector.extract_strided_slice %260 {offsets = [0, 0], sizes = [1, 256], strides = [1, 1]} : vector<4x256xf32> to vector<1x256xf32>
    %262 = vector.shape_cast %261 : vector<1x256xf32> to vector<256xf32>
    %263 = vector.extract_strided_slice %260 {offsets = [1, 0], sizes = [1, 256], strides = [1, 1]} : vector<4x256xf32> to vector<1x256xf32>
    %264 = vector.shape_cast %263 : vector<1x256xf32> to vector<256xf32>
    %265 = vector.extract_strided_slice %260 {offsets = [2, 0], sizes = [1, 256], strides = [1, 1]} : vector<4x256xf32> to vector<1x256xf32>
    %266 = vector.shape_cast %265 : vector<1x256xf32> to vector<256xf32>
    %267 = vector.extract_strided_slice %260 {offsets = [3, 0], sizes = [1, 256], strides = [1, 1]} : vector<4x256xf32> to vector<1x256xf32>
    %268 = vector.shape_cast %267 : vector<1x256xf32> to vector<256xf32>
    %c2_39 = arith.constant 2 : index
    %269 = memref.load %arg9[%c2_39] : memref<144xf32, #tpu.memory_space<smem>>
    %270 = vector.broadcast %269 : f32 to vector<256xf32>
    %271 = arith.mulf %270, %262 : vector<256xf32>
    %c11_40 = arith.constant 11 : index
    %272 = memref.load %arg9[%c11_40] : memref<144xf32, #tpu.memory_space<smem>>
    %273 = vector.broadcast %272 : f32 to vector<256xf32>
    %274 = arith.mulf %273, %264 : vector<256xf32>
    %275 = arith.addf %271, %274 : vector<256xf32>
    %c20 = arith.constant 20 : index
    %276 = memref.load %arg9[%c20] : memref<144xf32, #tpu.memory_space<smem>>
    %277 = vector.broadcast %276 : f32 to vector<256xf32>
    %278 = arith.mulf %277, %266 : vector<256xf32>
    %279 = arith.addf %275, %278 : vector<256xf32>
    %c29 = arith.constant 29 : index
    %280 = memref.load %arg9[%c29] : memref<144xf32, #tpu.memory_space<smem>>
    %281 = vector.broadcast %280 : f32 to vector<256xf32>
    %282 = arith.mulf %281, %268 : vector<256xf32>
    %283 = arith.addf %279, %282 : vector<256xf32>
    %284 = arith.addf %204, %283 : vector<256xf32>
    %c38 = arith.constant 38 : index
    %285 = memref.load %arg9[%c38] : memref<144xf32, #tpu.memory_space<smem>>
    %286 = vector.broadcast %285 : f32 to vector<256xf32>
    %287 = arith.mulf %286, %262 : vector<256xf32>
    %c47 = arith.constant 47 : index
    %288 = memref.load %arg9[%c47] : memref<144xf32, #tpu.memory_space<smem>>
    %289 = vector.broadcast %288 : f32 to vector<256xf32>
    %290 = arith.mulf %289, %264 : vector<256xf32>
    %291 = arith.addf %287, %290 : vector<256xf32>
    %c56 = arith.constant 56 : index
    %292 = memref.load %arg9[%c56] : memref<144xf32, #tpu.memory_space<smem>>
    %293 = vector.broadcast %292 : f32 to vector<256xf32>
    %294 = arith.mulf %293, %266 : vector<256xf32>
    %295 = arith.addf %291, %294 : vector<256xf32>
    %c65 = arith.constant 65 : index
    %296 = memref.load %arg9[%c65] : memref<144xf32, #tpu.memory_space<smem>>
    %297 = vector.broadcast %296 : f32 to vector<256xf32>
    %298 = arith.mulf %297, %268 : vector<256xf32>
    %299 = arith.addf %295, %298 : vector<256xf32>
    %300 = arith.addf %220, %299 : vector<256xf32>
    %c74 = arith.constant 74 : index
    %301 = memref.load %arg9[%c74] : memref<144xf32, #tpu.memory_space<smem>>
    %302 = vector.broadcast %301 : f32 to vector<256xf32>
    %303 = arith.mulf %302, %262 : vector<256xf32>
    %c83 = arith.constant 83 : index
    %304 = memref.load %arg9[%c83] : memref<144xf32, #tpu.memory_space<smem>>
    %305 = vector.broadcast %304 : f32 to vector<256xf32>
    %306 = arith.mulf %305, %264 : vector<256xf32>
    %307 = arith.addf %303, %306 : vector<256xf32>
    %c92 = arith.constant 92 : index
    %308 = memref.load %arg9[%c92] : memref<144xf32, #tpu.memory_space<smem>>
    %309 = vector.broadcast %308 : f32 to vector<256xf32>
    %310 = arith.mulf %309, %266 : vector<256xf32>
    %311 = arith.addf %307, %310 : vector<256xf32>
    %c101 = arith.constant 101 : index
    %312 = memref.load %arg9[%c101] : memref<144xf32, #tpu.memory_space<smem>>
    %313 = vector.broadcast %312 : f32 to vector<256xf32>
    %314 = arith.mulf %313, %268 : vector<256xf32>
    %315 = arith.addf %311, %314 : vector<256xf32>
    %316 = arith.addf %236, %315 : vector<256xf32>
    %c110 = arith.constant 110 : index
    %317 = memref.load %arg9[%c110] : memref<144xf32, #tpu.memory_space<smem>>
    %318 = vector.broadcast %317 : f32 to vector<256xf32>
    %319 = arith.mulf %318, %262 : vector<256xf32>
    %c119 = arith.constant 119 : index
    %320 = memref.load %arg9[%c119] : memref<144xf32, #tpu.memory_space<smem>>
    %321 = vector.broadcast %320 : f32 to vector<256xf32>
    %322 = arith.mulf %321, %264 : vector<256xf32>
    %323 = arith.addf %319, %322 : vector<256xf32>
    %c128 = arith.constant 128 : index
    %324 = memref.load %arg9[%c128] : memref<144xf32, #tpu.memory_space<smem>>
    %325 = vector.broadcast %324 : f32 to vector<256xf32>
    %326 = arith.mulf %325, %266 : vector<256xf32>
    %327 = arith.addf %323, %326 : vector<256xf32>
    %c137 = arith.constant 137 : index
    %328 = memref.load %arg9[%c137] : memref<144xf32, #tpu.memory_space<smem>>
    %329 = vector.broadcast %328 : f32 to vector<256xf32>
    %330 = arith.mulf %329, %268 : vector<256xf32>
    %331 = arith.addf %327, %330 : vector<256xf32>
    %332 = arith.addf %252, %331 : vector<256xf32>
    %c1_i32_41 = arith.constant 1 : i32
    %333 = tpu.dynamic_rotate %99 by %c1_i32_41 dim 1 : vector<4x256xf32>, i32 -> vector<4x256xf32>
    %c1_i32_42 = arith.constant 1 : i32
    %334 = vector.broadcast %c1_i32_42 : i32 to vector<4x256xi32>
    %335 = arith.cmpi sge, %1, %334 : vector<4x256xi32>
    %cst_43 = arith.constant 0.000000e+00 : f32
    %336 = vector.broadcast %cst_43 : f32 to vector<4x256xf32>
    %337 = arith.select %335, %333, %336 : vector<4x256xi1>, vector<4x256xf32>
    %338 = vector.extract_strided_slice %337 {offsets = [0, 0], sizes = [1, 256], strides = [1, 1]} : vector<4x256xf32> to vector<1x256xf32>
    %339 = vector.shape_cast %338 : vector<1x256xf32> to vector<256xf32>
    %340 = vector.extract_strided_slice %337 {offsets = [1, 0], sizes = [1, 256], strides = [1, 1]} : vector<4x256xf32> to vector<1x256xf32>
    %341 = vector.shape_cast %340 : vector<1x256xf32> to vector<256xf32>
    %342 = vector.extract_strided_slice %337 {offsets = [2, 0], sizes = [1, 256], strides = [1, 1]} : vector<4x256xf32> to vector<1x256xf32>
    %343 = vector.shape_cast %342 : vector<1x256xf32> to vector<256xf32>
    %344 = vector.extract_strided_slice %337 {offsets = [3, 0], sizes = [1, 256], strides = [1, 1]} : vector<4x256xf32> to vector<1x256xf32>
    %345 = vector.shape_cast %344 : vector<1x256xf32> to vector<256xf32>
    %c3_44 = arith.constant 3 : index
    %346 = memref.load %arg9[%c3_44] : memref<144xf32, #tpu.memory_space<smem>>
    %347 = vector.broadcast %346 : f32 to vector<256xf32>
    %348 = arith.mulf %347, %339 : vector<256xf32>
    %c12_45 = arith.constant 12 : index
    %349 = memref.load %arg9[%c12_45] : memref<144xf32, #tpu.memory_space<smem>>
    %350 = vector.broadcast %349 : f32 to vector<256xf32>
    %351 = arith.mulf %350, %341 : vector<256xf32>
    %352 = arith.addf %348, %351 : vector<256xf32>
    %c21 = arith.constant 21 : index
    %353 = memref.load %arg9[%c21] : memref<144xf32, #tpu.memory_space<smem>>
    %354 = vector.broadcast %353 : f32 to vector<256xf32>
    %355 = arith.mulf %354, %343 : vector<256xf32>
    %356 = arith.addf %352, %355 : vector<256xf32>
    %c30 = arith.constant 30 : index
    %357 = memref.load %arg9[%c30] : memref<144xf32, #tpu.memory_space<smem>>
    %358 = vector.broadcast %357 : f32 to vector<256xf32>
    %359 = arith.mulf %358, %345 : vector<256xf32>
    %360 = arith.addf %356, %359 : vector<256xf32>
    %361 = arith.addf %284, %360 : vector<256xf32>
    %c39 = arith.constant 39 : index
    %362 = memref.load %arg9[%c39] : memref<144xf32, #tpu.memory_space<smem>>
    %363 = vector.broadcast %362 : f32 to vector<256xf32>
    %364 = arith.mulf %363, %339 : vector<256xf32>
    %c48 = arith.constant 48 : index
    %365 = memref.load %arg9[%c48] : memref<144xf32, #tpu.memory_space<smem>>
    %366 = vector.broadcast %365 : f32 to vector<256xf32>
    %367 = arith.mulf %366, %341 : vector<256xf32>
    %368 = arith.addf %364, %367 : vector<256xf32>
    %c57 = arith.constant 57 : index
    %369 = memref.load %arg9[%c57] : memref<144xf32, #tpu.memory_space<smem>>
    %370 = vector.broadcast %369 : f32 to vector<256xf32>
    %371 = arith.mulf %370, %343 : vector<256xf32>
    %372 = arith.addf %368, %371 : vector<256xf32>
    %c66 = arith.constant 66 : index
    %373 = memref.load %arg9[%c66] : memref<144xf32, #tpu.memory_space<smem>>
    %374 = vector.broadcast %373 : f32 to vector<256xf32>
    %375 = arith.mulf %374, %345 : vector<256xf32>
    %376 = arith.addf %372, %375 : vector<256xf32>
    %377 = arith.addf %300, %376 : vector<256xf32>
    %c75 = arith.constant 75 : index
    %378 = memref.load %arg9[%c75] : memref<144xf32, #tpu.memory_space<smem>>
    %379 = vector.broadcast %378 : f32 to vector<256xf32>
    %380 = arith.mulf %379, %339 : vector<256xf32>
    %c84 = arith.constant 84 : index
    %381 = memref.load %arg9[%c84] : memref<144xf32, #tpu.memory_space<smem>>
    %382 = vector.broadcast %381 : f32 to vector<256xf32>
    %383 = arith.mulf %382, %341 : vector<256xf32>
    %384 = arith.addf %380, %383 : vector<256xf32>
    %c93 = arith.constant 93 : index
    %385 = memref.load %arg9[%c93] : memref<144xf32, #tpu.memory_space<smem>>
    %386 = vector.broadcast %385 : f32 to vector<256xf32>
    %387 = arith.mulf %386, %343 : vector<256xf32>
    %388 = arith.addf %384, %387 : vector<256xf32>
    %c102 = arith.constant 102 : index
    %389 = memref.load %arg9[%c102] : memref<144xf32, #tpu.memory_space<smem>>
    %390 = vector.broadcast %389 : f32 to vector<256xf32>
    %391 = arith.mulf %390, %345 : vector<256xf32>
    %392 = arith.addf %388, %391 : vector<256xf32>
    %393 = arith.addf %316, %392 : vector<256xf32>
    %c111 = arith.constant 111 : index
    %394 = memref.load %arg9[%c111] : memref<144xf32, #tpu.memory_space<smem>>
    %395 = vector.broadcast %394 : f32 to vector<256xf32>
    %396 = arith.mulf %395, %339 : vector<256xf32>
    %c120 = arith.constant 120 : index
    %397 = memref.load %arg9[%c120] : memref<144xf32, #tpu.memory_space<smem>>
    %398 = vector.broadcast %397 : f32 to vector<256xf32>
    %399 = arith.mulf %398, %341 : vector<256xf32>
    %400 = arith.addf %396, %399 : vector<256xf32>
    %c129 = arith.constant 129 : index
    %401 = memref.load %arg9[%c129] : memref<144xf32, #tpu.memory_space<smem>>
    %402 = vector.broadcast %401 : f32 to vector<256xf32>
    %403 = arith.mulf %402, %343 : vector<256xf32>
    %404 = arith.addf %400, %403 : vector<256xf32>
    %c138 = arith.constant 138 : index
    %405 = memref.load %arg9[%c138] : memref<144xf32, #tpu.memory_space<smem>>
    %406 = vector.broadcast %405 : f32 to vector<256xf32>
    %407 = arith.mulf %406, %345 : vector<256xf32>
    %408 = arith.addf %404, %407 : vector<256xf32>
    %409 = arith.addf %332, %408 : vector<256xf32>
    %410 = vector.extract_strided_slice %99 {offsets = [0, 0], sizes = [1, 256], strides = [1, 1]} : vector<4x256xf32> to vector<1x256xf32>
    %411 = vector.shape_cast %410 : vector<1x256xf32> to vector<256xf32>
    %412 = vector.extract_strided_slice %99 {offsets = [1, 0], sizes = [1, 256], strides = [1, 1]} : vector<4x256xf32> to vector<1x256xf32>
    %413 = vector.shape_cast %412 : vector<1x256xf32> to vector<256xf32>
    %414 = vector.extract_strided_slice %99 {offsets = [2, 0], sizes = [1, 256], strides = [1, 1]} : vector<4x256xf32> to vector<1x256xf32>
    %415 = vector.shape_cast %414 : vector<1x256xf32> to vector<256xf32>
    %416 = vector.extract_strided_slice %99 {offsets = [3, 0], sizes = [1, 256], strides = [1, 1]} : vector<4x256xf32> to vector<1x256xf32>
    %417 = vector.shape_cast %416 : vector<1x256xf32> to vector<256xf32>
    %c4_46 = arith.constant 4 : index
    %418 = memref.load %arg9[%c4_46] : memref<144xf32, #tpu.memory_space<smem>>
    %419 = vector.broadcast %418 : f32 to vector<256xf32>
    %420 = arith.mulf %419, %411 : vector<256xf32>
    %c13_47 = arith.constant 13 : index
    %421 = memref.load %arg9[%c13_47] : memref<144xf32, #tpu.memory_space<smem>>
    %422 = vector.broadcast %421 : f32 to vector<256xf32>
    %423 = arith.mulf %422, %413 : vector<256xf32>
    %424 = arith.addf %420, %423 : vector<256xf32>
    %c22 = arith.constant 22 : index
    %425 = memref.load %arg9[%c22] : memref<144xf32, #tpu.memory_space<smem>>
    %426 = vector.broadcast %425 : f32 to vector<256xf32>
    %427 = arith.mulf %426, %415 : vector<256xf32>
    %428 = arith.addf %424, %427 : vector<256xf32>
    %c31 = arith.constant 31 : index
    %429 = memref.load %arg9[%c31] : memref<144xf32, #tpu.memory_space<smem>>
    %430 = vector.broadcast %429 : f32 to vector<256xf32>
    %431 = arith.mulf %430, %417 : vector<256xf32>
    %432 = arith.addf %428, %431 : vector<256xf32>
    %433 = arith.addf %361, %432 : vector<256xf32>
    %c40 = arith.constant 40 : index
    %434 = memref.load %arg9[%c40] : memref<144xf32, #tpu.memory_space<smem>>
    %435 = vector.broadcast %434 : f32 to vector<256xf32>
    %436 = arith.mulf %435, %411 : vector<256xf32>
    %c49 = arith.constant 49 : index
    %437 = memref.load %arg9[%c49] : memref<144xf32, #tpu.memory_space<smem>>
    %438 = vector.broadcast %437 : f32 to vector<256xf32>
    %439 = arith.mulf %438, %413 : vector<256xf32>
    %440 = arith.addf %436, %439 : vector<256xf32>
    %c58 = arith.constant 58 : index
    %441 = memref.load %arg9[%c58] : memref<144xf32, #tpu.memory_space<smem>>
    %442 = vector.broadcast %441 : f32 to vector<256xf32>
    %443 = arith.mulf %442, %415 : vector<256xf32>
    %444 = arith.addf %440, %443 : vector<256xf32>
    %c67 = arith.constant 67 : index
    %445 = memref.load %arg9[%c67] : memref<144xf32, #tpu.memory_space<smem>>
    %446 = vector.broadcast %445 : f32 to vector<256xf32>
    %447 = arith.mulf %446, %417 : vector<256xf32>
    %448 = arith.addf %444, %447 : vector<256xf32>
    %449 = arith.addf %377, %448 : vector<256xf32>
    %c76 = arith.constant 76 : index
    %450 = memref.load %arg9[%c76] : memref<144xf32, #tpu.memory_space<smem>>
    %451 = vector.broadcast %450 : f32 to vector<256xf32>
    %452 = arith.mulf %451, %411 : vector<256xf32>
    %c85 = arith.constant 85 : index
    %453 = memref.load %arg9[%c85] : memref<144xf32, #tpu.memory_space<smem>>
    %454 = vector.broadcast %453 : f32 to vector<256xf32>
    %455 = arith.mulf %454, %413 : vector<256xf32>
    %456 = arith.addf %452, %455 : vector<256xf32>
    %c94 = arith.constant 94 : index
    %457 = memref.load %arg9[%c94] : memref<144xf32, #tpu.memory_space<smem>>
    %458 = vector.broadcast %457 : f32 to vector<256xf32>
    %459 = arith.mulf %458, %415 : vector<256xf32>
    %460 = arith.addf %456, %459 : vector<256xf32>
    %c103 = arith.constant 103 : index
    %461 = memref.load %arg9[%c103] : memref<144xf32, #tpu.memory_space<smem>>
    %462 = vector.broadcast %461 : f32 to vector<256xf32>
    %463 = arith.mulf %462, %417 : vector<256xf32>
    %464 = arith.addf %460, %463 : vector<256xf32>
    %465 = arith.addf %393, %464 : vector<256xf32>
    %c112 = arith.constant 112 : index
    %466 = memref.load %arg9[%c112] : memref<144xf32, #tpu.memory_space<smem>>
    %467 = vector.broadcast %466 : f32 to vector<256xf32>
    %468 = arith.mulf %467, %411 : vector<256xf32>
    %c121 = arith.constant 121 : index
    %469 = memref.load %arg9[%c121] : memref<144xf32, #tpu.memory_space<smem>>
    %470 = vector.broadcast %469 : f32 to vector<256xf32>
    %471 = arith.mulf %470, %413 : vector<256xf32>
    %472 = arith.addf %468, %471 : vector<256xf32>
    %c130 = arith.constant 130 : index
    %473 = memref.load %arg9[%c130] : memref<144xf32, #tpu.memory_space<smem>>
    %474 = vector.broadcast %473 : f32 to vector<256xf32>
    %475 = arith.mulf %474, %415 : vector<256xf32>
    %476 = arith.addf %472, %475 : vector<256xf32>
    %c139 = arith.constant 139 : index
    %477 = memref.load %arg9[%c139] : memref<144xf32, #tpu.memory_space<smem>>
    %478 = vector.broadcast %477 : f32 to vector<256xf32>
    %479 = arith.mulf %478, %417 : vector<256xf32>
    %480 = arith.addf %476, %479 : vector<256xf32>
    %481 = arith.addf %409, %480 : vector<256xf32>
    %c255_i32 = arith.constant 255 : i32
    %482 = tpu.dynamic_rotate %99 by %c255_i32 dim 1 : vector<4x256xf32>, i32 -> vector<4x256xf32>
    %c15_i32_48 = arith.constant 15 : i32
    %483 = vector.broadcast %c15_i32_48 : i32 to vector<4x256xi32>
    %484 = arith.cmpi slt, %1, %483 : vector<4x256xi32>
    %cst_49 = arith.constant 0.000000e+00 : f32
    %485 = vector.broadcast %cst_49 : f32 to vector<4x256xf32>
    %486 = arith.select %484, %482, %485 : vector<4x256xi1>, vector<4x256xf32>
    %487 = vector.extract_strided_slice %486 {offsets = [0, 0], sizes = [1, 256], strides = [1, 1]} : vector<4x256xf32> to vector<1x256xf32>
    %488 = vector.shape_cast %487 : vector<1x256xf32> to vector<256xf32>
    %489 = vector.extract_strided_slice %486 {offsets = [1, 0], sizes = [1, 256], strides = [1, 1]} : vector<4x256xf32> to vector<1x256xf32>
    %490 = vector.shape_cast %489 : vector<1x256xf32> to vector<256xf32>
    %491 = vector.extract_strided_slice %486 {offsets = [2, 0], sizes = [1, 256], strides = [1, 1]} : vector<4x256xf32> to vector<1x256xf32>
    %492 = vector.shape_cast %491 : vector<1x256xf32> to vector<256xf32>
    %493 = vector.extract_strided_slice %486 {offsets = [3, 0], sizes = [1, 256], strides = [1, 1]} : vector<4x256xf32> to vector<1x256xf32>
    %494 = vector.shape_cast %493 : vector<1x256xf32> to vector<256xf32>
    %c5_50 = arith.constant 5 : index
    %495 = memref.load %arg9[%c5_50] : memref<144xf32, #tpu.memory_space<smem>>
    %496 = vector.broadcast %495 : f32 to vector<256xf32>
    %497 = arith.mulf %496, %488 : vector<256xf32>
    %c14_51 = arith.constant 14 : index
    %498 = memref.load %arg9[%c14_51] : memref<144xf32, #tpu.memory_space<smem>>
    %499 = vector.broadcast %498 : f32 to vector<256xf32>
    %500 = arith.mulf %499, %490 : vector<256xf32>
    %501 = arith.addf %497, %500 : vector<256xf32>
    %c23 = arith.constant 23 : index
    %502 = memref.load %arg9[%c23] : memref<144xf32, #tpu.memory_space<smem>>
    %503 = vector.broadcast %502 : f32 to vector<256xf32>
    %504 = arith.mulf %503, %492 : vector<256xf32>
    %505 = arith.addf %501, %504 : vector<256xf32>
    %c32 = arith.constant 32 : index
    %506 = memref.load %arg9[%c32] : memref<144xf32, #tpu.memory_space<smem>>
    %507 = vector.broadcast %506 : f32 to vector<256xf32>
    %508 = arith.mulf %507, %494 : vector<256xf32>
    %509 = arith.addf %505, %508 : vector<256xf32>
    %510 = arith.addf %433, %509 : vector<256xf32>
    %c41 = arith.constant 41 : index
    %511 = memref.load %arg9[%c41] : memref<144xf32, #tpu.memory_space<smem>>
    %512 = vector.broadcast %511 : f32 to vector<256xf32>
    %513 = arith.mulf %512, %488 : vector<256xf32>
    %c50 = arith.constant 50 : index
    %514 = memref.load %arg9[%c50] : memref<144xf32, #tpu.memory_space<smem>>
    %515 = vector.broadcast %514 : f32 to vector<256xf32>
    %516 = arith.mulf %515, %490 : vector<256xf32>
    %517 = arith.addf %513, %516 : vector<256xf32>
    %c59 = arith.constant 59 : index
    %518 = memref.load %arg9[%c59] : memref<144xf32, #tpu.memory_space<smem>>
    %519 = vector.broadcast %518 : f32 to vector<256xf32>
    %520 = arith.mulf %519, %492 : vector<256xf32>
    %521 = arith.addf %517, %520 : vector<256xf32>
    %c68 = arith.constant 68 : index
    %522 = memref.load %arg9[%c68] : memref<144xf32, #tpu.memory_space<smem>>
    %523 = vector.broadcast %522 : f32 to vector<256xf32>
    %524 = arith.mulf %523, %494 : vector<256xf32>
    %525 = arith.addf %521, %524 : vector<256xf32>
    %526 = arith.addf %449, %525 : vector<256xf32>
    %c77 = arith.constant 77 : index
    %527 = memref.load %arg9[%c77] : memref<144xf32, #tpu.memory_space<smem>>
    %528 = vector.broadcast %527 : f32 to vector<256xf32>
    %529 = arith.mulf %528, %488 : vector<256xf32>
    %c86 = arith.constant 86 : index
    %530 = memref.load %arg9[%c86] : memref<144xf32, #tpu.memory_space<smem>>
    %531 = vector.broadcast %530 : f32 to vector<256xf32>
    %532 = arith.mulf %531, %490 : vector<256xf32>
    %533 = arith.addf %529, %532 : vector<256xf32>
    %c95 = arith.constant 95 : index
    %534 = memref.load %arg9[%c95] : memref<144xf32, #tpu.memory_space<smem>>
    %535 = vector.broadcast %534 : f32 to vector<256xf32>
    %536 = arith.mulf %535, %492 : vector<256xf32>
    %537 = arith.addf %533, %536 : vector<256xf32>
    %c104 = arith.constant 104 : index
    %538 = memref.load %arg9[%c104] : memref<144xf32, #tpu.memory_space<smem>>
    %539 = vector.broadcast %538 : f32 to vector<256xf32>
    %540 = arith.mulf %539, %494 : vector<256xf32>
    %541 = arith.addf %537, %540 : vector<256xf32>
    %542 = arith.addf %465, %541 : vector<256xf32>
    %c113 = arith.constant 113 : index
    %543 = memref.load %arg9[%c113] : memref<144xf32, #tpu.memory_space<smem>>
    %544 = vector.broadcast %543 : f32 to vector<256xf32>
    %545 = arith.mulf %544, %488 : vector<256xf32>
    %c122 = arith.constant 122 : index
    %546 = memref.load %arg9[%c122] : memref<144xf32, #tpu.memory_space<smem>>
    %547 = vector.broadcast %546 : f32 to vector<256xf32>
    %548 = arith.mulf %547, %490 : vector<256xf32>
    %549 = arith.addf %545, %548 : vector<256xf32>
    %c131 = arith.constant 131 : index
    %550 = memref.load %arg9[%c131] : memref<144xf32, #tpu.memory_space<smem>>
    %551 = vector.broadcast %550 : f32 to vector<256xf32>
    %552 = arith.mulf %551, %492 : vector<256xf32>
    %553 = arith.addf %549, %552 : vector<256xf32>
    %c140 = arith.constant 140 : index
    %554 = memref.load %arg9[%c140] : memref<144xf32, #tpu.memory_space<smem>>
    %555 = vector.broadcast %554 : f32 to vector<256xf32>
    %556 = arith.mulf %555, %494 : vector<256xf32>
    %557 = arith.addf %553, %556 : vector<256xf32>
    %558 = arith.addf %481, %557 : vector<256xf32>
    %c241_i32 = arith.constant 241 : i32
    %559 = tpu.dynamic_rotate %99 by %c241_i32 dim 1 : vector<4x256xf32>, i32 -> vector<4x256xf32>
    %c15_i32_52 = arith.constant 15 : i32
    %560 = vector.broadcast %c15_i32_52 : i32 to vector<4x256xi32>
    %561 = arith.cmpi slt, %0, %560 : vector<4x256xi32>
    %c1_i32_53 = arith.constant 1 : i32
    %562 = vector.broadcast %c1_i32_53 : i32 to vector<4x256xi32>
    %563 = arith.cmpi sge, %1, %562 : vector<4x256xi32>
    %564 = arith.andi %561, %563 : vector<4x256xi1>
    %cst_54 = arith.constant 0.000000e+00 : f32
    %565 = vector.broadcast %cst_54 : f32 to vector<4x256xf32>
    %566 = arith.select %564, %559, %565 : vector<4x256xi1>, vector<4x256xf32>
    %567 = vector.extract_strided_slice %566 {offsets = [0, 0], sizes = [1, 256], strides = [1, 1]} : vector<4x256xf32> to vector<1x256xf32>
    %568 = vector.shape_cast %567 : vector<1x256xf32> to vector<256xf32>
    %569 = vector.extract_strided_slice %566 {offsets = [1, 0], sizes = [1, 256], strides = [1, 1]} : vector<4x256xf32> to vector<1x256xf32>
    %570 = vector.shape_cast %569 : vector<1x256xf32> to vector<256xf32>
    %571 = vector.extract_strided_slice %566 {offsets = [2, 0], sizes = [1, 256], strides = [1, 1]} : vector<4x256xf32> to vector<1x256xf32>
    %572 = vector.shape_cast %571 : vector<1x256xf32> to vector<256xf32>
    %573 = vector.extract_strided_slice %566 {offsets = [3, 0], sizes = [1, 256], strides = [1, 1]} : vector<4x256xf32> to vector<1x256xf32>
    %574 = vector.shape_cast %573 : vector<1x256xf32> to vector<256xf32>
    %c6_55 = arith.constant 6 : index
    %575 = memref.load %arg9[%c6_55] : memref<144xf32, #tpu.memory_space<smem>>
    %576 = vector.broadcast %575 : f32 to vector<256xf32>
    %577 = arith.mulf %576, %568 : vector<256xf32>
    %c15_56 = arith.constant 15 : index
    %578 = memref.load %arg9[%c15_56] : memref<144xf32, #tpu.memory_space<smem>>
    %579 = vector.broadcast %578 : f32 to vector<256xf32>
    %580 = arith.mulf %579, %570 : vector<256xf32>
    %581 = arith.addf %577, %580 : vector<256xf32>
    %c24 = arith.constant 24 : index
    %582 = memref.load %arg9[%c24] : memref<144xf32, #tpu.memory_space<smem>>
    %583 = vector.broadcast %582 : f32 to vector<256xf32>
    %584 = arith.mulf %583, %572 : vector<256xf32>
    %585 = arith.addf %581, %584 : vector<256xf32>
    %c33 = arith.constant 33 : index
    %586 = memref.load %arg9[%c33] : memref<144xf32, #tpu.memory_space<smem>>
    %587 = vector.broadcast %586 : f32 to vector<256xf32>
    %588 = arith.mulf %587, %574 : vector<256xf32>
    %589 = arith.addf %585, %588 : vector<256xf32>
    %590 = arith.addf %510, %589 : vector<256xf32>
    %c42 = arith.constant 42 : index
    %591 = memref.load %arg9[%c42] : memref<144xf32, #tpu.memory_space<smem>>
    %592 = vector.broadcast %591 : f32 to vector<256xf32>
    %593 = arith.mulf %592, %568 : vector<256xf32>
    %c51 = arith.constant 51 : index
    %594 = memref.load %arg9[%c51] : memref<144xf32, #tpu.memory_space<smem>>
    %595 = vector.broadcast %594 : f32 to vector<256xf32>
    %596 = arith.mulf %595, %570 : vector<256xf32>
    %597 = arith.addf %593, %596 : vector<256xf32>
    %c60 = arith.constant 60 : index
    %598 = memref.load %arg9[%c60] : memref<144xf32, #tpu.memory_space<smem>>
    %599 = vector.broadcast %598 : f32 to vector<256xf32>
    %600 = arith.mulf %599, %572 : vector<256xf32>
    %601 = arith.addf %597, %600 : vector<256xf32>
    %c69 = arith.constant 69 : index
    %602 = memref.load %arg9[%c69] : memref<144xf32, #tpu.memory_space<smem>>
    %603 = vector.broadcast %602 : f32 to vector<256xf32>
    %604 = arith.mulf %603, %574 : vector<256xf32>
    %605 = arith.addf %601, %604 : vector<256xf32>
    %606 = arith.addf %526, %605 : vector<256xf32>
    %c78 = arith.constant 78 : index
    %607 = memref.load %arg9[%c78] : memref<144xf32, #tpu.memory_space<smem>>
    %608 = vector.broadcast %607 : f32 to vector<256xf32>
    %609 = arith.mulf %608, %568 : vector<256xf32>
    %c87 = arith.constant 87 : index
    %610 = memref.load %arg9[%c87] : memref<144xf32, #tpu.memory_space<smem>>
    %611 = vector.broadcast %610 : f32 to vector<256xf32>
    %612 = arith.mulf %611, %570 : vector<256xf32>
    %613 = arith.addf %609, %612 : vector<256xf32>
    %c96 = arith.constant 96 : index
    %614 = memref.load %arg9[%c96] : memref<144xf32, #tpu.memory_space<smem>>
    %615 = vector.broadcast %614 : f32 to vector<256xf32>
    %616 = arith.mulf %615, %572 : vector<256xf32>
    %617 = arith.addf %613, %616 : vector<256xf32>
    %c105 = arith.constant 105 : index
    %618 = memref.load %arg9[%c105] : memref<144xf32, #tpu.memory_space<smem>>
    %619 = vector.broadcast %618 : f32 to vector<256xf32>
    %620 = arith.mulf %619, %574 : vector<256xf32>
    %621 = arith.addf %617, %620 : vector<256xf32>
    %622 = arith.addf %542, %621 : vector<256xf32>
    %c114 = arith.constant 114 : index
    %623 = memref.load %arg9[%c114] : memref<144xf32, #tpu.memory_space<smem>>
    %624 = vector.broadcast %623 : f32 to vector<256xf32>
    %625 = arith.mulf %624, %568 : vector<256xf32>
    %c123 = arith.constant 123 : index
    %626 = memref.load %arg9[%c123] : memref<144xf32, #tpu.memory_space<smem>>
    %627 = vector.broadcast %626 : f32 to vector<256xf32>
    %628 = arith.mulf %627, %570 : vector<256xf32>
    %629 = arith.addf %625, %628 : vector<256xf32>
    %c132 = arith.constant 132 : index
    %630 = memref.load %arg9[%c132] : memref<144xf32, #tpu.memory_space<smem>>
    %631 = vector.broadcast %630 : f32 to vector<256xf32>
    %632 = arith.mulf %631, %572 : vector<256xf32>
    %633 = arith.addf %629, %632 : vector<256xf32>
    %c141 = arith.constant 141 : index
    %634 = memref.load %arg9[%c141] : memref<144xf32, #tpu.memory_space<smem>>
    %635 = vector.broadcast %634 : f32 to vector<256xf32>
    %636 = arith.mulf %635, %574 : vector<256xf32>
    %637 = arith.addf %633, %636 : vector<256xf32>
    %638 = arith.addf %558, %637 : vector<256xf32>
    %c240_i32 = arith.constant 240 : i32
    %639 = tpu.dynamic_rotate %99 by %c240_i32 dim 1 : vector<4x256xf32>, i32 -> vector<4x256xf32>
    %c15_i32_57 = arith.constant 15 : i32
    %640 = vector.broadcast %c15_i32_57 : i32 to vector<4x256xi32>
    %641 = arith.cmpi slt, %0, %640 : vector<4x256xi32>
    %cst_58 = arith.constant 0.000000e+00 : f32
    %642 = vector.broadcast %cst_58 : f32 to vector<4x256xf32>
    %643 = arith.select %641, %639, %642 : vector<4x256xi1>, vector<4x256xf32>
    %644 = vector.extract_strided_slice %643 {offsets = [0, 0], sizes = [1, 256], strides = [1, 1]} : vector<4x256xf32> to vector<1x256xf32>
    %645 = vector.shape_cast %644 : vector<1x256xf32> to vector<256xf32>
    %646 = vector.extract_strided_slice %643 {offsets = [1, 0], sizes = [1, 256], strides = [1, 1]} : vector<4x256xf32> to vector<1x256xf32>
    %647 = vector.shape_cast %646 : vector<1x256xf32> to vector<256xf32>
    %648 = vector.extract_strided_slice %643 {offsets = [2, 0], sizes = [1, 256], strides = [1, 1]} : vector<4x256xf32> to vector<1x256xf32>
    %649 = vector.shape_cast %648 : vector<1x256xf32> to vector<256xf32>
    %650 = vector.extract_strided_slice %643 {offsets = [3, 0], sizes = [1, 256], strides = [1, 1]} : vector<4x256xf32> to vector<1x256xf32>
    %651 = vector.shape_cast %650 : vector<1x256xf32> to vector<256xf32>
    %c7_59 = arith.constant 7 : index
    %652 = memref.load %arg9[%c7_59] : memref<144xf32, #tpu.memory_space<smem>>
    %653 = vector.broadcast %652 : f32 to vector<256xf32>
    %654 = arith.mulf %653, %645 : vector<256xf32>
    %c16 = arith.constant 16 : index
    %655 = memref.load %arg9[%c16] : memref<144xf32, #tpu.memory_space<smem>>
    %656 = vector.broadcast %655 : f32 to vector<256xf32>
    %657 = arith.mulf %656, %647 : vector<256xf32>
    %658 = arith.addf %654, %657 : vector<256xf32>
    %c25 = arith.constant 25 : index
    %659 = memref.load %arg9[%c25] : memref<144xf32, #tpu.memory_space<smem>>
    %660 = vector.broadcast %659 : f32 to vector<256xf32>
    %661 = arith.mulf %660, %649 : vector<256xf32>
    %662 = arith.addf %658, %661 : vector<256xf32>
    %c34 = arith.constant 34 : index
    %663 = memref.load %arg9[%c34] : memref<144xf32, #tpu.memory_space<smem>>
    %664 = vector.broadcast %663 : f32 to vector<256xf32>
    %665 = arith.mulf %664, %651 : vector<256xf32>
    %666 = arith.addf %662, %665 : vector<256xf32>
    %667 = arith.addf %590, %666 : vector<256xf32>
    %c43 = arith.constant 43 : index
    %668 = memref.load %arg9[%c43] : memref<144xf32, #tpu.memory_space<smem>>
    %669 = vector.broadcast %668 : f32 to vector<256xf32>
    %670 = arith.mulf %669, %645 : vector<256xf32>
    %c52 = arith.constant 52 : index
    %671 = memref.load %arg9[%c52] : memref<144xf32, #tpu.memory_space<smem>>
    %672 = vector.broadcast %671 : f32 to vector<256xf32>
    %673 = arith.mulf %672, %647 : vector<256xf32>
    %674 = arith.addf %670, %673 : vector<256xf32>
    %c61 = arith.constant 61 : index
    %675 = memref.load %arg9[%c61] : memref<144xf32, #tpu.memory_space<smem>>
    %676 = vector.broadcast %675 : f32 to vector<256xf32>
    %677 = arith.mulf %676, %649 : vector<256xf32>
    %678 = arith.addf %674, %677 : vector<256xf32>
    %c70 = arith.constant 70 : index
    %679 = memref.load %arg9[%c70] : memref<144xf32, #tpu.memory_space<smem>>
    %680 = vector.broadcast %679 : f32 to vector<256xf32>
    %681 = arith.mulf %680, %651 : vector<256xf32>
    %682 = arith.addf %678, %681 : vector<256xf32>
    %683 = arith.addf %606, %682 : vector<256xf32>
    %c79 = arith.constant 79 : index
    %684 = memref.load %arg9[%c79] : memref<144xf32, #tpu.memory_space<smem>>
    %685 = vector.broadcast %684 : f32 to vector<256xf32>
    %686 = arith.mulf %685, %645 : vector<256xf32>
    %c88 = arith.constant 88 : index
    %687 = memref.load %arg9[%c88] : memref<144xf32, #tpu.memory_space<smem>>
    %688 = vector.broadcast %687 : f32 to vector<256xf32>
    %689 = arith.mulf %688, %647 : vector<256xf32>
    %690 = arith.addf %686, %689 : vector<256xf32>
    %c97 = arith.constant 97 : index
    %691 = memref.load %arg9[%c97] : memref<144xf32, #tpu.memory_space<smem>>
    %692 = vector.broadcast %691 : f32 to vector<256xf32>
    %693 = arith.mulf %692, %649 : vector<256xf32>
    %694 = arith.addf %690, %693 : vector<256xf32>
    %c106 = arith.constant 106 : index
    %695 = memref.load %arg9[%c106] : memref<144xf32, #tpu.memory_space<smem>>
    %696 = vector.broadcast %695 : f32 to vector<256xf32>
    %697 = arith.mulf %696, %651 : vector<256xf32>
    %698 = arith.addf %694, %697 : vector<256xf32>
    %699 = arith.addf %622, %698 : vector<256xf32>
    %c115 = arith.constant 115 : index
    %700 = memref.load %arg9[%c115] : memref<144xf32, #tpu.memory_space<smem>>
    %701 = vector.broadcast %700 : f32 to vector<256xf32>
    %702 = arith.mulf %701, %645 : vector<256xf32>
    %c124 = arith.constant 124 : index
    %703 = memref.load %arg9[%c124] : memref<144xf32, #tpu.memory_space<smem>>
    %704 = vector.broadcast %703 : f32 to vector<256xf32>
    %705 = arith.mulf %704, %647 : vector<256xf32>
    %706 = arith.addf %702, %705 : vector<256xf32>
    %c133 = arith.constant 133 : index
    %707 = memref.load %arg9[%c133] : memref<144xf32, #tpu.memory_space<smem>>
    %708 = vector.broadcast %707 : f32 to vector<256xf32>
    %709 = arith.mulf %708, %649 : vector<256xf32>
    %710 = arith.addf %706, %709 : vector<256xf32>
    %c142 = arith.constant 142 : index
    %711 = memref.load %arg9[%c142] : memref<144xf32, #tpu.memory_space<smem>>
    %712 = vector.broadcast %711 : f32 to vector<256xf32>
    %713 = arith.mulf %712, %651 : vector<256xf32>
    %714 = arith.addf %710, %713 : vector<256xf32>
    %715 = arith.addf %638, %714 : vector<256xf32>
    %c239_i32 = arith.constant 239 : i32
    %716 = tpu.dynamic_rotate %99 by %c239_i32 dim 1 : vector<4x256xf32>, i32 -> vector<4x256xf32>
    %c15_i32_60 = arith.constant 15 : i32
    %717 = vector.broadcast %c15_i32_60 : i32 to vector<4x256xi32>
    %718 = arith.cmpi slt, %0, %717 : vector<4x256xi32>
    %c15_i32_61 = arith.constant 15 : i32
    %719 = vector.broadcast %c15_i32_61 : i32 to vector<4x256xi32>
    %720 = arith.cmpi slt, %1, %719 : vector<4x256xi32>
    %721 = arith.andi %718, %720 : vector<4x256xi1>
    %cst_62 = arith.constant 0.000000e+00 : f32
    %722 = vector.broadcast %cst_62 : f32 to vector<4x256xf32>
    %723 = arith.select %721, %716, %722 : vector<4x256xi1>, vector<4x256xf32>
    %724 = vector.extract_strided_slice %723 {offsets = [0, 0], sizes = [1, 256], strides = [1, 1]} : vector<4x256xf32> to vector<1x256xf32>
    %725 = vector.shape_cast %724 : vector<1x256xf32> to vector<256xf32>
    %726 = vector.extract_strided_slice %723 {offsets = [1, 0], sizes = [1, 256], strides = [1, 1]} : vector<4x256xf32> to vector<1x256xf32>
    %727 = vector.shape_cast %726 : vector<1x256xf32> to vector<256xf32>
    %728 = vector.extract_strided_slice %723 {offsets = [2, 0], sizes = [1, 256], strides = [1, 1]} : vector<4x256xf32> to vector<1x256xf32>
    %729 = vector.shape_cast %728 : vector<1x256xf32> to vector<256xf32>
    %730 = vector.extract_strided_slice %723 {offsets = [3, 0], sizes = [1, 256], strides = [1, 1]} : vector<4x256xf32> to vector<1x256xf32>
    %731 = vector.shape_cast %730 : vector<1x256xf32> to vector<256xf32>
    %c8_63 = arith.constant 8 : index
    %732 = memref.load %arg9[%c8_63] : memref<144xf32, #tpu.memory_space<smem>>
    %733 = vector.broadcast %732 : f32 to vector<256xf32>
    %734 = arith.mulf %733, %725 : vector<256xf32>
    %c17 = arith.constant 17 : index
    %735 = memref.load %arg9[%c17] : memref<144xf32, #tpu.memory_space<smem>>
    %736 = vector.broadcast %735 : f32 to vector<256xf32>
    %737 = arith.mulf %736, %727 : vector<256xf32>
    %738 = arith.addf %734, %737 : vector<256xf32>
    %c26 = arith.constant 26 : index
    %739 = memref.load %arg9[%c26] : memref<144xf32, #tpu.memory_space<smem>>
    %740 = vector.broadcast %739 : f32 to vector<256xf32>
    %741 = arith.mulf %740, %729 : vector<256xf32>
    %742 = arith.addf %738, %741 : vector<256xf32>
    %c35 = arith.constant 35 : index
    %743 = memref.load %arg9[%c35] : memref<144xf32, #tpu.memory_space<smem>>
    %744 = vector.broadcast %743 : f32 to vector<256xf32>
    %745 = arith.mulf %744, %731 : vector<256xf32>
    %746 = arith.addf %742, %745 : vector<256xf32>
    %747 = arith.addf %667, %746 : vector<256xf32>
    %c44 = arith.constant 44 : index
    %748 = memref.load %arg9[%c44] : memref<144xf32, #tpu.memory_space<smem>>
    %749 = vector.broadcast %748 : f32 to vector<256xf32>
    %750 = arith.mulf %749, %725 : vector<256xf32>
    %c53 = arith.constant 53 : index
    %751 = memref.load %arg9[%c53] : memref<144xf32, #tpu.memory_space<smem>>
    %752 = vector.broadcast %751 : f32 to vector<256xf32>
    %753 = arith.mulf %752, %727 : vector<256xf32>
    %754 = arith.addf %750, %753 : vector<256xf32>
    %c62 = arith.constant 62 : index
    %755 = memref.load %arg9[%c62] : memref<144xf32, #tpu.memory_space<smem>>
    %756 = vector.broadcast %755 : f32 to vector<256xf32>
    %757 = arith.mulf %756, %729 : vector<256xf32>
    %758 = arith.addf %754, %757 : vector<256xf32>
    %c71 = arith.constant 71 : index
    %759 = memref.load %arg9[%c71] : memref<144xf32, #tpu.memory_space<smem>>
    %760 = vector.broadcast %759 : f32 to vector<256xf32>
    %761 = arith.mulf %760, %731 : vector<256xf32>
    %762 = arith.addf %758, %761 : vector<256xf32>
    %763 = arith.addf %683, %762 : vector<256xf32>
    %c80 = arith.constant 80 : index
    %764 = memref.load %arg9[%c80] : memref<144xf32, #tpu.memory_space<smem>>
    %765 = vector.broadcast %764 : f32 to vector<256xf32>
    %766 = arith.mulf %765, %725 : vector<256xf32>
    %c89 = arith.constant 89 : index
    %767 = memref.load %arg9[%c89] : memref<144xf32, #tpu.memory_space<smem>>
    %768 = vector.broadcast %767 : f32 to vector<256xf32>
    %769 = arith.mulf %768, %727 : vector<256xf32>
    %770 = arith.addf %766, %769 : vector<256xf32>
    %c98 = arith.constant 98 : index
    %771 = memref.load %arg9[%c98] : memref<144xf32, #tpu.memory_space<smem>>
    %772 = vector.broadcast %771 : f32 to vector<256xf32>
    %773 = arith.mulf %772, %729 : vector<256xf32>
    %774 = arith.addf %770, %773 : vector<256xf32>
    %c107 = arith.constant 107 : index
    %775 = memref.load %arg9[%c107] : memref<144xf32, #tpu.memory_space<smem>>
    %776 = vector.broadcast %775 : f32 to vector<256xf32>
    %777 = arith.mulf %776, %731 : vector<256xf32>
    %778 = arith.addf %774, %777 : vector<256xf32>
    %779 = arith.addf %699, %778 : vector<256xf32>
    %c116 = arith.constant 116 : index
    %780 = memref.load %arg9[%c116] : memref<144xf32, #tpu.memory_space<smem>>
    %781 = vector.broadcast %780 : f32 to vector<256xf32>
    %782 = arith.mulf %781, %725 : vector<256xf32>
    %c125 = arith.constant 125 : index
    %783 = memref.load %arg9[%c125] : memref<144xf32, #tpu.memory_space<smem>>
    %784 = vector.broadcast %783 : f32 to vector<256xf32>
    %785 = arith.mulf %784, %727 : vector<256xf32>
    %786 = arith.addf %782, %785 : vector<256xf32>
    %c134 = arith.constant 134 : index
    %787 = memref.load %arg9[%c134] : memref<144xf32, #tpu.memory_space<smem>>
    %788 = vector.broadcast %787 : f32 to vector<256xf32>
    %789 = arith.mulf %788, %729 : vector<256xf32>
    %790 = arith.addf %786, %789 : vector<256xf32>
    %c143 = arith.constant 143 : index
    %791 = memref.load %arg9[%c143] : memref<144xf32, #tpu.memory_space<smem>>
    %792 = vector.broadcast %791 : f32 to vector<256xf32>
    %793 = arith.mulf %792, %731 : vector<256xf32>
    %794 = arith.addf %790, %793 : vector<256xf32>
    %795 = arith.addf %715, %794 : vector<256xf32>
    %c0_64 = arith.constant 0 : index
    %c4_65 = arith.constant 4 : index
    %c0_66 = arith.constant 0 : index
    %796 = vector.load %arg13[%c0_64, %c4_65, %c0_66] : memref<1x12x256xf32, #tpu.memory_space<vmem>>, vector<1x1x256xf32>
    %797 = vector.shape_cast %796 : vector<1x1x256xf32> to vector<256xf32>
    %798 = vector.shape_cast %747 : vector<256xf32> to vector<1x1x256xf32>
    tpu.vector_store %arg13[%c0_64, %c4_65, %c0_66], %798 {strides = array<i32>} : memref<1x12x256xf32, #tpu.memory_space<vmem>>, vector<1x1x256xf32>,
    %c0_67 = arith.constant 0 : index
    %c5_68 = arith.constant 5 : index
    %c0_69 = arith.constant 0 : index
    %799 = vector.load %arg13[%c0_67, %c5_68, %c0_69] : memref<1x12x256xf32, #tpu.memory_space<vmem>>, vector<1x1x256xf32>
    %800 = vector.shape_cast %799 : vector<1x1x256xf32> to vector<256xf32>
    %801 = vector.shape_cast %763 : vector<256xf32> to vector<1x1x256xf32>
    tpu.vector_store %arg13[%c0_67, %c5_68, %c0_69], %801 {strides = array<i32>} : memref<1x12x256xf32, #tpu.memory_space<vmem>>, vector<1x1x256xf32>,
    %c0_70 = arith.constant 0 : index
    %c6_71 = arith.constant 6 : index
    %c0_72 = arith.constant 0 : index
    %802 = vector.load %arg13[%c0_70, %c6_71, %c0_72] : memref<1x12x256xf32, #tpu.memory_space<vmem>>, vector<1x1x256xf32>
    %803 = vector.shape_cast %802 : vector<1x1x256xf32> to vector<256xf32>
    %804 = vector.shape_cast %779 : vector<256xf32> to vector<1x1x256xf32>
    tpu.vector_store %arg13[%c0_70, %c6_71, %c0_72], %804 {strides = array<i32>} : memref<1x12x256xf32, #tpu.memory_space<vmem>>, vector<1x1x256xf32>,
    %c0_73 = arith.constant 0 : index
    %c7_74 = arith.constant 7 : index
    %c0_75 = arith.constant 0 : index
    %805 = vector.load %arg13[%c0_73, %c7_74, %c0_75] : memref<1x12x256xf32, #tpu.memory_space<vmem>>, vector<1x1x256xf32>
    %806 = vector.shape_cast %805 : vector<1x1x256xf32> to vector<256xf32>
    %807 = vector.shape_cast %795 : vector<256xf32> to vector<1x1x256xf32>
    tpu.vector_store %arg13[%c0_73, %c7_74, %c0_75], %807 {strides = array<i32>} : memref<1x12x256xf32, #tpu.memory_space<vmem>>, vector<1x1x256xf32>,
    %c0_76 = arith.constant 0 : index
    %c0_77 = arith.constant 0 : index
    %808 = vector.load %arg10[%c0_76, %c0_77] : memref<4x1xf32, #tpu.memory_space<vmem>>, vector<4x1xf32>
    %809 = vector.broadcast %808 : vector<4x1xf32> to vector<4x256xf32>
    %810 = arith.mulf %3, %809 : vector<4x256xf32>
    %c0_78 = arith.constant 0 : index
    %c0_79 = arith.constant 0 : index
    %811 = vector.load %arg11[%c0_78, %c0_79] : memref<4x1xf32, #tpu.memory_space<vmem>>, vector<4x1xf32>
    %812 = vector.broadcast %811 : vector<4x1xf32> to vector<4x256xf32>
    %813 = arith.addf %810, %812 : vector<4x256xf32>
    %cst_80 = arith.constant 0.000000e+00 : f32
    %814 = vector.broadcast %cst_80 : f32 to vector<4x256xf32>
    %815 = arith.maximumf %813, %814 : vector<4x256xf32>
    %c34_i32 = arith.constant 34 : i32
    %816 = tpu.dynamic_rotate %815 by %c34_i32 dim 1 : vector<4x256xf32>, i32 -> vector<4x256xf32>
    %c2_i32 = arith.constant 2 : i32
    %817 = vector.broadcast %c2_i32 : i32 to vector<4x256xi32>
    %818 = arith.cmpi sge, %0, %817 : vector<4x256xi32>
    %c2_i32_81 = arith.constant 2 : i32
    %819 = vector.broadcast %c2_i32_81 : i32 to vector<4x256xi32>
    %820 = arith.cmpi sge, %1, %819 : vector<4x256xi32>
    %821 = arith.andi %818, %820 : vector<4x256xi1>
    %cst_82 = arith.constant 0.000000e+00 : f32
    %822 = vector.broadcast %cst_82 : f32 to vector<4x256xf32>
    %823 = arith.select %821, %816, %822 : vector<4x256xi1>, vector<4x256xf32>
    %824 = vector.extract_strided_slice %823 {offsets = [0, 0], sizes = [1, 256], strides = [1, 1]} : vector<4x256xf32> to vector<1x256xf32>
    %825 = vector.shape_cast %824 : vector<1x256xf32> to vector<256xf32>
    %826 = vector.extract_strided_slice %823 {offsets = [1, 0], sizes = [1, 256], strides = [1, 1]} : vector<4x256xf32> to vector<1x256xf32>
    %827 = vector.shape_cast %826 : vector<1x256xf32> to vector<256xf32>
    %828 = vector.extract_strided_slice %823 {offsets = [2, 0], sizes = [1, 256], strides = [1, 1]} : vector<4x256xf32> to vector<1x256xf32>
    %829 = vector.shape_cast %828 : vector<1x256xf32> to vector<256xf32>
    %830 = vector.extract_strided_slice %823 {offsets = [3, 0], sizes = [1, 256], strides = [1, 1]} : vector<4x256xf32> to vector<1x256xf32>
    %831 = vector.shape_cast %830 : vector<1x256xf32> to vector<256xf32>
    %c0_83 = arith.constant 0 : index
    %832 = memref.load %arg12[%c0_83] : memref<400xf32, #tpu.memory_space<smem>>
    %833 = vector.broadcast %832 : f32 to vector<256xf32>
    %834 = arith.mulf %833, %825 : vector<256xf32>
    %c25_84 = arith.constant 25 : index
    %835 = memref.load %arg12[%c25_84] : memref<400xf32, #tpu.memory_space<smem>>
    %836 = vector.broadcast %835 : f32 to vector<256xf32>
    %837 = arith.mulf %836, %827 : vector<256xf32>
    %838 = arith.addf %834, %837 : vector<256xf32>
    %c50_85 = arith.constant 50 : index
    %839 = memref.load %arg12[%c50_85] : memref<400xf32, #tpu.memory_space<smem>>
    %840 = vector.broadcast %839 : f32 to vector<256xf32>
    %841 = arith.mulf %840, %829 : vector<256xf32>
    %842 = arith.addf %838, %841 : vector<256xf32>
    %c75_86 = arith.constant 75 : index
    %843 = memref.load %arg12[%c75_86] : memref<400xf32, #tpu.memory_space<smem>>
    %844 = vector.broadcast %843 : f32 to vector<256xf32>
    %845 = arith.mulf %844, %831 : vector<256xf32>
    %846 = arith.addf %842, %845 : vector<256xf32>
    %c100_87 = arith.constant 100 : index
    %847 = memref.load %arg12[%c100_87] : memref<400xf32, #tpu.memory_space<smem>>
    %848 = vector.broadcast %847 : f32 to vector<256xf32>
    %849 = arith.mulf %848, %825 : vector<256xf32>
    %c125_88 = arith.constant 125 : index
    %850 = memref.load %arg12[%c125_88] : memref<400xf32, #tpu.memory_space<smem>>
    %851 = vector.broadcast %850 : f32 to vector<256xf32>
    %852 = arith.mulf %851, %827 : vector<256xf32>
    %853 = arith.addf %849, %852 : vector<256xf32>
    %c150 = arith.constant 150 : index
    %854 = memref.load %arg12[%c150] : memref<400xf32, #tpu.memory_space<smem>>
    %855 = vector.broadcast %854 : f32 to vector<256xf32>
    %856 = arith.mulf %855, %829 : vector<256xf32>
    %857 = arith.addf %853, %856 : vector<256xf32>
    %c175 = arith.constant 175 : index
    %858 = memref.load %arg12[%c175] : memref<400xf32, #tpu.memory_space<smem>>
    %859 = vector.broadcast %858 : f32 to vector<256xf32>
    %860 = arith.mulf %859, %831 : vector<256xf32>
    %861 = arith.addf %857, %860 : vector<256xf32>
    %c200 = arith.constant 200 : index
    %862 = memref.load %arg12[%c200] : memref<400xf32, #tpu.memory_space<smem>>
    %863 = vector.broadcast %862 : f32 to vector<256xf32>
    %864 = arith.mulf %863, %825 : vector<256xf32>
    %c225 = arith.constant 225 : index
    %865 = memref.load %arg12[%c225] : memref<400xf32, #tpu.memory_space<smem>>
    %866 = vector.broadcast %865 : f32 to vector<256xf32>
    %867 = arith.mulf %866, %827 : vector<256xf32>
    %868 = arith.addf %864, %867 : vector<256xf32>
    %c250 = arith.constant 250 : index
    %869 = memref.load %arg12[%c250] : memref<400xf32, #tpu.memory_space<smem>>
    %870 = vector.broadcast %869 : f32 to vector<256xf32>
    %871 = arith.mulf %870, %829 : vector<256xf32>
    %872 = arith.addf %868, %871 : vector<256xf32>
    %c275 = arith.constant 275 : index
    %873 = memref.load %arg12[%c275] : memref<400xf32, #tpu.memory_space<smem>>
    %874 = vector.broadcast %873 : f32 to vector<256xf32>
    %875 = arith.mulf %874, %831 : vector<256xf32>
    %876 = arith.addf %872, %875 : vector<256xf32>
    %c300 = arith.constant 300 : index
    %877 = memref.load %arg12[%c300] : memref<400xf32, #tpu.memory_space<smem>>
    %878 = vector.broadcast %877 : f32 to vector<256xf32>
    %879 = arith.mulf %878, %825 : vector<256xf32>
    %c325 = arith.constant 325 : index
    %880 = memref.load %arg12[%c325] : memref<400xf32, #tpu.memory_space<smem>>
    %881 = vector.broadcast %880 : f32 to vector<256xf32>
    %882 = arith.mulf %881, %827 : vector<256xf32>
    %883 = arith.addf %879, %882 : vector<256xf32>
    %c350 = arith.constant 350 : index
    %884 = memref.load %arg12[%c350] : memref<400xf32, #tpu.memory_space<smem>>
    %885 = vector.broadcast %884 : f32 to vector<256xf32>
    %886 = arith.mulf %885, %829 : vector<256xf32>
    %887 = arith.addf %883, %886 : vector<256xf32>
    %c375 = arith.constant 375 : index
    %888 = memref.load %arg12[%c375] : memref<400xf32, #tpu.memory_space<smem>>
    %889 = vector.broadcast %888 : f32 to vector<256xf32>
    %890 = arith.mulf %889, %831 : vector<256xf32>
    %891 = arith.addf %887, %890 : vector<256xf32>
    %c33_i32 = arith.constant 33 : i32
    %892 = tpu.dynamic_rotate %815 by %c33_i32 dim 1 : vector<4x256xf32>, i32 -> vector<4x256xf32>
    %c2_i32_89 = arith.constant 2 : i32
    %893 = vector.broadcast %c2_i32_89 : i32 to vector<4x256xi32>
    %894 = arith.cmpi sge, %0, %893 : vector<4x256xi32>
    %c1_i32_90 = arith.constant 1 : i32
    %895 = vector.broadcast %c1_i32_90 : i32 to vector<4x256xi32>
    %896 = arith.cmpi sge, %1, %895 : vector<4x256xi32>
    %897 = arith.andi %894, %896 : vector<4x256xi1>
    %cst_91 = arith.constant 0.000000e+00 : f32
    %898 = vector.broadcast %cst_91 : f32 to vector<4x256xf32>
    %899 = arith.select %897, %892, %898 : vector<4x256xi1>, vector<4x256xf32>
    %900 = vector.extract_strided_slice %899 {offsets = [0, 0], sizes = [1, 256], strides = [1, 1]} : vector<4x256xf32> to vector<1x256xf32>
    %901 = vector.shape_cast %900 : vector<1x256xf32> to vector<256xf32>
    %902 = vector.extract_strided_slice %899 {offsets = [1, 0], sizes = [1, 256], strides = [1, 1]} : vector<4x256xf32> to vector<1x256xf32>
    %903 = vector.shape_cast %902 : vector<1x256xf32> to vector<256xf32>
    %904 = vector.extract_strided_slice %899 {offsets = [2, 0], sizes = [1, 256], strides = [1, 1]} : vector<4x256xf32> to vector<1x256xf32>
    %905 = vector.shape_cast %904 : vector<1x256xf32> to vector<256xf32>
    %906 = vector.extract_strided_slice %899 {offsets = [3, 0], sizes = [1, 256], strides = [1, 1]} : vector<4x256xf32> to vector<1x256xf32>
    %907 = vector.shape_cast %906 : vector<1x256xf32> to vector<256xf32>
    %c1_92 = arith.constant 1 : index
    %908 = memref.load %arg12[%c1_92] : memref<400xf32, #tpu.memory_space<smem>>
    %909 = vector.broadcast %908 : f32 to vector<256xf32>
    %910 = arith.mulf %909, %901 : vector<256xf32>
    %c26_93 = arith.constant 26 : index
    %911 = memref.load %arg12[%c26_93] : memref<400xf32, #tpu.memory_space<smem>>
    %912 = vector.broadcast %911 : f32 to vector<256xf32>
    %913 = arith.mulf %912, %903 : vector<256xf32>
    %914 = arith.addf %910, %913 : vector<256xf32>
    %c51_94 = arith.constant 51 : index
    %915 = memref.load %arg12[%c51_94] : memref<400xf32, #tpu.memory_space<smem>>
    %916 = vector.broadcast %915 : f32 to vector<256xf32>
    %917 = arith.mulf %916, %905 : vector<256xf32>
    %918 = arith.addf %914, %917 : vector<256xf32>
    %c76_95 = arith.constant 76 : index
    %919 = memref.load %arg12[%c76_95] : memref<400xf32, #tpu.memory_space<smem>>
    %920 = vector.broadcast %919 : f32 to vector<256xf32>
    %921 = arith.mulf %920, %907 : vector<256xf32>
    %922 = arith.addf %918, %921 : vector<256xf32>
    %923 = arith.addf %846, %922 : vector<256xf32>
    %c101_96 = arith.constant 101 : index
    %924 = memref.load %arg12[%c101_96] : memref<400xf32, #tpu.memory_space<smem>>
    %925 = vector.broadcast %924 : f32 to vector<256xf32>
    %926 = arith.mulf %925, %901 : vector<256xf32>
    %c126_97 = arith.constant 126 : index
    %927 = memref.load %arg12[%c126_97] : memref<400xf32, #tpu.memory_space<smem>>
    %928 = vector.broadcast %927 : f32 to vector<256xf32>
    %929 = arith.mulf %928, %903 : vector<256xf32>
    %930 = arith.addf %926, %929 : vector<256xf32>
    %c151 = arith.constant 151 : index
    %931 = memref.load %arg12[%c151] : memref<400xf32, #tpu.memory_space<smem>>
    %932 = vector.broadcast %931 : f32 to vector<256xf32>
    %933 = arith.mulf %932, %905 : vector<256xf32>
    %934 = arith.addf %930, %933 : vector<256xf32>
    %c176 = arith.constant 176 : index
    %935 = memref.load %arg12[%c176] : memref<400xf32, #tpu.memory_space<smem>>
    %936 = vector.broadcast %935 : f32 to vector<256xf32>
    %937 = arith.mulf %936, %907 : vector<256xf32>
    %938 = arith.addf %934, %937 : vector<256xf32>
    %939 = arith.addf %861, %938 : vector<256xf32>
    %c201 = arith.constant 201 : index
    %940 = memref.load %arg12[%c201] : memref<400xf32, #tpu.memory_space<smem>>
    %941 = vector.broadcast %940 : f32 to vector<256xf32>
    %942 = arith.mulf %941, %901 : vector<256xf32>
    %c226 = arith.constant 226 : index
    %943 = memref.load %arg12[%c226] : memref<400xf32, #tpu.memory_space<smem>>
    %944 = vector.broadcast %943 : f32 to vector<256xf32>
    %945 = arith.mulf %944, %903 : vector<256xf32>
    %946 = arith.addf %942, %945 : vector<256xf32>
    %c251 = arith.constant 251 : index
    %947 = memref.load %arg12[%c251] : memref<400xf32, #tpu.memory_space<smem>>
    %948 = vector.broadcast %947 : f32 to vector<256xf32>
    %949 = arith.mulf %948, %905 : vector<256xf32>
    %950 = arith.addf %946, %949 : vector<256xf32>
    %c276 = arith.constant 276 : index
    %951 = memref.load %arg12[%c276] : memref<400xf32, #tpu.memory_space<smem>>
    %952 = vector.broadcast %951 : f32 to vector<256xf32>
    %953 = arith.mulf %952, %907 : vector<256xf32>
    %954 = arith.addf %950, %953 : vector<256xf32>
    %955 = arith.addf %876, %954 : vector<256xf32>
    %c301 = arith.constant 301 : index
    %956 = memref.load %arg12[%c301] : memref<400xf32, #tpu.memory_space<smem>>
    %957 = vector.broadcast %956 : f32 to vector<256xf32>
    %958 = arith.mulf %957, %901 : vector<256xf32>
    %c326 = arith.constant 326 : index
    %959 = memref.load %arg12[%c326] : memref<400xf32, #tpu.memory_space<smem>>
    %960 = vector.broadcast %959 : f32 to vector<256xf32>
    %961 = arith.mulf %960, %903 : vector<256xf32>
    %962 = arith.addf %958, %961 : vector<256xf32>
    %c351 = arith.constant 351 : index
    %963 = memref.load %arg12[%c351] : memref<400xf32, #tpu.memory_space<smem>>
    %964 = vector.broadcast %963 : f32 to vector<256xf32>
    %965 = arith.mulf %964, %905 : vector<256xf32>
    %966 = arith.addf %962, %965 : vector<256xf32>
    %c376 = arith.constant 376 : index
    %967 = memref.load %arg12[%c376] : memref<400xf32, #tpu.memory_space<smem>>
    %968 = vector.broadcast %967 : f32 to vector<256xf32>
    %969 = arith.mulf %968, %907 : vector<256xf32>
    %970 = arith.addf %966, %969 : vector<256xf32>
    %971 = arith.addf %891, %970 : vector<256xf32>
    %c32_i32 = arith.constant 32 : i32
    %972 = tpu.dynamic_rotate %815 by %c32_i32 dim 1 : vector<4x256xf32>, i32 -> vector<4x256xf32>
    %c2_i32_98 = arith.constant 2 : i32
    %973 = vector.broadcast %c2_i32_98 : i32 to vector<4x256xi32>
    %974 = arith.cmpi sge, %0, %973 : vector<4x256xi32>
    %cst_99 = arith.constant 0.000000e+00 : f32
    %975 = vector.broadcast %cst_99 : f32 to vector<4x256xf32>
    %976 = arith.select %974, %972, %975 : vector<4x256xi1>, vector<4x256xf32>
    %977 = vector.extract_strided_slice %976 {offsets = [0, 0], sizes = [1, 256], strides = [1, 1]} : vector<4x256xf32> to vector<1x256xf32>
    %978 = vector.shape_cast %977 : vector<1x256xf32> to vector<256xf32>
    %979 = vector.extract_strided_slice %976 {offsets = [1, 0], sizes = [1, 256], strides = [1, 1]} : vector<4x256xf32> to vector<1x256xf32>
    %980 = vector.shape_cast %979 : vector<1x256xf32> to vector<256xf32>
    %981 = vector.extract_strided_slice %976 {offsets = [2, 0], sizes = [1, 256], strides = [1, 1]} : vector<4x256xf32> to vector<1x256xf32>
    %982 = vector.shape_cast %981 : vector<1x256xf32> to vector<256xf32>
    %983 = vector.extract_strided_slice %976 {offsets = [3, 0], sizes = [1, 256], strides = [1, 1]} : vector<4x256xf32> to vector<1x256xf32>
    %984 = vector.shape_cast %983 : vector<1x256xf32> to vector<256xf32>
    %c2_100 = arith.constant 2 : index
    %985 = memref.load %arg12[%c2_100] : memref<400xf32, #tpu.memory_space<smem>>
    %986 = vector.broadcast %985 : f32 to vector<256xf32>
    %987 = arith.mulf %986, %978 : vector<256xf32>
    %c27_101 = arith.constant 27 : index
    %988 = memref.load %arg12[%c27_101] : memref<400xf32, #tpu.memory_space<smem>>
    %989 = vector.broadcast %988 : f32 to vector<256xf32>
    %990 = arith.mulf %989, %980 : vector<256xf32>
    %991 = arith.addf %987, %990 : vector<256xf32>
    %c52_102 = arith.constant 52 : index
    %992 = memref.load %arg12[%c52_102] : memref<400xf32, #tpu.memory_space<smem>>
    %993 = vector.broadcast %992 : f32 to vector<256xf32>
    %994 = arith.mulf %993, %982 : vector<256xf32>
    %995 = arith.addf %991, %994 : vector<256xf32>
    %c77_103 = arith.constant 77 : index
    %996 = memref.load %arg12[%c77_103] : memref<400xf32, #tpu.memory_space<smem>>
    %997 = vector.broadcast %996 : f32 to vector<256xf32>
    %998 = arith.mulf %997, %984 : vector<256xf32>
    %999 = arith.addf %995, %998 : vector<256xf32>
    %1000 = arith.addf %923, %999 : vector<256xf32>
    %c102_104 = arith.constant 102 : index
    %1001 = memref.load %arg12[%c102_104] : memref<400xf32, #tpu.memory_space<smem>>
    %1002 = vector.broadcast %1001 : f32 to vector<256xf32>
    %1003 = arith.mulf %1002, %978 : vector<256xf32>
    %c127_105 = arith.constant 127 : index
    %1004 = memref.load %arg12[%c127_105] : memref<400xf32, #tpu.memory_space<smem>>
    %1005 = vector.broadcast %1004 : f32 to vector<256xf32>
    %1006 = arith.mulf %1005, %980 : vector<256xf32>
    %1007 = arith.addf %1003, %1006 : vector<256xf32>
    %c152 = arith.constant 152 : index
    %1008 = memref.load %arg12[%c152] : memref<400xf32, #tpu.memory_space<smem>>
    %1009 = vector.broadcast %1008 : f32 to vector<256xf32>
    %1010 = arith.mulf %1009, %982 : vector<256xf32>
    %1011 = arith.addf %1007, %1010 : vector<256xf32>
    %c177 = arith.constant 177 : index
    %1012 = memref.load %arg12[%c177] : memref<400xf32, #tpu.memory_space<smem>>
    %1013 = vector.broadcast %1012 : f32 to vector<256xf32>
    %1014 = arith.mulf %1013, %984 : vector<256xf32>
    %1015 = arith.addf %1011, %1014 : vector<256xf32>
    %1016 = arith.addf %939, %1015 : vector<256xf32>
    %c202 = arith.constant 202 : index
    %1017 = memref.load %arg12[%c202] : memref<400xf32, #tpu.memory_space<smem>>
    %1018 = vector.broadcast %1017 : f32 to vector<256xf32>
    %1019 = arith.mulf %1018, %978 : vector<256xf32>
    %c227 = arith.constant 227 : index
    %1020 = memref.load %arg12[%c227] : memref<400xf32, #tpu.memory_space<smem>>
    %1021 = vector.broadcast %1020 : f32 to vector<256xf32>
    %1022 = arith.mulf %1021, %980 : vector<256xf32>
    %1023 = arith.addf %1019, %1022 : vector<256xf32>
    %c252 = arith.constant 252 : index
    %1024 = memref.load %arg12[%c252] : memref<400xf32, #tpu.memory_space<smem>>
    %1025 = vector.broadcast %1024 : f32 to vector<256xf32>
    %1026 = arith.mulf %1025, %982 : vector<256xf32>
    %1027 = arith.addf %1023, %1026 : vector<256xf32>
    %c277 = arith.constant 277 : index
    %1028 = memref.load %arg12[%c277] : memref<400xf32, #tpu.memory_space<smem>>
    %1029 = vector.broadcast %1028 : f32 to vector<256xf32>
    %1030 = arith.mulf %1029, %984 : vector<256xf32>
    %1031 = arith.addf %1027, %1030 : vector<256xf32>
    %1032 = arith.addf %955, %1031 : vector<256xf32>
    %c302 = arith.constant 302 : index
    %1033 = memref.load %arg12[%c302] : memref<400xf32, #tpu.memory_space<smem>>
    %1034 = vector.broadcast %1033 : f32 to vector<256xf32>
    %1035 = arith.mulf %1034, %978 : vector<256xf32>
    %c327 = arith.constant 327 : index
    %1036 = memref.load %arg12[%c327] : memref<400xf32, #tpu.memory_space<smem>>
    %1037 = vector.broadcast %1036 : f32 to vector<256xf32>
    %1038 = arith.mulf %1037, %980 : vector<256xf32>
    %1039 = arith.addf %1035, %1038 : vector<256xf32>
    %c352 = arith.constant 352 : index
    %1040 = memref.load %arg12[%c352] : memref<400xf32, #tpu.memory_space<smem>>
    %1041 = vector.broadcast %1040 : f32 to vector<256xf32>
    %1042 = arith.mulf %1041, %982 : vector<256xf32>
    %1043 = arith.addf %1039, %1042 : vector<256xf32>
    %c377 = arith.constant 377 : index
    %1044 = memref.load %arg12[%c377] : memref<400xf32, #tpu.memory_space<smem>>
    %1045 = vector.broadcast %1044 : f32 to vector<256xf32>
    %1046 = arith.mulf %1045, %984 : vector<256xf32>
    %1047 = arith.addf %1043, %1046 : vector<256xf32>
    %1048 = arith.addf %971, %1047 : vector<256xf32>
    %c31_i32 = arith.constant 31 : i32
    %1049 = tpu.dynamic_rotate %815 by %c31_i32 dim 1 : vector<4x256xf32>, i32 -> vector<4x256xf32>
    %c2_i32_106 = arith.constant 2 : i32
    %1050 = vector.broadcast %c2_i32_106 : i32 to vector<4x256xi32>
    %1051 = arith.cmpi sge, %0, %1050 : vector<4x256xi32>
    %c15_i32_107 = arith.constant 15 : i32
    %1052 = vector.broadcast %c15_i32_107 : i32 to vector<4x256xi32>
    %1053 = arith.cmpi slt, %1, %1052 : vector<4x256xi32>
    %1054 = arith.andi %1051, %1053 : vector<4x256xi1>
    %cst_108 = arith.constant 0.000000e+00 : f32
    %1055 = vector.broadcast %cst_108 : f32 to vector<4x256xf32>
    %1056 = arith.select %1054, %1049, %1055 : vector<4x256xi1>, vector<4x256xf32>
    %1057 = vector.extract_strided_slice %1056 {offsets = [0, 0], sizes = [1, 256], strides = [1, 1]} : vector<4x256xf32> to vector<1x256xf32>
    %1058 = vector.shape_cast %1057 : vector<1x256xf32> to vector<256xf32>
    %1059 = vector.extract_strided_slice %1056 {offsets = [1, 0], sizes = [1, 256], strides = [1, 1]} : vector<4x256xf32> to vector<1x256xf32>
    %1060 = vector.shape_cast %1059 : vector<1x256xf32> to vector<256xf32>
    %1061 = vector.extract_strided_slice %1056 {offsets = [2, 0], sizes = [1, 256], strides = [1, 1]} : vector<4x256xf32> to vector<1x256xf32>
    %1062 = vector.shape_cast %1061 : vector<1x256xf32> to vector<256xf32>
    %1063 = vector.extract_strided_slice %1056 {offsets = [3, 0], sizes = [1, 256], strides = [1, 1]} : vector<4x256xf32> to vector<1x256xf32>
    %1064 = vector.shape_cast %1063 : vector<1x256xf32> to vector<256xf32>
    %c3_109 = arith.constant 3 : index
    %1065 = memref.load %arg12[%c3_109] : memref<400xf32, #tpu.memory_space<smem>>
    %1066 = vector.broadcast %1065 : f32 to vector<256xf32>
    %1067 = arith.mulf %1066, %1058 : vector<256xf32>
    %c28_110 = arith.constant 28 : index
    %1068 = memref.load %arg12[%c28_110] : memref<400xf32, #tpu.memory_space<smem>>
    %1069 = vector.broadcast %1068 : f32 to vector<256xf32>
    %1070 = arith.mulf %1069, %1060 : vector<256xf32>
    %1071 = arith.addf %1067, %1070 : vector<256xf32>
    %c53_111 = arith.constant 53 : index
    %1072 = memref.load %arg12[%c53_111] : memref<400xf32, #tpu.memory_space<smem>>
    %1073 = vector.broadcast %1072 : f32 to vector<256xf32>
    %1074 = arith.mulf %1073, %1062 : vector<256xf32>
    %1075 = arith.addf %1071, %1074 : vector<256xf32>
    %c78_112 = arith.constant 78 : index
    %1076 = memref.load %arg12[%c78_112] : memref<400xf32, #tpu.memory_space<smem>>
    %1077 = vector.broadcast %1076 : f32 to vector<256xf32>
    %1078 = arith.mulf %1077, %1064 : vector<256xf32>
    %1079 = arith.addf %1075, %1078 : vector<256xf32>
    %1080 = arith.addf %1000, %1079 : vector<256xf32>
    %c103_113 = arith.constant 103 : index
    %1081 = memref.load %arg12[%c103_113] : memref<400xf32, #tpu.memory_space<smem>>
    %1082 = vector.broadcast %1081 : f32 to vector<256xf32>
    %1083 = arith.mulf %1082, %1058 : vector<256xf32>
    %c128_114 = arith.constant 128 : index
    %1084 = memref.load %arg12[%c128_114] : memref<400xf32, #tpu.memory_space<smem>>
    %1085 = vector.broadcast %1084 : f32 to vector<256xf32>
    %1086 = arith.mulf %1085, %1060 : vector<256xf32>
    %1087 = arith.addf %1083, %1086 : vector<256xf32>
    %c153 = arith.constant 153 : index
    %1088 = memref.load %arg12[%c153] : memref<400xf32, #tpu.memory_space<smem>>
    %1089 = vector.broadcast %1088 : f32 to vector<256xf32>
    %1090 = arith.mulf %1089, %1062 : vector<256xf32>
    %1091 = arith.addf %1087, %1090 : vector<256xf32>
    %c178 = arith.constant 178 : index
    %1092 = memref.load %arg12[%c178] : memref<400xf32, #tpu.memory_space<smem>>
    %1093 = vector.broadcast %1092 : f32 to vector<256xf32>
    %1094 = arith.mulf %1093, %1064 : vector<256xf32>
    %1095 = arith.addf %1091, %1094 : vector<256xf32>
    %1096 = arith.addf %1016, %1095 : vector<256xf32>
    %c203 = arith.constant 203 : index
    %1097 = memref.load %arg12[%c203] : memref<400xf32, #tpu.memory_space<smem>>
    %1098 = vector.broadcast %1097 : f32 to vector<256xf32>
    %1099 = arith.mulf %1098, %1058 : vector<256xf32>
    %c228 = arith.constant 228 : index
    %1100 = memref.load %arg12[%c228] : memref<400xf32, #tpu.memory_space<smem>>
    %1101 = vector.broadcast %1100 : f32 to vector<256xf32>
    %1102 = arith.mulf %1101, %1060 : vector<256xf32>
    %1103 = arith.addf %1099, %1102 : vector<256xf32>
    %c253 = arith.constant 253 : index
    %1104 = memref.load %arg12[%c253] : memref<400xf32, #tpu.memory_space<smem>>
    %1105 = vector.broadcast %1104 : f32 to vector<256xf32>
    %1106 = arith.mulf %1105, %1062 : vector<256xf32>
    %1107 = arith.addf %1103, %1106 : vector<256xf32>
    %c278 = arith.constant 278 : index
    %1108 = memref.load %arg12[%c278] : memref<400xf32, #tpu.memory_space<smem>>
    %1109 = vector.broadcast %1108 : f32 to vector<256xf32>
    %1110 = arith.mulf %1109, %1064 : vector<256xf32>
    %1111 = arith.addf %1107, %1110 : vector<256xf32>
    %1112 = arith.addf %1032, %1111 : vector<256xf32>
    %c303 = arith.constant 303 : index
    %1113 = memref.load %arg12[%c303] : memref<400xf32, #tpu.memory_space<smem>>
    %1114 = vector.broadcast %1113 : f32 to vector<256xf32>
    %1115 = arith.mulf %1114, %1058 : vector<256xf32>
    %c328 = arith.constant 328 : index
    %1116 = memref.load %arg12[%c328] : memref<400xf32, #tpu.memory_space<smem>>
    %1117 = vector.broadcast %1116 : f32 to vector<256xf32>
    %1118 = arith.mulf %1117, %1060 : vector<256xf32>
    %1119 = arith.addf %1115, %1118 : vector<256xf32>
    %c353 = arith.constant 353 : index
    %1120 = memref.load %arg12[%c353] : memref<400xf32, #tpu.memory_space<smem>>
    %1121 = vector.broadcast %1120 : f32 to vector<256xf32>
    %1122 = arith.mulf %1121, %1062 : vector<256xf32>
    %1123 = arith.addf %1119, %1122 : vector<256xf32>
    %c378 = arith.constant 378 : index
    %1124 = memref.load %arg12[%c378] : memref<400xf32, #tpu.memory_space<smem>>
    %1125 = vector.broadcast %1124 : f32 to vector<256xf32>
    %1126 = arith.mulf %1125, %1064 : vector<256xf32>
    %1127 = arith.addf %1123, %1126 : vector<256xf32>
    %1128 = arith.addf %1048, %1127 : vector<256xf32>
    %c30_i32 = arith.constant 30 : i32
    %1129 = tpu.dynamic_rotate %815 by %c30_i32 dim 1 : vector<4x256xf32>, i32 -> vector<4x256xf32>
    %c2_i32_115 = arith.constant 2 : i32
    %1130 = vector.broadcast %c2_i32_115 : i32 to vector<4x256xi32>
    %1131 = arith.cmpi sge, %0, %1130 : vector<4x256xi32>
    %c14_i32 = arith.constant 14 : i32
    %1132 = vector.broadcast %c14_i32 : i32 to vector<4x256xi32>
    %1133 = arith.cmpi slt, %1, %1132 : vector<4x256xi32>
    %1134 = arith.andi %1131, %1133 : vector<4x256xi1>
    %cst_116 = arith.constant 0.000000e+00 : f32
    %1135 = vector.broadcast %cst_116 : f32 to vector<4x256xf32>
    %1136 = arith.select %1134, %1129, %1135 : vector<4x256xi1>, vector<4x256xf32>
    %1137 = vector.extract_strided_slice %1136 {offsets = [0, 0], sizes = [1, 256], strides = [1, 1]} : vector<4x256xf32> to vector<1x256xf32>
    %1138 = vector.shape_cast %1137 : vector<1x256xf32> to vector<256xf32>
    %1139 = vector.extract_strided_slice %1136 {offsets = [1, 0], sizes = [1, 256], strides = [1, 1]} : vector<4x256xf32> to vector<1x256xf32>
    %1140 = vector.shape_cast %1139 : vector<1x256xf32> to vector<256xf32>
    %1141 = vector.extract_strided_slice %1136 {offsets = [2, 0], sizes = [1, 256], strides = [1, 1]} : vector<4x256xf32> to vector<1x256xf32>
    %1142 = vector.shape_cast %1141 : vector<1x256xf32> to vector<256xf32>
    %1143 = vector.extract_strided_slice %1136 {offsets = [3, 0], sizes = [1, 256], strides = [1, 1]} : vector<4x256xf32> to vector<1x256xf32>
    %1144 = vector.shape_cast %1143 : vector<1x256xf32> to vector<256xf32>
    %c4_117 = arith.constant 4 : index
    %1145 = memref.load %arg12[%c4_117] : memref<400xf32, #tpu.memory_space<smem>>
    %1146 = vector.broadcast %1145 : f32 to vector<256xf32>
    %1147 = arith.mulf %1146, %1138 : vector<256xf32>
    %c29_118 = arith.constant 29 : index
    %1148 = memref.load %arg12[%c29_118] : memref<400xf32, #tpu.memory_space<smem>>
    %1149 = vector.broadcast %1148 : f32 to vector<256xf32>
    %1150 = arith.mulf %1149, %1140 : vector<256xf32>
    %1151 = arith.addf %1147, %1150 : vector<256xf32>
    %c54_119 = arith.constant 54 : index
    %1152 = memref.load %arg12[%c54_119] : memref<400xf32, #tpu.memory_space<smem>>
    %1153 = vector.broadcast %1152 : f32 to vector<256xf32>
    %1154 = arith.mulf %1153, %1142 : vector<256xf32>
    %1155 = arith.addf %1151, %1154 : vector<256xf32>
    %c79_120 = arith.constant 79 : index
    %1156 = memref.load %arg12[%c79_120] : memref<400xf32, #tpu.memory_space<smem>>
    %1157 = vector.broadcast %1156 : f32 to vector<256xf32>
    %1158 = arith.mulf %1157, %1144 : vector<256xf32>
    %1159 = arith.addf %1155, %1158 : vector<256xf32>
    %1160 = arith.addf %1080, %1159 : vector<256xf32>
    %c104_121 = arith.constant 104 : index
    %1161 = memref.load %arg12[%c104_121] : memref<400xf32, #tpu.memory_space<smem>>
    %1162 = vector.broadcast %1161 : f32 to vector<256xf32>
    %1163 = arith.mulf %1162, %1138 : vector<256xf32>
    %c129_122 = arith.constant 129 : index
    %1164 = memref.load %arg12[%c129_122] : memref<400xf32, #tpu.memory_space<smem>>
    %1165 = vector.broadcast %1164 : f32 to vector<256xf32>
    %1166 = arith.mulf %1165, %1140 : vector<256xf32>
    %1167 = arith.addf %1163, %1166 : vector<256xf32>
    %c154 = arith.constant 154 : index
    %1168 = memref.load %arg12[%c154] : memref<400xf32, #tpu.memory_space<smem>>
    %1169 = vector.broadcast %1168 : f32 to vector<256xf32>
    %1170 = arith.mulf %1169, %1142 : vector<256xf32>
    %1171 = arith.addf %1167, %1170 : vector<256xf32>
    %c179 = arith.constant 179 : index
    %1172 = memref.load %arg12[%c179] : memref<400xf32, #tpu.memory_space<smem>>
    %1173 = vector.broadcast %1172 : f32 to vector<256xf32>
    %1174 = arith.mulf %1173, %1144 : vector<256xf32>
    %1175 = arith.addf %1171, %1174 : vector<256xf32>
    %1176 = arith.addf %1096, %1175 : vector<256xf32>
    %c204 = arith.constant 204 : index
    %1177 = memref.load %arg12[%c204] : memref<400xf32, #tpu.memory_space<smem>>
    %1178 = vector.broadcast %1177 : f32 to vector<256xf32>
    %1179 = arith.mulf %1178, %1138 : vector<256xf32>
    %c229 = arith.constant 229 : index
    %1180 = memref.load %arg12[%c229] : memref<400xf32, #tpu.memory_space<smem>>
    %1181 = vector.broadcast %1180 : f32 to vector<256xf32>
    %1182 = arith.mulf %1181, %1140 : vector<256xf32>
    %1183 = arith.addf %1179, %1182 : vector<256xf32>
    %c254 = arith.constant 254 : index
    %1184 = memref.load %arg12[%c254] : memref<400xf32, #tpu.memory_space<smem>>
    %1185 = vector.broadcast %1184 : f32 to vector<256xf32>
    %1186 = arith.mulf %1185, %1142 : vector<256xf32>
    %1187 = arith.addf %1183, %1186 : vector<256xf32>
    %c279 = arith.constant 279 : index
    %1188 = memref.load %arg12[%c279] : memref<400xf32, #tpu.memory_space<smem>>
    %1189 = vector.broadcast %1188 : f32 to vector<256xf32>
    %1190 = arith.mulf %1189, %1144 : vector<256xf32>
    %1191 = arith.addf %1187, %1190 : vector<256xf32>
    %1192 = arith.addf %1112, %1191 : vector<256xf32>
    %c304 = arith.constant 304 : index
    %1193 = memref.load %arg12[%c304] : memref<400xf32, #tpu.memory_space<smem>>
    %1194 = vector.broadcast %1193 : f32 to vector<256xf32>
    %1195 = arith.mulf %1194, %1138 : vector<256xf32>
    %c329 = arith.constant 329 : index
    %1196 = memref.load %arg12[%c329] : memref<400xf32, #tpu.memory_space<smem>>
    %1197 = vector.broadcast %1196 : f32 to vector<256xf32>
    %1198 = arith.mulf %1197, %1140 : vector<256xf32>
    %1199 = arith.addf %1195, %1198 : vector<256xf32>
    %c354 = arith.constant 354 : index
    %1200 = memref.load %arg12[%c354] : memref<400xf32, #tpu.memory_space<smem>>
    %1201 = vector.broadcast %1200 : f32 to vector<256xf32>
    %1202 = arith.mulf %1201, %1142 : vector<256xf32>
    %1203 = arith.addf %1199, %1202 : vector<256xf32>
    %c379 = arith.constant 379 : index
    %1204 = memref.load %arg12[%c379] : memref<400xf32, #tpu.memory_space<smem>>
    %1205 = vector.broadcast %1204 : f32 to vector<256xf32>
    %1206 = arith.mulf %1205, %1144 : vector<256xf32>
    %1207 = arith.addf %1203, %1206 : vector<256xf32>
    %1208 = arith.addf %1128, %1207 : vector<256xf32>
    %c18_i32 = arith.constant 18 : i32
    %1209 = tpu.dynamic_rotate %815 by %c18_i32 dim 1 : vector<4x256xf32>, i32 -> vector<4x256xf32>
    %c1_i32_123 = arith.constant 1 : i32
    %1210 = vector.broadcast %c1_i32_123 : i32 to vector<4x256xi32>
    %1211 = arith.cmpi sge, %0, %1210 : vector<4x256xi32>
    %c2_i32_124 = arith.constant 2 : i32
    %1212 = vector.broadcast %c2_i32_124 : i32 to vector<4x256xi32>
    %1213 = arith.cmpi sge, %1, %1212 : vector<4x256xi32>
    %1214 = arith.andi %1211, %1213 : vector<4x256xi1>
    %cst_125 = arith.constant 0.000000e+00 : f32
    %1215 = vector.broadcast %cst_125 : f32 to vector<4x256xf32>
    %1216 = arith.select %1214, %1209, %1215 : vector<4x256xi1>, vector<4x256xf32>
    %1217 = vector.extract_strided_slice %1216 {offsets = [0, 0], sizes = [1, 256], strides = [1, 1]} : vector<4x256xf32> to vector<1x256xf32>
    %1218 = vector.shape_cast %1217 : vector<1x256xf32> to vector<256xf32>
    %1219 = vector.extract_strided_slice %1216 {offsets = [1, 0], sizes = [1, 256], strides = [1, 1]} : vector<4x256xf32> to vector<1x256xf32>
    %1220 = vector.shape_cast %1219 : vector<1x256xf32> to vector<256xf32>
    %1221 = vector.extract_strided_slice %1216 {offsets = [2, 0], sizes = [1, 256], strides = [1, 1]} : vector<4x256xf32> to vector<1x256xf32>
    %1222 = vector.shape_cast %1221 : vector<1x256xf32> to vector<256xf32>
    %1223 = vector.extract_strided_slice %1216 {offsets = [3, 0], sizes = [1, 256], strides = [1, 1]} : vector<4x256xf32> to vector<1x256xf32>
    %1224 = vector.shape_cast %1223 : vector<1x256xf32> to vector<256xf32>
    %c5_126 = arith.constant 5 : index
    %1225 = memref.load %arg12[%c5_126] : memref<400xf32, #tpu.memory_space<smem>>
    %1226 = vector.broadcast %1225 : f32 to vector<256xf32>
    %1227 = arith.mulf %1226, %1218 : vector<256xf32>
    %c30_127 = arith.constant 30 : index
    %1228 = memref.load %arg12[%c30_127] : memref<400xf32, #tpu.memory_space<smem>>
    %1229 = vector.broadcast %1228 : f32 to vector<256xf32>
    %1230 = arith.mulf %1229, %1220 : vector<256xf32>
    %1231 = arith.addf %1227, %1230 : vector<256xf32>
    %c55_128 = arith.constant 55 : index
    %1232 = memref.load %arg12[%c55_128] : memref<400xf32, #tpu.memory_space<smem>>
    %1233 = vector.broadcast %1232 : f32 to vector<256xf32>
    %1234 = arith.mulf %1233, %1222 : vector<256xf32>
    %1235 = arith.addf %1231, %1234 : vector<256xf32>
    %c80_129 = arith.constant 80 : index
    %1236 = memref.load %arg12[%c80_129] : memref<400xf32, #tpu.memory_space<smem>>
    %1237 = vector.broadcast %1236 : f32 to vector<256xf32>
    %1238 = arith.mulf %1237, %1224 : vector<256xf32>
    %1239 = arith.addf %1235, %1238 : vector<256xf32>
    %1240 = arith.addf %1160, %1239 : vector<256xf32>
    %c105_130 = arith.constant 105 : index
    %1241 = memref.load %arg12[%c105_130] : memref<400xf32, #tpu.memory_space<smem>>
    %1242 = vector.broadcast %1241 : f32 to vector<256xf32>
    %1243 = arith.mulf %1242, %1218 : vector<256xf32>
    %c130_131 = arith.constant 130 : index
    %1244 = memref.load %arg12[%c130_131] : memref<400xf32, #tpu.memory_space<smem>>
    %1245 = vector.broadcast %1244 : f32 to vector<256xf32>
    %1246 = arith.mulf %1245, %1220 : vector<256xf32>
    %1247 = arith.addf %1243, %1246 : vector<256xf32>
    %c155 = arith.constant 155 : index
    %1248 = memref.load %arg12[%c155] : memref<400xf32, #tpu.memory_space<smem>>
    %1249 = vector.broadcast %1248 : f32 to vector<256xf32>
    %1250 = arith.mulf %1249, %1222 : vector<256xf32>
    %1251 = arith.addf %1247, %1250 : vector<256xf32>
    %c180 = arith.constant 180 : index
    %1252 = memref.load %arg12[%c180] : memref<400xf32, #tpu.memory_space<smem>>
    %1253 = vector.broadcast %1252 : f32 to vector<256xf32>
    %1254 = arith.mulf %1253, %1224 : vector<256xf32>
    %1255 = arith.addf %1251, %1254 : vector<256xf32>
    %1256 = arith.addf %1176, %1255 : vector<256xf32>
    %c205 = arith.constant 205 : index
    %1257 = memref.load %arg12[%c205] : memref<400xf32, #tpu.memory_space<smem>>
    %1258 = vector.broadcast %1257 : f32 to vector<256xf32>
    %1259 = arith.mulf %1258, %1218 : vector<256xf32>
    %c230 = arith.constant 230 : index
    %1260 = memref.load %arg12[%c230] : memref<400xf32, #tpu.memory_space<smem>>
    %1261 = vector.broadcast %1260 : f32 to vector<256xf32>
    %1262 = arith.mulf %1261, %1220 : vector<256xf32>
    %1263 = arith.addf %1259, %1262 : vector<256xf32>
    %c255 = arith.constant 255 : index
    %1264 = memref.load %arg12[%c255] : memref<400xf32, #tpu.memory_space<smem>>
    %1265 = vector.broadcast %1264 : f32 to vector<256xf32>
    %1266 = arith.mulf %1265, %1222 : vector<256xf32>
    %1267 = arith.addf %1263, %1266 : vector<256xf32>
    %c280 = arith.constant 280 : index
    %1268 = memref.load %arg12[%c280] : memref<400xf32, #tpu.memory_space<smem>>
    %1269 = vector.broadcast %1268 : f32 to vector<256xf32>
    %1270 = arith.mulf %1269, %1224 : vector<256xf32>
    %1271 = arith.addf %1267, %1270 : vector<256xf32>
    %1272 = arith.addf %1192, %1271 : vector<256xf32>
    %c305 = arith.constant 305 : index
    %1273 = memref.load %arg12[%c305] : memref<400xf32, #tpu.memory_space<smem>>
    %1274 = vector.broadcast %1273 : f32 to vector<256xf32>
    %1275 = arith.mulf %1274, %1218 : vector<256xf32>
    %c330 = arith.constant 330 : index
    %1276 = memref.load %arg12[%c330] : memref<400xf32, #tpu.memory_space<smem>>
    %1277 = vector.broadcast %1276 : f32 to vector<256xf32>
    %1278 = arith.mulf %1277, %1220 : vector<256xf32>
    %1279 = arith.addf %1275, %1278 : vector<256xf32>
    %c355 = arith.constant 355 : index
    %1280 = memref.load %arg12[%c355] : memref<400xf32, #tpu.memory_space<smem>>
    %1281 = vector.broadcast %1280 : f32 to vector<256xf32>
    %1282 = arith.mulf %1281, %1222 : vector<256xf32>
    %1283 = arith.addf %1279, %1282 : vector<256xf32>
    %c380 = arith.constant 380 : index
    %1284 = memref.load %arg12[%c380] : memref<400xf32, #tpu.memory_space<smem>>
    %1285 = vector.broadcast %1284 : f32 to vector<256xf32>
    %1286 = arith.mulf %1285, %1224 : vector<256xf32>
    %1287 = arith.addf %1283, %1286 : vector<256xf32>
    %1288 = arith.addf %1208, %1287 : vector<256xf32>
    %c17_i32_132 = arith.constant 17 : i32
    %1289 = tpu.dynamic_rotate %815 by %c17_i32_132 dim 1 : vector<4x256xf32>, i32 -> vector<4x256xf32>
    %c1_i32_133 = arith.constant 1 : i32
    %1290 = vector.broadcast %c1_i32_133 : i32 to vector<4x256xi32>
    %1291 = arith.cmpi sge, %0, %1290 : vector<4x256xi32>
    %c1_i32_134 = arith.constant 1 : i32
    %1292 = vector.broadcast %c1_i32_134 : i32 to vector<4x256xi32>
    %1293 = arith.cmpi sge, %1, %1292 : vector<4x256xi32>
    %1294 = arith.andi %1291, %1293 : vector<4x256xi1>
    %cst_135 = arith.constant 0.000000e+00 : f32
    %1295 = vector.broadcast %cst_135 : f32 to vector<4x256xf32>
    %1296 = arith.select %1294, %1289, %1295 : vector<4x256xi1>, vector<4x256xf32>
    %1297 = vector.extract_strided_slice %1296 {offsets = [0, 0], sizes = [1, 256], strides = [1, 1]} : vector<4x256xf32> to vector<1x256xf32>
    %1298 = vector.shape_cast %1297 : vector<1x256xf32> to vector<256xf32>
    %1299 = vector.extract_strided_slice %1296 {offsets = [1, 0], sizes = [1, 256], strides = [1, 1]} : vector<4x256xf32> to vector<1x256xf32>
    %1300 = vector.shape_cast %1299 : vector<1x256xf32> to vector<256xf32>
    %1301 = vector.extract_strided_slice %1296 {offsets = [2, 0], sizes = [1, 256], strides = [1, 1]} : vector<4x256xf32> to vector<1x256xf32>
    %1302 = vector.shape_cast %1301 : vector<1x256xf32> to vector<256xf32>
    %1303 = vector.extract_strided_slice %1296 {offsets = [3, 0], sizes = [1, 256], strides = [1, 1]} : vector<4x256xf32> to vector<1x256xf32>
    %1304 = vector.shape_cast %1303 : vector<1x256xf32> to vector<256xf32>
    %c6_136 = arith.constant 6 : index
    %1305 = memref.load %arg12[%c6_136] : memref<400xf32, #tpu.memory_space<smem>>
    %1306 = vector.broadcast %1305 : f32 to vector<256xf32>
    %1307 = arith.mulf %1306, %1298 : vector<256xf32>
    %c31_137 = arith.constant 31 : index
    %1308 = memref.load %arg12[%c31_137] : memref<400xf32, #tpu.memory_space<smem>>
    %1309 = vector.broadcast %1308 : f32 to vector<256xf32>
    %1310 = arith.mulf %1309, %1300 : vector<256xf32>
    %1311 = arith.addf %1307, %1310 : vector<256xf32>
    %c56_138 = arith.constant 56 : index
    %1312 = memref.load %arg12[%c56_138] : memref<400xf32, #tpu.memory_space<smem>>
    %1313 = vector.broadcast %1312 : f32 to vector<256xf32>
    %1314 = arith.mulf %1313, %1302 : vector<256xf32>
    %1315 = arith.addf %1311, %1314 : vector<256xf32>
    %c81_139 = arith.constant 81 : index
    %1316 = memref.load %arg12[%c81_139] : memref<400xf32, #tpu.memory_space<smem>>
    %1317 = vector.broadcast %1316 : f32 to vector<256xf32>
    %1318 = arith.mulf %1317, %1304 : vector<256xf32>
    %1319 = arith.addf %1315, %1318 : vector<256xf32>
    %1320 = arith.addf %1240, %1319 : vector<256xf32>
    %c106_140 = arith.constant 106 : index
    %1321 = memref.load %arg12[%c106_140] : memref<400xf32, #tpu.memory_space<smem>>
    %1322 = vector.broadcast %1321 : f32 to vector<256xf32>
    %1323 = arith.mulf %1322, %1298 : vector<256xf32>
    %c131_141 = arith.constant 131 : index
    %1324 = memref.load %arg12[%c131_141] : memref<400xf32, #tpu.memory_space<smem>>
    %1325 = vector.broadcast %1324 : f32 to vector<256xf32>
    %1326 = arith.mulf %1325, %1300 : vector<256xf32>
    %1327 = arith.addf %1323, %1326 : vector<256xf32>
    %c156 = arith.constant 156 : index
    %1328 = memref.load %arg12[%c156] : memref<400xf32, #tpu.memory_space<smem>>
    %1329 = vector.broadcast %1328 : f32 to vector<256xf32>
    %1330 = arith.mulf %1329, %1302 : vector<256xf32>
    %1331 = arith.addf %1327, %1330 : vector<256xf32>
    %c181 = arith.constant 181 : index
    %1332 = memref.load %arg12[%c181] : memref<400xf32, #tpu.memory_space<smem>>
    %1333 = vector.broadcast %1332 : f32 to vector<256xf32>
    %1334 = arith.mulf %1333, %1304 : vector<256xf32>
    %1335 = arith.addf %1331, %1334 : vector<256xf32>
    %1336 = arith.addf %1256, %1335 : vector<256xf32>
    %c206 = arith.constant 206 : index
    %1337 = memref.load %arg12[%c206] : memref<400xf32, #tpu.memory_space<smem>>
    %1338 = vector.broadcast %1337 : f32 to vector<256xf32>
    %1339 = arith.mulf %1338, %1298 : vector<256xf32>
    %c231 = arith.constant 231 : index
    %1340 = memref.load %arg12[%c231] : memref<400xf32, #tpu.memory_space<smem>>
    %1341 = vector.broadcast %1340 : f32 to vector<256xf32>
    %1342 = arith.mulf %1341, %1300 : vector<256xf32>
    %1343 = arith.addf %1339, %1342 : vector<256xf32>
    %c256 = arith.constant 256 : index
    %1344 = memref.load %arg12[%c256] : memref<400xf32, #tpu.memory_space<smem>>
    %1345 = vector.broadcast %1344 : f32 to vector<256xf32>
    %1346 = arith.mulf %1345, %1302 : vector<256xf32>
    %1347 = arith.addf %1343, %1346 : vector<256xf32>
    %c281 = arith.constant 281 : index
    %1348 = memref.load %arg12[%c281] : memref<400xf32, #tpu.memory_space<smem>>
    %1349 = vector.broadcast %1348 : f32 to vector<256xf32>
    %1350 = arith.mulf %1349, %1304 : vector<256xf32>
    %1351 = arith.addf %1347, %1350 : vector<256xf32>
    %1352 = arith.addf %1272, %1351 : vector<256xf32>
    %c306 = arith.constant 306 : index
    %1353 = memref.load %arg12[%c306] : memref<400xf32, #tpu.memory_space<smem>>
    %1354 = vector.broadcast %1353 : f32 to vector<256xf32>
    %1355 = arith.mulf %1354, %1298 : vector<256xf32>
    %c331 = arith.constant 331 : index
    %1356 = memref.load %arg12[%c331] : memref<400xf32, #tpu.memory_space<smem>>
    %1357 = vector.broadcast %1356 : f32 to vector<256xf32>
    %1358 = arith.mulf %1357, %1300 : vector<256xf32>
    %1359 = arith.addf %1355, %1358 : vector<256xf32>
    %c356 = arith.constant 356 : index
    %1360 = memref.load %arg12[%c356] : memref<400xf32, #tpu.memory_space<smem>>
    %1361 = vector.broadcast %1360 : f32 to vector<256xf32>
    %1362 = arith.mulf %1361, %1302 : vector<256xf32>
    %1363 = arith.addf %1359, %1362 : vector<256xf32>
    %c381 = arith.constant 381 : index
    %1364 = memref.load %arg12[%c381] : memref<400xf32, #tpu.memory_space<smem>>
    %1365 = vector.broadcast %1364 : f32 to vector<256xf32>
    %1366 = arith.mulf %1365, %1304 : vector<256xf32>
    %1367 = arith.addf %1363, %1366 : vector<256xf32>
    %1368 = arith.addf %1288, %1367 : vector<256xf32>
    %c16_i32_142 = arith.constant 16 : i32
    %1369 = tpu.dynamic_rotate %815 by %c16_i32_142 dim 1 : vector<4x256xf32>, i32 -> vector<4x256xf32>
    %c1_i32_143 = arith.constant 1 : i32
    %1370 = vector.broadcast %c1_i32_143 : i32 to vector<4x256xi32>
    %1371 = arith.cmpi sge, %0, %1370 : vector<4x256xi32>
    %cst_144 = arith.constant 0.000000e+00 : f32
    %1372 = vector.broadcast %cst_144 : f32 to vector<4x256xf32>
    %1373 = arith.select %1371, %1369, %1372 : vector<4x256xi1>, vector<4x256xf32>
    %1374 = vector.extract_strided_slice %1373 {offsets = [0, 0], sizes = [1, 256], strides = [1, 1]} : vector<4x256xf32> to vector<1x256xf32>
    %1375 = vector.shape_cast %1374 : vector<1x256xf32> to vector<256xf32>
    %1376 = vector.extract_strided_slice %1373 {offsets = [1, 0], sizes = [1, 256], strides = [1, 1]} : vector<4x256xf32> to vector<1x256xf32>
    %1377 = vector.shape_cast %1376 : vector<1x256xf32> to vector<256xf32>
    %1378 = vector.extract_strided_slice %1373 {offsets = [2, 0], sizes = [1, 256], strides = [1, 1]} : vector<4x256xf32> to vector<1x256xf32>
    %1379 = vector.shape_cast %1378 : vector<1x256xf32> to vector<256xf32>
    %1380 = vector.extract_strided_slice %1373 {offsets = [3, 0], sizes = [1, 256], strides = [1, 1]} : vector<4x256xf32> to vector<1x256xf32>
    %1381 = vector.shape_cast %1380 : vector<1x256xf32> to vector<256xf32>
    %c7_145 = arith.constant 7 : index
    %1382 = memref.load %arg12[%c7_145] : memref<400xf32, #tpu.memory_space<smem>>
    %1383 = vector.broadcast %1382 : f32 to vector<256xf32>
    %1384 = arith.mulf %1383, %1375 : vector<256xf32>
    %c32_146 = arith.constant 32 : index
    %1385 = memref.load %arg12[%c32_146] : memref<400xf32, #tpu.memory_space<smem>>
    %1386 = vector.broadcast %1385 : f32 to vector<256xf32>
    %1387 = arith.mulf %1386, %1377 : vector<256xf32>
    %1388 = arith.addf %1384, %1387 : vector<256xf32>
    %c57_147 = arith.constant 57 : index
    %1389 = memref.load %arg12[%c57_147] : memref<400xf32, #tpu.memory_space<smem>>
    %1390 = vector.broadcast %1389 : f32 to vector<256xf32>
    %1391 = arith.mulf %1390, %1379 : vector<256xf32>
    %1392 = arith.addf %1388, %1391 : vector<256xf32>
    %c82_148 = arith.constant 82 : index
    %1393 = memref.load %arg12[%c82_148] : memref<400xf32, #tpu.memory_space<smem>>
    %1394 = vector.broadcast %1393 : f32 to vector<256xf32>
    %1395 = arith.mulf %1394, %1381 : vector<256xf32>
    %1396 = arith.addf %1392, %1395 : vector<256xf32>
    %1397 = arith.addf %1320, %1396 : vector<256xf32>
    %c107_149 = arith.constant 107 : index
    %1398 = memref.load %arg12[%c107_149] : memref<400xf32, #tpu.memory_space<smem>>
    %1399 = vector.broadcast %1398 : f32 to vector<256xf32>
    %1400 = arith.mulf %1399, %1375 : vector<256xf32>
    %c132_150 = arith.constant 132 : index
    %1401 = memref.load %arg12[%c132_150] : memref<400xf32, #tpu.memory_space<smem>>
    %1402 = vector.broadcast %1401 : f32 to vector<256xf32>
    %1403 = arith.mulf %1402, %1377 : vector<256xf32>
    %1404 = arith.addf %1400, %1403 : vector<256xf32>
    %c157 = arith.constant 157 : index
    %1405 = memref.load %arg12[%c157] : memref<400xf32, #tpu.memory_space<smem>>
    %1406 = vector.broadcast %1405 : f32 to vector<256xf32>
    %1407 = arith.mulf %1406, %1379 : vector<256xf32>
    %1408 = arith.addf %1404, %1407 : vector<256xf32>
    %c182 = arith.constant 182 : index
    %1409 = memref.load %arg12[%c182] : memref<400xf32, #tpu.memory_space<smem>>
    %1410 = vector.broadcast %1409 : f32 to vector<256xf32>
    %1411 = arith.mulf %1410, %1381 : vector<256xf32>
    %1412 = arith.addf %1408, %1411 : vector<256xf32>
    %1413 = arith.addf %1336, %1412 : vector<256xf32>
    %c207 = arith.constant 207 : index
    %1414 = memref.load %arg12[%c207] : memref<400xf32, #tpu.memory_space<smem>>
    %1415 = vector.broadcast %1414 : f32 to vector<256xf32>
    %1416 = arith.mulf %1415, %1375 : vector<256xf32>
    %c232 = arith.constant 232 : index
    %1417 = memref.load %arg12[%c232] : memref<400xf32, #tpu.memory_space<smem>>
    %1418 = vector.broadcast %1417 : f32 to vector<256xf32>
    %1419 = arith.mulf %1418, %1377 : vector<256xf32>
    %1420 = arith.addf %1416, %1419 : vector<256xf32>
    %c257 = arith.constant 257 : index
    %1421 = memref.load %arg12[%c257] : memref<400xf32, #tpu.memory_space<smem>>
    %1422 = vector.broadcast %1421 : f32 to vector<256xf32>
    %1423 = arith.mulf %1422, %1379 : vector<256xf32>
    %1424 = arith.addf %1420, %1423 : vector<256xf32>
    %c282 = arith.constant 282 : index
    %1425 = memref.load %arg12[%c282] : memref<400xf32, #tpu.memory_space<smem>>
    %1426 = vector.broadcast %1425 : f32 to vector<256xf32>
    %1427 = arith.mulf %1426, %1381 : vector<256xf32>
    %1428 = arith.addf %1424, %1427 : vector<256xf32>
    %1429 = arith.addf %1352, %1428 : vector<256xf32>
    %c307 = arith.constant 307 : index
    %1430 = memref.load %arg12[%c307] : memref<400xf32, #tpu.memory_space<smem>>
    %1431 = vector.broadcast %1430 : f32 to vector<256xf32>
    %1432 = arith.mulf %1431, %1375 : vector<256xf32>
    %c332 = arith.constant 332 : index
    %1433 = memref.load %arg12[%c332] : memref<400xf32, #tpu.memory_space<smem>>
    %1434 = vector.broadcast %1433 : f32 to vector<256xf32>
    %1435 = arith.mulf %1434, %1377 : vector<256xf32>
    %1436 = arith.addf %1432, %1435 : vector<256xf32>
    %c357 = arith.constant 357 : index
    %1437 = memref.load %arg12[%c357] : memref<400xf32, #tpu.memory_space<smem>>
    %1438 = vector.broadcast %1437 : f32 to vector<256xf32>
    %1439 = arith.mulf %1438, %1379 : vector<256xf32>
    %1440 = arith.addf %1436, %1439 : vector<256xf32>
    %c382 = arith.constant 382 : index
    %1441 = memref.load %arg12[%c382] : memref<400xf32, #tpu.memory_space<smem>>
    %1442 = vector.broadcast %1441 : f32 to vector<256xf32>
    %1443 = arith.mulf %1442, %1381 : vector<256xf32>
    %1444 = arith.addf %1440, %1443 : vector<256xf32>
    %1445 = arith.addf %1368, %1444 : vector<256xf32>
    %c15_i32_151 = arith.constant 15 : i32
    %1446 = tpu.dynamic_rotate %815 by %c15_i32_151 dim 1 : vector<4x256xf32>, i32 -> vector<4x256xf32>
    %c1_i32_152 = arith.constant 1 : i32
    %1447 = vector.broadcast %c1_i32_152 : i32 to vector<4x256xi32>
    %1448 = arith.cmpi sge, %0, %1447 : vector<4x256xi32>
    %c15_i32_153 = arith.constant 15 : i32
    %1449 = vector.broadcast %c15_i32_153 : i32 to vector<4x256xi32>
    %1450 = arith.cmpi slt, %1, %1449 : vector<4x256xi32>
    %1451 = arith.andi %1448, %1450 : vector<4x256xi1>
    %cst_154 = arith.constant 0.000000e+00 : f32
    %1452 = vector.broadcast %cst_154 : f32 to vector<4x256xf32>
    %1453 = arith.select %1451, %1446, %1452 : vector<4x256xi1>, vector<4x256xf32>
    %1454 = vector.extract_strided_slice %1453 {offsets = [0, 0], sizes = [1, 256], strides = [1, 1]} : vector<4x256xf32> to vector<1x256xf32>
    %1455 = vector.shape_cast %1454 : vector<1x256xf32> to vector<256xf32>
    %1456 = vector.extract_strided_slice %1453 {offsets = [1, 0], sizes = [1, 256], strides = [1, 1]} : vector<4x256xf32> to vector<1x256xf32>
    %1457 = vector.shape_cast %1456 : vector<1x256xf32> to vector<256xf32>
    %1458 = vector.extract_strided_slice %1453 {offsets = [2, 0], sizes = [1, 256], strides = [1, 1]} : vector<4x256xf32> to vector<1x256xf32>
    %1459 = vector.shape_cast %1458 : vector<1x256xf32> to vector<256xf32>
    %1460 = vector.extract_strided_slice %1453 {offsets = [3, 0], sizes = [1, 256], strides = [1, 1]} : vector<4x256xf32> to vector<1x256xf32>
    %1461 = vector.shape_cast %1460 : vector<1x256xf32> to vector<256xf32>
    %c8_155 = arith.constant 8 : index
    %1462 = memref.load %arg12[%c8_155] : memref<400xf32, #tpu.memory_space<smem>>
    %1463 = vector.broadcast %1462 : f32 to vector<256xf32>
    %1464 = arith.mulf %1463, %1455 : vector<256xf32>
    %c33_156 = arith.constant 33 : index
    %1465 = memref.load %arg12[%c33_156] : memref<400xf32, #tpu.memory_space<smem>>
    %1466 = vector.broadcast %1465 : f32 to vector<256xf32>
    %1467 = arith.mulf %1466, %1457 : vector<256xf32>
    %1468 = arith.addf %1464, %1467 : vector<256xf32>
    %c58_157 = arith.constant 58 : index
    %1469 = memref.load %arg12[%c58_157] : memref<400xf32, #tpu.memory_space<smem>>
    %1470 = vector.broadcast %1469 : f32 to vector<256xf32>
    %1471 = arith.mulf %1470, %1459 : vector<256xf32>
    %1472 = arith.addf %1468, %1471 : vector<256xf32>
    %c83_158 = arith.constant 83 : index
    %1473 = memref.load %arg12[%c83_158] : memref<400xf32, #tpu.memory_space<smem>>
    %1474 = vector.broadcast %1473 : f32 to vector<256xf32>
    %1475 = arith.mulf %1474, %1461 : vector<256xf32>
    %1476 = arith.addf %1472, %1475 : vector<256xf32>
    %1477 = arith.addf %1397, %1476 : vector<256xf32>
    %c108_159 = arith.constant 108 : index
    %1478 = memref.load %arg12[%c108_159] : memref<400xf32, #tpu.memory_space<smem>>
    %1479 = vector.broadcast %1478 : f32 to vector<256xf32>
    %1480 = arith.mulf %1479, %1455 : vector<256xf32>
    %c133_160 = arith.constant 133 : index
    %1481 = memref.load %arg12[%c133_160] : memref<400xf32, #tpu.memory_space<smem>>
    %1482 = vector.broadcast %1481 : f32 to vector<256xf32>
    %1483 = arith.mulf %1482, %1457 : vector<256xf32>
    %1484 = arith.addf %1480, %1483 : vector<256xf32>
    %c158 = arith.constant 158 : index
    %1485 = memref.load %arg12[%c158] : memref<400xf32, #tpu.memory_space<smem>>
    %1486 = vector.broadcast %1485 : f32 to vector<256xf32>
    %1487 = arith.mulf %1486, %1459 : vector<256xf32>
    %1488 = arith.addf %1484, %1487 : vector<256xf32>
    %c183 = arith.constant 183 : index
    %1489 = memref.load %arg12[%c183] : memref<400xf32, #tpu.memory_space<smem>>
    %1490 = vector.broadcast %1489 : f32 to vector<256xf32>
    %1491 = arith.mulf %1490, %1461 : vector<256xf32>
    %1492 = arith.addf %1488, %1491 : vector<256xf32>
    %1493 = arith.addf %1413, %1492 : vector<256xf32>
    %c208 = arith.constant 208 : index
    %1494 = memref.load %arg12[%c208] : memref<400xf32, #tpu.memory_space<smem>>
    %1495 = vector.broadcast %1494 : f32 to vector<256xf32>
    %1496 = arith.mulf %1495, %1455 : vector<256xf32>
    %c233 = arith.constant 233 : index
    %1497 = memref.load %arg12[%c233] : memref<400xf32, #tpu.memory_space<smem>>
    %1498 = vector.broadcast %1497 : f32 to vector<256xf32>
    %1499 = arith.mulf %1498, %1457 : vector<256xf32>
    %1500 = arith.addf %1496, %1499 : vector<256xf32>
    %c258 = arith.constant 258 : index
    %1501 = memref.load %arg12[%c258] : memref<400xf32, #tpu.memory_space<smem>>
    %1502 = vector.broadcast %1501 : f32 to vector<256xf32>
    %1503 = arith.mulf %1502, %1459 : vector<256xf32>
    %1504 = arith.addf %1500, %1503 : vector<256xf32>
    %c283 = arith.constant 283 : index
    %1505 = memref.load %arg12[%c283] : memref<400xf32, #tpu.memory_space<smem>>
    %1506 = vector.broadcast %1505 : f32 to vector<256xf32>
    %1507 = arith.mulf %1506, %1461 : vector<256xf32>
    %1508 = arith.addf %1504, %1507 : vector<256xf32>
    %1509 = arith.addf %1429, %1508 : vector<256xf32>
    %c308 = arith.constant 308 : index
    %1510 = memref.load %arg12[%c308] : memref<400xf32, #tpu.memory_space<smem>>
    %1511 = vector.broadcast %1510 : f32 to vector<256xf32>
    %1512 = arith.mulf %1511, %1455 : vector<256xf32>
    %c333 = arith.constant 333 : index
    %1513 = memref.load %arg12[%c333] : memref<400xf32, #tpu.memory_space<smem>>
    %1514 = vector.broadcast %1513 : f32 to vector<256xf32>
    %1515 = arith.mulf %1514, %1457 : vector<256xf32>
    %1516 = arith.addf %1512, %1515 : vector<256xf32>
    %c358 = arith.constant 358 : index
    %1517 = memref.load %arg12[%c358] : memref<400xf32, #tpu.memory_space<smem>>
    %1518 = vector.broadcast %1517 : f32 to vector<256xf32>
    %1519 = arith.mulf %1518, %1459 : vector<256xf32>
    %1520 = arith.addf %1516, %1519 : vector<256xf32>
    %c383 = arith.constant 383 : index
    %1521 = memref.load %arg12[%c383] : memref<400xf32, #tpu.memory_space<smem>>
    %1522 = vector.broadcast %1521 : f32 to vector<256xf32>
    %1523 = arith.mulf %1522, %1461 : vector<256xf32>
    %1524 = arith.addf %1520, %1523 : vector<256xf32>
    %1525 = arith.addf %1445, %1524 : vector<256xf32>
    %c14_i32_161 = arith.constant 14 : i32
    %1526 = tpu.dynamic_rotate %815 by %c14_i32_161 dim 1 : vector<4x256xf32>, i32 -> vector<4x256xf32>
    %c1_i32_162 = arith.constant 1 : i32
    %1527 = vector.broadcast %c1_i32_162 : i32 to vector<4x256xi32>
    %1528 = arith.cmpi sge, %0, %1527 : vector<4x256xi32>
    %c14_i32_163 = arith.constant 14 : i32
    %1529 = vector.broadcast %c14_i32_163 : i32 to vector<4x256xi32>
    %1530 = arith.cmpi slt, %1, %1529 : vector<4x256xi32>
    %1531 = arith.andi %1528, %1530 : vector<4x256xi1>
    %cst_164 = arith.constant 0.000000e+00 : f32
    %1532 = vector.broadcast %cst_164 : f32 to vector<4x256xf32>
    %1533 = arith.select %1531, %1526, %1532 : vector<4x256xi1>, vector<4x256xf32>
    %1534 = vector.extract_strided_slice %1533 {offsets = [0, 0], sizes = [1, 256], strides = [1, 1]} : vector<4x256xf32> to vector<1x256xf32>
    %1535 = vector.shape_cast %1534 : vector<1x256xf32> to vector<256xf32>
    %1536 = vector.extract_strided_slice %1533 {offsets = [1, 0], sizes = [1, 256], strides = [1, 1]} : vector<4x256xf32> to vector<1x256xf32>
    %1537 = vector.shape_cast %1536 : vector<1x256xf32> to vector<256xf32>
    %1538 = vector.extract_strided_slice %1533 {offsets = [2, 0], sizes = [1, 256], strides = [1, 1]} : vector<4x256xf32> to vector<1x256xf32>
    %1539 = vector.shape_cast %1538 : vector<1x256xf32> to vector<256xf32>
    %1540 = vector.extract_strided_slice %1533 {offsets = [3, 0], sizes = [1, 256], strides = [1, 1]} : vector<4x256xf32> to vector<1x256xf32>
    %1541 = vector.shape_cast %1540 : vector<1x256xf32> to vector<256xf32>
    %c9_165 = arith.constant 9 : index
    %1542 = memref.load %arg12[%c9_165] : memref<400xf32, #tpu.memory_space<smem>>
    %1543 = vector.broadcast %1542 : f32 to vector<256xf32>
    %1544 = arith.mulf %1543, %1535 : vector<256xf32>
    %c34_166 = arith.constant 34 : index
    %1545 = memref.load %arg12[%c34_166] : memref<400xf32, #tpu.memory_space<smem>>
    %1546 = vector.broadcast %1545 : f32 to vector<256xf32>
    %1547 = arith.mulf %1546, %1537 : vector<256xf32>
    %1548 = arith.addf %1544, %1547 : vector<256xf32>
    %c59_167 = arith.constant 59 : index
    %1549 = memref.load %arg12[%c59_167] : memref<400xf32, #tpu.memory_space<smem>>
    %1550 = vector.broadcast %1549 : f32 to vector<256xf32>
    %1551 = arith.mulf %1550, %1539 : vector<256xf32>
    %1552 = arith.addf %1548, %1551 : vector<256xf32>
    %c84_168 = arith.constant 84 : index
    %1553 = memref.load %arg12[%c84_168] : memref<400xf32, #tpu.memory_space<smem>>
    %1554 = vector.broadcast %1553 : f32 to vector<256xf32>
    %1555 = arith.mulf %1554, %1541 : vector<256xf32>
    %1556 = arith.addf %1552, %1555 : vector<256xf32>
    %1557 = arith.addf %1477, %1556 : vector<256xf32>
    %c109_169 = arith.constant 109 : index
    %1558 = memref.load %arg12[%c109_169] : memref<400xf32, #tpu.memory_space<smem>>
    %1559 = vector.broadcast %1558 : f32 to vector<256xf32>
    %1560 = arith.mulf %1559, %1535 : vector<256xf32>
    %c134_170 = arith.constant 134 : index
    %1561 = memref.load %arg12[%c134_170] : memref<400xf32, #tpu.memory_space<smem>>
    %1562 = vector.broadcast %1561 : f32 to vector<256xf32>
    %1563 = arith.mulf %1562, %1537 : vector<256xf32>
    %1564 = arith.addf %1560, %1563 : vector<256xf32>
    %c159 = arith.constant 159 : index
    %1565 = memref.load %arg12[%c159] : memref<400xf32, #tpu.memory_space<smem>>
    %1566 = vector.broadcast %1565 : f32 to vector<256xf32>
    %1567 = arith.mulf %1566, %1539 : vector<256xf32>
    %1568 = arith.addf %1564, %1567 : vector<256xf32>
    %c184 = arith.constant 184 : index
    %1569 = memref.load %arg12[%c184] : memref<400xf32, #tpu.memory_space<smem>>
    %1570 = vector.broadcast %1569 : f32 to vector<256xf32>
    %1571 = arith.mulf %1570, %1541 : vector<256xf32>
    %1572 = arith.addf %1568, %1571 : vector<256xf32>
    %1573 = arith.addf %1493, %1572 : vector<256xf32>
    %c209 = arith.constant 209 : index
    %1574 = memref.load %arg12[%c209] : memref<400xf32, #tpu.memory_space<smem>>
    %1575 = vector.broadcast %1574 : f32 to vector<256xf32>
    %1576 = arith.mulf %1575, %1535 : vector<256xf32>
    %c234 = arith.constant 234 : index
    %1577 = memref.load %arg12[%c234] : memref<400xf32, #tpu.memory_space<smem>>
    %1578 = vector.broadcast %1577 : f32 to vector<256xf32>
    %1579 = arith.mulf %1578, %1537 : vector<256xf32>
    %1580 = arith.addf %1576, %1579 : vector<256xf32>
    %c259 = arith.constant 259 : index
    %1581 = memref.load %arg12[%c259] : memref<400xf32, #tpu.memory_space<smem>>
    %1582 = vector.broadcast %1581 : f32 to vector<256xf32>
    %1583 = arith.mulf %1582, %1539 : vector<256xf32>
    %1584 = arith.addf %1580, %1583 : vector<256xf32>
    %c284 = arith.constant 284 : index
    %1585 = memref.load %arg12[%c284] : memref<400xf32, #tpu.memory_space<smem>>
    %1586 = vector.broadcast %1585 : f32 to vector<256xf32>
    %1587 = arith.mulf %1586, %1541 : vector<256xf32>
    %1588 = arith.addf %1584, %1587 : vector<256xf32>
    %1589 = arith.addf %1509, %1588 : vector<256xf32>
    %c309 = arith.constant 309 : index
    %1590 = memref.load %arg12[%c309] : memref<400xf32, #tpu.memory_space<smem>>
    %1591 = vector.broadcast %1590 : f32 to vector<256xf32>
    %1592 = arith.mulf %1591, %1535 : vector<256xf32>
    %c334 = arith.constant 334 : index
    %1593 = memref.load %arg12[%c334] : memref<400xf32, #tpu.memory_space<smem>>
    %1594 = vector.broadcast %1593 : f32 to vector<256xf32>
    %1595 = arith.mulf %1594, %1537 : vector<256xf32>
    %1596 = arith.addf %1592, %1595 : vector<256xf32>
    %c359 = arith.constant 359 : index
    %1597 = memref.load %arg12[%c359] : memref<400xf32, #tpu.memory_space<smem>>
    %1598 = vector.broadcast %1597 : f32 to vector<256xf32>
    %1599 = arith.mulf %1598, %1539 : vector<256xf32>
    %1600 = arith.addf %1596, %1599 : vector<256xf32>
    %c384 = arith.constant 384 : index
    %1601 = memref.load %arg12[%c384] : memref<400xf32, #tpu.memory_space<smem>>
    %1602 = vector.broadcast %1601 : f32 to vector<256xf32>
    %1603 = arith.mulf %1602, %1541 : vector<256xf32>
    %1604 = arith.addf %1600, %1603 : vector<256xf32>
    %1605 = arith.addf %1525, %1604 : vector<256xf32>
    %c2_i32_171 = arith.constant 2 : i32
    %1606 = tpu.dynamic_rotate %815 by %c2_i32_171 dim 1 : vector<4x256xf32>, i32 -> vector<4x256xf32>
    %c2_i32_172 = arith.constant 2 : i32
    %1607 = vector.broadcast %c2_i32_172 : i32 to vector<4x256xi32>
    %1608 = arith.cmpi sge, %1, %1607 : vector<4x256xi32>
    %cst_173 = arith.constant 0.000000e+00 : f32
    %1609 = vector.broadcast %cst_173 : f32 to vector<4x256xf32>
    %1610 = arith.select %1608, %1606, %1609 : vector<4x256xi1>, vector<4x256xf32>
    %1611 = vector.extract_strided_slice %1610 {offsets = [0, 0], sizes = [1, 256], strides = [1, 1]} : vector<4x256xf32> to vector<1x256xf32>
    %1612 = vector.shape_cast %1611 : vector<1x256xf32> to vector<256xf32>
    %1613 = vector.extract_strided_slice %1610 {offsets = [1, 0], sizes = [1, 256], strides = [1, 1]} : vector<4x256xf32> to vector<1x256xf32>
    %1614 = vector.shape_cast %1613 : vector<1x256xf32> to vector<256xf32>
    %1615 = vector.extract_strided_slice %1610 {offsets = [2, 0], sizes = [1, 256], strides = [1, 1]} : vector<4x256xf32> to vector<1x256xf32>
    %1616 = vector.shape_cast %1615 : vector<1x256xf32> to vector<256xf32>
    %1617 = vector.extract_strided_slice %1610 {offsets = [3, 0], sizes = [1, 256], strides = [1, 1]} : vector<4x256xf32> to vector<1x256xf32>
    %1618 = vector.shape_cast %1617 : vector<1x256xf32> to vector<256xf32>
    %c10_174 = arith.constant 10 : index
    %1619 = memref.load %arg12[%c10_174] : memref<400xf32, #tpu.memory_space<smem>>
    %1620 = vector.broadcast %1619 : f32 to vector<256xf32>
    %1621 = arith.mulf %1620, %1612 : vector<256xf32>
    %c35_175 = arith.constant 35 : index
    %1622 = memref.load %arg12[%c35_175] : memref<400xf32, #tpu.memory_space<smem>>
    %1623 = vector.broadcast %1622 : f32 to vector<256xf32>
    %1624 = arith.mulf %1623, %1614 : vector<256xf32>
    %1625 = arith.addf %1621, %1624 : vector<256xf32>
    %c60_176 = arith.constant 60 : index
    %1626 = memref.load %arg12[%c60_176] : memref<400xf32, #tpu.memory_space<smem>>
    %1627 = vector.broadcast %1626 : f32 to vector<256xf32>
    %1628 = arith.mulf %1627, %1616 : vector<256xf32>
    %1629 = arith.addf %1625, %1628 : vector<256xf32>
    %c85_177 = arith.constant 85 : index
    %1630 = memref.load %arg12[%c85_177] : memref<400xf32, #tpu.memory_space<smem>>
    %1631 = vector.broadcast %1630 : f32 to vector<256xf32>
    %1632 = arith.mulf %1631, %1618 : vector<256xf32>
    %1633 = arith.addf %1629, %1632 : vector<256xf32>
    %1634 = arith.addf %1557, %1633 : vector<256xf32>
    %c110_178 = arith.constant 110 : index
    %1635 = memref.load %arg12[%c110_178] : memref<400xf32, #tpu.memory_space<smem>>
    %1636 = vector.broadcast %1635 : f32 to vector<256xf32>
    %1637 = arith.mulf %1636, %1612 : vector<256xf32>
    %c135_179 = arith.constant 135 : index
    %1638 = memref.load %arg12[%c135_179] : memref<400xf32, #tpu.memory_space<smem>>
    %1639 = vector.broadcast %1638 : f32 to vector<256xf32>
    %1640 = arith.mulf %1639, %1614 : vector<256xf32>
    %1641 = arith.addf %1637, %1640 : vector<256xf32>
    %c160 = arith.constant 160 : index
    %1642 = memref.load %arg12[%c160] : memref<400xf32, #tpu.memory_space<smem>>
    %1643 = vector.broadcast %1642 : f32 to vector<256xf32>
    %1644 = arith.mulf %1643, %1616 : vector<256xf32>
    %1645 = arith.addf %1641, %1644 : vector<256xf32>
    %c185 = arith.constant 185 : index
    %1646 = memref.load %arg12[%c185] : memref<400xf32, #tpu.memory_space<smem>>
    %1647 = vector.broadcast %1646 : f32 to vector<256xf32>
    %1648 = arith.mulf %1647, %1618 : vector<256xf32>
    %1649 = arith.addf %1645, %1648 : vector<256xf32>
    %1650 = arith.addf %1573, %1649 : vector<256xf32>
    %c210 = arith.constant 210 : index
    %1651 = memref.load %arg12[%c210] : memref<400xf32, #tpu.memory_space<smem>>
    %1652 = vector.broadcast %1651 : f32 to vector<256xf32>
    %1653 = arith.mulf %1652, %1612 : vector<256xf32>
    %c235 = arith.constant 235 : index
    %1654 = memref.load %arg12[%c235] : memref<400xf32, #tpu.memory_space<smem>>
    %1655 = vector.broadcast %1654 : f32 to vector<256xf32>
    %1656 = arith.mulf %1655, %1614 : vector<256xf32>
    %1657 = arith.addf %1653, %1656 : vector<256xf32>
    %c260 = arith.constant 260 : index
    %1658 = memref.load %arg12[%c260] : memref<400xf32, #tpu.memory_space<smem>>
    %1659 = vector.broadcast %1658 : f32 to vector<256xf32>
    %1660 = arith.mulf %1659, %1616 : vector<256xf32>
    %1661 = arith.addf %1657, %1660 : vector<256xf32>
    %c285 = arith.constant 285 : index
    %1662 = memref.load %arg12[%c285] : memref<400xf32, #tpu.memory_space<smem>>
    %1663 = vector.broadcast %1662 : f32 to vector<256xf32>
    %1664 = arith.mulf %1663, %1618 : vector<256xf32>
    %1665 = arith.addf %1661, %1664 : vector<256xf32>
    %1666 = arith.addf %1589, %1665 : vector<256xf32>
    %c310 = arith.constant 310 : index
    %1667 = memref.load %arg12[%c310] : memref<400xf32, #tpu.memory_space<smem>>
    %1668 = vector.broadcast %1667 : f32 to vector<256xf32>
    %1669 = arith.mulf %1668, %1612 : vector<256xf32>
    %c335 = arith.constant 335 : index
    %1670 = memref.load %arg12[%c335] : memref<400xf32, #tpu.memory_space<smem>>
    %1671 = vector.broadcast %1670 : f32 to vector<256xf32>
    %1672 = arith.mulf %1671, %1614 : vector<256xf32>
    %1673 = arith.addf %1669, %1672 : vector<256xf32>
    %c360 = arith.constant 360 : index
    %1674 = memref.load %arg12[%c360] : memref<400xf32, #tpu.memory_space<smem>>
    %1675 = vector.broadcast %1674 : f32 to vector<256xf32>
    %1676 = arith.mulf %1675, %1616 : vector<256xf32>
    %1677 = arith.addf %1673, %1676 : vector<256xf32>
    %c385 = arith.constant 385 : index
    %1678 = memref.load %arg12[%c385] : memref<400xf32, #tpu.memory_space<smem>>
    %1679 = vector.broadcast %1678 : f32 to vector<256xf32>
    %1680 = arith.mulf %1679, %1618 : vector<256xf32>
    %1681 = arith.addf %1677, %1680 : vector<256xf32>
    %1682 = arith.addf %1605, %1681 : vector<256xf32>
    %c1_i32_180 = arith.constant 1 : i32
    %1683 = tpu.dynamic_rotate %815 by %c1_i32_180 dim 1 : vector<4x256xf32>, i32 -> vector<4x256xf32>
    %c1_i32_181 = arith.constant 1 : i32
    %1684 = vector.broadcast %c1_i32_181 : i32 to vector<4x256xi32>
    %1685 = arith.cmpi sge, %1, %1684 : vector<4x256xi32>
    %cst_182 = arith.constant 0.000000e+00 : f32
    %1686 = vector.broadcast %cst_182 : f32 to vector<4x256xf32>
    %1687 = arith.select %1685, %1683, %1686 : vector<4x256xi1>, vector<4x256xf32>
    %1688 = vector.extract_strided_slice %1687 {offsets = [0, 0], sizes = [1, 256], strides = [1, 1]} : vector<4x256xf32> to vector<1x256xf32>
    %1689 = vector.shape_cast %1688 : vector<1x256xf32> to vector<256xf32>
    %1690 = vector.extract_strided_slice %1687 {offsets = [1, 0], sizes = [1, 256], strides = [1, 1]} : vector<4x256xf32> to vector<1x256xf32>
    %1691 = vector.shape_cast %1690 : vector<1x256xf32> to vector<256xf32>
    %1692 = vector.extract_strided_slice %1687 {offsets = [2, 0], sizes = [1, 256], strides = [1, 1]} : vector<4x256xf32> to vector<1x256xf32>
    %1693 = vector.shape_cast %1692 : vector<1x256xf32> to vector<256xf32>
    %1694 = vector.extract_strided_slice %1687 {offsets = [3, 0], sizes = [1, 256], strides = [1, 1]} : vector<4x256xf32> to vector<1x256xf32>
    %1695 = vector.shape_cast %1694 : vector<1x256xf32> to vector<256xf32>
    %c11_183 = arith.constant 11 : index
    %1696 = memref.load %arg12[%c11_183] : memref<400xf32, #tpu.memory_space<smem>>
    %1697 = vector.broadcast %1696 : f32 to vector<256xf32>
    %1698 = arith.mulf %1697, %1689 : vector<256xf32>
    %c36_184 = arith.constant 36 : index
    %1699 = memref.load %arg12[%c36_184] : memref<400xf32, #tpu.memory_space<smem>>
    %1700 = vector.broadcast %1699 : f32 to vector<256xf32>
    %1701 = arith.mulf %1700, %1691 : vector<256xf32>
    %1702 = arith.addf %1698, %1701 : vector<256xf32>
    %c61_185 = arith.constant 61 : index
    %1703 = memref.load %arg12[%c61_185] : memref<400xf32, #tpu.memory_space<smem>>
    %1704 = vector.broadcast %1703 : f32 to vector<256xf32>
    %1705 = arith.mulf %1704, %1693 : vector<256xf32>
    %1706 = arith.addf %1702, %1705 : vector<256xf32>
    %c86_186 = arith.constant 86 : index
    %1707 = memref.load %arg12[%c86_186] : memref<400xf32, #tpu.memory_space<smem>>
    %1708 = vector.broadcast %1707 : f32 to vector<256xf32>
    %1709 = arith.mulf %1708, %1695 : vector<256xf32>
    %1710 = arith.addf %1706, %1709 : vector<256xf32>
    %1711 = arith.addf %1634, %1710 : vector<256xf32>
    %c111_187 = arith.constant 111 : index
    %1712 = memref.load %arg12[%c111_187] : memref<400xf32, #tpu.memory_space<smem>>
    %1713 = vector.broadcast %1712 : f32 to vector<256xf32>
    %1714 = arith.mulf %1713, %1689 : vector<256xf32>
    %c136_188 = arith.constant 136 : index
    %1715 = memref.load %arg12[%c136_188] : memref<400xf32, #tpu.memory_space<smem>>
    %1716 = vector.broadcast %1715 : f32 to vector<256xf32>
    %1717 = arith.mulf %1716, %1691 : vector<256xf32>
    %1718 = arith.addf %1714, %1717 : vector<256xf32>
    %c161 = arith.constant 161 : index
    %1719 = memref.load %arg12[%c161] : memref<400xf32, #tpu.memory_space<smem>>
    %1720 = vector.broadcast %1719 : f32 to vector<256xf32>
    %1721 = arith.mulf %1720, %1693 : vector<256xf32>
    %1722 = arith.addf %1718, %1721 : vector<256xf32>
    %c186 = arith.constant 186 : index
    %1723 = memref.load %arg12[%c186] : memref<400xf32, #tpu.memory_space<smem>>
    %1724 = vector.broadcast %1723 : f32 to vector<256xf32>
    %1725 = arith.mulf %1724, %1695 : vector<256xf32>
    %1726 = arith.addf %1722, %1725 : vector<256xf32>
    %1727 = arith.addf %1650, %1726 : vector<256xf32>
    %c211 = arith.constant 211 : index
    %1728 = memref.load %arg12[%c211] : memref<400xf32, #tpu.memory_space<smem>>
    %1729 = vector.broadcast %1728 : f32 to vector<256xf32>
    %1730 = arith.mulf %1729, %1689 : vector<256xf32>
    %c236 = arith.constant 236 : index
    %1731 = memref.load %arg12[%c236] : memref<400xf32, #tpu.memory_space<smem>>
    %1732 = vector.broadcast %1731 : f32 to vector<256xf32>
    %1733 = arith.mulf %1732, %1691 : vector<256xf32>
    %1734 = arith.addf %1730, %1733 : vector<256xf32>
    %c261 = arith.constant 261 : index
    %1735 = memref.load %arg12[%c261] : memref<400xf32, #tpu.memory_space<smem>>
    %1736 = vector.broadcast %1735 : f32 to vector<256xf32>
    %1737 = arith.mulf %1736, %1693 : vector<256xf32>
    %1738 = arith.addf %1734, %1737 : vector<256xf32>
    %c286 = arith.constant 286 : index
    %1739 = memref.load %arg12[%c286] : memref<400xf32, #tpu.memory_space<smem>>
    %1740 = vector.broadcast %1739 : f32 to vector<256xf32>
    %1741 = arith.mulf %1740, %1695 : vector<256xf32>
    %1742 = arith.addf %1738, %1741 : vector<256xf32>
    %1743 = arith.addf %1666, %1742 : vector<256xf32>
    %c311 = arith.constant 311 : index
    %1744 = memref.load %arg12[%c311] : memref<400xf32, #tpu.memory_space<smem>>
    %1745 = vector.broadcast %1744 : f32 to vector<256xf32>
    %1746 = arith.mulf %1745, %1689 : vector<256xf32>
    %c336 = arith.constant 336 : index
    %1747 = memref.load %arg12[%c336] : memref<400xf32, #tpu.memory_space<smem>>
    %1748 = vector.broadcast %1747 : f32 to vector<256xf32>
    %1749 = arith.mulf %1748, %1691 : vector<256xf32>
    %1750 = arith.addf %1746, %1749 : vector<256xf32>
    %c361 = arith.constant 361 : index
    %1751 = memref.load %arg12[%c361] : memref<400xf32, #tpu.memory_space<smem>>
    %1752 = vector.broadcast %1751 : f32 to vector<256xf32>
    %1753 = arith.mulf %1752, %1693 : vector<256xf32>
    %1754 = arith.addf %1750, %1753 : vector<256xf32>
    %c386 = arith.constant 386 : index
    %1755 = memref.load %arg12[%c386] : memref<400xf32, #tpu.memory_space<smem>>
    %1756 = vector.broadcast %1755 : f32 to vector<256xf32>
    %1757 = arith.mulf %1756, %1695 : vector<256xf32>
    %1758 = arith.addf %1754, %1757 : vector<256xf32>
    %1759 = arith.addf %1682, %1758 : vector<256xf32>
    %1760 = vector.extract_strided_slice %815 {offsets = [0, 0], sizes = [1, 256], strides = [1, 1]} : vector<4x256xf32> to vector<1x256xf32>
    %1761 = vector.shape_cast %1760 : vector<1x256xf32> to vector<256xf32>
    %1762 = vector.extract_strided_slice %815 {offsets = [1, 0], sizes = [1, 256], strides = [1, 1]} : vector<4x256xf32> to vector<1x256xf32>
    %1763 = vector.shape_cast %1762 : vector<1x256xf32> to vector<256xf32>
    %1764 = vector.extract_strided_slice %815 {offsets = [2, 0], sizes = [1, 256], strides = [1, 1]} : vector<4x256xf32> to vector<1x256xf32>
    %1765 = vector.shape_cast %1764 : vector<1x256xf32> to vector<256xf32>
    %1766 = vector.extract_strided_slice %815 {offsets = [3, 0], sizes = [1, 256], strides = [1, 1]} : vector<4x256xf32> to vector<1x256xf32>
    %1767 = vector.shape_cast %1766 : vector<1x256xf32> to vector<256xf32>
    %c12_189 = arith.constant 12 : index
    %1768 = memref.load %arg12[%c12_189] : memref<400xf32, #tpu.memory_space<smem>>
    %1769 = vector.broadcast %1768 : f32 to vector<256xf32>
    %1770 = arith.mulf %1769, %1761 : vector<256xf32>
    %c37_190 = arith.constant 37 : index
    %1771 = memref.load %arg12[%c37_190] : memref<400xf32, #tpu.memory_space<smem>>
    %1772 = vector.broadcast %1771 : f32 to vector<256xf32>
    %1773 = arith.mulf %1772, %1763 : vector<256xf32>
    %1774 = arith.addf %1770, %1773 : vector<256xf32>
    %c62_191 = arith.constant 62 : index
    %1775 = memref.load %arg12[%c62_191] : memref<400xf32, #tpu.memory_space<smem>>
    %1776 = vector.broadcast %1775 : f32 to vector<256xf32>
    %1777 = arith.mulf %1776, %1765 : vector<256xf32>
    %1778 = arith.addf %1774, %1777 : vector<256xf32>
    %c87_192 = arith.constant 87 : index
    %1779 = memref.load %arg12[%c87_192] : memref<400xf32, #tpu.memory_space<smem>>
    %1780 = vector.broadcast %1779 : f32 to vector<256xf32>
    %1781 = arith.mulf %1780, %1767 : vector<256xf32>
    %1782 = arith.addf %1778, %1781 : vector<256xf32>
    %1783 = arith.addf %1711, %1782 : vector<256xf32>
    %c112_193 = arith.constant 112 : index
    %1784 = memref.load %arg12[%c112_193] : memref<400xf32, #tpu.memory_space<smem>>
    %1785 = vector.broadcast %1784 : f32 to vector<256xf32>
    %1786 = arith.mulf %1785, %1761 : vector<256xf32>
    %c137_194 = arith.constant 137 : index
    %1787 = memref.load %arg12[%c137_194] : memref<400xf32, #tpu.memory_space<smem>>
    %1788 = vector.broadcast %1787 : f32 to vector<256xf32>
    %1789 = arith.mulf %1788, %1763 : vector<256xf32>
    %1790 = arith.addf %1786, %1789 : vector<256xf32>
    %c162 = arith.constant 162 : index
    %1791 = memref.load %arg12[%c162] : memref<400xf32, #tpu.memory_space<smem>>
    %1792 = vector.broadcast %1791 : f32 to vector<256xf32>
    %1793 = arith.mulf %1792, %1765 : vector<256xf32>
    %1794 = arith.addf %1790, %1793 : vector<256xf32>
    %c187 = arith.constant 187 : index
    %1795 = memref.load %arg12[%c187] : memref<400xf32, #tpu.memory_space<smem>>
    %1796 = vector.broadcast %1795 : f32 to vector<256xf32>
    %1797 = arith.mulf %1796, %1767 : vector<256xf32>
    %1798 = arith.addf %1794, %1797 : vector<256xf32>
    %1799 = arith.addf %1727, %1798 : vector<256xf32>
    %c212 = arith.constant 212 : index
    %1800 = memref.load %arg12[%c212] : memref<400xf32, #tpu.memory_space<smem>>
    %1801 = vector.broadcast %1800 : f32 to vector<256xf32>
    %1802 = arith.mulf %1801, %1761 : vector<256xf32>
    %c237 = arith.constant 237 : index
    %1803 = memref.load %arg12[%c237] : memref<400xf32, #tpu.memory_space<smem>>
    %1804 = vector.broadcast %1803 : f32 to vector<256xf32>
    %1805 = arith.mulf %1804, %1763 : vector<256xf32>
    %1806 = arith.addf %1802, %1805 : vector<256xf32>
    %c262 = arith.constant 262 : index
    %1807 = memref.load %arg12[%c262] : memref<400xf32, #tpu.memory_space<smem>>
    %1808 = vector.broadcast %1807 : f32 to vector<256xf32>
    %1809 = arith.mulf %1808, %1765 : vector<256xf32>
    %1810 = arith.addf %1806, %1809 : vector<256xf32>
    %c287 = arith.constant 287 : index
    %1811 = memref.load %arg12[%c287] : memref<400xf32, #tpu.memory_space<smem>>
    %1812 = vector.broadcast %1811 : f32 to vector<256xf32>
    %1813 = arith.mulf %1812, %1767 : vector<256xf32>
    %1814 = arith.addf %1810, %1813 : vector<256xf32>
    %1815 = arith.addf %1743, %1814 : vector<256xf32>
    %c312 = arith.constant 312 : index
    %1816 = memref.load %arg12[%c312] : memref<400xf32, #tpu.memory_space<smem>>
    %1817 = vector.broadcast %1816 : f32 to vector<256xf32>
    %1818 = arith.mulf %1817, %1761 : vector<256xf32>
    %c337 = arith.constant 337 : index
    %1819 = memref.load %arg12[%c337] : memref<400xf32, #tpu.memory_space<smem>>
    %1820 = vector.broadcast %1819 : f32 to vector<256xf32>
    %1821 = arith.mulf %1820, %1763 : vector<256xf32>
    %1822 = arith.addf %1818, %1821 : vector<256xf32>
    %c362 = arith.constant 362 : index
    %1823 = memref.load %arg12[%c362] : memref<400xf32, #tpu.memory_space<smem>>
    %1824 = vector.broadcast %1823 : f32 to vector<256xf32>
    %1825 = arith.mulf %1824, %1765 : vector<256xf32>
    %1826 = arith.addf %1822, %1825 : vector<256xf32>
    %c387 = arith.constant 387 : index
    %1827 = memref.load %arg12[%c387] : memref<400xf32, #tpu.memory_space<smem>>
    %1828 = vector.broadcast %1827 : f32 to vector<256xf32>
    %1829 = arith.mulf %1828, %1767 : vector<256xf32>
    %1830 = arith.addf %1826, %1829 : vector<256xf32>
    %1831 = arith.addf %1759, %1830 : vector<256xf32>
    %c255_i32_195 = arith.constant 255 : i32
    %1832 = tpu.dynamic_rotate %815 by %c255_i32_195 dim 1 : vector<4x256xf32>, i32 -> vector<4x256xf32>
    %c15_i32_196 = arith.constant 15 : i32
    %1833 = vector.broadcast %c15_i32_196 : i32 to vector<4x256xi32>
    %1834 = arith.cmpi slt, %1, %1833 : vector<4x256xi32>
    %cst_197 = arith.constant 0.000000e+00 : f32
    %1835 = vector.broadcast %cst_197 : f32 to vector<4x256xf32>
    %1836 = arith.select %1834, %1832, %1835 : vector<4x256xi1>, vector<4x256xf32>
    %1837 = vector.extract_strided_slice %1836 {offsets = [0, 0], sizes = [1, 256], strides = [1, 1]} : vector<4x256xf32> to vector<1x256xf32>
    %1838 = vector.shape_cast %1837 : vector<1x256xf32> to vector<256xf32>
    %1839 = vector.extract_strided_slice %1836 {offsets = [1, 0], sizes = [1, 256], strides = [1, 1]} : vector<4x256xf32> to vector<1x256xf32>
    %1840 = vector.shape_cast %1839 : vector<1x256xf32> to vector<256xf32>
    %1841 = vector.extract_strided_slice %1836 {offsets = [2, 0], sizes = [1, 256], strides = [1, 1]} : vector<4x256xf32> to vector<1x256xf32>
    %1842 = vector.shape_cast %1841 : vector<1x256xf32> to vector<256xf32>
    %1843 = vector.extract_strided_slice %1836 {offsets = [3, 0], sizes = [1, 256], strides = [1, 1]} : vector<4x256xf32> to vector<1x256xf32>
    %1844 = vector.shape_cast %1843 : vector<1x256xf32> to vector<256xf32>
    %c13_198 = arith.constant 13 : index
    %1845 = memref.load %arg12[%c13_198] : memref<400xf32, #tpu.memory_space<smem>>
    %1846 = vector.broadcast %1845 : f32 to vector<256xf32>
    %1847 = arith.mulf %1846, %1838 : vector<256xf32>
    %c38_199 = arith.constant 38 : index
    %1848 = memref.load %arg12[%c38_199] : memref<400xf32, #tpu.memory_space<smem>>
    %1849 = vector.broadcast %1848 : f32 to vector<256xf32>
    %1850 = arith.mulf %1849, %1840 : vector<256xf32>
    %1851 = arith.addf %1847, %1850 : vector<256xf32>
    %c63_200 = arith.constant 63 : index
    %1852 = memref.load %arg12[%c63_200] : memref<400xf32, #tpu.memory_space<smem>>
    %1853 = vector.broadcast %1852 : f32 to vector<256xf32>
    %1854 = arith.mulf %1853, %1842 : vector<256xf32>
    %1855 = arith.addf %1851, %1854 : vector<256xf32>
    %c88_201 = arith.constant 88 : index
    %1856 = memref.load %arg12[%c88_201] : memref<400xf32, #tpu.memory_space<smem>>
    %1857 = vector.broadcast %1856 : f32 to vector<256xf32>
    %1858 = arith.mulf %1857, %1844 : vector<256xf32>
    %1859 = arith.addf %1855, %1858 : vector<256xf32>
    %1860 = arith.addf %1783, %1859 : vector<256xf32>
    %c113_202 = arith.constant 113 : index
    %1861 = memref.load %arg12[%c113_202] : memref<400xf32, #tpu.memory_space<smem>>
    %1862 = vector.broadcast %1861 : f32 to vector<256xf32>
    %1863 = arith.mulf %1862, %1838 : vector<256xf32>
    %c138_203 = arith.constant 138 : index
    %1864 = memref.load %arg12[%c138_203] : memref<400xf32, #tpu.memory_space<smem>>
    %1865 = vector.broadcast %1864 : f32 to vector<256xf32>
    %1866 = arith.mulf %1865, %1840 : vector<256xf32>
    %1867 = arith.addf %1863, %1866 : vector<256xf32>
    %c163 = arith.constant 163 : index
    %1868 = memref.load %arg12[%c163] : memref<400xf32, #tpu.memory_space<smem>>
    %1869 = vector.broadcast %1868 : f32 to vector<256xf32>
    %1870 = arith.mulf %1869, %1842 : vector<256xf32>
    %1871 = arith.addf %1867, %1870 : vector<256xf32>
    %c188 = arith.constant 188 : index
    %1872 = memref.load %arg12[%c188] : memref<400xf32, #tpu.memory_space<smem>>
    %1873 = vector.broadcast %1872 : f32 to vector<256xf32>
    %1874 = arith.mulf %1873, %1844 : vector<256xf32>
    %1875 = arith.addf %1871, %1874 : vector<256xf32>
    %1876 = arith.addf %1799, %1875 : vector<256xf32>
    %c213 = arith.constant 213 : index
    %1877 = memref.load %arg12[%c213] : memref<400xf32, #tpu.memory_space<smem>>
    %1878 = vector.broadcast %1877 : f32 to vector<256xf32>
    %1879 = arith.mulf %1878, %1838 : vector<256xf32>
    %c238 = arith.constant 238 : index
    %1880 = memref.load %arg12[%c238] : memref<400xf32, #tpu.memory_space<smem>>
    %1881 = vector.broadcast %1880 : f32 to vector<256xf32>
    %1882 = arith.mulf %1881, %1840 : vector<256xf32>
    %1883 = arith.addf %1879, %1882 : vector<256xf32>
    %c263 = arith.constant 263 : index
    %1884 = memref.load %arg12[%c263] : memref<400xf32, #tpu.memory_space<smem>>
    %1885 = vector.broadcast %1884 : f32 to vector<256xf32>
    %1886 = arith.mulf %1885, %1842 : vector<256xf32>
    %1887 = arith.addf %1883, %1886 : vector<256xf32>
    %c288 = arith.constant 288 : index
    %1888 = memref.load %arg12[%c288] : memref<400xf32, #tpu.memory_space<smem>>
    %1889 = vector.broadcast %1888 : f32 to vector<256xf32>
    %1890 = arith.mulf %1889, %1844 : vector<256xf32>
    %1891 = arith.addf %1887, %1890 : vector<256xf32>
    %1892 = arith.addf %1815, %1891 : vector<256xf32>
    %c313 = arith.constant 313 : index
    %1893 = memref.load %arg12[%c313] : memref<400xf32, #tpu.memory_space<smem>>
    %1894 = vector.broadcast %1893 : f32 to vector<256xf32>
    %1895 = arith.mulf %1894, %1838 : vector<256xf32>
    %c338 = arith.constant 338 : index
    %1896 = memref.load %arg12[%c338] : memref<400xf32, #tpu.memory_space<smem>>
    %1897 = vector.broadcast %1896 : f32 to vector<256xf32>
    %1898 = arith.mulf %1897, %1840 : vector<256xf32>
    %1899 = arith.addf %1895, %1898 : vector<256xf32>
    %c363 = arith.constant 363 : index
    %1900 = memref.load %arg12[%c363] : memref<400xf32, #tpu.memory_space<smem>>
    %1901 = vector.broadcast %1900 : f32 to vector<256xf32>
    %1902 = arith.mulf %1901, %1842 : vector<256xf32>
    %1903 = arith.addf %1899, %1902 : vector<256xf32>
    %c388 = arith.constant 388 : index
    %1904 = memref.load %arg12[%c388] : memref<400xf32, #tpu.memory_space<smem>>
    %1905 = vector.broadcast %1904 : f32 to vector<256xf32>
    %1906 = arith.mulf %1905, %1844 : vector<256xf32>
    %1907 = arith.addf %1903, %1906 : vector<256xf32>
    %1908 = arith.addf %1831, %1907 : vector<256xf32>
    %c254_i32 = arith.constant 254 : i32
    %1909 = tpu.dynamic_rotate %815 by %c254_i32 dim 1 : vector<4x256xf32>, i32 -> vector<4x256xf32>
    %c14_i32_204 = arith.constant 14 : i32
    %1910 = vector.broadcast %c14_i32_204 : i32 to vector<4x256xi32>
    %1911 = arith.cmpi slt, %1, %1910 : vector<4x256xi32>
    %cst_205 = arith.constant 0.000000e+00 : f32
    %1912 = vector.broadcast %cst_205 : f32 to vector<4x256xf32>
    %1913 = arith.select %1911, %1909, %1912 : vector<4x256xi1>, vector<4x256xf32>
    %1914 = vector.extract_strided_slice %1913 {offsets = [0, 0], sizes = [1, 256], strides = [1, 1]} : vector<4x256xf32> to vector<1x256xf32>
    %1915 = vector.shape_cast %1914 : vector<1x256xf32> to vector<256xf32>
    %1916 = vector.extract_strided_slice %1913 {offsets = [1, 0], sizes = [1, 256], strides = [1, 1]} : vector<4x256xf32> to vector<1x256xf32>
    %1917 = vector.shape_cast %1916 : vector<1x256xf32> to vector<256xf32>
    %1918 = vector.extract_strided_slice %1913 {offsets = [2, 0], sizes = [1, 256], strides = [1, 1]} : vector<4x256xf32> to vector<1x256xf32>
    %1919 = vector.shape_cast %1918 : vector<1x256xf32> to vector<256xf32>
    %1920 = vector.extract_strided_slice %1913 {offsets = [3, 0], sizes = [1, 256], strides = [1, 1]} : vector<4x256xf32> to vector<1x256xf32>
    %1921 = vector.shape_cast %1920 : vector<1x256xf32> to vector<256xf32>
    %c14_206 = arith.constant 14 : index
    %1922 = memref.load %arg12[%c14_206] : memref<400xf32, #tpu.memory_space<smem>>
    %1923 = vector.broadcast %1922 : f32 to vector<256xf32>
    %1924 = arith.mulf %1923, %1915 : vector<256xf32>
    %c39_207 = arith.constant 39 : index
    %1925 = memref.load %arg12[%c39_207] : memref<400xf32, #tpu.memory_space<smem>>
    %1926 = vector.broadcast %1925 : f32 to vector<256xf32>
    %1927 = arith.mulf %1926, %1917 : vector<256xf32>
    %1928 = arith.addf %1924, %1927 : vector<256xf32>
    %c64_208 = arith.constant 64 : index
    %1929 = memref.load %arg12[%c64_208] : memref<400xf32, #tpu.memory_space<smem>>
    %1930 = vector.broadcast %1929 : f32 to vector<256xf32>
    %1931 = arith.mulf %1930, %1919 : vector<256xf32>
    %1932 = arith.addf %1928, %1931 : vector<256xf32>
    %c89_209 = arith.constant 89 : index
    %1933 = memref.load %arg12[%c89_209] : memref<400xf32, #tpu.memory_space<smem>>
    %1934 = vector.broadcast %1933 : f32 to vector<256xf32>
    %1935 = arith.mulf %1934, %1921 : vector<256xf32>
    %1936 = arith.addf %1932, %1935 : vector<256xf32>
    %1937 = arith.addf %1860, %1936 : vector<256xf32>
    %c114_210 = arith.constant 114 : index
    %1938 = memref.load %arg12[%c114_210] : memref<400xf32, #tpu.memory_space<smem>>
    %1939 = vector.broadcast %1938 : f32 to vector<256xf32>
    %1940 = arith.mulf %1939, %1915 : vector<256xf32>
    %c139_211 = arith.constant 139 : index
    %1941 = memref.load %arg12[%c139_211] : memref<400xf32, #tpu.memory_space<smem>>
    %1942 = vector.broadcast %1941 : f32 to vector<256xf32>
    %1943 = arith.mulf %1942, %1917 : vector<256xf32>
    %1944 = arith.addf %1940, %1943 : vector<256xf32>
    %c164 = arith.constant 164 : index
    %1945 = memref.load %arg12[%c164] : memref<400xf32, #tpu.memory_space<smem>>
    %1946 = vector.broadcast %1945 : f32 to vector<256xf32>
    %1947 = arith.mulf %1946, %1919 : vector<256xf32>
    %1948 = arith.addf %1944, %1947 : vector<256xf32>
    %c189 = arith.constant 189 : index
    %1949 = memref.load %arg12[%c189] : memref<400xf32, #tpu.memory_space<smem>>
    %1950 = vector.broadcast %1949 : f32 to vector<256xf32>
    %1951 = arith.mulf %1950, %1921 : vector<256xf32>
    %1952 = arith.addf %1948, %1951 : vector<256xf32>
    %1953 = arith.addf %1876, %1952 : vector<256xf32>
    %c214 = arith.constant 214 : index
    %1954 = memref.load %arg12[%c214] : memref<400xf32, #tpu.memory_space<smem>>
    %1955 = vector.broadcast %1954 : f32 to vector<256xf32>
    %1956 = arith.mulf %1955, %1915 : vector<256xf32>
    %c239 = arith.constant 239 : index
    %1957 = memref.load %arg12[%c239] : memref<400xf32, #tpu.memory_space<smem>>
    %1958 = vector.broadcast %1957 : f32 to vector<256xf32>
    %1959 = arith.mulf %1958, %1917 : vector<256xf32>
    %1960 = arith.addf %1956, %1959 : vector<256xf32>
    %c264 = arith.constant 264 : index
    %1961 = memref.load %arg12[%c264] : memref<400xf32, #tpu.memory_space<smem>>
    %1962 = vector.broadcast %1961 : f32 to vector<256xf32>
    %1963 = arith.mulf %1962, %1919 : vector<256xf32>
    %1964 = arith.addf %1960, %1963 : vector<256xf32>
    %c289 = arith.constant 289 : index
    %1965 = memref.load %arg12[%c289] : memref<400xf32, #tpu.memory_space<smem>>
    %1966 = vector.broadcast %1965 : f32 to vector<256xf32>
    %1967 = arith.mulf %1966, %1921 : vector<256xf32>
    %1968 = arith.addf %1964, %1967 : vector<256xf32>
    %1969 = arith.addf %1892, %1968 : vector<256xf32>
    %c314 = arith.constant 314 : index
    %1970 = memref.load %arg12[%c314] : memref<400xf32, #tpu.memory_space<smem>>
    %1971 = vector.broadcast %1970 : f32 to vector<256xf32>
    %1972 = arith.mulf %1971, %1915 : vector<256xf32>
    %c339 = arith.constant 339 : index
    %1973 = memref.load %arg12[%c339] : memref<400xf32, #tpu.memory_space<smem>>
    %1974 = vector.broadcast %1973 : f32 to vector<256xf32>
    %1975 = arith.mulf %1974, %1917 : vector<256xf32>
    %1976 = arith.addf %1972, %1975 : vector<256xf32>
    %c364 = arith.constant 364 : index
    %1977 = memref.load %arg12[%c364] : memref<400xf32, #tpu.memory_space<smem>>
    %1978 = vector.broadcast %1977 : f32 to vector<256xf32>
    %1979 = arith.mulf %1978, %1919 : vector<256xf32>
    %1980 = arith.addf %1976, %1979 : vector<256xf32>
    %c389 = arith.constant 389 : index
    %1981 = memref.load %arg12[%c389] : memref<400xf32, #tpu.memory_space<smem>>
    %1982 = vector.broadcast %1981 : f32 to vector<256xf32>
    %1983 = arith.mulf %1982, %1921 : vector<256xf32>
    %1984 = arith.addf %1980, %1983 : vector<256xf32>
    %1985 = arith.addf %1908, %1984 : vector<256xf32>
    %c242_i32 = arith.constant 242 : i32
    %1986 = tpu.dynamic_rotate %815 by %c242_i32 dim 1 : vector<4x256xf32>, i32 -> vector<4x256xf32>
    %c15_i32_212 = arith.constant 15 : i32
    %1987 = vector.broadcast %c15_i32_212 : i32 to vector<4x256xi32>
    %1988 = arith.cmpi slt, %0, %1987 : vector<4x256xi32>
    %c2_i32_213 = arith.constant 2 : i32
    %1989 = vector.broadcast %c2_i32_213 : i32 to vector<4x256xi32>
    %1990 = arith.cmpi sge, %1, %1989 : vector<4x256xi32>
    %1991 = arith.andi %1988, %1990 : vector<4x256xi1>
    %cst_214 = arith.constant 0.000000e+00 : f32
    %1992 = vector.broadcast %cst_214 : f32 to vector<4x256xf32>
    %1993 = arith.select %1991, %1986, %1992 : vector<4x256xi1>, vector<4x256xf32>
    %1994 = vector.extract_strided_slice %1993 {offsets = [0, 0], sizes = [1, 256], strides = [1, 1]} : vector<4x256xf32> to vector<1x256xf32>
    %1995 = vector.shape_cast %1994 : vector<1x256xf32> to vector<256xf32>
    %1996 = vector.extract_strided_slice %1993 {offsets = [1, 0], sizes = [1, 256], strides = [1, 1]} : vector<4x256xf32> to vector<1x256xf32>
    %1997 = vector.shape_cast %1996 : vector<1x256xf32> to vector<256xf32>
    %1998 = vector.extract_strided_slice %1993 {offsets = [2, 0], sizes = [1, 256], strides = [1, 1]} : vector<4x256xf32> to vector<1x256xf32>
    %1999 = vector.shape_cast %1998 : vector<1x256xf32> to vector<256xf32>
    %2000 = vector.extract_strided_slice %1993 {offsets = [3, 0], sizes = [1, 256], strides = [1, 1]} : vector<4x256xf32> to vector<1x256xf32>
    %2001 = vector.shape_cast %2000 : vector<1x256xf32> to vector<256xf32>
    %c15_215 = arith.constant 15 : index
    %2002 = memref.load %arg12[%c15_215] : memref<400xf32, #tpu.memory_space<smem>>
    %2003 = vector.broadcast %2002 : f32 to vector<256xf32>
    %2004 = arith.mulf %2003, %1995 : vector<256xf32>
    %c40_216 = arith.constant 40 : index
    %2005 = memref.load %arg12[%c40_216] : memref<400xf32, #tpu.memory_space<smem>>
    %2006 = vector.broadcast %2005 : f32 to vector<256xf32>
    %2007 = arith.mulf %2006, %1997 : vector<256xf32>
    %2008 = arith.addf %2004, %2007 : vector<256xf32>
    %c65_217 = arith.constant 65 : index
    %2009 = memref.load %arg12[%c65_217] : memref<400xf32, #tpu.memory_space<smem>>
    %2010 = vector.broadcast %2009 : f32 to vector<256xf32>
    %2011 = arith.mulf %2010, %1999 : vector<256xf32>
    %2012 = arith.addf %2008, %2011 : vector<256xf32>
    %c90_218 = arith.constant 90 : index
    %2013 = memref.load %arg12[%c90_218] : memref<400xf32, #tpu.memory_space<smem>>
    %2014 = vector.broadcast %2013 : f32 to vector<256xf32>
    %2015 = arith.mulf %2014, %2001 : vector<256xf32>
    %2016 = arith.addf %2012, %2015 : vector<256xf32>
    %2017 = arith.addf %1937, %2016 : vector<256xf32>
    %c115_219 = arith.constant 115 : index
    %2018 = memref.load %arg12[%c115_219] : memref<400xf32, #tpu.memory_space<smem>>
    %2019 = vector.broadcast %2018 : f32 to vector<256xf32>
    %2020 = arith.mulf %2019, %1995 : vector<256xf32>
    %c140_220 = arith.constant 140 : index
    %2021 = memref.load %arg12[%c140_220] : memref<400xf32, #tpu.memory_space<smem>>
    %2022 = vector.broadcast %2021 : f32 to vector<256xf32>
    %2023 = arith.mulf %2022, %1997 : vector<256xf32>
    %2024 = arith.addf %2020, %2023 : vector<256xf32>
    %c165 = arith.constant 165 : index
    %2025 = memref.load %arg12[%c165] : memref<400xf32, #tpu.memory_space<smem>>
    %2026 = vector.broadcast %2025 : f32 to vector<256xf32>
    %2027 = arith.mulf %2026, %1999 : vector<256xf32>
    %2028 = arith.addf %2024, %2027 : vector<256xf32>
    %c190 = arith.constant 190 : index
    %2029 = memref.load %arg12[%c190] : memref<400xf32, #tpu.memory_space<smem>>
    %2030 = vector.broadcast %2029 : f32 to vector<256xf32>
    %2031 = arith.mulf %2030, %2001 : vector<256xf32>
    %2032 = arith.addf %2028, %2031 : vector<256xf32>
    %2033 = arith.addf %1953, %2032 : vector<256xf32>
    %c215 = arith.constant 215 : index
    %2034 = memref.load %arg12[%c215] : memref<400xf32, #tpu.memory_space<smem>>
    %2035 = vector.broadcast %2034 : f32 to vector<256xf32>
    %2036 = arith.mulf %2035, %1995 : vector<256xf32>
    %c240 = arith.constant 240 : index
    %2037 = memref.load %arg12[%c240] : memref<400xf32, #tpu.memory_space<smem>>
    %2038 = vector.broadcast %2037 : f32 to vector<256xf32>
    %2039 = arith.mulf %2038, %1997 : vector<256xf32>
    %2040 = arith.addf %2036, %2039 : vector<256xf32>
    %c265 = arith.constant 265 : index
    %2041 = memref.load %arg12[%c265] : memref<400xf32, #tpu.memory_space<smem>>
    %2042 = vector.broadcast %2041 : f32 to vector<256xf32>
    %2043 = arith.mulf %2042, %1999 : vector<256xf32>
    %2044 = arith.addf %2040, %2043 : vector<256xf32>
    %c290 = arith.constant 290 : index
    %2045 = memref.load %arg12[%c290] : memref<400xf32, #tpu.memory_space<smem>>
    %2046 = vector.broadcast %2045 : f32 to vector<256xf32>
    %2047 = arith.mulf %2046, %2001 : vector<256xf32>
    %2048 = arith.addf %2044, %2047 : vector<256xf32>
    %2049 = arith.addf %1969, %2048 : vector<256xf32>
    %c315 = arith.constant 315 : index
    %2050 = memref.load %arg12[%c315] : memref<400xf32, #tpu.memory_space<smem>>
    %2051 = vector.broadcast %2050 : f32 to vector<256xf32>
    %2052 = arith.mulf %2051, %1995 : vector<256xf32>
    %c340 = arith.constant 340 : index
    %2053 = memref.load %arg12[%c340] : memref<400xf32, #tpu.memory_space<smem>>
    %2054 = vector.broadcast %2053 : f32 to vector<256xf32>
    %2055 = arith.mulf %2054, %1997 : vector<256xf32>
    %2056 = arith.addf %2052, %2055 : vector<256xf32>
    %c365 = arith.constant 365 : index
    %2057 = memref.load %arg12[%c365] : memref<400xf32, #tpu.memory_space<smem>>
    %2058 = vector.broadcast %2057 : f32 to vector<256xf32>
    %2059 = arith.mulf %2058, %1999 : vector<256xf32>
    %2060 = arith.addf %2056, %2059 : vector<256xf32>
    %c390 = arith.constant 390 : index
    %2061 = memref.load %arg12[%c390] : memref<400xf32, #tpu.memory_space<smem>>
    %2062 = vector.broadcast %2061 : f32 to vector<256xf32>
    %2063 = arith.mulf %2062, %2001 : vector<256xf32>
    %2064 = arith.addf %2060, %2063 : vector<256xf32>
    %2065 = arith.addf %1985, %2064 : vector<256xf32>
    %c241_i32_221 = arith.constant 241 : i32
    %2066 = tpu.dynamic_rotate %815 by %c241_i32_221 dim 1 : vector<4x256xf32>, i32 -> vector<4x256xf32>
    %c15_i32_222 = arith.constant 15 : i32
    %2067 = vector.broadcast %c15_i32_222 : i32 to vector<4x256xi32>
    %2068 = arith.cmpi slt, %0, %2067 : vector<4x256xi32>
    %c1_i32_223 = arith.constant 1 : i32
    %2069 = vector.broadcast %c1_i32_223 : i32 to vector<4x256xi32>
    %2070 = arith.cmpi sge, %1, %2069 : vector<4x256xi32>
    %2071 = arith.andi %2068, %2070 : vector<4x256xi1>
    %cst_224 = arith.constant 0.000000e+00 : f32
    %2072 = vector.broadcast %cst_224 : f32 to vector<4x256xf32>
    %2073 = arith.select %2071, %2066, %2072 : vector<4x256xi1>, vector<4x256xf32>
    %2074 = vector.extract_strided_slice %2073 {offsets = [0, 0], sizes = [1, 256], strides = [1, 1]} : vector<4x256xf32> to vector<1x256xf32>
    %2075 = vector.shape_cast %2074 : vector<1x256xf32> to vector<256xf32>
    %2076 = vector.extract_strided_slice %2073 {offsets = [1, 0], sizes = [1, 256], strides = [1, 1]} : vector<4x256xf32> to vector<1x256xf32>
    %2077 = vector.shape_cast %2076 : vector<1x256xf32> to vector<256xf32>
    %2078 = vector.extract_strided_slice %2073 {offsets = [2, 0], sizes = [1, 256], strides = [1, 1]} : vector<4x256xf32> to vector<1x256xf32>
    %2079 = vector.shape_cast %2078 : vector<1x256xf32> to vector<256xf32>
    %2080 = vector.extract_strided_slice %2073 {offsets = [3, 0], sizes = [1, 256], strides = [1, 1]} : vector<4x256xf32> to vector<1x256xf32>
    %2081 = vector.shape_cast %2080 : vector<1x256xf32> to vector<256xf32>
    %c16_225 = arith.constant 16 : index
    %2082 = memref.load %arg12[%c16_225] : memref<400xf32, #tpu.memory_space<smem>>
    %2083 = vector.broadcast %2082 : f32 to vector<256xf32>
    %2084 = arith.mulf %2083, %2075 : vector<256xf32>
    %c41_226 = arith.constant 41 : index
    %2085 = memref.load %arg12[%c41_226] : memref<400xf32, #tpu.memory_space<smem>>
    %2086 = vector.broadcast %2085 : f32 to vector<256xf32>
    %2087 = arith.mulf %2086, %2077 : vector<256xf32>
    %2088 = arith.addf %2084, %2087 : vector<256xf32>
    %c66_227 = arith.constant 66 : index
    %2089 = memref.load %arg12[%c66_227] : memref<400xf32, #tpu.memory_space<smem>>
    %2090 = vector.broadcast %2089 : f32 to vector<256xf32>
    %2091 = arith.mulf %2090, %2079 : vector<256xf32>
    %2092 = arith.addf %2088, %2091 : vector<256xf32>
    %c91_228 = arith.constant 91 : index
    %2093 = memref.load %arg12[%c91_228] : memref<400xf32, #tpu.memory_space<smem>>
    %2094 = vector.broadcast %2093 : f32 to vector<256xf32>
    %2095 = arith.mulf %2094, %2081 : vector<256xf32>
    %2096 = arith.addf %2092, %2095 : vector<256xf32>
    %2097 = arith.addf %2017, %2096 : vector<256xf32>
    %c116_229 = arith.constant 116 : index
    %2098 = memref.load %arg12[%c116_229] : memref<400xf32, #tpu.memory_space<smem>>
    %2099 = vector.broadcast %2098 : f32 to vector<256xf32>
    %2100 = arith.mulf %2099, %2075 : vector<256xf32>
    %c141_230 = arith.constant 141 : index
    %2101 = memref.load %arg12[%c141_230] : memref<400xf32, #tpu.memory_space<smem>>
    %2102 = vector.broadcast %2101 : f32 to vector<256xf32>
    %2103 = arith.mulf %2102, %2077 : vector<256xf32>
    %2104 = arith.addf %2100, %2103 : vector<256xf32>
    %c166 = arith.constant 166 : index
    %2105 = memref.load %arg12[%c166] : memref<400xf32, #tpu.memory_space<smem>>
    %2106 = vector.broadcast %2105 : f32 to vector<256xf32>
    %2107 = arith.mulf %2106, %2079 : vector<256xf32>
    %2108 = arith.addf %2104, %2107 : vector<256xf32>
    %c191 = arith.constant 191 : index
    %2109 = memref.load %arg12[%c191] : memref<400xf32, #tpu.memory_space<smem>>
    %2110 = vector.broadcast %2109 : f32 to vector<256xf32>
    %2111 = arith.mulf %2110, %2081 : vector<256xf32>
    %2112 = arith.addf %2108, %2111 : vector<256xf32>
    %2113 = arith.addf %2033, %2112 : vector<256xf32>
    %c216 = arith.constant 216 : index
    %2114 = memref.load %arg12[%c216] : memref<400xf32, #tpu.memory_space<smem>>
    %2115 = vector.broadcast %2114 : f32 to vector<256xf32>
    %2116 = arith.mulf %2115, %2075 : vector<256xf32>
    %c241 = arith.constant 241 : index
    %2117 = memref.load %arg12[%c241] : memref<400xf32, #tpu.memory_space<smem>>
    %2118 = vector.broadcast %2117 : f32 to vector<256xf32>
    %2119 = arith.mulf %2118, %2077 : vector<256xf32>
    %2120 = arith.addf %2116, %2119 : vector<256xf32>
    %c266 = arith.constant 266 : index
    %2121 = memref.load %arg12[%c266] : memref<400xf32, #tpu.memory_space<smem>>
    %2122 = vector.broadcast %2121 : f32 to vector<256xf32>
    %2123 = arith.mulf %2122, %2079 : vector<256xf32>
    %2124 = arith.addf %2120, %2123 : vector<256xf32>
    %c291 = arith.constant 291 : index
    %2125 = memref.load %arg12[%c291] : memref<400xf32, #tpu.memory_space<smem>>
    %2126 = vector.broadcast %2125 : f32 to vector<256xf32>
    %2127 = arith.mulf %2126, %2081 : vector<256xf32>
    %2128 = arith.addf %2124, %2127 : vector<256xf32>
    %2129 = arith.addf %2049, %2128 : vector<256xf32>
    %c316 = arith.constant 316 : index
    %2130 = memref.load %arg12[%c316] : memref<400xf32, #tpu.memory_space<smem>>
    %2131 = vector.broadcast %2130 : f32 to vector<256xf32>
    %2132 = arith.mulf %2131, %2075 : vector<256xf32>
    %c341 = arith.constant 341 : index
    %2133 = memref.load %arg12[%c341] : memref<400xf32, #tpu.memory_space<smem>>
    %2134 = vector.broadcast %2133 : f32 to vector<256xf32>
    %2135 = arith.mulf %2134, %2077 : vector<256xf32>
    %2136 = arith.addf %2132, %2135 : vector<256xf32>
    %c366 = arith.constant 366 : index
    %2137 = memref.load %arg12[%c366] : memref<400xf32, #tpu.memory_space<smem>>
    %2138 = vector.broadcast %2137 : f32 to vector<256xf32>
    %2139 = arith.mulf %2138, %2079 : vector<256xf32>
    %2140 = arith.addf %2136, %2139 : vector<256xf32>
    %c391 = arith.constant 391 : index
    %2141 = memref.load %arg12[%c391] : memref<400xf32, #tpu.memory_space<smem>>
    %2142 = vector.broadcast %2141 : f32 to vector<256xf32>
    %2143 = arith.mulf %2142, %2081 : vector<256xf32>
    %2144 = arith.addf %2140, %2143 : vector<256xf32>
    %2145 = arith.addf %2065, %2144 : vector<256xf32>
    %c240_i32_231 = arith.constant 240 : i32
    %2146 = tpu.dynamic_rotate %815 by %c240_i32_231 dim 1 : vector<4x256xf32>, i32 -> vector<4x256xf32>
    %c15_i32_232 = arith.constant 15 : i32
    %2147 = vector.broadcast %c15_i32_232 : i32 to vector<4x256xi32>
    %2148 = arith.cmpi slt, %0, %2147 : vector<4x256xi32>
    %cst_233 = arith.constant 0.000000e+00 : f32
    %2149 = vector.broadcast %cst_233 : f32 to vector<4x256xf32>
    %2150 = arith.select %2148, %2146, %2149 : vector<4x256xi1>, vector<4x256xf32>
    %2151 = vector.extract_strided_slice %2150 {offsets = [0, 0], sizes = [1, 256], strides = [1, 1]} : vector<4x256xf32> to vector<1x256xf32>
    %2152 = vector.shape_cast %2151 : vector<1x256xf32> to vector<256xf32>
    %2153 = vector.extract_strided_slice %2150 {offsets = [1, 0], sizes = [1, 256], strides = [1, 1]} : vector<4x256xf32> to vector<1x256xf32>
    %2154 = vector.shape_cast %2153 : vector<1x256xf32> to vector<256xf32>
    %2155 = vector.extract_strided_slice %2150 {offsets = [2, 0], sizes = [1, 256], strides = [1, 1]} : vector<4x256xf32> to vector<1x256xf32>
    %2156 = vector.shape_cast %2155 : vector<1x256xf32> to vector<256xf32>
    %2157 = vector.extract_strided_slice %2150 {offsets = [3, 0], sizes = [1, 256], strides = [1, 1]} : vector<4x256xf32> to vector<1x256xf32>
    %2158 = vector.shape_cast %2157 : vector<1x256xf32> to vector<256xf32>
    %c17_234 = arith.constant 17 : index
    %2159 = memref.load %arg12[%c17_234] : memref<400xf32, #tpu.memory_space<smem>>
    %2160 = vector.broadcast %2159 : f32 to vector<256xf32>
    %2161 = arith.mulf %2160, %2152 : vector<256xf32>
    %c42_235 = arith.constant 42 : index
    %2162 = memref.load %arg12[%c42_235] : memref<400xf32, #tpu.memory_space<smem>>
    %2163 = vector.broadcast %2162 : f32 to vector<256xf32>
    %2164 = arith.mulf %2163, %2154 : vector<256xf32>
    %2165 = arith.addf %2161, %2164 : vector<256xf32>
    %c67_236 = arith.constant 67 : index
    %2166 = memref.load %arg12[%c67_236] : memref<400xf32, #tpu.memory_space<smem>>
    %2167 = vector.broadcast %2166 : f32 to vector<256xf32>
    %2168 = arith.mulf %2167, %2156 : vector<256xf32>
    %2169 = arith.addf %2165, %2168 : vector<256xf32>
    %c92_237 = arith.constant 92 : index
    %2170 = memref.load %arg12[%c92_237] : memref<400xf32, #tpu.memory_space<smem>>
    %2171 = vector.broadcast %2170 : f32 to vector<256xf32>
    %2172 = arith.mulf %2171, %2158 : vector<256xf32>
    %2173 = arith.addf %2169, %2172 : vector<256xf32>
    %2174 = arith.addf %2097, %2173 : vector<256xf32>
    %c117_238 = arith.constant 117 : index
    %2175 = memref.load %arg12[%c117_238] : memref<400xf32, #tpu.memory_space<smem>>
    %2176 = vector.broadcast %2175 : f32 to vector<256xf32>
    %2177 = arith.mulf %2176, %2152 : vector<256xf32>
    %c142_239 = arith.constant 142 : index
    %2178 = memref.load %arg12[%c142_239] : memref<400xf32, #tpu.memory_space<smem>>
    %2179 = vector.broadcast %2178 : f32 to vector<256xf32>
    %2180 = arith.mulf %2179, %2154 : vector<256xf32>
    %2181 = arith.addf %2177, %2180 : vector<256xf32>
    %c167 = arith.constant 167 : index
    %2182 = memref.load %arg12[%c167] : memref<400xf32, #tpu.memory_space<smem>>
    %2183 = vector.broadcast %2182 : f32 to vector<256xf32>
    %2184 = arith.mulf %2183, %2156 : vector<256xf32>
    %2185 = arith.addf %2181, %2184 : vector<256xf32>
    %c192 = arith.constant 192 : index
    %2186 = memref.load %arg12[%c192] : memref<400xf32, #tpu.memory_space<smem>>
    %2187 = vector.broadcast %2186 : f32 to vector<256xf32>
    %2188 = arith.mulf %2187, %2158 : vector<256xf32>
    %2189 = arith.addf %2185, %2188 : vector<256xf32>
    %2190 = arith.addf %2113, %2189 : vector<256xf32>
    %c217 = arith.constant 217 : index
    %2191 = memref.load %arg12[%c217] : memref<400xf32, #tpu.memory_space<smem>>
    %2192 = vector.broadcast %2191 : f32 to vector<256xf32>
    %2193 = arith.mulf %2192, %2152 : vector<256xf32>
    %c242 = arith.constant 242 : index
    %2194 = memref.load %arg12[%c242] : memref<400xf32, #tpu.memory_space<smem>>
    %2195 = vector.broadcast %2194 : f32 to vector<256xf32>
    %2196 = arith.mulf %2195, %2154 : vector<256xf32>
    %2197 = arith.addf %2193, %2196 : vector<256xf32>
    %c267 = arith.constant 267 : index
    %2198 = memref.load %arg12[%c267] : memref<400xf32, #tpu.memory_space<smem>>
    %2199 = vector.broadcast %2198 : f32 to vector<256xf32>
    %2200 = arith.mulf %2199, %2156 : vector<256xf32>
    %2201 = arith.addf %2197, %2200 : vector<256xf32>
    %c292 = arith.constant 292 : index
    %2202 = memref.load %arg12[%c292] : memref<400xf32, #tpu.memory_space<smem>>
    %2203 = vector.broadcast %2202 : f32 to vector<256xf32>
    %2204 = arith.mulf %2203, %2158 : vector<256xf32>
    %2205 = arith.addf %2201, %2204 : vector<256xf32>
    %2206 = arith.addf %2129, %2205 : vector<256xf32>
    %c317 = arith.constant 317 : index
    %2207 = memref.load %arg12[%c317] : memref<400xf32, #tpu.memory_space<smem>>
    %2208 = vector.broadcast %2207 : f32 to vector<256xf32>
    %2209 = arith.mulf %2208, %2152 : vector<256xf32>
    %c342 = arith.constant 342 : index
    %2210 = memref.load %arg12[%c342] : memref<400xf32, #tpu.memory_space<smem>>
    %2211 = vector.broadcast %2210 : f32 to vector<256xf32>
    %2212 = arith.mulf %2211, %2154 : vector<256xf32>
    %2213 = arith.addf %2209, %2212 : vector<256xf32>
    %c367 = arith.constant 367 : index
    %2214 = memref.load %arg12[%c367] : memref<400xf32, #tpu.memory_space<smem>>
    %2215 = vector.broadcast %2214 : f32 to vector<256xf32>
    %2216 = arith.mulf %2215, %2156 : vector<256xf32>
    %2217 = arith.addf %2213, %2216 : vector<256xf32>
    %c392 = arith.constant 392 : index
    %2218 = memref.load %arg12[%c392] : memref<400xf32, #tpu.memory_space<smem>>
    %2219 = vector.broadcast %2218 : f32 to vector<256xf32>
    %2220 = arith.mulf %2219, %2158 : vector<256xf32>
    %2221 = arith.addf %2217, %2220 : vector<256xf32>
    %2222 = arith.addf %2145, %2221 : vector<256xf32>
    %c239_i32_240 = arith.constant 239 : i32
    %2223 = tpu.dynamic_rotate %815 by %c239_i32_240 dim 1 : vector<4x256xf32>, i32 -> vector<4x256xf32>
    %c15_i32_241 = arith.constant 15 : i32
    %2224 = vector.broadcast %c15_i32_241 : i32 to vector<4x256xi32>
    %2225 = arith.cmpi slt, %0, %2224 : vector<4x256xi32>
    %c15_i32_242 = arith.constant 15 : i32
    %2226 = vector.broadcast %c15_i32_242 : i32 to vector<4x256xi32>
    %2227 = arith.cmpi slt, %1, %2226 : vector<4x256xi32>
    %2228 = arith.andi %2225, %2227 : vector<4x256xi1>
    %cst_243 = arith.constant 0.000000e+00 : f32
    %2229 = vector.broadcast %cst_243 : f32 to vector<4x256xf32>
    %2230 = arith.select %2228, %2223, %2229 : vector<4x256xi1>, vector<4x256xf32>
    %2231 = vector.extract_strided_slice %2230 {offsets = [0, 0], sizes = [1, 256], strides = [1, 1]} : vector<4x256xf32> to vector<1x256xf32>
    %2232 = vector.shape_cast %2231 : vector<1x256xf32> to vector<256xf32>
    %2233 = vector.extract_strided_slice %2230 {offsets = [1, 0], sizes = [1, 256], strides = [1, 1]} : vector<4x256xf32> to vector<1x256xf32>
    %2234 = vector.shape_cast %2233 : vector<1x256xf32> to vector<256xf32>
    %2235 = vector.extract_strided_slice %2230 {offsets = [2, 0], sizes = [1, 256], strides = [1, 1]} : vector<4x256xf32> to vector<1x256xf32>
    %2236 = vector.shape_cast %2235 : vector<1x256xf32> to vector<256xf32>
    %2237 = vector.extract_strided_slice %2230 {offsets = [3, 0], sizes = [1, 256], strides = [1, 1]} : vector<4x256xf32> to vector<1x256xf32>
    %2238 = vector.shape_cast %2237 : vector<1x256xf32> to vector<256xf32>
    %c18_244 = arith.constant 18 : index
    %2239 = memref.load %arg12[%c18_244] : memref<400xf32, #tpu.memory_space<smem>>
    %2240 = vector.broadcast %2239 : f32 to vector<256xf32>
    %2241 = arith.mulf %2240, %2232 : vector<256xf32>
    %c43_245 = arith.constant 43 : index
    %2242 = memref.load %arg12[%c43_245] : memref<400xf32, #tpu.memory_space<smem>>
    %2243 = vector.broadcast %2242 : f32 to vector<256xf32>
    %2244 = arith.mulf %2243, %2234 : vector<256xf32>
    %2245 = arith.addf %2241, %2244 : vector<256xf32>
    %c68_246 = arith.constant 68 : index
    %2246 = memref.load %arg12[%c68_246] : memref<400xf32, #tpu.memory_space<smem>>
    %2247 = vector.broadcast %2246 : f32 to vector<256xf32>
    %2248 = arith.mulf %2247, %2236 : vector<256xf32>
    %2249 = arith.addf %2245, %2248 : vector<256xf32>
    %c93_247 = arith.constant 93 : index
    %2250 = memref.load %arg12[%c93_247] : memref<400xf32, #tpu.memory_space<smem>>
    %2251 = vector.broadcast %2250 : f32 to vector<256xf32>
    %2252 = arith.mulf %2251, %2238 : vector<256xf32>
    %2253 = arith.addf %2249, %2252 : vector<256xf32>
    %2254 = arith.addf %2174, %2253 : vector<256xf32>
    %c118_248 = arith.constant 118 : index
    %2255 = memref.load %arg12[%c118_248] : memref<400xf32, #tpu.memory_space<smem>>
    %2256 = vector.broadcast %2255 : f32 to vector<256xf32>
    %2257 = arith.mulf %2256, %2232 : vector<256xf32>
    %c143_249 = arith.constant 143 : index
    %2258 = memref.load %arg12[%c143_249] : memref<400xf32, #tpu.memory_space<smem>>
    %2259 = vector.broadcast %2258 : f32 to vector<256xf32>
    %2260 = arith.mulf %2259, %2234 : vector<256xf32>
    %2261 = arith.addf %2257, %2260 : vector<256xf32>
    %c168 = arith.constant 168 : index
    %2262 = memref.load %arg12[%c168] : memref<400xf32, #tpu.memory_space<smem>>
    %2263 = vector.broadcast %2262 : f32 to vector<256xf32>
    %2264 = arith.mulf %2263, %2236 : vector<256xf32>
    %2265 = arith.addf %2261, %2264 : vector<256xf32>
    %c193 = arith.constant 193 : index
    %2266 = memref.load %arg12[%c193] : memref<400xf32, #tpu.memory_space<smem>>
    %2267 = vector.broadcast %2266 : f32 to vector<256xf32>
    %2268 = arith.mulf %2267, %2238 : vector<256xf32>
    %2269 = arith.addf %2265, %2268 : vector<256xf32>
    %2270 = arith.addf %2190, %2269 : vector<256xf32>
    %c218 = arith.constant 218 : index
    %2271 = memref.load %arg12[%c218] : memref<400xf32, #tpu.memory_space<smem>>
    %2272 = vector.broadcast %2271 : f32 to vector<256xf32>
    %2273 = arith.mulf %2272, %2232 : vector<256xf32>
    %c243 = arith.constant 243 : index
    %2274 = memref.load %arg12[%c243] : memref<400xf32, #tpu.memory_space<smem>>
    %2275 = vector.broadcast %2274 : f32 to vector<256xf32>
    %2276 = arith.mulf %2275, %2234 : vector<256xf32>
    %2277 = arith.addf %2273, %2276 : vector<256xf32>
    %c268 = arith.constant 268 : index
    %2278 = memref.load %arg12[%c268] : memref<400xf32, #tpu.memory_space<smem>>
    %2279 = vector.broadcast %2278 : f32 to vector<256xf32>
    %2280 = arith.mulf %2279, %2236 : vector<256xf32>
    %2281 = arith.addf %2277, %2280 : vector<256xf32>
    %c293 = arith.constant 293 : index
    %2282 = memref.load %arg12[%c293] : memref<400xf32, #tpu.memory_space<smem>>
    %2283 = vector.broadcast %2282 : f32 to vector<256xf32>
    %2284 = arith.mulf %2283, %2238 : vector<256xf32>
    %2285 = arith.addf %2281, %2284 : vector<256xf32>
    %2286 = arith.addf %2206, %2285 : vector<256xf32>
    %c318 = arith.constant 318 : index
    %2287 = memref.load %arg12[%c318] : memref<400xf32, #tpu.memory_space<smem>>
    %2288 = vector.broadcast %2287 : f32 to vector<256xf32>
    %2289 = arith.mulf %2288, %2232 : vector<256xf32>
    %c343 = arith.constant 343 : index
    %2290 = memref.load %arg12[%c343] : memref<400xf32, #tpu.memory_space<smem>>
    %2291 = vector.broadcast %2290 : f32 to vector<256xf32>
    %2292 = arith.mulf %2291, %2234 : vector<256xf32>
    %2293 = arith.addf %2289, %2292 : vector<256xf32>
    %c368 = arith.constant 368 : index
    %2294 = memref.load %arg12[%c368] : memref<400xf32, #tpu.memory_space<smem>>
    %2295 = vector.broadcast %2294 : f32 to vector<256xf32>
    %2296 = arith.mulf %2295, %2236 : vector<256xf32>
    %2297 = arith.addf %2293, %2296 : vector<256xf32>
    %c393 = arith.constant 393 : index
    %2298 = memref.load %arg12[%c393] : memref<400xf32, #tpu.memory_space<smem>>
    %2299 = vector.broadcast %2298 : f32 to vector<256xf32>
    %2300 = arith.mulf %2299, %2238 : vector<256xf32>
    %2301 = arith.addf %2297, %2300 : vector<256xf32>
    %2302 = arith.addf %2222, %2301 : vector<256xf32>
    %c238_i32 = arith.constant 238 : i32
    %2303 = tpu.dynamic_rotate %815 by %c238_i32 dim 1 : vector<4x256xf32>, i32 -> vector<4x256xf32>
    %c15_i32_250 = arith.constant 15 : i32
    %2304 = vector.broadcast %c15_i32_250 : i32 to vector<4x256xi32>
    %2305 = arith.cmpi slt, %0, %2304 : vector<4x256xi32>
    %c14_i32_251 = arith.constant 14 : i32
    %2306 = vector.broadcast %c14_i32_251 : i32 to vector<4x256xi32>
    %2307 = arith.cmpi slt, %1, %2306 : vector<4x256xi32>
    %2308 = arith.andi %2305, %2307 : vector<4x256xi1>
    %cst_252 = arith.constant 0.000000e+00 : f32
    %2309 = vector.broadcast %cst_252 : f32 to vector<4x256xf32>
    %2310 = arith.select %2308, %2303, %2309 : vector<4x256xi1>, vector<4x256xf32>
    %2311 = vector.extract_strided_slice %2310 {offsets = [0, 0], sizes = [1, 256], strides = [1, 1]} : vector<4x256xf32> to vector<1x256xf32>
    %2312 = vector.shape_cast %2311 : vector<1x256xf32> to vector<256xf32>
    %2313 = vector.extract_strided_slice %2310 {offsets = [1, 0], sizes = [1, 256], strides = [1, 1]} : vector<4x256xf32> to vector<1x256xf32>
    %2314 = vector.shape_cast %2313 : vector<1x256xf32> to vector<256xf32>
    %2315 = vector.extract_strided_slice %2310 {offsets = [2, 0], sizes = [1, 256], strides = [1, 1]} : vector<4x256xf32> to vector<1x256xf32>
    %2316 = vector.shape_cast %2315 : vector<1x256xf32> to vector<256xf32>
    %2317 = vector.extract_strided_slice %2310 {offsets = [3, 0], sizes = [1, 256], strides = [1, 1]} : vector<4x256xf32> to vector<1x256xf32>
    %2318 = vector.shape_cast %2317 : vector<1x256xf32> to vector<256xf32>
    %c19_253 = arith.constant 19 : index
    %2319 = memref.load %arg12[%c19_253] : memref<400xf32, #tpu.memory_space<smem>>
    %2320 = vector.broadcast %2319 : f32 to vector<256xf32>
    %2321 = arith.mulf %2320, %2312 : vector<256xf32>
    %c44_254 = arith.constant 44 : index
    %2322 = memref.load %arg12[%c44_254] : memref<400xf32, #tpu.memory_space<smem>>
    %2323 = vector.broadcast %2322 : f32 to vector<256xf32>
    %2324 = arith.mulf %2323, %2314 : vector<256xf32>
    %2325 = arith.addf %2321, %2324 : vector<256xf32>
    %c69_255 = arith.constant 69 : index
    %2326 = memref.load %arg12[%c69_255] : memref<400xf32, #tpu.memory_space<smem>>
    %2327 = vector.broadcast %2326 : f32 to vector<256xf32>
    %2328 = arith.mulf %2327, %2316 : vector<256xf32>
    %2329 = arith.addf %2325, %2328 : vector<256xf32>
    %c94_256 = arith.constant 94 : index
    %2330 = memref.load %arg12[%c94_256] : memref<400xf32, #tpu.memory_space<smem>>
    %2331 = vector.broadcast %2330 : f32 to vector<256xf32>
    %2332 = arith.mulf %2331, %2318 : vector<256xf32>
    %2333 = arith.addf %2329, %2332 : vector<256xf32>
    %2334 = arith.addf %2254, %2333 : vector<256xf32>
    %c119_257 = arith.constant 119 : index
    %2335 = memref.load %arg12[%c119_257] : memref<400xf32, #tpu.memory_space<smem>>
    %2336 = vector.broadcast %2335 : f32 to vector<256xf32>
    %2337 = arith.mulf %2336, %2312 : vector<256xf32>
    %c144 = arith.constant 144 : index
    %2338 = memref.load %arg12[%c144] : memref<400xf32, #tpu.memory_space<smem>>
    %2339 = vector.broadcast %2338 : f32 to vector<256xf32>
    %2340 = arith.mulf %2339, %2314 : vector<256xf32>
    %2341 = arith.addf %2337, %2340 : vector<256xf32>
    %c169 = arith.constant 169 : index
    %2342 = memref.load %arg12[%c169] : memref<400xf32, #tpu.memory_space<smem>>
    %2343 = vector.broadcast %2342 : f32 to vector<256xf32>
    %2344 = arith.mulf %2343, %2316 : vector<256xf32>
    %2345 = arith.addf %2341, %2344 : vector<256xf32>
    %c194 = arith.constant 194 : index
    %2346 = memref.load %arg12[%c194] : memref<400xf32, #tpu.memory_space<smem>>
    %2347 = vector.broadcast %2346 : f32 to vector<256xf32>
    %2348 = arith.mulf %2347, %2318 : vector<256xf32>
    %2349 = arith.addf %2345, %2348 : vector<256xf32>
    %2350 = arith.addf %2270, %2349 : vector<256xf32>
    %c219 = arith.constant 219 : index
    %2351 = memref.load %arg12[%c219] : memref<400xf32, #tpu.memory_space<smem>>
    %2352 = vector.broadcast %2351 : f32 to vector<256xf32>
    %2353 = arith.mulf %2352, %2312 : vector<256xf32>
    %c244 = arith.constant 244 : index
    %2354 = memref.load %arg12[%c244] : memref<400xf32, #tpu.memory_space<smem>>
    %2355 = vector.broadcast %2354 : f32 to vector<256xf32>
    %2356 = arith.mulf %2355, %2314 : vector<256xf32>
    %2357 = arith.addf %2353, %2356 : vector<256xf32>
    %c269 = arith.constant 269 : index
    %2358 = memref.load %arg12[%c269] : memref<400xf32, #tpu.memory_space<smem>>
    %2359 = vector.broadcast %2358 : f32 to vector<256xf32>
    %2360 = arith.mulf %2359, %2316 : vector<256xf32>
    %2361 = arith.addf %2357, %2360 : vector<256xf32>
    %c294 = arith.constant 294 : index
    %2362 = memref.load %arg12[%c294] : memref<400xf32, #tpu.memory_space<smem>>
    %2363 = vector.broadcast %2362 : f32 to vector<256xf32>
    %2364 = arith.mulf %2363, %2318 : vector<256xf32>
    %2365 = arith.addf %2361, %2364 : vector<256xf32>
    %2366 = arith.addf %2286, %2365 : vector<256xf32>
    %c319 = arith.constant 319 : index
    %2367 = memref.load %arg12[%c319] : memref<400xf32, #tpu.memory_space<smem>>
    %2368 = vector.broadcast %2367 : f32 to vector<256xf32>
    %2369 = arith.mulf %2368, %2312 : vector<256xf32>
    %c344 = arith.constant 344 : index
    %2370 = memref.load %arg12[%c344] : memref<400xf32, #tpu.memory_space<smem>>
    %2371 = vector.broadcast %2370 : f32 to vector<256xf32>
    %2372 = arith.mulf %2371, %2314 : vector<256xf32>
    %2373 = arith.addf %2369, %2372 : vector<256xf32>
    %c369 = arith.constant 369 : index
    %2374 = memref.load %arg12[%c369] : memref<400xf32, #tpu.memory_space<smem>>
    %2375 = vector.broadcast %2374 : f32 to vector<256xf32>
    %2376 = arith.mulf %2375, %2316 : vector<256xf32>
    %2377 = arith.addf %2373, %2376 : vector<256xf32>
    %c394 = arith.constant 394 : index
    %2378 = memref.load %arg12[%c394] : memref<400xf32, #tpu.memory_space<smem>>
    %2379 = vector.broadcast %2378 : f32 to vector<256xf32>
    %2380 = arith.mulf %2379, %2318 : vector<256xf32>
    %2381 = arith.addf %2377, %2380 : vector<256xf32>
    %2382 = arith.addf %2302, %2381 : vector<256xf32>
    %c226_i32 = arith.constant 226 : i32
    %2383 = tpu.dynamic_rotate %815 by %c226_i32 dim 1 : vector<4x256xf32>, i32 -> vector<4x256xf32>
    %c14_i32_258 = arith.constant 14 : i32
    %2384 = vector.broadcast %c14_i32_258 : i32 to vector<4x256xi32>
    %2385 = arith.cmpi slt, %0, %2384 : vector<4x256xi32>
    %c2_i32_259 = arith.constant 2 : i32
    %2386 = vector.broadcast %c2_i32_259 : i32 to vector<4x256xi32>
    %2387 = arith.cmpi sge, %1, %2386 : vector<4x256xi32>
    %2388 = arith.andi %2385, %2387 : vector<4x256xi1>
    %cst_260 = arith.constant 0.000000e+00 : f32
    %2389 = vector.broadcast %cst_260 : f32 to vector<4x256xf32>
    %2390 = arith.select %2388, %2383, %2389 : vector<4x256xi1>, vector<4x256xf32>
    %2391 = vector.extract_strided_slice %2390 {offsets = [0, 0], sizes = [1, 256], strides = [1, 1]} : vector<4x256xf32> to vector<1x256xf32>
    %2392 = vector.shape_cast %2391 : vector<1x256xf32> to vector<256xf32>
    %2393 = vector.extract_strided_slice %2390 {offsets = [1, 0], sizes = [1, 256], strides = [1, 1]} : vector<4x256xf32> to vector<1x256xf32>
    %2394 = vector.shape_cast %2393 : vector<1x256xf32> to vector<256xf32>
    %2395 = vector.extract_strided_slice %2390 {offsets = [2, 0], sizes = [1, 256], strides = [1, 1]} : vector<4x256xf32> to vector<1x256xf32>
    %2396 = vector.shape_cast %2395 : vector<1x256xf32> to vector<256xf32>
    %2397 = vector.extract_strided_slice %2390 {offsets = [3, 0], sizes = [1, 256], strides = [1, 1]} : vector<4x256xf32> to vector<1x256xf32>
    %2398 = vector.shape_cast %2397 : vector<1x256xf32> to vector<256xf32>
    %c20_261 = arith.constant 20 : index
    %2399 = memref.load %arg12[%c20_261] : memref<400xf32, #tpu.memory_space<smem>>
    %2400 = vector.broadcast %2399 : f32 to vector<256xf32>
    %2401 = arith.mulf %2400, %2392 : vector<256xf32>
    %c45_262 = arith.constant 45 : index
    %2402 = memref.load %arg12[%c45_262] : memref<400xf32, #tpu.memory_space<smem>>
    %2403 = vector.broadcast %2402 : f32 to vector<256xf32>
    %2404 = arith.mulf %2403, %2394 : vector<256xf32>
    %2405 = arith.addf %2401, %2404 : vector<256xf32>
    %c70_263 = arith.constant 70 : index
    %2406 = memref.load %arg12[%c70_263] : memref<400xf32, #tpu.memory_space<smem>>
    %2407 = vector.broadcast %2406 : f32 to vector<256xf32>
    %2408 = arith.mulf %2407, %2396 : vector<256xf32>
    %2409 = arith.addf %2405, %2408 : vector<256xf32>
    %c95_264 = arith.constant 95 : index
    %2410 = memref.load %arg12[%c95_264] : memref<400xf32, #tpu.memory_space<smem>>
    %2411 = vector.broadcast %2410 : f32 to vector<256xf32>
    %2412 = arith.mulf %2411, %2398 : vector<256xf32>
    %2413 = arith.addf %2409, %2412 : vector<256xf32>
    %2414 = arith.addf %2334, %2413 : vector<256xf32>
    %c120_265 = arith.constant 120 : index
    %2415 = memref.load %arg12[%c120_265] : memref<400xf32, #tpu.memory_space<smem>>
    %2416 = vector.broadcast %2415 : f32 to vector<256xf32>
    %2417 = arith.mulf %2416, %2392 : vector<256xf32>
    %c145 = arith.constant 145 : index
    %2418 = memref.load %arg12[%c145] : memref<400xf32, #tpu.memory_space<smem>>
    %2419 = vector.broadcast %2418 : f32 to vector<256xf32>
    %2420 = arith.mulf %2419, %2394 : vector<256xf32>
    %2421 = arith.addf %2417, %2420 : vector<256xf32>
    %c170 = arith.constant 170 : index
    %2422 = memref.load %arg12[%c170] : memref<400xf32, #tpu.memory_space<smem>>
    %2423 = vector.broadcast %2422 : f32 to vector<256xf32>
    %2424 = arith.mulf %2423, %2396 : vector<256xf32>
    %2425 = arith.addf %2421, %2424 : vector<256xf32>
    %c195 = arith.constant 195 : index
    %2426 = memref.load %arg12[%c195] : memref<400xf32, #tpu.memory_space<smem>>
    %2427 = vector.broadcast %2426 : f32 to vector<256xf32>
    %2428 = arith.mulf %2427, %2398 : vector<256xf32>
    %2429 = arith.addf %2425, %2428 : vector<256xf32>
    %2430 = arith.addf %2350, %2429 : vector<256xf32>
    %c220 = arith.constant 220 : index
    %2431 = memref.load %arg12[%c220] : memref<400xf32, #tpu.memory_space<smem>>
    %2432 = vector.broadcast %2431 : f32 to vector<256xf32>
    %2433 = arith.mulf %2432, %2392 : vector<256xf32>
    %c245 = arith.constant 245 : index
    %2434 = memref.load %arg12[%c245] : memref<400xf32, #tpu.memory_space<smem>>
    %2435 = vector.broadcast %2434 : f32 to vector<256xf32>
    %2436 = arith.mulf %2435, %2394 : vector<256xf32>
    %2437 = arith.addf %2433, %2436 : vector<256xf32>
    %c270 = arith.constant 270 : index
    %2438 = memref.load %arg12[%c270] : memref<400xf32, #tpu.memory_space<smem>>
    %2439 = vector.broadcast %2438 : f32 to vector<256xf32>
    %2440 = arith.mulf %2439, %2396 : vector<256xf32>
    %2441 = arith.addf %2437, %2440 : vector<256xf32>
    %c295 = arith.constant 295 : index
    %2442 = memref.load %arg12[%c295] : memref<400xf32, #tpu.memory_space<smem>>
    %2443 = vector.broadcast %2442 : f32 to vector<256xf32>
    %2444 = arith.mulf %2443, %2398 : vector<256xf32>
    %2445 = arith.addf %2441, %2444 : vector<256xf32>
    %2446 = arith.addf %2366, %2445 : vector<256xf32>
    %c320 = arith.constant 320 : index
    %2447 = memref.load %arg12[%c320] : memref<400xf32, #tpu.memory_space<smem>>
    %2448 = vector.broadcast %2447 : f32 to vector<256xf32>
    %2449 = arith.mulf %2448, %2392 : vector<256xf32>
    %c345 = arith.constant 345 : index
    %2450 = memref.load %arg12[%c345] : memref<400xf32, #tpu.memory_space<smem>>
    %2451 = vector.broadcast %2450 : f32 to vector<256xf32>
    %2452 = arith.mulf %2451, %2394 : vector<256xf32>
    %2453 = arith.addf %2449, %2452 : vector<256xf32>
    %c370 = arith.constant 370 : index
    %2454 = memref.load %arg12[%c370] : memref<400xf32, #tpu.memory_space<smem>>
    %2455 = vector.broadcast %2454 : f32 to vector<256xf32>
    %2456 = arith.mulf %2455, %2396 : vector<256xf32>
    %2457 = arith.addf %2453, %2456 : vector<256xf32>
    %c395 = arith.constant 395 : index
    %2458 = memref.load %arg12[%c395] : memref<400xf32, #tpu.memory_space<smem>>
    %2459 = vector.broadcast %2458 : f32 to vector<256xf32>
    %2460 = arith.mulf %2459, %2398 : vector<256xf32>
    %2461 = arith.addf %2457, %2460 : vector<256xf32>
    %2462 = arith.addf %2382, %2461 : vector<256xf32>
    %c225_i32 = arith.constant 225 : i32
    %2463 = tpu.dynamic_rotate %815 by %c225_i32 dim 1 : vector<4x256xf32>, i32 -> vector<4x256xf32>
    %c14_i32_266 = arith.constant 14 : i32
    %2464 = vector.broadcast %c14_i32_266 : i32 to vector<4x256xi32>
    %2465 = arith.cmpi slt, %0, %2464 : vector<4x256xi32>
    %c1_i32_267 = arith.constant 1 : i32
    %2466 = vector.broadcast %c1_i32_267 : i32 to vector<4x256xi32>
    %2467 = arith.cmpi sge, %1, %2466 : vector<4x256xi32>
    %2468 = arith.andi %2465, %2467 : vector<4x256xi1>
    %cst_268 = arith.constant 0.000000e+00 : f32
    %2469 = vector.broadcast %cst_268 : f32 to vector<4x256xf32>
    %2470 = arith.select %2468, %2463, %2469 : vector<4x256xi1>, vector<4x256xf32>
    %2471 = vector.extract_strided_slice %2470 {offsets = [0, 0], sizes = [1, 256], strides = [1, 1]} : vector<4x256xf32> to vector<1x256xf32>
    %2472 = vector.shape_cast %2471 : vector<1x256xf32> to vector<256xf32>
    %2473 = vector.extract_strided_slice %2470 {offsets = [1, 0], sizes = [1, 256], strides = [1, 1]} : vector<4x256xf32> to vector<1x256xf32>
    %2474 = vector.shape_cast %2473 : vector<1x256xf32> to vector<256xf32>
    %2475 = vector.extract_strided_slice %2470 {offsets = [2, 0], sizes = [1, 256], strides = [1, 1]} : vector<4x256xf32> to vector<1x256xf32>
    %2476 = vector.shape_cast %2475 : vector<1x256xf32> to vector<256xf32>
    %2477 = vector.extract_strided_slice %2470 {offsets = [3, 0], sizes = [1, 256], strides = [1, 1]} : vector<4x256xf32> to vector<1x256xf32>
    %2478 = vector.shape_cast %2477 : vector<1x256xf32> to vector<256xf32>
    %c21_269 = arith.constant 21 : index
    %2479 = memref.load %arg12[%c21_269] : memref<400xf32, #tpu.memory_space<smem>>
    %2480 = vector.broadcast %2479 : f32 to vector<256xf32>
    %2481 = arith.mulf %2480, %2472 : vector<256xf32>
    %c46_270 = arith.constant 46 : index
    %2482 = memref.load %arg12[%c46_270] : memref<400xf32, #tpu.memory_space<smem>>
    %2483 = vector.broadcast %2482 : f32 to vector<256xf32>
    %2484 = arith.mulf %2483, %2474 : vector<256xf32>
    %2485 = arith.addf %2481, %2484 : vector<256xf32>
    %c71_271 = arith.constant 71 : index
    %2486 = memref.load %arg12[%c71_271] : memref<400xf32, #tpu.memory_space<smem>>
    %2487 = vector.broadcast %2486 : f32 to vector<256xf32>
    %2488 = arith.mulf %2487, %2476 : vector<256xf32>
    %2489 = arith.addf %2485, %2488 : vector<256xf32>
    %c96_272 = arith.constant 96 : index
    %2490 = memref.load %arg12[%c96_272] : memref<400xf32, #tpu.memory_space<smem>>
    %2491 = vector.broadcast %2490 : f32 to vector<256xf32>
    %2492 = arith.mulf %2491, %2478 : vector<256xf32>
    %2493 = arith.addf %2489, %2492 : vector<256xf32>
    %2494 = arith.addf %2414, %2493 : vector<256xf32>
    %c121_273 = arith.constant 121 : index
    %2495 = memref.load %arg12[%c121_273] : memref<400xf32, #tpu.memory_space<smem>>
    %2496 = vector.broadcast %2495 : f32 to vector<256xf32>
    %2497 = arith.mulf %2496, %2472 : vector<256xf32>
    %c146 = arith.constant 146 : index
    %2498 = memref.load %arg12[%c146] : memref<400xf32, #tpu.memory_space<smem>>
    %2499 = vector.broadcast %2498 : f32 to vector<256xf32>
    %2500 = arith.mulf %2499, %2474 : vector<256xf32>
    %2501 = arith.addf %2497, %2500 : vector<256xf32>
    %c171 = arith.constant 171 : index
    %2502 = memref.load %arg12[%c171] : memref<400xf32, #tpu.memory_space<smem>>
    %2503 = vector.broadcast %2502 : f32 to vector<256xf32>
    %2504 = arith.mulf %2503, %2476 : vector<256xf32>
    %2505 = arith.addf %2501, %2504 : vector<256xf32>
    %c196 = arith.constant 196 : index
    %2506 = memref.load %arg12[%c196] : memref<400xf32, #tpu.memory_space<smem>>
    %2507 = vector.broadcast %2506 : f32 to vector<256xf32>
    %2508 = arith.mulf %2507, %2478 : vector<256xf32>
    %2509 = arith.addf %2505, %2508 : vector<256xf32>
    %2510 = arith.addf %2430, %2509 : vector<256xf32>
    %c221 = arith.constant 221 : index
    %2511 = memref.load %arg12[%c221] : memref<400xf32, #tpu.memory_space<smem>>
    %2512 = vector.broadcast %2511 : f32 to vector<256xf32>
    %2513 = arith.mulf %2512, %2472 : vector<256xf32>
    %c246 = arith.constant 246 : index
    %2514 = memref.load %arg12[%c246] : memref<400xf32, #tpu.memory_space<smem>>
    %2515 = vector.broadcast %2514 : f32 to vector<256xf32>
    %2516 = arith.mulf %2515, %2474 : vector<256xf32>
    %2517 = arith.addf %2513, %2516 : vector<256xf32>
    %c271 = arith.constant 271 : index
    %2518 = memref.load %arg12[%c271] : memref<400xf32, #tpu.memory_space<smem>>
    %2519 = vector.broadcast %2518 : f32 to vector<256xf32>
    %2520 = arith.mulf %2519, %2476 : vector<256xf32>
    %2521 = arith.addf %2517, %2520 : vector<256xf32>
    %c296 = arith.constant 296 : index
    %2522 = memref.load %arg12[%c296] : memref<400xf32, #tpu.memory_space<smem>>
    %2523 = vector.broadcast %2522 : f32 to vector<256xf32>
    %2524 = arith.mulf %2523, %2478 : vector<256xf32>
    %2525 = arith.addf %2521, %2524 : vector<256xf32>
    %2526 = arith.addf %2446, %2525 : vector<256xf32>
    %c321 = arith.constant 321 : index
    %2527 = memref.load %arg12[%c321] : memref<400xf32, #tpu.memory_space<smem>>
    %2528 = vector.broadcast %2527 : f32 to vector<256xf32>
    %2529 = arith.mulf %2528, %2472 : vector<256xf32>
    %c346 = arith.constant 346 : index
    %2530 = memref.load %arg12[%c346] : memref<400xf32, #tpu.memory_space<smem>>
    %2531 = vector.broadcast %2530 : f32 to vector<256xf32>
    %2532 = arith.mulf %2531, %2474 : vector<256xf32>
    %2533 = arith.addf %2529, %2532 : vector<256xf32>
    %c371 = arith.constant 371 : index
    %2534 = memref.load %arg12[%c371] : memref<400xf32, #tpu.memory_space<smem>>
    %2535 = vector.broadcast %2534 : f32 to vector<256xf32>
    %2536 = arith.mulf %2535, %2476 : vector<256xf32>
    %2537 = arith.addf %2533, %2536 : vector<256xf32>
    %c396 = arith.constant 396 : index
    %2538 = memref.load %arg12[%c396] : memref<400xf32, #tpu.memory_space<smem>>
    %2539 = vector.broadcast %2538 : f32 to vector<256xf32>
    %2540 = arith.mulf %2539, %2478 : vector<256xf32>
    %2541 = arith.addf %2537, %2540 : vector<256xf32>
    %2542 = arith.addf %2462, %2541 : vector<256xf32>
    %c224_i32 = arith.constant 224 : i32
    %2543 = tpu.dynamic_rotate %815 by %c224_i32 dim 1 : vector<4x256xf32>, i32 -> vector<4x256xf32>
    %c14_i32_274 = arith.constant 14 : i32
    %2544 = vector.broadcast %c14_i32_274 : i32 to vector<4x256xi32>
    %2545 = arith.cmpi slt, %0, %2544 : vector<4x256xi32>
    %cst_275 = arith.constant 0.000000e+00 : f32
    %2546 = vector.broadcast %cst_275 : f32 to vector<4x256xf32>
    %2547 = arith.select %2545, %2543, %2546 : vector<4x256xi1>, vector<4x256xf32>
    %2548 = vector.extract_strided_slice %2547 {offsets = [0, 0], sizes = [1, 256], strides = [1, 1]} : vector<4x256xf32> to vector<1x256xf32>
    %2549 = vector.shape_cast %2548 : vector<1x256xf32> to vector<256xf32>
    %2550 = vector.extract_strided_slice %2547 {offsets = [1, 0], sizes = [1, 256], strides = [1, 1]} : vector<4x256xf32> to vector<1x256xf32>
    %2551 = vector.shape_cast %2550 : vector<1x256xf32> to vector<256xf32>
    %2552 = vector.extract_strided_slice %2547 {offsets = [2, 0], sizes = [1, 256], strides = [1, 1]} : vector<4x256xf32> to vector<1x256xf32>
    %2553 = vector.shape_cast %2552 : vector<1x256xf32> to vector<256xf32>
    %2554 = vector.extract_strided_slice %2547 {offsets = [3, 0], sizes = [1, 256], strides = [1, 1]} : vector<4x256xf32> to vector<1x256xf32>
    %2555 = vector.shape_cast %2554 : vector<1x256xf32> to vector<256xf32>
    %c22_276 = arith.constant 22 : index
    %2556 = memref.load %arg12[%c22_276] : memref<400xf32, #tpu.memory_space<smem>>
    %2557 = vector.broadcast %2556 : f32 to vector<256xf32>
    %2558 = arith.mulf %2557, %2549 : vector<256xf32>
    %c47_277 = arith.constant 47 : index
    %2559 = memref.load %arg12[%c47_277] : memref<400xf32, #tpu.memory_space<smem>>
    %2560 = vector.broadcast %2559 : f32 to vector<256xf32>
    %2561 = arith.mulf %2560, %2551 : vector<256xf32>
    %2562 = arith.addf %2558, %2561 : vector<256xf32>
    %c72_278 = arith.constant 72 : index
    %2563 = memref.load %arg12[%c72_278] : memref<400xf32, #tpu.memory_space<smem>>
    %2564 = vector.broadcast %2563 : f32 to vector<256xf32>
    %2565 = arith.mulf %2564, %2553 : vector<256xf32>
    %2566 = arith.addf %2562, %2565 : vector<256xf32>
    %c97_279 = arith.constant 97 : index
    %2567 = memref.load %arg12[%c97_279] : memref<400xf32, #tpu.memory_space<smem>>
    %2568 = vector.broadcast %2567 : f32 to vector<256xf32>
    %2569 = arith.mulf %2568, %2555 : vector<256xf32>
    %2570 = arith.addf %2566, %2569 : vector<256xf32>
    %2571 = arith.addf %2494, %2570 : vector<256xf32>
    %c122_280 = arith.constant 122 : index
    %2572 = memref.load %arg12[%c122_280] : memref<400xf32, #tpu.memory_space<smem>>
    %2573 = vector.broadcast %2572 : f32 to vector<256xf32>
    %2574 = arith.mulf %2573, %2549 : vector<256xf32>
    %c147 = arith.constant 147 : index
    %2575 = memref.load %arg12[%c147] : memref<400xf32, #tpu.memory_space<smem>>
    %2576 = vector.broadcast %2575 : f32 to vector<256xf32>
    %2577 = arith.mulf %2576, %2551 : vector<256xf32>
    %2578 = arith.addf %2574, %2577 : vector<256xf32>
    %c172 = arith.constant 172 : index
    %2579 = memref.load %arg12[%c172] : memref<400xf32, #tpu.memory_space<smem>>
    %2580 = vector.broadcast %2579 : f32 to vector<256xf32>
    %2581 = arith.mulf %2580, %2553 : vector<256xf32>
    %2582 = arith.addf %2578, %2581 : vector<256xf32>
    %c197 = arith.constant 197 : index
    %2583 = memref.load %arg12[%c197] : memref<400xf32, #tpu.memory_space<smem>>
    %2584 = vector.broadcast %2583 : f32 to vector<256xf32>
    %2585 = arith.mulf %2584, %2555 : vector<256xf32>
    %2586 = arith.addf %2582, %2585 : vector<256xf32>
    %2587 = arith.addf %2510, %2586 : vector<256xf32>
    %c222 = arith.constant 222 : index
    %2588 = memref.load %arg12[%c222] : memref<400xf32, #tpu.memory_space<smem>>
    %2589 = vector.broadcast %2588 : f32 to vector<256xf32>
    %2590 = arith.mulf %2589, %2549 : vector<256xf32>
    %c247 = arith.constant 247 : index
    %2591 = memref.load %arg12[%c247] : memref<400xf32, #tpu.memory_space<smem>>
    %2592 = vector.broadcast %2591 : f32 to vector<256xf32>
    %2593 = arith.mulf %2592, %2551 : vector<256xf32>
    %2594 = arith.addf %2590, %2593 : vector<256xf32>
    %c272 = arith.constant 272 : index
    %2595 = memref.load %arg12[%c272] : memref<400xf32, #tpu.memory_space<smem>>
    %2596 = vector.broadcast %2595 : f32 to vector<256xf32>
    %2597 = arith.mulf %2596, %2553 : vector<256xf32>
    %2598 = arith.addf %2594, %2597 : vector<256xf32>
    %c297 = arith.constant 297 : index
    %2599 = memref.load %arg12[%c297] : memref<400xf32, #tpu.memory_space<smem>>
    %2600 = vector.broadcast %2599 : f32 to vector<256xf32>
    %2601 = arith.mulf %2600, %2555 : vector<256xf32>
    %2602 = arith.addf %2598, %2601 : vector<256xf32>
    %2603 = arith.addf %2526, %2602 : vector<256xf32>
    %c322 = arith.constant 322 : index
    %2604 = memref.load %arg12[%c322] : memref<400xf32, #tpu.memory_space<smem>>
    %2605 = vector.broadcast %2604 : f32 to vector<256xf32>
    %2606 = arith.mulf %2605, %2549 : vector<256xf32>
    %c347 = arith.constant 347 : index
    %2607 = memref.load %arg12[%c347] : memref<400xf32, #tpu.memory_space<smem>>
    %2608 = vector.broadcast %2607 : f32 to vector<256xf32>
    %2609 = arith.mulf %2608, %2551 : vector<256xf32>
    %2610 = arith.addf %2606, %2609 : vector<256xf32>
    %c372 = arith.constant 372 : index
    %2611 = memref.load %arg12[%c372] : memref<400xf32, #tpu.memory_space<smem>>
    %2612 = vector.broadcast %2611 : f32 to vector<256xf32>
    %2613 = arith.mulf %2612, %2553 : vector<256xf32>
    %2614 = arith.addf %2610, %2613 : vector<256xf32>
    %c397 = arith.constant 397 : index
    %2615 = memref.load %arg12[%c397] : memref<400xf32, #tpu.memory_space<smem>>
    %2616 = vector.broadcast %2615 : f32 to vector<256xf32>
    %2617 = arith.mulf %2616, %2555 : vector<256xf32>
    %2618 = arith.addf %2614, %2617 : vector<256xf32>
    %2619 = arith.addf %2542, %2618 : vector<256xf32>
    %c223_i32 = arith.constant 223 : i32
    %2620 = tpu.dynamic_rotate %815 by %c223_i32 dim 1 : vector<4x256xf32>, i32 -> vector<4x256xf32>
    %c14_i32_281 = arith.constant 14 : i32
    %2621 = vector.broadcast %c14_i32_281 : i32 to vector<4x256xi32>
    %2622 = arith.cmpi slt, %0, %2621 : vector<4x256xi32>
    %c15_i32_282 = arith.constant 15 : i32
    %2623 = vector.broadcast %c15_i32_282 : i32 to vector<4x256xi32>
    %2624 = arith.cmpi slt, %1, %2623 : vector<4x256xi32>
    %2625 = arith.andi %2622, %2624 : vector<4x256xi1>
    %cst_283 = arith.constant 0.000000e+00 : f32
    %2626 = vector.broadcast %cst_283 : f32 to vector<4x256xf32>
    %2627 = arith.select %2625, %2620, %2626 : vector<4x256xi1>, vector<4x256xf32>
    %2628 = vector.extract_strided_slice %2627 {offsets = [0, 0], sizes = [1, 256], strides = [1, 1]} : vector<4x256xf32> to vector<1x256xf32>
    %2629 = vector.shape_cast %2628 : vector<1x256xf32> to vector<256xf32>
    %2630 = vector.extract_strided_slice %2627 {offsets = [1, 0], sizes = [1, 256], strides = [1, 1]} : vector<4x256xf32> to vector<1x256xf32>
    %2631 = vector.shape_cast %2630 : vector<1x256xf32> to vector<256xf32>
    %2632 = vector.extract_strided_slice %2627 {offsets = [2, 0], sizes = [1, 256], strides = [1, 1]} : vector<4x256xf32> to vector<1x256xf32>
    %2633 = vector.shape_cast %2632 : vector<1x256xf32> to vector<256xf32>
    %2634 = vector.extract_strided_slice %2627 {offsets = [3, 0], sizes = [1, 256], strides = [1, 1]} : vector<4x256xf32> to vector<1x256xf32>
    %2635 = vector.shape_cast %2634 : vector<1x256xf32> to vector<256xf32>
    %c23_284 = arith.constant 23 : index
    %2636 = memref.load %arg12[%c23_284] : memref<400xf32, #tpu.memory_space<smem>>
    %2637 = vector.broadcast %2636 : f32 to vector<256xf32>
    %2638 = arith.mulf %2637, %2629 : vector<256xf32>
    %c48_285 = arith.constant 48 : index
    %2639 = memref.load %arg12[%c48_285] : memref<400xf32, #tpu.memory_space<smem>>
    %2640 = vector.broadcast %2639 : f32 to vector<256xf32>
    %2641 = arith.mulf %2640, %2631 : vector<256xf32>
    %2642 = arith.addf %2638, %2641 : vector<256xf32>
    %c73_286 = arith.constant 73 : index
    %2643 = memref.load %arg12[%c73_286] : memref<400xf32, #tpu.memory_space<smem>>
    %2644 = vector.broadcast %2643 : f32 to vector<256xf32>
    %2645 = arith.mulf %2644, %2633 : vector<256xf32>
    %2646 = arith.addf %2642, %2645 : vector<256xf32>
    %c98_287 = arith.constant 98 : index
    %2647 = memref.load %arg12[%c98_287] : memref<400xf32, #tpu.memory_space<smem>>
    %2648 = vector.broadcast %2647 : f32 to vector<256xf32>
    %2649 = arith.mulf %2648, %2635 : vector<256xf32>
    %2650 = arith.addf %2646, %2649 : vector<256xf32>
    %2651 = arith.addf %2571, %2650 : vector<256xf32>
    %c123_288 = arith.constant 123 : index
    %2652 = memref.load %arg12[%c123_288] : memref<400xf32, #tpu.memory_space<smem>>
    %2653 = vector.broadcast %2652 : f32 to vector<256xf32>
    %2654 = arith.mulf %2653, %2629 : vector<256xf32>
    %c148 = arith.constant 148 : index
    %2655 = memref.load %arg12[%c148] : memref<400xf32, #tpu.memory_space<smem>>
    %2656 = vector.broadcast %2655 : f32 to vector<256xf32>
    %2657 = arith.mulf %2656, %2631 : vector<256xf32>
    %2658 = arith.addf %2654, %2657 : vector<256xf32>
    %c173 = arith.constant 173 : index
    %2659 = memref.load %arg12[%c173] : memref<400xf32, #tpu.memory_space<smem>>
    %2660 = vector.broadcast %2659 : f32 to vector<256xf32>
    %2661 = arith.mulf %2660, %2633 : vector<256xf32>
    %2662 = arith.addf %2658, %2661 : vector<256xf32>
    %c198 = arith.constant 198 : index
    %2663 = memref.load %arg12[%c198] : memref<400xf32, #tpu.memory_space<smem>>
    %2664 = vector.broadcast %2663 : f32 to vector<256xf32>
    %2665 = arith.mulf %2664, %2635 : vector<256xf32>
    %2666 = arith.addf %2662, %2665 : vector<256xf32>
    %2667 = arith.addf %2587, %2666 : vector<256xf32>
    %c223 = arith.constant 223 : index
    %2668 = memref.load %arg12[%c223] : memref<400xf32, #tpu.memory_space<smem>>
    %2669 = vector.broadcast %2668 : f32 to vector<256xf32>
    %2670 = arith.mulf %2669, %2629 : vector<256xf32>
    %c248 = arith.constant 248 : index
    %2671 = memref.load %arg12[%c248] : memref<400xf32, #tpu.memory_space<smem>>
    %2672 = vector.broadcast %2671 : f32 to vector<256xf32>
    %2673 = arith.mulf %2672, %2631 : vector<256xf32>
    %2674 = arith.addf %2670, %2673 : vector<256xf32>
    %c273 = arith.constant 273 : index
    %2675 = memref.load %arg12[%c273] : memref<400xf32, #tpu.memory_space<smem>>
    %2676 = vector.broadcast %2675 : f32 to vector<256xf32>
    %2677 = arith.mulf %2676, %2633 : vector<256xf32>
    %2678 = arith.addf %2674, %2677 : vector<256xf32>
    %c298 = arith.constant 298 : index
    %2679 = memref.load %arg12[%c298] : memref<400xf32, #tpu.memory_space<smem>>
    %2680 = vector.broadcast %2679 : f32 to vector<256xf32>
    %2681 = arith.mulf %2680, %2635 : vector<256xf32>
    %2682 = arith.addf %2678, %2681 : vector<256xf32>
    %2683 = arith.addf %2603, %2682 : vector<256xf32>
    %c323 = arith.constant 323 : index
    %2684 = memref.load %arg12[%c323] : memref<400xf32, #tpu.memory_space<smem>>
    %2685 = vector.broadcast %2684 : f32 to vector<256xf32>
    %2686 = arith.mulf %2685, %2629 : vector<256xf32>
    %c348 = arith.constant 348 : index
    %2687 = memref.load %arg12[%c348] : memref<400xf32, #tpu.memory_space<smem>>
    %2688 = vector.broadcast %2687 : f32 to vector<256xf32>
    %2689 = arith.mulf %2688, %2631 : vector<256xf32>
    %2690 = arith.addf %2686, %2689 : vector<256xf32>
    %c373 = arith.constant 373 : index
    %2691 = memref.load %arg12[%c373] : memref<400xf32, #tpu.memory_space<smem>>
    %2692 = vector.broadcast %2691 : f32 to vector<256xf32>
    %2693 = arith.mulf %2692, %2633 : vector<256xf32>
    %2694 = arith.addf %2690, %2693 : vector<256xf32>
    %c398 = arith.constant 398 : index
    %2695 = memref.load %arg12[%c398] : memref<400xf32, #tpu.memory_space<smem>>
    %2696 = vector.broadcast %2695 : f32 to vector<256xf32>
    %2697 = arith.mulf %2696, %2635 : vector<256xf32>
    %2698 = arith.addf %2694, %2697 : vector<256xf32>
    %2699 = arith.addf %2619, %2698 : vector<256xf32>
    %c222_i32 = arith.constant 222 : i32
    %2700 = tpu.dynamic_rotate %815 by %c222_i32 dim 1 : vector<4x256xf32>, i32 -> vector<4x256xf32>
    %c14_i32_289 = arith.constant 14 : i32
    %2701 = vector.broadcast %c14_i32_289 : i32 to vector<4x256xi32>
    %2702 = arith.cmpi slt, %0, %2701 : vector<4x256xi32>
    %c14_i32_290 = arith.constant 14 : i32
    %2703 = vector.broadcast %c14_i32_290 : i32 to vector<4x256xi32>
    %2704 = arith.cmpi slt, %1, %2703 : vector<4x256xi32>
    %2705 = arith.andi %2702, %2704 : vector<4x256xi1>
    %cst_291 = arith.constant 0.000000e+00 : f32
    %2706 = vector.broadcast %cst_291 : f32 to vector<4x256xf32>
    %2707 = arith.select %2705, %2700, %2706 : vector<4x256xi1>, vector<4x256xf32>
    %2708 = vector.extract_strided_slice %2707 {offsets = [0, 0], sizes = [1, 256], strides = [1, 1]} : vector<4x256xf32> to vector<1x256xf32>
    %2709 = vector.shape_cast %2708 : vector<1x256xf32> to vector<256xf32>
    %2710 = vector.extract_strided_slice %2707 {offsets = [1, 0], sizes = [1, 256], strides = [1, 1]} : vector<4x256xf32> to vector<1x256xf32>
    %2711 = vector.shape_cast %2710 : vector<1x256xf32> to vector<256xf32>
    %2712 = vector.extract_strided_slice %2707 {offsets = [2, 0], sizes = [1, 256], strides = [1, 1]} : vector<4x256xf32> to vector<1x256xf32>
    %2713 = vector.shape_cast %2712 : vector<1x256xf32> to vector<256xf32>
    %2714 = vector.extract_strided_slice %2707 {offsets = [3, 0], sizes = [1, 256], strides = [1, 1]} : vector<4x256xf32> to vector<1x256xf32>
    %2715 = vector.shape_cast %2714 : vector<1x256xf32> to vector<256xf32>
    %c24_292 = arith.constant 24 : index
    %2716 = memref.load %arg12[%c24_292] : memref<400xf32, #tpu.memory_space<smem>>
    %2717 = vector.broadcast %2716 : f32 to vector<256xf32>
    %2718 = arith.mulf %2717, %2709 : vector<256xf32>
    %c49_293 = arith.constant 49 : index
    %2719 = memref.load %arg12[%c49_293] : memref<400xf32, #tpu.memory_space<smem>>
    %2720 = vector.broadcast %2719 : f32 to vector<256xf32>
    %2721 = arith.mulf %2720, %2711 : vector<256xf32>
    %2722 = arith.addf %2718, %2721 : vector<256xf32>
    %c74_294 = arith.constant 74 : index
    %2723 = memref.load %arg12[%c74_294] : memref<400xf32, #tpu.memory_space<smem>>
    %2724 = vector.broadcast %2723 : f32 to vector<256xf32>
    %2725 = arith.mulf %2724, %2713 : vector<256xf32>
    %2726 = arith.addf %2722, %2725 : vector<256xf32>
    %c99_295 = arith.constant 99 : index
    %2727 = memref.load %arg12[%c99_295] : memref<400xf32, #tpu.memory_space<smem>>
    %2728 = vector.broadcast %2727 : f32 to vector<256xf32>
    %2729 = arith.mulf %2728, %2715 : vector<256xf32>
    %2730 = arith.addf %2726, %2729 : vector<256xf32>
    %2731 = arith.addf %2651, %2730 : vector<256xf32>
    %c124_296 = arith.constant 124 : index
    %2732 = memref.load %arg12[%c124_296] : memref<400xf32, #tpu.memory_space<smem>>
    %2733 = vector.broadcast %2732 : f32 to vector<256xf32>
    %2734 = arith.mulf %2733, %2709 : vector<256xf32>
    %c149 = arith.constant 149 : index
    %2735 = memref.load %arg12[%c149] : memref<400xf32, #tpu.memory_space<smem>>
    %2736 = vector.broadcast %2735 : f32 to vector<256xf32>
    %2737 = arith.mulf %2736, %2711 : vector<256xf32>
    %2738 = arith.addf %2734, %2737 : vector<256xf32>
    %c174 = arith.constant 174 : index
    %2739 = memref.load %arg12[%c174] : memref<400xf32, #tpu.memory_space<smem>>
    %2740 = vector.broadcast %2739 : f32 to vector<256xf32>
    %2741 = arith.mulf %2740, %2713 : vector<256xf32>
    %2742 = arith.addf %2738, %2741 : vector<256xf32>
    %c199 = arith.constant 199 : index
    %2743 = memref.load %arg12[%c199] : memref<400xf32, #tpu.memory_space<smem>>
    %2744 = vector.broadcast %2743 : f32 to vector<256xf32>
    %2745 = arith.mulf %2744, %2715 : vector<256xf32>
    %2746 = arith.addf %2742, %2745 : vector<256xf32>
    %2747 = arith.addf %2667, %2746 : vector<256xf32>
    %c224 = arith.constant 224 : index
    %2748 = memref.load %arg12[%c224] : memref<400xf32, #tpu.memory_space<smem>>
    %2749 = vector.broadcast %2748 : f32 to vector<256xf32>
    %2750 = arith.mulf %2749, %2709 : vector<256xf32>
    %c249 = arith.constant 249 : index
    %2751 = memref.load %arg12[%c249] : memref<400xf32, #tpu.memory_space<smem>>
    %2752 = vector.broadcast %2751 : f32 to vector<256xf32>
    %2753 = arith.mulf %2752, %2711 : vector<256xf32>
    %2754 = arith.addf %2750, %2753 : vector<256xf32>
    %c274 = arith.constant 274 : index
    %2755 = memref.load %arg12[%c274] : memref<400xf32, #tpu.memory_space<smem>>
    %2756 = vector.broadcast %2755 : f32 to vector<256xf32>
    %2757 = arith.mulf %2756, %2713 : vector<256xf32>
    %2758 = arith.addf %2754, %2757 : vector<256xf32>
    %c299 = arith.constant 299 : index
    %2759 = memref.load %arg12[%c299] : memref<400xf32, #tpu.memory_space<smem>>
    %2760 = vector.broadcast %2759 : f32 to vector<256xf32>
    %2761 = arith.mulf %2760, %2715 : vector<256xf32>
    %2762 = arith.addf %2758, %2761 : vector<256xf32>
    %2763 = arith.addf %2683, %2762 : vector<256xf32>
    %c324 = arith.constant 324 : index
    %2764 = memref.load %arg12[%c324] : memref<400xf32, #tpu.memory_space<smem>>
    %2765 = vector.broadcast %2764 : f32 to vector<256xf32>
    %2766 = arith.mulf %2765, %2709 : vector<256xf32>
    %c349 = arith.constant 349 : index
    %2767 = memref.load %arg12[%c349] : memref<400xf32, #tpu.memory_space<smem>>
    %2768 = vector.broadcast %2767 : f32 to vector<256xf32>
    %2769 = arith.mulf %2768, %2711 : vector<256xf32>
    %2770 = arith.addf %2766, %2769 : vector<256xf32>
    %c374 = arith.constant 374 : index
    %2771 = memref.load %arg12[%c374] : memref<400xf32, #tpu.memory_space<smem>>
    %2772 = vector.broadcast %2771 : f32 to vector<256xf32>
    %2773 = arith.mulf %2772, %2713 : vector<256xf32>
    %2774 = arith.addf %2770, %2773 : vector<256xf32>
    %c399 = arith.constant 399 : index
    %2775 = memref.load %arg12[%c399] : memref<400xf32, #tpu.memory_space<smem>>
    %2776 = vector.broadcast %2775 : f32 to vector<256xf32>
    %2777 = arith.mulf %2776, %2715 : vector<256xf32>
    %2778 = arith.addf %2774, %2777 : vector<256xf32>
    %2779 = arith.addf %2699, %2778 : vector<256xf32>
    %c0_297 = arith.constant 0 : index
    %c8_298 = arith.constant 8 : index
    %c0_299 = arith.constant 0 : index
    %2780 = vector.load %arg13[%c0_297, %c8_298, %c0_299] : memref<1x12x256xf32, #tpu.memory_space<vmem>>, vector<1x1x256xf32>
    %2781 = vector.shape_cast %2780 : vector<1x1x256xf32> to vector<256xf32>
    %2782 = vector.shape_cast %2731 : vector<256xf32> to vector<1x1x256xf32>
    tpu.vector_store %arg13[%c0_297, %c8_298, %c0_299], %2782 {strides = array<i32>} : memref<1x12x256xf32, #tpu.memory_space<vmem>>, vector<1x1x256xf32>,
    %c0_300 = arith.constant 0 : index
    %c9_301 = arith.constant 9 : index
    %c0_302 = arith.constant 0 : index
    %2783 = vector.load %arg13[%c0_300, %c9_301, %c0_302] : memref<1x12x256xf32, #tpu.memory_space<vmem>>, vector<1x1x256xf32>
    %2784 = vector.shape_cast %2783 : vector<1x1x256xf32> to vector<256xf32>
    %2785 = vector.shape_cast %2747 : vector<256xf32> to vector<1x1x256xf32>
    tpu.vector_store %arg13[%c0_300, %c9_301, %c0_302], %2785 {strides = array<i32>} : memref<1x12x256xf32, #tpu.memory_space<vmem>>, vector<1x1x256xf32>,
    %c0_303 = arith.constant 0 : index
    %c10_304 = arith.constant 10 : index
    %c0_305 = arith.constant 0 : index
    %2786 = vector.load %arg13[%c0_303, %c10_304, %c0_305] : memref<1x12x256xf32, #tpu.memory_space<vmem>>, vector<1x1x256xf32>
    %2787 = vector.shape_cast %2786 : vector<1x1x256xf32> to vector<256xf32>
    %2788 = vector.shape_cast %2763 : vector<256xf32> to vector<1x1x256xf32>
    tpu.vector_store %arg13[%c0_303, %c10_304, %c0_305], %2788 {strides = array<i32>} : memref<1x12x256xf32, #tpu.memory_space<vmem>>, vector<1x1x256xf32>,
    %c0_306 = arith.constant 0 : index
    %c11_307 = arith.constant 11 : index
    %c0_308 = arith.constant 0 : index
    %2789 = vector.load %arg13[%c0_306, %c11_307, %c0_308] : memref<1x12x256xf32, #tpu.memory_space<vmem>>, vector<1x1x256xf32>
    %2790 = vector.shape_cast %2789 : vector<1x1x256xf32> to vector<256xf32>
    %2791 = vector.shape_cast %2779 : vector<256xf32> to vector<1x1x256xf32>
    tpu.vector_store %arg13[%c0_306, %c11_307, %c0_308], %2791 {strides = array<i32>} : memref<1x12x256xf32, #tpu.memory_space<vmem>>, vector<1x1x256xf32>,
    return
  }
  func.func @transform_0(%arg0: i32) -> (i32, i32, i32) {
    %c0_i32 = arith.constant 0 : i32
    %c0_i32_0 = arith.constant 0 : i32
    %c0_i32_1 = arith.constant 0 : i32
    return %arg0, %c0_i32, %c0_i32_0 : i32, i32, i32
  }
  func.func @transform_1(%arg0: i32) -> (i32, i32) {
    %c0_i32 = arith.constant 0 : i32
    %c0_i32_0 = arith.constant 0 : i32
    %c0_i32_1 = arith.constant 0 : i32
    return %c0_i32, %c0_i32_0 : i32, i32
  }
  func.func @transform_2(%arg0: i32) -> (i32, i32) {
    %c0_i32 = arith.constant 0 : i32
    %c0_i32_0 = arith.constant 0 : i32
    %c0_i32_1 = arith.constant 0 : i32
    return %c0_i32, %c0_i32_0 : i32, i32
  }
  func.func @transform_3(%arg0: i32) -> (i32, i32) {
    %c0_i32 = arith.constant 0 : i32
    %c0_i32_0 = arith.constant 0 : i32
    %c0_i32_1 = arith.constant 0 : i32
    return %c0_i32, %c0_i32_0 : i32, i32
  }
  func.func @transform_4(%arg0: i32) -> (i32, i32) {
    %c0_i32 = arith.constant 0 : i32
    %c0_i32_0 = arith.constant 0 : i32
    %c0_i32_1 = arith.constant 0 : i32
    return %c0_i32, %c0_i32_0 : i32, i32
  }
  func.func @transform_5(%arg0: i32) -> i32 {
    %c0_i32 = arith.constant 0 : i32
    %c0_i32_0 = arith.constant 0 : i32
    return %c0_i32 : i32
  }
  func.func @transform_6(%arg0: i32) -> (i32, i32) {
    %c0_i32 = arith.constant 0 : i32
    %c0_i32_0 = arith.constant 0 : i32
    %c0_i32_1 = arith.constant 0 : i32
    return %c0_i32, %c0_i32_0 : i32, i32
  }
  func.func @transform_7(%arg0: i32) -> (i32, i32) {
    %c0_i32 = arith.constant 0 : i32
    %c0_i32_0 = arith.constant 0 : i32
    %c0_i32_1 = arith.constant 0 : i32
    return %c0_i32, %c0_i32_0 : i32, i32
  }
  func.func @transform_8(%arg0: i32) -> i32 {
    %c0_i32 = arith.constant 0 : i32
    %c0_i32_0 = arith.constant 0 : i32
    return %c0_i32 : i32
  }
  func.func @transform_9(%arg0: i32) -> (i32, i32) {
    %c0_i32 = arith.constant 0 : i32
    %c0_i32_0 = arith.constant 0 : i32
    %c0_i32_1 = arith.constant 0 : i32
    return %c0_i32, %c0_i32_0 : i32, i32
  }
  func.func @transform_10(%arg0: i32) -> (i32, i32) {
    %c0_i32 = arith.constant 0 : i32
    %c0_i32_0 = arith.constant 0 : i32
    %c0_i32_1 = arith.constant 0 : i32
    return %c0_i32, %c0_i32_0 : i32, i32
  }
  func.func @transform_11(%arg0: i32) -> i32 {
    %c0_i32 = arith.constant 0 : i32
    %c0_i32_0 = arith.constant 0 : i32
    return %c0_i32 : i32
  }
  func.func @transform_12(%arg0: i32) -> (i32, i32, i32) {
    %c0_i32 = arith.constant 0 : i32
    %c0_i32_0 = arith.constant 0 : i32
    %c0_i32_1 = arith.constant 0 : i32
    return %arg0, %c0_i32, %c0_i32_0 : i32, i32, i32
  }
}

</mosaic_0001>

<llo_original>
// kernel: tpu_custom_call.1
$region0: #{tpu_custom_call.1}
  #allocation0 [shape = 'u32[]', space=smem, size = 0x4, offset = 0x4, fixed_abs, tag = 'smem constant byte address 0x4 - core index']
  #allocation1 [shape = 'u32[144,128]{1,0:T(1,128)}', space=vmem, size = 0x12000, scoped, tag = 'internal scratch']
  %s0 = inlined_call_operand.vmem [shape: f32[2,4,256], index: 0, kind: input, shape index: {}]
  %s1 = inlined_call_operand.vmem [shape: s32[4,256], index: 1, kind: input, shape index: {}]
  %s2 = inlined_call_operand.vmem [shape: s32[4,256], index: 2, kind: input, shape index: {}]
  %s3 = inlined_call_operand.vmem [shape: f32[4,1], index: 3, kind: input, shape index: {}]
  %s4 = inlined_call_operand.vmem [shape: f32[4,1], index: 4, kind: input, shape index: {}]
  %s5 = inlined_call_operand.vmem [shape: f32[16], index: 5, kind: input, shape index: {}]
  %s6 = inlined_call_operand.vmem [shape: f32[4,1], index: 6, kind: input, shape index: {}]
  %s7 = inlined_call_operand.vmem [shape: f32[4,1], index: 7, kind: input, shape index: {}]
  %s8 = inlined_call_operand.vmem [shape: f32[144], index: 8, kind: input, shape index: {}]
  %s9 = inlined_call_operand.vmem [shape: f32[4,1], index: 9, kind: input, shape index: {}]
  %s10 = inlined_call_operand.vmem [shape: f32[4,1], index: 10, kind: input, shape index: {}]
  %s11 = inlined_call_operand.vmem [shape: f32[400], index: 11, kind: input, shape index: {}]
  %s12 = inlined_call_operand.vmem [shape: f32[2,12,256], index: 12, kind: output, shape index: {}]
  %s13 = sld [smem:[#allocation0]]
  $region93: #{tpu_custom_call.1} parent=0
    _
  %s15 = ssub.s32 1, %s13
  %s16 = scalar_select 0, %s15, %s13
  $region1: #{tpu_custom_call.1} parent=0
    #allocation2 [shape = 'u8[512]{0}', space=smem, size = 0x200, scoped, tag = 'input window, operand 5, single buffered']
    #allocation3 [shape = 's32[2]{0}', space=sflag, size = 0x8, scoped, tag = 'scoped memory for tpu_custom_call.1']
    #allocation4 [shape = 'u8[1024]{0}', space=smem, size = 0x400, scoped, tag = 'input window, operand 8, single buffered']
    #allocation5 [shape = 's32[1]{0}', space=sflag, size = 0x4, scoped, tag = 'scoped memory for tpu_custom_call.1']
    #allocation6 [shape = 'u8[2048]{0}', space=smem, size = 0x800, scoped, tag = 'input window, operand 11, single buffered']
    %17 = vsyncpa [#allocation3], 0
    %18 = vsyncpa [#allocation5], 0
    loop: start=0, step=1, limit=4
    $region2: #{tpu_custom_call.1} parent=1 // loop_pre_header
      _
    $region3: #{tpu_custom_call.1} parent=1 // loop_header
      %s20 = sphi 0, %s24
      %p21 = scmp.ge.s32.totalorder %s20, 4
      %s30 = sphi 0, %s32
      %s33 = sphi 0, %s30
      %s34 = sphi 0, %s33
      %s50 = sphi 0, %s34
      %s54 = sphi 0, %s54
      %s56 = sphi 0, %s54
      %s57 = sphi 0, %s56
      %s71 = sphi 0, %s57
      %s75 = sphi 0, %s75
      %s77 = sphi 0, %s75
      %s78 = sphi 0, %s77
      %s92 = sphi 0, %s78
      %s96 = sphi 0, %s96
      %s98 = sphi 0, %s96
      %s99 = sphi 0, %s98
      %s113 = sphi 0, %s99
      %s117 = sphi 0, %s117
      %s119 = sphi 0, %s117
      %s120 = sphi 0, %s119
      %s134 = sphi 0, %s120
      %s138 = sphi 0, %s138
      %s140 = sphi 0, %s138
      %s141 = sphi 0, %s140
      %s155 = sphi 0, %s141
      %s159 = sphi 0, %s159
      %s161 = sphi 0, %s159
      %s162 = sphi 0, %s161
      %s176 = sphi 0, %s162
      %s180 = sphi 0, %s180
      %s182 = sphi 0, %s180
      %s183 = sphi 0, %s182
      %s197 = sphi 0, %s183
      %s201 = sphi 0, %s201
      %s203 = sphi 0, %s201
      %s204 = sphi 0, %s203
      %s218 = sphi 0, %s204
      %s222 = sphi 0, %s222
      %s224 = sphi 0, %s222
      %s225 = sphi 0, %s224
      %s239 = sphi 0, %s225
      %s243 = sphi 0, %s243
      %s245 = sphi 0, %s243
      %s246 = sphi 0, %s245
      %s260 = sphi 0, %s246
      %s264 = sphi 0, %s264
      %s266 = sphi 0, %s264
      %s267 = sphi 0, %s266
      %s281 = sphi 0, %s267
      %s287 = sphi 0, %s289
      %s290 = sphi 0, %s287
      %s291 = sphi 0, %s290
      %s307 = sphi 0, %s291
    $region4: #{tpu_custom_call.1} parent=1 // loop_header_branch
      %23 = sbr.rel (%p21) target = $region8
    $region5: #{tpu_custom_call.1} parent=1 // loop_body
      %s25 = ssub.s32 %s20, 1
      %s26 = ssub.s32 %s20, 2
      %s27 = sadd.s32 %s20, 1
      %s28 = ssub.s32 %s20, %s27
      %p29 = scmp.eq.s32.totalorder %s28, 0
      %s31 = sadd.s32 %s30, 1
      %s32 = scalar_select %p29, %s30, %s31
      %p35 = pneg %p29
      %p36 = scmp.eq.s32.totalorder %s20, 1
      %p37 = por %p35, %p36
      %p38 = scmp.ne.s32.totalorder %s30, %s33
      %p39 = scmp.eq.s32.totalorder %s20, 0
      %p40 = por %p38, %p39
      %p41 = scmp.ne.s32.totalorder %s30, %s33
      %p42 = scmp.eq.s32.totalorder %s25, 1
      %p43 = por %p41, %p42
      %p44 = scmp.ne.s32.totalorder %s33, %s34
      %p45 = scmp.eq.s32.totalorder %s25, 0
      %p46 = por %p44, %p45
      %p47 = scmp.ne.s32.totalorder %s33, %s34
      %p48 = scmp.eq.s32.totalorder %s26, 1
      %p49 = por %p47, %p48
      %p51 = scmp.ne.s32.totalorder %s34, %s50
      %p52 = scmp.eq.s32.totalorder %s26, 0
      %p53 = por %p51, %p52
      %s55 = sadd.s32 %s54, 1
      %p58 = scmp.eq.s32.totalorder %s20, 1
      %p59 = scmp.ne.s32.totalorder %s54, %s56
      %p60 = scmp.eq.s32.totalorder %s20, 0
      %p61 = por %p59, %p60
      %p62 = scmp.ne.s32.totalorder %s54, %s56
      %p63 = scmp.eq.s32.totalorder %s25, 1
      %p64 = por %p62, %p63
      %p65 = scmp.ne.s32.totalorder %s56, %s57
      %p66 = scmp.eq.s32.totalorder %s25, 0
      %p67 = por %p65, %p66
      %p68 = scmp.ne.s32.totalorder %s56, %s57
      %p69 = scmp.eq.s32.totalorder %s26, 1
      %p70 = por %p68, %p69
      %p72 = scmp.ne.s32.totalorder %s57, %s71
      %p73 = scmp.eq.s32.totalorder %s26, 0
      %p74 = por %p72, %p73
      %s76 = sadd.s32 %s75, 1
      %p79 = scmp.eq.s32.totalorder %s20, 1
      %p80 = scmp.ne.s32.totalorder %s75, %s77
      %p81 = scmp.eq.s32.totalorder %s20, 0
      %p82 = por %p80, %p81
      %p83 = scmp.ne.s32.totalorder %s75, %s77
      %p84 = scmp.eq.s32.totalorder %s25, 1
      %p85 = por %p83, %p84
      %p86 = scmp.ne.s32.totalorder %s77, %s78
      %p87 = scmp.eq.s32.totalorder %s25, 0
      %p88 = por %p86, %p87
      %p89 = scmp.ne.s32.totalorder %s77, %s78
      %p90 = scmp.eq.s32.totalorder %s26, 1
      %p91 = por %p89, %p90
      %p93 = scmp.ne.s32.totalorder %s78, %s92
      %p94 = scmp.eq.s32.totalorder %s26, 0
      %p95 = por %p93, %p94
      %s97 = sadd.s32 %s96, 1
      %p100 = scmp.eq.s32.totalorder %s20, 1
      %p101 = scmp.ne.s32.totalorder %s96, %s98
      %p102 = scmp.eq.s32.totalorder %s20, 0
      %p103 = por %p101, %p102
      %p104 = scmp.ne.s32.totalorder %s96, %s98
      %p105 = scmp.eq.s32.totalorder %s25, 1
      %p106 = por %p104, %p105
      %p107 = scmp.ne.s32.totalorder %s98, %s99
      %p108 = scmp.eq.s32.totalorder %s25, 0
      %p109 = por %p107, %p108
      %p110 = scmp.ne.s32.totalorder %s98, %s99
      %p111 = scmp.eq.s32.totalorder %s26, 1
      %p112 = por %p110, %p111
      %p114 = scmp.ne.s32.totalorder %s99, %s113
      %p115 = scmp.eq.s32.totalorder %s26, 0
      %p116 = por %p114, %p115
      %s118 = sadd.s32 %s117, 1
      %p121 = scmp.eq.s32.totalorder %s20, 1
      %p122 = scmp.ne.s32.totalorder %s117, %s119
      %p123 = scmp.eq.s32.totalorder %s20, 0
      %p124 = por %p122, %p123
      %p125 = scmp.ne.s32.totalorder %s117, %s119
      %p126 = scmp.eq.s32.totalorder %s25, 1
      %p127 = por %p125, %p126
      %p128 = scmp.ne.s32.totalorder %s119, %s120
      %p129 = scmp.eq.s32.totalorder %s25, 0
      %p130 = por %p128, %p129
      %p131 = scmp.ne.s32.totalorder %s119, %s120
      %p132 = scmp.eq.s32.totalorder %s26, 1
      %p133 = por %p131, %p132
      %p135 = scmp.ne.s32.totalorder %s120, %s134
      %p136 = scmp.eq.s32.totalorder %s26, 0
      %p137 = por %p135, %p136
      %s139 = sadd.s32 %s138, 1
      %p142 = scmp.eq.s32.totalorder %s20, 1
      %p143 = scmp.ne.s32.totalorder %s138, %s140
      %p144 = scmp.eq.s32.totalorder %s20, 0
      %p145 = por %p143, %p144
      %p146 = scmp.ne.s32.totalorder %s138, %s140
      %p147 = scmp.eq.s32.totalorder %s25, 1
      %p148 = por %p146, %p147
      %p149 = scmp.ne.s32.totalorder %s140, %s141
      %p150 = scmp.eq.s32.totalorder %s25, 0
      %p151 = por %p149, %p150
      %p152 = scmp.ne.s32.totalorder %s140, %s141
      %p153 = scmp.eq.s32.totalorder %s26, 1
      %p154 = por %p152, %p153
      %p156 = scmp.ne.s32.totalorder %s141, %s155
      %p157 = scmp.eq.s32.totalorder %s26, 0
      %p158 = por %p156, %p157
      %s160 = sadd.s32 %s159, 1
      %p163 = scmp.eq.s32.totalorder %s20, 1
      %p164 = scmp.ne.s32.totalorder %s159, %s161
      %p165 = scmp.eq.s32.totalorder %s20, 0
      %p166 = por %p164, %p165
      %p167 = scmp.ne.s32.totalorder %s159, %s161
      %p168 = scmp.eq.s32.totalorder %s25, 1
      %p169 = por %p167, %p168
      %p170 = scmp.ne.s32.totalorder %s161, %s162
      %p171 = scmp.eq.s32.totalorder %s25, 0
      %p172 = por %p170, %p171
      %p173 = scmp.ne.s32.totalorder %s161, %s162
      %p174 = scmp.eq.s32.totalorder %s26, 1
      %p175 = por %p173, %p174
      %p177 = scmp.ne.s32.totalorder %s162, %s176
      %p178 = scmp.eq.s32.totalorder %s26, 0
      %p179 = por %p177, %p178
      %s181 = sadd.s32 %s180, 1
      %p184 = scmp.eq.s32.totalorder %s20, 1
      %p185 = scmp.ne.s32.totalorder %s180, %s182
      %p186 = scmp.eq.s32.totalorder %s20, 0
      %p187 = por %p185, %p186
      %p188 = scmp.ne.s32.totalorder %s180, %s182
      %p189 = scmp.eq.s32.totalorder %s25, 1
      %p190 = por %p188, %p189
      %p191 = scmp.ne.s32.totalorder %s182, %s183
      %p192 = scmp.eq.s32.totalorder %s25, 0
      %p193 = por %p191, %p192
      %p194 = scmp.ne.s32.totalorder %s182, %s183
      %p195 = scmp.eq.s32.totalorder %s26, 1
      %p196 = por %p194, %p195
      %p198 = scmp.ne.s32.totalorder %s183, %s197
      %p199 = scmp.eq.s32.totalorder %s26, 0
      %p200 = por %p198, %p199
      %s202 = sadd.s32 %s201, 1
      %p205 = scmp.eq.s32.totalorder %s20, 1
      %p206 = scmp.ne.s32.totalorder %s201, %s203
      %p207 = scmp.eq.s32.totalorder %s20, 0
      %p208 = por %p206, %p207
      %p209 = scmp.ne.s32.totalorder %s201, %s203
      %p210 = scmp.eq.s32.totalorder %s25, 1
      %p211 = por %p209, %p210
      %p212 = scmp.ne.s32.totalorder %s203, %s204
      %p213 = scmp.eq.s32.totalorder %s25, 0
      %p214 = por %p212, %p213
      %p215 = scmp.ne.s32.totalorder %s203, %s204
      %p216 = scmp.eq.s32.totalorder %s26, 1
      %p217 = por %p215, %p216
      %p219 = scmp.ne.s32.totalorder %s204, %s218
      %p220 = scmp.eq.s32.totalorder %s26, 0
      %p221 = por %p219, %p220
      %s223 = sadd.s32 %s222, 1
      %p226 = scmp.eq.s32.totalorder %s20, 1
      %p227 = scmp.ne.s32.totalorder %s222, %s224
      %p228 = scmp.eq.s32.totalorder %s20, 0
      %p229 = por %p227, %p228
      %p230 = scmp.ne.s32.totalorder %s222, %s224
      %p231 = scmp.eq.s32.totalorder %s25, 1
      %p232 = por %p230, %p231
      %p233 = scmp.ne.s32.totalorder %s224, %s225
      %p234 = scmp.eq.s32.totalorder %s25, 0
      %p235 = por %p233, %p234
      %p236 = scmp.ne.s32.totalorder %s224, %s225
      %p237 = scmp.eq.s32.totalorder %s26, 1
      %p238 = por %p236, %p237
      %p240 = scmp.ne.s32.totalorder %s225, %s239
      %p241 = scmp.eq.s32.totalorder %s26, 0
      %p242 = por %p240, %p241
      %s244 = sadd.s32 %s243, 1
      %p247 = scmp.eq.s32.totalorder %s20, 1
      %p248 = scmp.ne.s32.totalorder %s243, %s245
      %p249 = scmp.eq.s32.totalorder %s20, 0
      %p250 = por %p248, %p249
      %p251 = scmp.ne.s32.totalorder %s243, %s245
      %p252 = scmp.eq.s32.totalorder %s25, 1
      %p253 = por %p251, %p252
      %p254 = scmp.ne.s32.totalorder %s245, %s246
      %p255 = scmp.eq.s32.totalorder %s25, 0
      %p256 = por %p254, %p255
      %p257 = scmp.ne.s32.totalorder %s245, %s246
      %p258 = scmp.eq.s32.totalorder %s26, 1
      %p259 = por %p257, %p258
      %p261 = scmp.ne.s32.totalorder %s246, %s260
      %p262 = scmp.eq.s32.totalorder %s26, 0
      %p263 = por %p261, %p262
      %s265 = sadd.s32 %s264, 1
      %p268 = scmp.eq.s32.totalorder %s20, 1
      %p269 = scmp.ne.s32.totalorder %s264, %s266
      %p270 = scmp.eq.s32.totalorder %s20, 0
      %p271 = por %p269, %p270
      %p272 = scmp.ne.s32.totalorder %s264, %s266
      %p273 = scmp.eq.s32.totalorder %s25, 1
      %p274 = por %p272, %p273
      %p275 = scmp.ne.s32.totalorder %s266, %s267
      %p276 = scmp.eq.s32.totalorder %s25, 0
      %p277 = por %p275, %p276
      %p278 = scmp.ne.s32.totalorder %s266, %s267
      %p279 = scmp.eq.s32.totalorder %s26, 1
      %p280 = por %p278, %p279
      %p282 = scmp.ne.s32.totalorder %s267, %s281
      %p283 = scmp.eq.s32.totalorder %s26, 0
      %p284 = por %p282, %p283
      %s285 = ssub.s32 %s20, %s27
      %p286 = scmp.eq.s32.totalorder %s285, 0
      %s288 = sadd.s32 %s287, 1
      %s289 = scalar_select %p286, %s287, %s288
      %p292 = pneg %p286
      %p293 = scmp.eq.s32.totalorder %s20, 1
      %p294 = por %p292, %p293
      %p295 = scmp.ne.s32.totalorder %s287, %s290
      %p296 = scmp.eq.s32.totalorder %s20, 0
      %p297 = por %p295, %p296
      %p298 = scmp.ne.s32.totalorder %s287, %s290
      %p299 = scmp.eq.s32.totalorder %s25, 1
      %p300 = por %p298, %p299
      %p301 = scmp.ne.s32.totalorder %s290, %s291
      %p302 = scmp.eq.s32.totalorder %s25, 0
      %p303 = por %p301, %p302
      %p304 = scmp.ne.s32.totalorder %s290, %s291
      %p305 = scmp.eq.s32.totalorder %s26, 1
      %p306 = por %p304, %p305
      %p308 = scmp.ne.s32.totalorder %s291, %s307
      %p309 = scmp.eq.s32.totalorder %s26, 0
      %p310 = por %p308, %p309
      %p311 = scmp.le.s32.totalorder 1, %s20
      %p312 = scmp.lt.s32.totalorder %s20, 3
      %p313 = pnand %p311, %p312
      %p314 = pneg %p313
      // Predicated region
      $region9: #{tpu_custom_call.1} parent=5 // pred_check
        _
      $region10: #{tpu_custom_call.1} parent=5 // pred_check_branch
        %316 = sbr.rel (%p313) target = $region12
      $region11: #{tpu_custom_call.1} parent=5 // pred_region
        %s317 = ssub.s32 %s20, 1
        // Predicated region
        $region13: #{tpu_custom_call.1} parent=11 // pred_check
          %p318 = pneg %p67
        $region14: #{tpu_custom_call.1} parent=11 // pred_check_branch
          %320 = sbr.rel (%p318) target = $region16
        $region15: #{tpu_custom_call.1} parent=11 // pred_region
          _
        $region16: #{tpu_custom_call.1} parent=11 // pred_fallthru
          _
        // Predicated region
        $region17: #{tpu_custom_call.1} parent=11 // pred_check
          %p321 = pneg %p88
        $region18: #{tpu_custom_call.1} parent=11 // pred_check_branch
          %323 = sbr.rel (%p321) target = $region20
        $region19: #{tpu_custom_call.1} parent=11 // pred_region
          _
        $region20: #{tpu_custom_call.1} parent=11 // pred_fallthru
          _
        // Predicated region
        $region21: #{tpu_custom_call.1} parent=11 // pred_check
          %p324 = pneg %p109
        $region22: #{tpu_custom_call.1} parent=11 // pred_check_branch
          %326 = sbr.rel (%p324) target = $region24
        $region23: #{tpu_custom_call.1} parent=11 // pred_region
          _
        $region24: #{tpu_custom_call.1} parent=11 // pred_fallthru
          _
        // Predicated region
        $region25: #{tpu_custom_call.1} parent=11 // pred_check
          %p327 = pneg %p130
        $region26: #{tpu_custom_call.1} parent=11 // pred_check_branch
          %329 = sbr.rel (%p327) target = $region28
        $region27: #{tpu_custom_call.1} parent=11 // pred_region
          _
        $region28: #{tpu_custom_call.1} parent=11 // pred_fallthru
          _
        // Predicated region
        $region29: #{tpu_custom_call.1} parent=11 // pred_check
          %p330 = pneg %p151
        $region30: #{tpu_custom_call.1} parent=11 // pred_check_branch
          %332 = sbr.rel (%p330) target = $region32
        $region31: #{tpu_custom_call.1} parent=11 // pred_region
          %s334 = ssub.s32 16, 16
          %335 = vsyncadd [#allocation3], %s334
          %s337 = sshll.u32 %s5, 4
          %s338 = int_to_ptr.vmem [resolvable:$true] %s337
          %340 = dma.vmem_to_smem %s338, 16, [#allocation2], [#allocation3]
        $region32: #{tpu_custom_call.1} parent=11 // pred_fallthru
          _
        // Predicated region
        $region33: #{tpu_custom_call.1} parent=11 // pred_check
          %p341 = pneg %p172
        $region34: #{tpu_custom_call.1} parent=11 // pred_check_branch
          %343 = sbr.rel (%p341) target = $region36
        $region35: #{tpu_custom_call.1} parent=11 // pred_region
          _
        $region36: #{tpu_custom_call.1} parent=11 // pred_fallthru
          _
        // Predicated region
        $region37: #{tpu_custom_call.1} parent=11 // pred_check
          %p344 = pneg %p193
        $region38: #{tpu_custom_call.1} parent=11 // pred_check_branch
          %346 = sbr.rel (%p344) target = $region40
        $region39: #{tpu_custom_call.1} parent=11 // pred_region
          _
        $region40: #{tpu_custom_call.1} parent=11 // pred_fallthru
          _
        // Predicated region
        $region41: #{tpu_custom_call.1} parent=11 // pred_check
          %p347 = pneg %p214
        $region42: #{tpu_custom_call.1} parent=11 // pred_check_branch
          %349 = sbr.rel (%p347) target = $region44
        $region43: #{tpu_custom_call.1} parent=11 // pred_region
          %s351 = ssub.s32 32, 32
          %352 = vsyncadd [#allocation5], %s351
          %s354 = sshll.u32 %s8, 4
          %s355 = int_to_ptr.vmem [resolvable:$true] %s354
          %357 = dma.vmem_to_smem %s355, 32, [#allocation4], [#allocation5]
        $region44: #{tpu_custom_call.1} parent=11 // pred_fallthru
          _
        // Predicated region
        $region45: #{tpu_custom_call.1} parent=11 // pred_check
          %p358 = pneg %p235
        $region46: #{tpu_custom_call.1} parent=11 // pred_check_branch
          %360 = sbr.rel (%p358) target = $region48
        $region47: #{tpu_custom_call.1} parent=11 // pred_region
          _
        $region48: #{tpu_custom_call.1} parent=11 // pred_fallthru
          _
        // Predicated region
        $region49: #{tpu_custom_call.1} parent=11 // pred_check
          %p361 = pneg %p256
        $region50: #{tpu_custom_call.1} parent=11 // pred_check_branch
          %363 = sbr.rel (%p361) target = $region52
        $region51: #{tpu_custom_call.1} parent=11 // pred_region
          _
        $region52: #{tpu_custom_call.1} parent=11 // pred_fallthru
          _
        // Predicated region
        $region53: #{tpu_custom_call.1} parent=11 // pred_check
          %p364 = pneg %p277
        $region54: #{tpu_custom_call.1} parent=11 // pred_check_branch
          %366 = sbr.rel (%p364) target = $region56
        $region55: #{tpu_custom_call.1} parent=11 // pred_region
          %s368 = ssub.s32 64, 64
          %369 = vsyncadd [#allocation5], %s368
          %s371 = sshll.u32 %s11, 4
          %s372 = int_to_ptr.vmem [resolvable:$true] %s371
          %374 = dma.vmem_to_smem %s372, 64, [#allocation6], [#allocation5]
        $region56: #{tpu_custom_call.1} parent=11 // pred_fallthru
          _
      $region12: #{tpu_custom_call.1} parent=5 // pred_fallthru
        _
      %p375 = scmp.lt.s32.totalorder %s20, 2
      // Predicated region
      $region57: #{tpu_custom_call.1} parent=5 // pred_check
        %p376 = pneg %p375
      $region58: #{tpu_custom_call.1} parent=5 // pred_check_branch
        %378 = sbr.rel (%p376) target = $region60
      $region59: #{tpu_custom_call.1} parent=5 // pred_region
        // Predicated region
        $region61: #{tpu_custom_call.1} parent=59 // pred_check
          %p379 = pneg %p40
        $region62: #{tpu_custom_call.1} parent=59 // pred_check_branch
          %381 = sbr.rel (%p379) target = $region64
        $region63: #{tpu_custom_call.1} parent=59 // pred_region
          %p382 = scmp.lt.s32.totalorder %s20, 1
          %s383 = scalar_select %p382, %s20, 1
          %s384 = smul.addr %s383, 2
          %s385 = smul.addr %s384, 4
          %s386 = scalar_lea.vmem %s0, %s385
        $region64: #{tpu_custom_call.1} parent=59 // pred_fallthru
          _
      $region60: #{tpu_custom_call.1} parent=5 // pred_fallthru
        _
      %p387 = scmp.le.s32.totalorder 1, %s20
      %p388 = scmp.lt.s32.totalorder %s20, 3
      %p389 = pnand %p387, %p388
      %p390 = pneg %p389
      // Predicated region
      $region65: #{tpu_custom_call.1} parent=5 // pred_check
        _
      $region66: #{tpu_custom_call.1} parent=5 // pred_check_branch
        %392 = sbr.rel (%p389) target = $region68
      $region67: #{tpu_custom_call.1} parent=5 // pred_region
        %s393 = ssub.s32 %s20, 1
        // Predicated region
        $region69: #{tpu_custom_call.1} parent=67 // pred_check
          %p394 = pneg %p151
        $region70: #{tpu_custom_call.1} parent=67 // pred_check_branch
          %396 = sbr.rel (%p394) target = $region72
        $region71: #{tpu_custom_call.1} parent=67 // pred_region
          %397 = dma.done [#allocation3], 16
        $region72: #{tpu_custom_call.1} parent=67 // pred_fallthru
          _
        // Predicated region
        $region73: #{tpu_custom_call.1} parent=67 // pred_check
          %p398 = pneg %p214
        $region74: #{tpu_custom_call.1} parent=67 // pred_check_branch
          %400 = sbr.rel (%p398) target = $region76
        $region75: #{tpu_custom_call.1} parent=67 // pred_region
          %401 = dma.done [#allocation5], 32
        $region76: #{tpu_custom_call.1} parent=67 // pred_fallthru
          _
        // Predicated region
        $region77: #{tpu_custom_call.1} parent=67 // pred_check
          %p402 = pneg %p277
        $region78: #{tpu_custom_call.1} parent=67 // pred_check_branch
          %404 = sbr.rel (%p402) target = $region80
        $region79: #{tpu_custom_call.1} parent=67 // pred_region
          %405 = dma.done [#allocation5], 64
        $region80: #{tpu_custom_call.1} parent=67 // pred_fallthru
          _
        %406 = sfence
        %p407 = scmp.lt.s32.totalorder %s25, 1
        %s408 = scalar_select %p407, %s25, 1
        %s409 = smul.addr %s408, 2
        %s410 = smul.addr %s409, 4
        %s411 = scalar_lea.vmem %s0, %s410
        %p412 = pneg %p46
        %p413 = pneg %p43
        %p414 = pneg %p67
        %p415 = pneg %p64
        %p416 = pneg %p88
        %p417 = pneg %p85
        %p418 = pneg %p109
        %p419 = pneg %p106
        %p420 = pneg %p130
        %p421 = pneg %p127
        %p422 = pneg %p151
        %p423 = pneg %p148
        %p424 = pneg %p172
        %p425 = pneg %p169
        %p426 = pneg %p193
        %p427 = pneg %p190
        %p428 = pneg %p214
        %p429 = pneg %p211
        %p430 = pneg %p235
        %p431 = pneg %p232
        %p432 = pneg %p256
        %p433 = pneg %p253
        %p434 = pneg %p277
        %p435 = pneg %p274
        %p436 = pneg %p303
        %p437 = pneg %p300
        %p438 = scmp.lt.s32.totalorder %s25, 1
        %s439 = scalar_select %p438, %s25, 1
        %s440 = smul.addr %s439, 4
        %s441 = smul.addr %s440, 8
        %s442 = scalar_lea.vmem %s12, %s441
        %p443 = scmp.lt.s32.totalorder %s25, 1
        %s444 = scalar_select %p443, %s25, 1
        %s445 = smul.addr %s444, 2
        %s446 = smul.addr %s445, 4
        %s447 = scalar_lea.vmem %s0, %s446
        %p448 = scmp.lt.s32.totalorder %s25, 1
        %s449 = scalar_select %p448, %s25, 1
        %s450 = smul.addr %s449, 4
        %s451 = smul.addr %s450, 8
        %s452 = scalar_lea.vmem %s12, %s451
        %v453 = vld [vmem:[%s1] sm:$0xff]
        %v454 = vld [vmem:[%s2] sm:$0xff]
        %v455 = vld [vmem:[%s447] sm:$0xff]
        %v456 = vld [vmem:[%s3] sm:$0xf]
        %458 = vset.pattern.permute.xlu0 0
        %459 = vperm.xlu0 %458, %v456
        %v460 = vpop.permute.xlu0 %459
        %v462 = vunpack.c.l.s4 839922192
        %v463 = vunpack.c.0.s8 %v462
        %v464 = vlaneseq
        %v465 = vshrl.u32 %v464, 7
        %v466 = vsub.s32 %v463, %v465
        %v467 = vrot.slane %v460, %v466
        %v469 = vmul.f32 %v455, %v467
        %v470 = vld [vmem:[%s4] sm:$0xf]
        %472 = vset.pattern.permute.xlu0 0
        %473 = vperm.xlu0 %472, %v470
        %v474 = vpop.permute.xlu0 %473
        %v476 = vunpack.c.l.s4 839922192
        %v477 = vunpack.c.0.s8 %v476
        %v478 = vlaneseq
        %v479 = vshrl.u32 %v478, 7
        %v480 = vsub.s32 %v477, %v479
        %v481 = vrot.slane %v474, %v480
        %v483 = vadd.f32 %v469, %v481
        %v484 = vmax.f32 %v483, 0.0
        %s485 = sld [smem:[#allocation2]]
        %v486 = vstv %s485
        %v487 = vmul.f32 %v486, %v484
        %s488 = sld [smem:[#allocation2 + $0x1]]
        %v489 = vstv %s488
        %v490 = vmul.f32 %v489, %v484
        %v492 = vrot.slane %v490, 5
        %v493 = vrot.slane %v492, 4
        %v495 = vadd.f32 %v487, %v493
        %s496 = sld [smem:[#allocation2 + $0x2]]
        %v497 = vstv %s496
        %v498 = vmul.f32 %v497, %v484
        %v500 = vrot.slane %v498, 6
        %v501 = vrot.slane %v500, 4
        %v503 = vadd.f32 %v495, %v501
        %s504 = sld [smem:[#allocation2 + $0x3]]
        %v505 = vstv %s504
        %v506 = vmul.f32 %v505, %v484
        %v508 = vrot.slane %v506, 7
        %v509 = vrot.slane %v508, 4
        %v511 = vadd.f32 %v503, %v509
        %s512 = sld [smem:[#allocation2 + $0x4]]
        %v513 = vstv %s512
        %v514 = vmul.f32 %v513, %v484
        %s515 = sld [smem:[#allocation2 + $0x5]]
        %v516 = vstv %s515
        %v517 = vmul.f32 %v516, %v484
        %v519 = vrot.slane %v517, 5
        %v520 = vrot.slane %v519, 4
        %v522 = vadd.f32 %v514, %v520
        %s523 = sld [smem:[#allocation2 + $0x6]]
        %v524 = vstv %s523
        %v525 = vmul.f32 %v524, %v484
        %v527 = vrot.slane %v525, 6
        %v528 = vrot.slane %v527, 4
        %v530 = vadd.f32 %v522, %v528
        %s531 = sld [smem:[#allocation2 + $0x7]]
        %v532 = vstv %s531
        %v533 = vmul.f32 %v532, %v484
        %v535 = vrot.slane %v533, 7
        %v536 = vrot.slane %v535, 4
        %v538 = vadd.f32 %v530, %v536
        %s539 = sld [smem:[#allocation2 + $0x8]]
        %v540 = vstv %s539
        %v541 = vmul.f32 %v540, %v484
        %s542 = sld [smem:[#allocation2 + $0x9]]
        %v543 = vstv %s542
        %v544 = vmul.f32 %v543, %v484
        %v546 = vrot.slane %v544, 5
        %v547 = vrot.slane %v546, 4
        %v549 = vadd.f32 %v541, %v547
        %s550 = sld [smem:[#allocation2 + $0xa]]
        %v551 = vstv %s550
        %v552 = vmul.f32 %v551, %v484
        %v554 = vrot.slane %v552, 6
        %v555 = vrot.slane %v554, 4
        %v557 = vadd.f32 %v549, %v555
        %s558 = sld [smem:[#allocation2 + $0xb]]
        %v559 = vstv %s558
        %v560 = vmul.f32 %v559, %v484
        %v562 = vrot.slane %v560, 7
        %v563 = vrot.slane %v562, 4
        %v565 = vadd.f32 %v557, %v563
        %s566 = sld [smem:[#allocation2 + $0xc]]
        %v567 = vstv %s566
        %v568 = vmul.f32 %v567, %v484
        %s569 = sld [smem:[#allocation2 + $0xd]]
        %v570 = vstv %s569
        %v571 = vmul.f32 %v570, %v484
        %v573 = vrot.slane %v571, 5
        %v574 = vrot.slane %v573, 4
        %v576 = vadd.f32 %v568, %v574
        %s577 = sld [smem:[#allocation2 + $0xe]]
        %v578 = vstv %s577
        %v579 = vmul.f32 %v578, %v484
        %v581 = vrot.slane %v579, 6
        %v582 = vrot.slane %v581, 4
        %v584 = vadd.f32 %v576, %v582
        %s585 = sld [smem:[#allocation2 + $0xf]]
        %v586 = vstv %s585
        %v587 = vmul.f32 %v586, %v484
        %v589 = vrot.slane %v587, 7
        %v590 = vrot.slane %v589, 4
        %v592 = vadd.f32 %v584, %v590
        %v595 = vunpack.c.l.s4 1966171168
        %v596 = vunpack.c.0.s8 %v595
        %v597 = vlaneseq
        %v598 = vshrl.u32 %v597, 7
        %v599 = vsub.s32 %v596, %v598
        %v600 = vrot.slane %v511, %v599
        %v602 = vunpack.c.l.s4 1966171168
        %v603 = vunpack.c.0.s8 %v602
        %v604 = vlaneseq
        %v605 = vshrl.u32 %v604, 7
        %v606 = vsub.s32 %v603, %v605
        %v607 = vrot.slane %v600, %v606
        %v609 = vlaneseq
        %vm610 = vcmp.ge.s32.totalorder %v609, 0
        %vm611 = vcmp.lt.s32.totalorder %v609, 256
        %vm612 = vmand %vm610, %vm611
        %613 = vst.msk [vmem:[%s452] ss:$8 sm:$0x3] %vm612, %v607
        %614 = vst.msk [vmem:[%s452] ss:$8 sm:$0x0] %vm612, %v607
        %v617 = vunpack.c.l.s4 1966171168
        %v618 = vunpack.c.0.s8 %v617
        %v619 = vlaneseq
        %v620 = vshrl.u32 %v619, 7
        %v621 = vsub.s32 %v618, %v620
        %v622 = vrot.slane %v538, %v621
        %v624 = vunpack.c.l.s4 1966171168
        %v625 = vunpack.c.0.s8 %v624
        %v626 = vlaneseq
        %v627 = vshrl.u32 %v626, 7
        %v628 = vsub.s32 %v625, %v627
        %v629 = vrot.slane %v622, %v628
        %s631 = scalar_lea.vmem %s452, 1
        %632 = vst.msk [vmem:[%s631] ss:$8 sm:$0x3] %vm612, %v629
        %633 = vst.msk [vmem:[%s631] ss:$8 sm:$0x0] %vm612, %v629
        %v636 = vunpack.c.l.s4 1966171168
        %v637 = vunpack.c.0.s8 %v636
        %v638 = vlaneseq
        %v639 = vshrl.u32 %v638, 7
        %v640 = vsub.s32 %v637, %v639
        %v641 = vrot.slane %v565, %v640
        %v643 = vunpack.c.l.s4 1966171168
        %v644 = vunpack.c.0.s8 %v643
        %v645 = vlaneseq
        %v646 = vshrl.u32 %v645, 7
        %v647 = vsub.s32 %v644, %v646
        %v648 = vrot.slane %v641, %v647
        %s650 = scalar_lea.vmem %s452, 2
        %651 = vst.msk [vmem:[%s650] ss:$8 sm:$0x3] %vm612, %v648
        %652 = vst.msk [vmem:[%s650] ss:$8 sm:$0x0] %vm612, %v648
        %v655 = vunpack.c.l.s4 1966171168
        %v656 = vunpack.c.0.s8 %v655
        %v657 = vlaneseq
        %v658 = vshrl.u32 %v657, 7
        %v659 = vsub.s32 %v656, %v658
        %v660 = vrot.slane %v592, %v659
        %v662 = vunpack.c.l.s4 1966171168
        %v663 = vunpack.c.0.s8 %v662
        %v664 = vlaneseq
        %v665 = vshrl.u32 %v664, 7
        %v666 = vsub.s32 %v663, %v665
        %v667 = vrot.slane %v660, %v666
        %s669 = scalar_lea.vmem %s452, 3
        %670 = vst.msk [vmem:[%s669] ss:$8 sm:$0x3] %vm612, %v667
        %671 = vst.msk [vmem:[%s669] ss:$8 sm:$0x0] %vm612, %v667
        %v672 = vld [vmem:[%s6] sm:$0xf]
        %674 = vset.pattern.permute.xlu0 0
        %675 = vperm.xlu0 %674, %v672
        %v676 = vpop.permute.xlu0 %675
        %v678 = vunpack.c.l.s4 839922192
        %v679 = vunpack.c.0.s8 %v678
        %v680 = vlaneseq
        %v681 = vshrl.u32 %v680, 7
        %v682 = vsub.s32 %v679, %v681
        %v683 = vrot.slane %v676, %v682
        %v685 = vmul.f32 %v455, %v683
        %v686 = vld [vmem:[%s7] sm:$0xf]
        %688 = vset.pattern.permute.xlu0 0
        %689 = vperm.xlu0 %688, %v686
        %v690 = vpop.permute.xlu0 %689
        %v692 = vunpack.c.l.s4 839922192
        %v693 = vunpack.c.0.s8 %v692
        %v694 = vlaneseq
        %v695 = vshrl.u32 %v694, 7
        %v696 = vsub.s32 %v693, %v695
        %v697 = vrot.slane %v690, %v696
        %v699 = vadd.f32 %v685, %v697
        %v700 = vmax.f32 %v699, 0.0
        %v702 = vcombine.high %v700, %v700
        %704 = vrot.lane.b32.xlu0 %v700, 17
        %v705 = vpop.permute.xlu0 %704
        %706 = vrot.lane.b32.xlu0 %v702, 17
        %v707 = vpop.permute.xlu0 %706
        %v708 = vlaneseq
        %v709 = vand.u32 %v708, 127
        %vm710 = vcmp.lt.s32.totalorder %v709, 17
        %v711 = vsel %vm710, %v705, %v707
        %v712 = vsel %vm710, %v707, %v705
        %vm713 = vcmp.ge.s32.totalorder %v453, 1
        %vm714 = vcmp.ge.s32.totalorder %v454, 1
        %vm715 = vmand %vm713, %vm714
        %v718 = vcombine.low %v712, %v711
        %v720 = vsel %vm715, %v718, 0.0
        %s721 = sld [smem:[#allocation4]]
        %v722 = vstv %s721
        %v723 = vmul.f32 %v722, %v720
        %s724 = sld [smem:[#allocation4 + $0x9]]
        %v725 = vstv %s724
        %v726 = vmul.f32 %v725, %v720
        %v728 = vrot.slane %v726, 5
        %v729 = vrot.slane %v728, 4
        %v731 = vadd.f32 %v723, %v729
        %s732 = sld [smem:[#allocation4 + $0x12]]
        %v733 = vstv %s732
        %v734 = vmul.f32 %v733, %v720
        %v736 = vrot.slane %v734, 6
        %v737 = vrot.slane %v736, 4
        %v739 = vadd.f32 %v731, %v737
        %s740 = sld [smem:[#allocation4 + $0x1b]]
        %v741 = vstv %s740
        %v742 = vmul.f32 %v741, %v720
        %v744 = vrot.slane %v742, 7
        %v745 = vrot.slane %v744, 4
        %v747 = vadd.f32 %v739, %v745
        %s748 = sld [smem:[#allocation4 + $0x24]]
        %v749 = vstv %s748
        %v750 = vmul.f32 %v749, %v720
        %s751 = sld [smem:[#allocation4 + $0x2d]]
        %v752 = vstv %s751
        %v753 = vmul.f32 %v752, %v720
        %v755 = vrot.slane %v753, 5
        %v756 = vrot.slane %v755, 4
        %v758 = vadd.f32 %v750, %v756
        %s759 = sld [smem:[#allocation4 + $0x36]]
        %v760 = vstv %s759
        %v761 = vmul.f32 %v760, %v720
        %v763 = vrot.slane %v761, 6
        %v764 = vrot.slane %v763, 4
        %v766 = vadd.f32 %v758, %v764
        %s767 = sld [smem:[#allocation4 + $0x3f]]
        %v768 = vstv %s767
        %v769 = vmul.f32 %v768, %v720
        %v771 = vrot.slane %v769, 7
        %v772 = vrot.slane %v771, 4
        %v774 = vadd.f32 %v766, %v772
        %s775 = sld [smem:[#allocation4 + $0x48]]
        %v776 = vstv %s775
        %v777 = vmul.f32 %v776, %v720
        %s778 = sld [smem:[#allocation4 + $0x51]]
        %v779 = vstv %s778
        %v780 = vmul.f32 %v779, %v720
        %v782 = vrot.slane %v780, 5
        %v783 = vrot.slane %v782, 4
        %v785 = vadd.f32 %v777, %v783
        %s786 = sld [smem:[#allocation4 + $0x5a]]
        %v787 = vstv %s786
        %v788 = vmul.f32 %v787, %v720
        %v790 = vrot.slane %v788, 6
        %v791 = vrot.slane %v790, 4
        %v793 = vadd.f32 %v785, %v791
        %s794 = sld [smem:[#allocation4 + $0x63]]
        %v795 = vstv %s794
        %v796 = vmul.f32 %v795, %v720
        %v798 = vrot.slane %v796, 7
        %v799 = vrot.slane %v798, 4
        %v801 = vadd.f32 %v793, %v799
        %s802 = sld [smem:[#allocation4 + $0x6c]]
        %v803 = vstv %s802
        %v804 = vmul.f32 %v803, %v720
        %s805 = sld [smem:[#allocation4 + $0x75]]
        %v806 = vstv %s805
        %v807 = vmul.f32 %v806, %v720
        %v809 = vrot.slane %v807, 5
        %v810 = vrot.slane %v809, 4
        %v812 = vadd.f32 %v804, %v810
        %s813 = sld [smem:[#allocation4 + $0x7e]]
        %v814 = vstv %s813
        %v815 = vmul.f32 %v814, %v720
        %v817 = vrot.slane %v815, 6
        %v818 = vrot.slane %v817, 4
        %v820 = vadd.f32 %v812, %v818
        %s821 = sld [smem:[#allocation4 + $0x87]]
        %v822 = vstv %s821
        %v823 = vmul.f32 %v822, %v720
        %v825 = vrot.slane %v823, 7
        %v826 = vrot.slane %v825, 4
        %v828 = vadd.f32 %v820, %v826
        %829 = vrot.lane.b32.xlu0 %v700, 16
        %v830 = vpop.permute.xlu0 %829
        %831 = vrot.lane.b32.xlu0 %v702, 16
        %v832 = vpop.permute.xlu0 %831
        %vm833 = vcmp.lt.s32.totalorder %v709, 16
        %v834 = vsel %vm833, %v830, %v832
        %v835 = vsel %vm833, %v832, %v830
        %v838 = vcombine.low %v835, %v834
        %v840 = vsel %vm713, %v838, 0.0
        %s841 = sld [smem:[#allocation4 + $0x1]]
        %v842 = vstv %s841
        %v843 = vmul.f32 %v842, %v840
        %s844 = sld [smem:[#allocation4 + $0xa]]
        %v845 = vstv %s844
        %v846 = vmul.f32 %v845, %v840
        %v848 = vrot.slane %v846, 5
        %v849 = vrot.slane %v848, 4
        %v851 = vadd.f32 %v843, %v849
        %s852 = sld [smem:[#allocation4 + $0x13]]
        %v853 = vstv %s852
        %v854 = vmul.f32 %v853, %v840
        %v856 = vrot.slane %v854, 6
        %v857 = vrot.slane %v856, 4
        %v859 = vadd.f32 %v851, %v857
        %s860 = sld [smem:[#allocation4 + $0x1c]]
        %v861 = vstv %s860
        %v862 = vmul.f32 %v861, %v840
        %v864 = vrot.slane %v862, 7
        %v865 = vrot.slane %v864, 4
        %v867 = vadd.f32 %v859, %v865
        %v868 = vadd.f32 %v747, %v867
        %s869 = sld [smem:[#allocation4 + $0x25]]
        %v870 = vstv %s869
        %v871 = vmul.f32 %v870, %v840
        %s872 = sld [smem:[#allocation4 + $0x2e]]
        %v873 = vstv %s872
        %v874 = vmul.f32 %v873, %v840
        %v876 = vrot.slane %v874, 5
        %v877 = vrot.slane %v876, 4
        %v879 = vadd.f32 %v871, %v877
        %s880 = sld [smem:[#allocation4 + $0x37]]
        %v881 = vstv %s880
        %v882 = vmul.f32 %v881, %v840
        %v884 = vrot.slane %v882, 6
        %v885 = vrot.slane %v884, 4
        %v887 = vadd.f32 %v879, %v885
        %s888 = sld [smem:[#allocation4 + $0x40]]
        %v889 = vstv %s888
        %v890 = vmul.f32 %v889, %v840
        %v892 = vrot.slane %v890, 7
        %v893 = vrot.slane %v892, 4
        %v895 = vadd.f32 %v887, %v893
        %v896 = vadd.f32 %v774, %v895
        %s897 = sld [smem:[#allocation4 + $0x49]]
        %v898 = vstv %s897
        %v899 = vmul.f32 %v898, %v840
        %s900 = sld [smem:[#allocation4 + $0x52]]
        %v901 = vstv %s900
        %v902 = vmul.f32 %v901, %v840
        %v904 = vrot.slane %v902, 5
        %v905 = vrot.slane %v904, 4
        %v907 = vadd.f32 %v899, %v905
        %s908 = sld [smem:[#allocation4 + $0x5b]]
        %v909 = vstv %s908
        %v910 = vmul.f32 %v909, %v840
        %v912 = vrot.slane %v910, 6
        %v913 = vrot.slane %v912, 4
        %v915 = vadd.f32 %v907, %v913
        %s916 = sld [smem:[#allocation4 + $0x64]]
        %v917 = vstv %s916
        %v918 = vmul.f32 %v917, %v840
        %v920 = vrot.slane %v918, 7
        %v921 = vrot.slane %v920, 4
        %v923 = vadd.f32 %v915, %v921
        %v924 = vadd.f32 %v801, %v923
        %s925 = sld [smem:[#allocation4 + $0x6d]]
        %v926 = vstv %s925
        %v927 = vmul.f32 %v926, %v840
        %s928 = sld [smem:[#allocation4 + $0x76]]
        %v929 = vstv %s928
        %v930 = vmul.f32 %v929, %v840
        %v932 = vrot.slane %v930, 5
        %v933 = vrot.slane %v932, 4
        %v935 = vadd.f32 %v927, %v933
        %s936 = sld [smem:[#allocation4 + $0x7f]]
        %v937 = vstv %s936
        %v938 = vmul.f32 %v937, %v840
        %v940 = vrot.slane %v938, 6
        %v941 = vrot.slane %v940, 4
        %v943 = vadd.f32 %v935, %v941
        %s944 = sld [smem:[#allocation4 + $0x88]]
        %v945 = vstv %s944
        %v946 = vmul.f32 %v945, %v840
        %v948 = vrot.slane %v946, 7
        %v949 = vrot.slane %v948, 4
        %v951 = vadd.f32 %v943, %v949
        %v952 = vadd.f32 %v828, %v951
        %953 = vrot.lane.b32.xlu0 %v700, 15
        %v954 = vpop.permute.xlu0 %953
        %955 = vrot.lane.b32.xlu0 %v702, 15
        %v956 = vpop.permute.xlu0 %955
        %vm957 = vcmp.lt.s32.totalorder %v709, 15
        %v958 = vsel %vm957, %v954, %v956
        %v959 = vsel %vm957, %v956, %v954
        %vm960 = vcmp.lt.s32.totalorder %v454, 15
        %vm961 = vmand %vm713, %vm960
        %v964 = vcombine.low %v959, %v958
        %v966 = vsel %vm961, %v964, 0.0
        %s967 = sld [smem:[#allocation4 + $0x2]]
        %v968 = vstv %s967
        %v969 = vmul.f32 %v968, %v966
        %s970 = sld [smem:[#allocation4 + $0xb]]
        %v971 = vstv %s970
        %v972 = vmul.f32 %v971, %v966
        %v974 = vrot.slane %v972, 5
        %v975 = vrot.slane %v974, 4
        %v977 = vadd.f32 %v969, %v975
        %s978 = sld [smem:[#allocation4 + $0x14]]
        %v979 = vstv %s978
        %v980 = vmul.f32 %v979, %v966
        %v982 = vrot.slane %v980, 6
        %v983 = vrot.slane %v982, 4
        %v985 = vadd.f32 %v977, %v983
        %s986 = sld [smem:[#allocation4 + $0x1d]]
        %v987 = vstv %s986
        %v988 = vmul.f32 %v987, %v966
        %v990 = vrot.slane %v988, 7
        %v991 = vrot.slane %v990, 4
        %v993 = vadd.f32 %v985, %v991
        %v994 = vadd.f32 %v868, %v993
        %s995 = sld [smem:[#allocation4 + $0x26]]
        %v996 = vstv %s995
        %v997 = vmul.f32 %v996, %v966
        %s998 = sld [smem:[#allocation4 + $0x2f]]
        %v999 = vstv %s998
        %v1000 = vmul.f32 %v999, %v966
        %v1002 = vrot.slane %v1000, 5
        %v1003 = vrot.slane %v1002, 4
        %v1005 = vadd.f32 %v997, %v1003
        %s1006 = sld [smem:[#allocation4 + $0x38]]
        %v1007 = vstv %s1006
        %v1008 = vmul.f32 %v1007, %v966
        %v1010 = vrot.slane %v1008, 6
        %v1011 = vrot.slane %v1010, 4
        %v1013 = vadd.f32 %v1005, %v1011
        %s1014 = sld [smem:[#allocation4 + $0x41]]
        %v1015 = vstv %s1014
        %v1016 = vmul.f32 %v1015, %v966
        %v1018 = vrot.slane %v1016, 7
        %v1019 = vrot.slane %v1018, 4
        %v1021 = vadd.f32 %v1013, %v1019
        %v1022 = vadd.f32 %v896, %v1021
        %s1023 = sld [smem:[#allocation4 + $0x4a]]
        %v1024 = vstv %s1023
        %v1025 = vmul.f32 %v1024, %v966
        %s1026 = sld [smem:[#allocation4 + $0x53]]
        %v1027 = vstv %s1026
        %v1028 = vmul.f32 %v1027, %v966
        %v1030 = vrot.slane %v1028, 5
        %v1031 = vrot.slane %v1030, 4
        %v1033 = vadd.f32 %v1025, %v1031
        %s1034 = sld [smem:[#allocation4 + $0x5c]]
        %v1035 = vstv %s1034
        %v1036 = vmul.f32 %v1035, %v966
        %v1038 = vrot.slane %v1036, 6
        %v1039 = vrot.slane %v1038, 4
        %v1041 = vadd.f32 %v1033, %v1039
        %s1042 = sld [smem:[#allocation4 + $0x65]]
        %v1043 = vstv %s1042
        %v1044 = vmul.f32 %v1043, %v966
        %v1046 = vrot.slane %v1044, 7
        %v1047 = vrot.slane %v1046, 4
        %v1049 = vadd.f32 %v1041, %v1047
        %v1050 = vadd.f32 %v924, %v1049
        %s1051 = sld [smem:[#allocation4 + $0x6e]]
        %v1052 = vstv %s1051
        %v1053 = vmul.f32 %v1052, %v966
        %s1054 = sld [smem:[#allocation4 + $0x77]]
        %v1055 = vstv %s1054
        %v1056 = vmul.f32 %v1055, %v966
        %v1058 = vrot.slane %v1056, 5
        %v1059 = vrot.slane %v1058, 4
        %v1061 = vadd.f32 %v1053, %v1059
        %s1062 = sld [smem:[#allocation4 + $0x80]]
        %v1063 = vstv %s1062
        %v1064 = vmul.f32 %v1063, %v966
        %v1066 = vrot.slane %v1064, 6
        %v1067 = vrot.slane %v1066, 4
        %v1069 = vadd.f32 %v1061, %v1067
        %s1070 = sld [smem:[#allocation4 + $0x89]]
        %v1071 = vstv %s1070
        %v1072 = vmul.f32 %v1071, %v966
        %v1074 = vrot.slane %v1072, 7
        %v1075 = vrot.slane %v1074, 4
        %v1077 = vadd.f32 %v1069, %v1075
        %v1078 = vadd.f32 %v952, %v1077
        %1079 = vrot.lane.b32.xlu0 %v700, 1
        %v1080 = vpop.permute.xlu0 %1079
        %1081 = vrot.lane.b32.xlu0 %v702, 1
        %v1082 = vpop.permute.xlu0 %1081
        %vm1083 = vcmp.lt.s32.totalorder %v709, 1
        %v1084 = vsel %vm1083, %v1080, %v1082
        %v1085 = vsel %vm1083, %v1082, %v1080
        %v1088 = vcombine.low %v1085, %v1084
        %v1090 = vsel %vm714, %v1088, 0.0
        %s1091 = sld [smem:[#allocation4 + $0x3]]
        %v1092 = vstv %s1091
        %v1093 = vmul.f32 %v1092, %v1090
        %s1094 = sld [smem:[#allocation4 + $0xc]]
        %v1095 = vstv %s1094
        %v1096 = vmul.f32 %v1095, %v1090
        %v1098 = vrot.slane %v1096, 5
        %v1099 = vrot.slane %v1098, 4
        %v1101 = vadd.f32 %v1093, %v1099
        %s1102 = sld [smem:[#allocation4 + $0x15]]
        %v1103 = vstv %s1102
        %v1104 = vmul.f32 %v1103, %v1090
        %v1106 = vrot.slane %v1104, 6
        %v1107 = vrot.slane %v1106, 4
        %v1109 = vadd.f32 %v1101, %v1107
        %s1110 = sld [smem:[#allocation4 + $0x1e]]
        %v1111 = vstv %s1110
        %v1112 = vmul.f32 %v1111, %v1090
        %v1114 = vrot.slane %v1112, 7
        %v1115 = vrot.slane %v1114, 4
        %v1117 = vadd.f32 %v1109, %v1115
        %v1118 = vadd.f32 %v994, %v1117
        %s1119 = sld [smem:[#allocation4 + $0x27]]
        %v1120 = vstv %s1119
        %v1121 = vmul.f32 %v1120, %v1090
        %s1122 = sld [smem:[#allocation4 + $0x30]]
        %v1123 = vstv %s1122
        %v1124 = vmul.f32 %v1123, %v1090
        %v1126 = vrot.slane %v1124, 5
        %v1127 = vrot.slane %v1126, 4
        %v1129 = vadd.f32 %v1121, %v1127
        %s1130 = sld [smem:[#allocation4 + $0x39]]
        %v1131 = vstv %s1130
        %v1132 = vmul.f32 %v1131, %v1090
        %v1134 = vrot.slane %v1132, 6
        %v1135 = vrot.slane %v1134, 4
        %v1137 = vadd.f32 %v1129, %v1135
        %s1138 = sld [smem:[#allocation4 + $0x42]]
        %v1139 = vstv %s1138
        %v1140 = vmul.f32 %v1139, %v1090
        %v1142 = vrot.slane %v1140, 7
        %v1143 = vrot.slane %v1142, 4
        %v1145 = vadd.f32 %v1137, %v1143
        %v1146 = vadd.f32 %v1022, %v1145
        %s1147 = sld [smem:[#allocation4 + $0x4b]]
        %v1148 = vstv %s1147
        %v1149 = vmul.f32 %v1148, %v1090
        %s1150 = sld [smem:[#allocation4 + $0x54]]
        %v1151 = vstv %s1150
        %v1152 = vmul.f32 %v1151, %v1090
        %v1154 = vrot.slane %v1152, 5
        %v1155 = vrot.slane %v1154, 4
        %v1157 = vadd.f32 %v1149, %v1155
        %s1158 = sld [smem:[#allocation4 + $0x5d]]
        %v1159 = vstv %s1158
        %v1160 = vmul.f32 %v1159, %v1090
        %v1162 = vrot.slane %v1160, 6
        %v1163 = vrot.slane %v1162, 4
        %v1165 = vadd.f32 %v1157, %v1163
        %s1166 = sld [smem:[#allocation4 + $0x66]]
        %v1167 = vstv %s1166
        %v1168 = vmul.f32 %v1167, %v1090
        %v1170 = vrot.slane %v1168, 7
        %v1171 = vrot.slane %v1170, 4
        %v1173 = vadd.f32 %v1165, %v1171
        %v1174 = vadd.f32 %v1050, %v1173
        %s1175 = sld [smem:[#allocation4 + $0x6f]]
        %v1176 = vstv %s1175
        %v1177 = vmul.f32 %v1176, %v1090
        %s1178 = sld [smem:[#allocation4 + $0x78]]
        %v1179 = vstv %s1178
        %v1180 = vmul.f32 %v1179, %v1090
        %v1182 = vrot.slane %v1180, 5
        %v1183 = vrot.slane %v1182, 4
        %v1185 = vadd.f32 %v1177, %v1183
        %s1186 = sld [smem:[#allocation4 + $0x81]]
        %v1187 = vstv %s1186
        %v1188 = vmul.f32 %v1187, %v1090
        %v1190 = vrot.slane %v1188, 6
        %v1191 = vrot.slane %v1190, 4
        %v1193 = vadd.f32 %v1185, %v1191
        %s1194 = sld [smem:[#allocation4 + $0x8a]]
        %v1195 = vstv %s1194
        %v1196 = vmul.f32 %v1195, %v1090
        %v1198 = vrot.slane %v1196, 7
        %v1199 = vrot.slane %v1198, 4
        %v1201 = vadd.f32 %v1193, %v1199
        %v1202 = vadd.f32 %v1078, %v1201
        %s1203 = sld [smem:[#allocation4 + $0x4]]
        %v1204 = vstv %s1203
        %v1205 = vmul.f32 %v1204, %v700
        %s1206 = sld [smem:[#allocation4 + $0xd]]
        %v1207 = vstv %s1206
        %v1208 = vmul.f32 %v1207, %v700
        %v1210 = vrot.slane %v1208, 5
        %v1211 = vrot.slane %v1210, 4
        %v1213 = vadd.f32 %v1205, %v1211
        %s1214 = sld [smem:[#allocation4 + $0x16]]
        %v1215 = vstv %s1214
        %v1216 = vmul.f32 %v1215, %v700
        %v1218 = vrot.slane %v1216, 6
        %v1219 = vrot.slane %v1218, 4
        %v1221 = vadd.f32 %v1213, %v1219
        %s1222 = sld [smem:[#allocation4 + $0x1f]]
        %v1223 = vstv %s1222
        %v1224 = vmul.f32 %v1223, %v700
        %v1226 = vrot.slane %v1224, 7
        %v1227 = vrot.slane %v1226, 4
        %v1229 = vadd.f32 %v1221, %v1227
        %v1230 = vadd.f32 %v1118, %v1229
        %s1231 = sld [smem:[#allocation4 + $0x28]]
        %v1232 = vstv %s1231
        %v1233 = vmul.f32 %v1232, %v700
        %s1234 = sld [smem:[#allocation4 + $0x31]]
        %v1235 = vstv %s1234
        %v1236 = vmul.f32 %v1235, %v700
        %v1238 = vrot.slane %v1236, 5
        %v1239 = vrot.slane %v1238, 4
        %v1241 = vadd.f32 %v1233, %v1239
        %s1242 = sld [smem:[#allocation4 + $0x3a]]
        %v1243 = vstv %s1242
        %v1244 = vmul.f32 %v1243, %v700
        %v1246 = vrot.slane %v1244, 6
        %v1247 = vrot.slane %v1246, 4
        %v1249 = vadd.f32 %v1241, %v1247
        %s1250 = sld [smem:[#allocation4 + $0x43]]
        %v1251 = vstv %s1250
        %v1252 = vmul.f32 %v1251, %v700
        %v1254 = vrot.slane %v1252, 7
        %v1255 = vrot.slane %v1254, 4
        %v1257 = vadd.f32 %v1249, %v1255
        %v1258 = vadd.f32 %v1146, %v1257
        %s1259 = sld [smem:[#allocation4 + $0x4c]]
        %v1260 = vstv %s1259
        %v1261 = vmul.f32 %v1260, %v700
        %s1262 = sld [smem:[#allocation4 + $0x55]]
        %v1263 = vstv %s1262
        %v1264 = vmul.f32 %v1263, %v700
        %v1266 = vrot.slane %v1264, 5
        %v1267 = vrot.slane %v1266, 4
        %v1269 = vadd.f32 %v1261, %v1267
        %s1270 = sld [smem:[#allocation4 + $0x5e]]
        %v1271 = vstv %s1270
        %v1272 = vmul.f32 %v1271, %v700
        %v1274 = vrot.slane %v1272, 6
        %v1275 = vrot.slane %v1274, 4
        %v1277 = vadd.f32 %v1269, %v1275
        %s1278 = sld [smem:[#allocation4 + $0x67]]
        %v1279 = vstv %s1278
        %v1280 = vmul.f32 %v1279, %v700
        %v1282 = vrot.slane %v1280, 7
        %v1283 = vrot.slane %v1282, 4
        %v1285 = vadd.f32 %v1277, %v1283
        %v1286 = vadd.f32 %v1174, %v1285
        %s1287 = sld [smem:[#allocation4 + $0x70]]
        %v1288 = vstv %s1287
        %v1289 = vmul.f32 %v1288, %v700
        %s1290 = sld [smem:[#allocation4 + $0x79]]
        %v1291 = vstv %s1290
        %v1292 = vmul.f32 %v1291, %v700
        %v1294 = vrot.slane %v1292, 5
        %v1295 = vrot.slane %v1294, 4
        %v1297 = vadd.f32 %v1289, %v1295
        %s1298 = sld [smem:[#allocation4 + $0x82]]
        %v1299 = vstv %s1298
        %v1300 = vmul.f32 %v1299, %v700
        %v1302 = vrot.slane %v1300, 6
        %v1303 = vrot.slane %v1302, 4
        %v1305 = vadd.f32 %v1297, %v1303
        %s1306 = sld [smem:[#allocation4 + $0x8b]]
        %v1307 = vstv %s1306
        %v1308 = vmul.f32 %v1307, %v700
        %v1310 = vrot.slane %v1308, 7
        %v1311 = vrot.slane %v1310, 4
        %v1313 = vadd.f32 %v1305, %v1311
        %v1314 = vadd.f32 %v1202, %v1313
        %1315 = vrot.lane.b32.xlu0 %v700, 127
        %v1316 = vpop.permute.xlu0 %1315
        %1317 = vrot.lane.b32.xlu0 %v702, 127
        %v1318 = vpop.permute.xlu0 %1317
        %vm1319 = vcmp.lt.s32.totalorder %v709, 127
        %v1320 = vsel %vm1319, %v1316, %v1318
        %v1321 = vsel %vm1319, %v1318, %v1316
        %v1324 = vcombine.low %v1320, %v1321
        %v1326 = vsel %vm960, %v1324, 0.0
        %s1327 = sld [smem:[#allocation4 + $0x5]]
        %v1328 = vstv %s1327
        %v1329 = vmul.f32 %v1328, %v1326
        %s1330 = sld [smem:[#allocation4 + $0xe]]
        %v1331 = vstv %s1330
        %v1332 = vmul.f32 %v1331, %v1326
        %v1334 = vrot.slane %v1332, 5
        %v1335 = vrot.slane %v1334, 4
        %v1337 = vadd.f32 %v1329, %v1335
        %s1338 = sld [smem:[#allocation4 + $0x17]]
        %v1339 = vstv %s1338
        %v1340 = vmul.f32 %v1339, %v1326
        %v1342 = vrot.slane %v1340, 6
        %v1343 = vrot.slane %v1342, 4
        %v1345 = vadd.f32 %v1337, %v1343
        %s1346 = sld [smem:[#allocation4 + $0x20]]
        %v1347 = vstv %s1346
        %v1348 = vmul.f32 %v1347, %v1326
        %v1350 = vrot.slane %v1348, 7
        %v1351 = vrot.slane %v1350, 4
        %v1353 = vadd.f32 %v1345, %v1351
        %v1354 = vadd.f32 %v1230, %v1353
        %s1355 = sld [smem:[#allocation4 + $0x29]]
        %v1356 = vstv %s1355
        %v1357 = vmul.f32 %v1356, %v1326
        %s1358 = sld [smem:[#allocation4 + $0x32]]
        %v1359 = vstv %s1358
        %v1360 = vmul.f32 %v1359, %v1326
        %v1362 = vrot.slane %v1360, 5
        %v1363 = vrot.slane %v1362, 4
        %v1365 = vadd.f32 %v1357, %v1363
        %s1366 = sld [smem:[#allocation4 + $0x3b]]
        %v1367 = vstv %s1366
        %v1368 = vmul.f32 %v1367, %v1326
        %v1370 = vrot.slane %v1368, 6
        %v1371 = vrot.slane %v1370, 4
        %v1373 = vadd.f32 %v1365, %v1371
        %s1374 = sld [smem:[#allocation4 + $0x44]]
        %v1375 = vstv %s1374
        %v1376 = vmul.f32 %v1375, %v1326
        %v1378 = vrot.slane %v1376, 7
        %v1379 = vrot.slane %v1378, 4
        %v1381 = vadd.f32 %v1373, %v1379
        %v1382 = vadd.f32 %v1258, %v1381
        %s1383 = sld [smem:[#allocation4 + $0x4d]]
        %v1384 = vstv %s1383
        %v1385 = vmul.f32 %v1384, %v1326
        %s1386 = sld [smem:[#allocation4 + $0x56]]
        %v1387 = vstv %s1386
        %v1388 = vmul.f32 %v1387, %v1326
        %v1390 = vrot.slane %v1388, 5
        %v1391 = vrot.slane %v1390, 4
        %v1393 = vadd.f32 %v1385, %v1391
        %s1394 = sld [smem:[#allocation4 + $0x5f]]
        %v1395 = vstv %s1394
        %v1396 = vmul.f32 %v1395, %v1326
        %v1398 = vrot.slane %v1396, 6
        %v1399 = vrot.slane %v1398, 4
        %v1401 = vadd.f32 %v1393, %v1399
        %s1402 = sld [smem:[#allocation4 + $0x68]]
        %v1403 = vstv %s1402
        %v1404 = vmul.f32 %v1403, %v1326
        %v1406 = vrot.slane %v1404, 7
        %v1407 = vrot.slane %v1406, 4
        %v1409 = vadd.f32 %v1401, %v1407
        %v1410 = vadd.f32 %v1286, %v1409
        %s1411 = sld [smem:[#allocation4 + $0x71]]
        %v1412 = vstv %s1411
        %v1413 = vmul.f32 %v1412, %v1326
        %s1414 = sld [smem:[#allocation4 + $0x7a]]
        %v1415 = vstv %s1414
        %v1416 = vmul.f32 %v1415, %v1326
        %v1418 = vrot.slane %v1416, 5
        %v1419 = vrot.slane %v1418, 4
        %v1421 = vadd.f32 %v1413, %v1419
        %s1422 = sld [smem:[#allocation4 + $0x83]]
        %v1423 = vstv %s1422
        %v1424 = vmul.f32 %v1423, %v1326
        %v1426 = vrot.slane %v1424, 6
        %v1427 = vrot.slane %v1426, 4
        %v1429 = vadd.f32 %v1421, %v1427
        %s1430 = sld [smem:[#allocation4 + $0x8c]]
        %v1431 = vstv %s1430
        %v1432 = vmul.f32 %v1431, %v1326
        %v1434 = vrot.slane %v1432, 7
        %v1435 = vrot.slane %v1434, 4
        %v1437 = vadd.f32 %v1429, %v1435
        %v1438 = vadd.f32 %v1314, %v1437
        %1439 = vrot.lane.b32.xlu0 %v700, 113
        %v1440 = vpop.permute.xlu0 %1439
        %1441 = vrot.lane.b32.xlu0 %v702, 113
        %v1442 = vpop.permute.xlu0 %1441
        %vm1443 = vcmp.lt.s32.totalorder %v709, 113
        %v1444 = vsel %vm1443, %v1440, %v1442
        %v1445 = vsel %vm1443, %v1442, %v1440
        %vm1446 = vcmp.lt.s32.totalorder %v453, 15
        %vm1447 = vmand %vm1446, %vm714
        %v1450 = vcombine.low %v1444, %v1445
        %v1452 = vsel %vm1447, %v1450, 0.0
        %s1453 = sld [smem:[#allocation4 + $0x6]]
        %v1454 = vstv %s1453
        %v1455 = vmul.f32 %v1454, %v1452
        %s1456 = sld [smem:[#allocation4 + $0xf]]
        %v1457 = vstv %s1456
        %v1458 = vmul.f32 %v1457, %v1452
        %v1460 = vrot.slane %v1458, 5
        %v1461 = vrot.slane %v1460, 4
        %v1463 = vadd.f32 %v1455, %v1461
        %s1464 = sld [smem:[#allocation4 + $0x18]]
        %v1465 = vstv %s1464
        %v1466 = vmul.f32 %v1465, %v1452
        %v1468 = vrot.slane %v1466, 6
        %v1469 = vrot.slane %v1468, 4
        %v1471 = vadd.f32 %v1463, %v1469
        %s1472 = sld [smem:[#allocation4 + $0x21]]
        %v1473 = vstv %s1472
        %v1474 = vmul.f32 %v1473, %v1452
        %v1476 = vrot.slane %v1474, 7
        %v1477 = vrot.slane %v1476, 4
        %v1479 = vadd.f32 %v1471, %v1477
        %v1480 = vadd.f32 %v1354, %v1479
        %s1481 = sld [smem:[#allocation4 + $0x2a]]
        %v1482 = vstv %s1481
        %v1483 = vmul.f32 %v1482, %v1452
        %s1484 = sld [smem:[#allocation4 + $0x33]]
        %v1485 = vstv %s1484
        %v1486 = vmul.f32 %v1485, %v1452
        %v1488 = vrot.slane %v1486, 5
        %v1489 = vrot.slane %v1488, 4
        %v1491 = vadd.f32 %v1483, %v1489
        %s1492 = sld [smem:[#allocation4 + $0x3c]]
        %v1493 = vstv %s1492
        %v1494 = vmul.f32 %v1493, %v1452
        %v1496 = vrot.slane %v1494, 6
        %v1497 = vrot.slane %v1496, 4
        %v1499 = vadd.f32 %v1491, %v1497
        %s1500 = sld [smem:[#allocation4 + $0x45]]
        %v1501 = vstv %s1500
        %v1502 = vmul.f32 %v1501, %v1452
        %v1504 = vrot.slane %v1502, 7
        %v1505 = vrot.slane %v1504, 4
        %v1507 = vadd.f32 %v1499, %v1505
        %v1508 = vadd.f32 %v1382, %v1507
        %s1509 = sld [smem:[#allocation4 + $0x4e]]
        %v1510 = vstv %s1509
        %v1511 = vmul.f32 %v1510, %v1452
        %s1512 = sld [smem:[#allocation4 + $0x57]]
        %v1513 = vstv %s1512
        %v1514 = vmul.f32 %v1513, %v1452
        %v1516 = vrot.slane %v1514, 5
        %v1517 = vrot.slane %v1516, 4
        %v1519 = vadd.f32 %v1511, %v1517
        %s1520 = sld [smem:[#allocation4 + $0x60]]
        %v1521 = vstv %s1520
        %v1522 = vmul.f32 %v1521, %v1452
        %v1524 = vrot.slane %v1522, 6
        %v1525 = vrot.slane %v1524, 4
        %v1527 = vadd.f32 %v1519, %v1525
        %s1528 = sld [smem:[#allocation4 + $0x69]]
        %v1529 = vstv %s1528
        %v1530 = vmul.f32 %v1529, %v1452
        %v1532 = vrot.slane %v1530, 7
        %v1533 = vrot.slane %v1532, 4
        %v1535 = vadd.f32 %v1527, %v1533
        %v1536 = vadd.f32 %v1410, %v1535
        %s1537 = sld [smem:[#allocation4 + $0x72]]
        %v1538 = vstv %s1537
        %v1539 = vmul.f32 %v1538, %v1452
        %s1540 = sld [smem:[#allocation4 + $0x7b]]
        %v1541 = vstv %s1540
        %v1542 = vmul.f32 %v1541, %v1452
        %v1544 = vrot.slane %v1542, 5
        %v1545 = vrot.slane %v1544, 4
        %v1547 = vadd.f32 %v1539, %v1545
        %s1548 = sld [smem:[#allocation4 + $0x84]]
        %v1549 = vstv %s1548
        %v1550 = vmul.f32 %v1549, %v1452
        %v1552 = vrot.slane %v1550, 6
        %v1553 = vrot.slane %v1552, 4
        %v1555 = vadd.f32 %v1547, %v1553
        %s1556 = sld [smem:[#allocation4 + $0x8d]]
        %v1557 = vstv %s1556
        %v1558 = vmul.f32 %v1557, %v1452
        %v1560 = vrot.slane %v1558, 7
        %v1561 = vrot.slane %v1560, 4
        %v1563 = vadd.f32 %v1555, %v1561
        %v1564 = vadd.f32 %v1438, %v1563
        %1565 = vrot.lane.b32.xlu0 %v700, 112
        %v1566 = vpop.permute.xlu0 %1565
        %1567 = vrot.lane.b32.xlu0 %v702, 112
        %v1568 = vpop.permute.xlu0 %1567
        %vm1569 = vcmp.lt.s32.totalorder %v709, 112
        %v1570 = vsel %vm1569, %v1566, %v1568
        %v1571 = vsel %vm1569, %v1568, %v1566
        %v1574 = vcombine.low %v1570, %v1571
        %v1576 = vsel %vm1446, %v1574, 0.0
        %s1577 = sld [smem:[#allocation4 + $0x7]]
        %v1578 = vstv %s1577
        %v1579 = vmul.f32 %v1578, %v1576
        %s1580 = sld [smem:[#allocation4 + $0x10]]
        %v1581 = vstv %s1580
        %v1582 = vmul.f32 %v1581, %v1576
        %v1584 = vrot.slane %v1582, 5
        %v1585 = vrot.slane %v1584, 4
        %v1587 = vadd.f32 %v1579, %v1585
        %s1588 = sld [smem:[#allocation4 + $0x19]]
        %v1589 = vstv %s1588
        %v1590 = vmul.f32 %v1589, %v1576
        %v1592 = vrot.slane %v1590, 6
        %v1593 = vrot.slane %v1592, 4
        %v1595 = vadd.f32 %v1587, %v1593
        %s1596 = sld [smem:[#allocation4 + $0x22]]
        %v1597 = vstv %s1596
        %v1598 = vmul.f32 %v1597, %v1576
        %v1600 = vrot.slane %v1598, 7
        %v1601 = vrot.slane %v1600, 4
        %v1603 = vadd.f32 %v1595, %v1601
        %v1604 = vadd.f32 %v1480, %v1603
        %s1605 = sld [smem:[#allocation4 + $0x2b]]
        %v1606 = vstv %s1605
        %v1607 = vmul.f32 %v1606, %v1576
        %s1608 = sld [smem:[#allocation4 + $0x34]]
        %v1609 = vstv %s1608
        %v1610 = vmul.f32 %v1609, %v1576
        %v1612 = vrot.slane %v1610, 5
        %v1613 = vrot.slane %v1612, 4
        %v1615 = vadd.f32 %v1607, %v1613
        %s1616 = sld [smem:[#allocation4 + $0x3d]]
        %v1617 = vstv %s1616
        %v1618 = vmul.f32 %v1617, %v1576
        %v1620 = vrot.slane %v1618, 6
        %v1621 = vrot.slane %v1620, 4
        %v1623 = vadd.f32 %v1615, %v1621
        %s1624 = sld [smem:[#allocation4 + $0x46]]
        %v1625 = vstv %s1624
        %v1626 = vmul.f32 %v1625, %v1576
        %v1628 = vrot.slane %v1626, 7
        %v1629 = vrot.slane %v1628, 4
        %v1631 = vadd.f32 %v1623, %v1629
        %v1632 = vadd.f32 %v1508, %v1631
        %s1633 = sld [smem:[#allocation4 + $0x4f]]
        %v1634 = vstv %s1633
        %v1635 = vmul.f32 %v1634, %v1576
        %s1636 = sld [smem:[#allocation4 + $0x58]]
        %v1637 = vstv %s1636
        %v1638 = vmul.f32 %v1637, %v1576
        %v1640 = vrot.slane %v1638, 5
        %v1641 = vrot.slane %v1640, 4
        %v1643 = vadd.f32 %v1635, %v1641
        %s1644 = sld [smem:[#allocation4 + $0x61]]
        %v1645 = vstv %s1644
        %v1646 = vmul.f32 %v1645, %v1576
        %v1648 = vrot.slane %v1646, 6
        %v1649 = vrot.slane %v1648, 4
        %v1651 = vadd.f32 %v1643, %v1649
        %s1652 = sld [smem:[#allocation4 + $0x6a]]
        %v1653 = vstv %s1652
        %v1654 = vmul.f32 %v1653, %v1576
        %v1656 = vrot.slane %v1654, 7
        %v1657 = vrot.slane %v1656, 4
        %v1659 = vadd.f32 %v1651, %v1657
        %v1660 = vadd.f32 %v1536, %v1659
        %s1661 = sld [smem:[#allocation4 + $0x73]]
        %v1662 = vstv %s1661
        %v1663 = vmul.f32 %v1662, %v1576
        %s1664 = sld [smem:[#allocation4 + $0x7c]]
        %v1665 = vstv %s1664
        %v1666 = vmul.f32 %v1665, %v1576
        %v1668 = vrot.slane %v1666, 5
        %v1669 = vrot.slane %v1668, 4
        %v1671 = vadd.f32 %v1663, %v1669
        %s1672 = sld [smem:[#allocation4 + $0x85]]
        %v1673 = vstv %s1672
        %v1674 = vmul.f32 %v1673, %v1576
        %v1676 = vrot.slane %v1674, 6
        %v1677 = vrot.slane %v1676, 4
        %v1679 = vadd.f32 %v1671, %v1677
        %s1680 = sld [smem:[#allocation4 + $0x8e]]
        %v1681 = vstv %s1680
        %v1682 = vmul.f32 %v1681, %v1576
        %v1684 = vrot.slane %v1682, 7
        %v1685 = vrot.slane %v1684, 4
        %v1687 = vadd.f32 %v1679, %v1685
        %v1688 = vadd.f32 %v1564, %v1687
        %1689 = vrot.lane.b32.xlu0 %v700, 111
        %v1690 = vpop.permute.xlu0 %1689
        %1691 = vrot.lane.b32.xlu0 %v702, 111
        %v1692 = vpop.permute.xlu0 %1691
        %vm1693 = vcmp.lt.s32.totalorder %v709, 111
        %v1694 = vsel %vm1693, %v1690, %v1692
        %v1695 = vsel %vm1693, %v1692, %v1690
        %vm1696 = vmand %vm1446, %vm960
        %v1699 = vcombine.low %v1694, %v1695
        %v1701 = vsel %vm1696, %v1699, 0.0
        %s1702 = sld [smem:[#allocation4 + $0x8]]
        %v1703 = vstv %s1702
        %v1704 = vmul.f32 %v1703, %v1701
        %s1705 = sld [smem:[#allocation4 + $0x11]]
        %v1706 = vstv %s1705
        %v1707 = vmul.f32 %v1706, %v1701
        %v1709 = vrot.slane %v1707, 5
        %v1710 = vrot.slane %v1709, 4
        %v1712 = vadd.f32 %v1704, %v1710
        %s1713 = sld [smem:[#allocation4 + $0x1a]]
        %v1714 = vstv %s1713
        %v1715 = vmul.f32 %v1714, %v1701
        %v1717 = vrot.slane %v1715, 6
        %v1718 = vrot.slane %v1717, 4
        %v1720 = vadd.f32 %v1712, %v1718
        %s1721 = sld [smem:[#allocation4 + $0x23]]
        %v1722 = vstv %s1721
        %v1723 = vmul.f32 %v1722, %v1701
        %v1725 = vrot.slane %v1723, 7
        %v1726 = vrot.slane %v1725, 4
        %v1728 = vadd.f32 %v1720, %v1726
        %v1729 = vadd.f32 %v1604, %v1728
        %s1730 = sld [smem:[#allocation4 + $0x2c]]
        %v1731 = vstv %s1730
        %v1732 = vmul.f32 %v1731, %v1701
        %s1733 = sld [smem:[#allocation4 + $0x35]]
        %v1734 = vstv %s1733
        %v1735 = vmul.f32 %v1734, %v1701
        %v1737 = vrot.slane %v1735, 5
        %v1738 = vrot.slane %v1737, 4
        %v1740 = vadd.f32 %v1732, %v1738
        %s1741 = sld [smem:[#allocation4 + $0x3e]]
        %v1742 = vstv %s1741
        %v1743 = vmul.f32 %v1742, %v1701
        %v1745 = vrot.slane %v1743, 6
        %v1746 = vrot.slane %v1745, 4
        %v1748 = vadd.f32 %v1740, %v1746
        %s1749 = sld [smem:[#allocation4 + $0x47]]
        %v1750 = vstv %s1749
        %v1751 = vmul.f32 %v1750, %v1701
        %v1753 = vrot.slane %v1751, 7
        %v1754 = vrot.slane %v1753, 4
        %v1756 = vadd.f32 %v1748, %v1754
        %v1757 = vadd.f32 %v1632, %v1756
        %s1758 = sld [smem:[#allocation4 + $0x50]]
        %v1759 = vstv %s1758
        %v1760 = vmul.f32 %v1759, %v1701
        %s1761 = sld [smem:[#allocation4 + $0x59]]
        %v1762 = vstv %s1761
        %v1763 = vmul.f32 %v1762, %v1701
        %v1765 = vrot.slane %v1763, 5
        %v1766 = vrot.slane %v1765, 4
        %v1768 = vadd.f32 %v1760, %v1766
        %s1769 = sld [smem:[#allocation4 + $0x62]]
        %v1770 = vstv %s1769
        %v1771 = vmul.f32 %v1770, %v1701
        %v1773 = vrot.slane %v1771, 6
        %v1774 = vrot.slane %v1773, 4
        %v1776 = vadd.f32 %v1768, %v1774
        %s1777 = sld [smem:[#allocation4 + $0x6b]]
        %v1778 = vstv %s1777
        %v1779 = vmul.f32 %v1778, %v1701
        %v1781 = vrot.slane %v1779, 7
        %v1782 = vrot.slane %v1781, 4
        %v1784 = vadd.f32 %v1776, %v1782
        %v1785 = vadd.f32 %v1660, %v1784
        %s1786 = sld [smem:[#allocation4 + $0x74]]
        %v1787 = vstv %s1786
        %v1788 = vmul.f32 %v1787, %v1701
        %s1789 = sld [smem:[#allocation4 + $0x7d]]
        %v1790 = vstv %s1789
        %v1791 = vmul.f32 %v1790, %v1701
        %v1793 = vrot.slane %v1791, 5
        %v1794 = vrot.slane %v1793, 4
        %v1796 = vadd.f32 %v1788, %v1794
        %s1797 = sld [smem:[#allocation4 + $0x86]]
        %v1798 = vstv %s1797
        %v1799 = vmul.f32 %v1798, %v1701
        %v1801 = vrot.slane %v1799, 6
        %v1802 = vrot.slane %v1801, 4
        %v1804 = vadd.f32 %v1796, %v1802
        %s1805 = sld [smem:[#allocation4 + $0x8f]]
        %v1806 = vstv %s1805
        %v1807 = vmul.f32 %v1806, %v1701
        %v1809 = vrot.slane %v1807, 7
        %v1810 = vrot.slane %v1809, 4
        %v1812 = vadd.f32 %v1804, %v1810
        %v1813 = vadd.f32 %v1688, %v1812
        %v1816 = vunpack.c.l.s4 1966171168
        %v1817 = vunpack.c.0.s8 %v1816
        %v1818 = vlaneseq
        %v1819 = vshrl.u32 %v1818, 7
        %v1820 = vsub.s32 %v1817, %v1819
        %v1821 = vrot.slane %v1729, %v1820
        %v1823 = vunpack.c.l.s4 1966171168
        %v1824 = vunpack.c.0.s8 %v1823
        %v1825 = vlaneseq
        %v1826 = vshrl.u32 %v1825, 7
        %v1827 = vsub.s32 %v1824, %v1826
        %v1828 = vrot.slane %v1821, %v1827
        %s1830 = scalar_lea.vmem %s452, 4
        %1831 = vst.msk [vmem:[%s1830] ss:$8 sm:$0x3] %vm612, %v1828
        %1832 = vst.msk [vmem:[%s1830] ss:$8 sm:$0x0] %vm612, %v1828
        %v1835 = vunpack.c.l.s4 1966171168
        %v1836 = vunpack.c.0.s8 %v1835
        %v1837 = vlaneseq
        %v1838 = vshrl.u32 %v1837, 7
        %v1839 = vsub.s32 %v1836, %v1838
        %v1840 = vrot.slane %v1757, %v1839
        %v1842 = vunpack.c.l.s4 1966171168
        %v1843 = vunpack.c.0.s8 %v1842
        %v1844 = vlaneseq
        %v1845 = vshrl.u32 %v1844, 7
        %v1846 = vsub.s32 %v1843, %v1845
        %v1847 = vrot.slane %v1840, %v1846
        %s1849 = scalar_lea.vmem %s452, 5
        %1850 = vst.msk [vmem:[%s1849] ss:$8 sm:$0x3] %vm612, %v1847
        %1851 = vst.msk [vmem:[%s1849] ss:$8 sm:$0x0] %vm612, %v1847
        %v1854 = vunpack.c.l.s4 1966171168
        %v1855 = vunpack.c.0.s8 %v1854
        %v1856 = vlaneseq
        %v1857 = vshrl.u32 %v1856, 7
        %v1858 = vsub.s32 %v1855, %v1857
        %v1859 = vrot.slane %v1785, %v1858
        %v1861 = vunpack.c.l.s4 1966171168
        %v1862 = vunpack.c.0.s8 %v1861
        %v1863 = vlaneseq
        %v1864 = vshrl.u32 %v1863, 7
        %v1865 = vsub.s32 %v1862, %v1864
        %v1866 = vrot.slane %v1859, %v1865
        %s1868 = scalar_lea.vmem %s452, 6
        %1869 = vst.msk [vmem:[%s1868] ss:$8 sm:$0x3] %vm612, %v1866
        %1870 = vst.msk [vmem:[%s1868] ss:$8 sm:$0x0] %vm612, %v1866
        %v1873 = vunpack.c.l.s4 1966171168
        %v1874 = vunpack.c.0.s8 %v1873
        %v1875 = vlaneseq
        %v1876 = vshrl.u32 %v1875, 7
        %v1877 = vsub.s32 %v1874, %v1876
        %v1878 = vrot.slane %v1813, %v1877
        %v1880 = vunpack.c.l.s4 1966171168
        %v1881 = vunpack.c.0.s8 %v1880
        %v1882 = vlaneseq
        %v1883 = vshrl.u32 %v1882, 7
        %v1884 = vsub.s32 %v1881, %v1883
        %v1885 = vrot.slane %v1878, %v1884
        %s1887 = scalar_lea.vmem %s452, 7
        %1888 = vst.msk [vmem:[%s1887] ss:$8 sm:$0x3] %vm612, %v1885
        %1889 = vst.msk [vmem:[%s1887] ss:$8 sm:$0x0] %vm612, %v1885
        %v1890 = vld [vmem:[%s9] sm:$0xf]
        %1892 = vset.pattern.permute.xlu0 0
        %1893 = vperm.xlu0 %1892, %v1890
        %v1894 = vpop.permute.xlu0 %1893
        %v1896 = vunpack.c.l.s4 839922192
        %v1897 = vunpack.c.0.s8 %v1896
        %v1898 = vlaneseq
        %v1899 = vshrl.u32 %v1898, 7
        %v1900 = vsub.s32 %v1897, %v1899
        %v1901 = vrot.slane %v1894, %v1900
        %v1903 = vmul.f32 %v455, %v1901
        %v1904 = vld [vmem:[%s10] sm:$0xf]
        %1906 = vset.pattern.permute.xlu0 0
        %1907 = vperm.xlu0 %1906, %v1904
        %v1908 = vpop.permute.xlu0 %1907
        %v1910 = vunpack.c.l.s4 839922192
        %v1911 = vunpack.c.0.s8 %v1910
        %v1912 = vlaneseq
        %v1913 = vshrl.u32 %v1912, 7
        %v1914 = vsub.s32 %v1911, %v1913
        %v1915 = vrot.slane %v1908, %v1914
        %v1917 = vadd.f32 %v1903, %v1915
        %v1918 = vmax.f32 %v1917, 0.0
        %v1920 = vcombine.high %v1918, %v1918
        %1922 = vrot.lane.b32.xlu0 %v1918, 34
        %v1923 = vpop.permute.xlu0 %1922
        %1924 = vrot.lane.b32.xlu0 %v1920, 34
        %v1925 = vpop.permute.xlu0 %1924
        %vm1926 = vcmp.lt.s32.totalorder %v709, 34
        %v1927 = vsel %vm1926, %v1923, %v1925
        %v1928 = vsel %vm1926, %v1925, %v1923
        %vm1929 = vcmp.ge.s32.totalorder %v453, 2
        %vm1930 = vcmp.ge.s32.totalorder %v454, 2
        %vm1931 = vmand %vm1929, %vm1930
        %v1934 = vcombine.low %v1928, %v1927
        %v1936 = vsel %vm1931, %v1934, 0.0
        %s1937 = sld [smem:[#allocation6]]
        %v1938 = vstv %s1937
        %v1939 = vmul.f32 %v1938, %v1936
        %s1940 = sld [smem:[#allocation6 + $0x19]]
        %v1941 = vstv %s1940
        %v1942 = vmul.f32 %v1941, %v1936
        %v1944 = vrot.slane %v1942, 5
        %v1945 = vrot.slane %v1944, 4
        %v1947 = vadd.f32 %v1939, %v1945
        %s1948 = sld [smem:[#allocation6 + $0x32]]
        %v1949 = vstv %s1948
        %v1950 = vmul.f32 %v1949, %v1936
        %v1952 = vrot.slane %v1950, 6
        %v1953 = vrot.slane %v1952, 4
        %v1955 = vadd.f32 %v1947, %v1953
        %s1956 = sld [smem:[#allocation6 + $0x4b]]
        %v1957 = vstv %s1956
        %v1958 = vmul.f32 %v1957, %v1936
        %v1960 = vrot.slane %v1958, 7
        %v1961 = vrot.slane %v1960, 4
        %v1963 = vadd.f32 %v1955, %v1961
        %s1964 = sld [smem:[#allocation6 + $0x64]]
        %v1965 = vstv %s1964
        %v1966 = vmul.f32 %v1965, %v1936
        %s1967 = sld [smem:[#allocation6 + $0x7d]]
        %v1968 = vstv %s1967
        %v1969 = vmul.f32 %v1968, %v1936
        %v1971 = vrot.slane %v1969, 5
        %v1972 = vrot.slane %v1971, 4
        %v1974 = vadd.f32 %v1966, %v1972
        %s1975 = sld [smem:[#allocation6 + $0x96]]
        %v1976 = vstv %s1975
        %v1977 = vmul.f32 %v1976, %v1936
        %v1979 = vrot.slane %v1977, 6
        %v1980 = vrot.slane %v1979, 4
        %v1982 = vadd.f32 %v1974, %v1980
        %s1983 = sld [smem:[#allocation6 + $0xaf]]
        %v1984 = vstv %s1983
        %v1985 = vmul.f32 %v1984, %v1936
        %v1987 = vrot.slane %v1985, 7
        %v1988 = vrot.slane %v1987, 4
        %v1990 = vadd.f32 %v1982, %v1988
        %s1991 = sld [smem:[#allocation6 + $0xc8]]
        %v1992 = vstv %s1991
        %v1993 = vmul.f32 %v1992, %v1936
        %s1994 = sld [smem:[#allocation6 + $0xe1]]
        %v1995 = vstv %s1994
        %v1996 = vmul.f32 %v1995, %v1936
        %v1998 = vrot.slane %v1996, 5
        %v1999 = vrot.slane %v1998, 4
        %v2001 = vadd.f32 %v1993, %v1999
        %s2002 = sld [smem:[#allocation6 + $0xfa]]
        %v2003 = vstv %s2002
        %v2004 = vmul.f32 %v2003, %v1936
        %v2006 = vrot.slane %v2004, 6
        %v2007 = vrot.slane %v2006, 4
        %v2009 = vadd.f32 %v2001, %v2007
        %s2010 = sld [smem:[#allocation6 + $0x113]]
        %v2011 = vstv %s2010
        %v2012 = vmul.f32 %v2011, %v1936
        %v2014 = vrot.slane %v2012, 7
        %v2015 = vrot.slane %v2014, 4
        %v2017 = vadd.f32 %v2009, %v2015
        %s2018 = sld [smem:[#allocation6 + $0x12c]]
        %v2019 = vstv %s2018
        %v2020 = vmul.f32 %v2019, %v1936
        %s2021 = sld [smem:[#allocation6 + $0x145]]
        %v2022 = vstv %s2021
        %v2023 = vmul.f32 %v2022, %v1936
        %v2025 = vrot.slane %v2023, 5
        %v2026 = vrot.slane %v2025, 4
        %v2028 = vadd.f32 %v2020, %v2026
        %s2029 = sld [smem:[#allocation6 + $0x15e]]
        %v2030 = vstv %s2029
        %v2031 = vmul.f32 %v2030, %v1936
        %v2033 = vrot.slane %v2031, 6
        %v2034 = vrot.slane %v2033, 4
        %v2036 = vadd.f32 %v2028, %v2034
        %s2037 = sld [smem:[#allocation6 + $0x177]]
        %v2038 = vstv %s2037
        %v2039 = vmul.f32 %v2038, %v1936
        %v2041 = vrot.slane %v2039, 7
        %v2042 = vrot.slane %v2041, 4
        %v2044 = vadd.f32 %v2036, %v2042
        %2045 = vrot.lane.b32.xlu0 %v1918, 33
        %v2046 = vpop.permute.xlu0 %2045
        %2047 = vrot.lane.b32.xlu0 %v1920, 33
        %v2048 = vpop.permute.xlu0 %2047
        %vm2049 = vcmp.lt.s32.totalorder %v709, 33
        %v2050 = vsel %vm2049, %v2046, %v2048
        %v2051 = vsel %vm2049, %v2048, %v2046
        %vm2052 = vmand %vm1929, %vm714
        %v2055 = vcombine.low %v2051, %v2050
        %v2057 = vsel %vm2052, %v2055, 0.0
        %s2058 = sld [smem:[#allocation6 + $0x1]]
        %v2059 = vstv %s2058
        %v2060 = vmul.f32 %v2059, %v2057
        %s2061 = sld [smem:[#allocation6 + $0x1a]]
        %v2062 = vstv %s2061
        %v2063 = vmul.f32 %v2062, %v2057
        %v2065 = vrot.slane %v2063, 5
        %v2066 = vrot.slane %v2065, 4
        %v2068 = vadd.f32 %v2060, %v2066
        %s2069 = sld [smem:[#allocation6 + $0x33]]
        %v2070 = vstv %s2069
        %v2071 = vmul.f32 %v2070, %v2057
        %v2073 = vrot.slane %v2071, 6
        %v2074 = vrot.slane %v2073, 4
        %v2076 = vadd.f32 %v2068, %v2074
        %s2077 = sld [smem:[#allocation6 + $0x4c]]
        %v2078 = vstv %s2077
        %v2079 = vmul.f32 %v2078, %v2057
        %v2081 = vrot.slane %v2079, 7
        %v2082 = vrot.slane %v2081, 4
        %v2084 = vadd.f32 %v2076, %v2082
        %v2085 = vadd.f32 %v1963, %v2084
        %s2086 = sld [smem:[#allocation6 + $0x65]]
        %v2087 = vstv %s2086
        %v2088 = vmul.f32 %v2087, %v2057
        %s2089 = sld [smem:[#allocation6 + $0x7e]]
        %v2090 = vstv %s2089
        %v2091 = vmul.f32 %v2090, %v2057
        %v2093 = vrot.slane %v2091, 5
        %v2094 = vrot.slane %v2093, 4
        %v2096 = vadd.f32 %v2088, %v2094
        %s2097 = sld [smem:[#allocation6 + $0x97]]
        %v2098 = vstv %s2097
        %v2099 = vmul.f32 %v2098, %v2057
        %v2101 = vrot.slane %v2099, 6
        %v2102 = vrot.slane %v2101, 4
        %v2104 = vadd.f32 %v2096, %v2102
        %s2105 = sld [smem:[#allocation6 + $0xb0]]
        %v2106 = vstv %s2105
        %v2107 = vmul.f32 %v2106, %v2057
        %v2109 = vrot.slane %v2107, 7
        %v2110 = vrot.slane %v2109, 4
        %v2112 = vadd.f32 %v2104, %v2110
        %v2113 = vadd.f32 %v1990, %v2112
        %s2114 = sld [smem:[#allocation6 + $0xc9]]
        %v2115 = vstv %s2114
        %v2116 = vmul.f32 %v2115, %v2057
        %s2117 = sld [smem:[#allocation6 + $0xe2]]
        %v2118 = vstv %s2117
        %v2119 = vmul.f32 %v2118, %v2057
        %v2121 = vrot.slane %v2119, 5
        %v2122 = vrot.slane %v2121, 4
        %v2124 = vadd.f32 %v2116, %v2122
        %s2125 = sld [smem:[#allocation6 + $0xfb]]
        %v2126 = vstv %s2125
        %v2127 = vmul.f32 %v2126, %v2057
        %v2129 = vrot.slane %v2127, 6
        %v2130 = vrot.slane %v2129, 4
        %v2132 = vadd.f32 %v2124, %v2130
        %s2133 = sld [smem:[#allocation6 + $0x114]]
        %v2134 = vstv %s2133
        %v2135 = vmul.f32 %v2134, %v2057
        %v2137 = vrot.slane %v2135, 7
        %v2138 = vrot.slane %v2137, 4
        %v2140 = vadd.f32 %v2132, %v2138
        %v2141 = vadd.f32 %v2017, %v2140
        %s2142 = sld [smem:[#allocation6 + $0x12d]]
        %v2143 = vstv %s2142
        %v2144 = vmul.f32 %v2143, %v2057
        %s2145 = sld [smem:[#allocation6 + $0x146]]
        %v2146 = vstv %s2145
        %v2147 = vmul.f32 %v2146, %v2057
        %v2149 = vrot.slane %v2147, 5
        %v2150 = vrot.slane %v2149, 4
        %v2152 = vadd.f32 %v2144, %v2150
        %s2153 = sld [smem:[#allocation6 + $0x15f]]
        %v2154 = vstv %s2153
        %v2155 = vmul.f32 %v2154, %v2057
        %v2157 = vrot.slane %v2155, 6
        %v2158 = vrot.slane %v2157, 4
        %v2160 = vadd.f32 %v2152, %v2158
        %s2161 = sld [smem:[#allocation6 + $0x178]]
        %v2162 = vstv %s2161
        %v2163 = vmul.f32 %v2162, %v2057
        %v2165 = vrot.slane %v2163, 7
        %v2166 = vrot.slane %v2165, 4
        %v2168 = vadd.f32 %v2160, %v2166
        %v2169 = vadd.f32 %v2044, %v2168
        %2170 = vrot.lane.b32.xlu0 %v1918, 32
        %v2171 = vpop.permute.xlu0 %2170
        %2172 = vrot.lane.b32.xlu0 %v1920, 32
        %v2173 = vpop.permute.xlu0 %2172
        %vm2174 = vcmp.lt.s32.totalorder %v709, 32
        %v2175 = vsel %vm2174, %v2171, %v2173
        %v2176 = vsel %vm2174, %v2173, %v2171
        %v2179 = vcombine.low %v2176, %v2175
        %v2181 = vsel %vm1929, %v2179, 0.0
        %s2182 = sld [smem:[#allocation6 + $0x2]]
        %v2183 = vstv %s2182
        %v2184 = vmul.f32 %v2183, %v2181
        %s2185 = sld [smem:[#allocation6 + $0x1b]]
        %v2186 = vstv %s2185
        %v2187 = vmul.f32 %v2186, %v2181
        %v2189 = vrot.slane %v2187, 5
        %v2190 = vrot.slane %v2189, 4
        %v2192 = vadd.f32 %v2184, %v2190
        %s2193 = sld [smem:[#allocation6 + $0x34]]
        %v2194 = vstv %s2193
        %v2195 = vmul.f32 %v2194, %v2181
        %v2197 = vrot.slane %v2195, 6
        %v2198 = vrot.slane %v2197, 4
        %v2200 = vadd.f32 %v2192, %v2198
        %s2201 = sld [smem:[#allocation6 + $0x4d]]
        %v2202 = vstv %s2201
        %v2203 = vmul.f32 %v2202, %v2181
        %v2205 = vrot.slane %v2203, 7
        %v2206 = vrot.slane %v2205, 4
        %v2208 = vadd.f32 %v2200, %v2206
        %v2209 = vadd.f32 %v2085, %v2208
        %s2210 = sld [smem:[#allocation6 + $0x66]]
        %v2211 = vstv %s2210
        %v2212 = vmul.f32 %v2211, %v2181
        %s2213 = sld [smem:[#allocation6 + $0x7f]]
        %v2214 = vstv %s2213
        %v2215 = vmul.f32 %v2214, %v2181
        %v2217 = vrot.slane %v2215, 5
        %v2218 = vrot.slane %v2217, 4
        %v2220 = vadd.f32 %v2212, %v2218
        %s2221 = sld [smem:[#allocation6 + $0x98]]
        %v2222 = vstv %s2221
        %v2223 = vmul.f32 %v2222, %v2181
        %v2225 = vrot.slane %v2223, 6
        %v2226 = vrot.slane %v2225, 4
        %v2228 = vadd.f32 %v2220, %v2226
        %s2229 = sld [smem:[#allocation6 + $0xb1]]
        %v2230 = vstv %s2229
        %v2231 = vmul.f32 %v2230, %v2181
        %v2233 = vrot.slane %v2231, 7
        %v2234 = vrot.slane %v2233, 4
        %v2236 = vadd.f32 %v2228, %v2234
        %v2237 = vadd.f32 %v2113, %v2236
        %s2238 = sld [smem:[#allocation6 + $0xca]]
        %v2239 = vstv %s2238
        %v2240 = vmul.f32 %v2239, %v2181
        %s2241 = sld [smem:[#allocation6 + $0xe3]]
        %v2242 = vstv %s2241
        %v2243 = vmul.f32 %v2242, %v2181
        %v2245 = vrot.slane %v2243, 5
        %v2246 = vrot.slane %v2245, 4
        %v2248 = vadd.f32 %v2240, %v2246
        %s2249 = sld [smem:[#allocation6 + $0xfc]]
        %v2250 = vstv %s2249
        %v2251 = vmul.f32 %v2250, %v2181
        %v2253 = vrot.slane %v2251, 6
        %v2254 = vrot.slane %v2253, 4
        %v2256 = vadd.f32 %v2248, %v2254
        %s2257 = sld [smem:[#allocation6 + $0x115]]
        %v2258 = vstv %s2257
        %v2259 = vmul.f32 %v2258, %v2181
        %v2261 = vrot.slane %v2259, 7
        %v2262 = vrot.slane %v2261, 4
        %v2264 = vadd.f32 %v2256, %v2262
        %v2265 = vadd.f32 %v2141, %v2264
        %s2266 = sld [smem:[#allocation6 + $0x12e]]
        %v2267 = vstv %s2266
        %v2268 = vmul.f32 %v2267, %v2181
        %s2269 = sld [smem:[#allocation6 + $0x147]]
        %v2270 = vstv %s2269
        %v2271 = vmul.f32 %v2270, %v2181
        %v2273 = vrot.slane %v2271, 5
        %v2274 = vrot.slane %v2273, 4
        %v2276 = vadd.f32 %v2268, %v2274
        %s2277 = sld [smem:[#allocation6 + $0x160]]
        %v2278 = vstv %s2277
        %v2279 = vmul.f32 %v2278, %v2181
        %v2281 = vrot.slane %v2279, 6
        %v2282 = vrot.slane %v2281, 4
        %v2284 = vadd.f32 %v2276, %v2282
        %s2285 = sld [smem:[#allocation6 + $0x179]]
        %v2286 = vstv %s2285
        %v2287 = vmul.f32 %v2286, %v2181
        %v2289 = vrot.slane %v2287, 7
        %v2290 = vrot.slane %v2289, 4
        %v2292 = vadd.f32 %v2284, %v2290
        %v2293 = vadd.f32 %v2169, %v2292
        %2294 = vrot.lane.b32.xlu0 %v1918, 31
        %v2295 = vpop.permute.xlu0 %2294
        %2296 = vrot.lane.b32.xlu0 %v1920, 31
        %v2297 = vpop.permute.xlu0 %2296
        %vm2298 = vcmp.lt.s32.totalorder %v709, 31
        %v2299 = vsel %vm2298, %v2295, %v2297
        %v2300 = vsel %vm2298, %v2297, %v2295
        %vm2301 = vmand %vm1929, %vm960
        %v2304 = vcombine.low %v2300, %v2299
        %v2306 = vsel %vm2301, %v2304, 0.0
        %s2307 = sld [smem:[#allocation6 + $0x3]]
        %v2308 = vstv %s2307
        %v2309 = vmul.f32 %v2308, %v2306
        %s2310 = sld [smem:[#allocation6 + $0x1c]]
        %v2311 = vstv %s2310
        %v2312 = vmul.f32 %v2311, %v2306
        %v2314 = vrot.slane %v2312, 5
        %v2315 = vrot.slane %v2314, 4
        %v2317 = vadd.f32 %v2309, %v2315
        %s2318 = sld [smem:[#allocation6 + $0x35]]
        %v2319 = vstv %s2318
        %v2320 = vmul.f32 %v2319, %v2306
        %v2322 = vrot.slane %v2320, 6
        %v2323 = vrot.slane %v2322, 4
        %v2325 = vadd.f32 %v2317, %v2323
        %s2326 = sld [smem:[#allocation6 + $0x4e]]
        %v2327 = vstv %s2326
        %v2328 = vmul.f32 %v2327, %v2306
        %v2330 = vrot.slane %v2328, 7
        %v2331 = vrot.slane %v2330, 4
        %v2333 = vadd.f32 %v2325, %v2331
        %v2334 = vadd.f32 %v2209, %v2333
        %s2335 = sld [smem:[#allocation6 + $0x67]]
        %v2336 = vstv %s2335
        %v2337 = vmul.f32 %v2336, %v2306
        %s2338 = sld [smem:[#allocation6 + $0x80]]
        %v2339 = vstv %s2338
        %v2340 = vmul.f32 %v2339, %v2306
        %v2342 = vrot.slane %v2340, 5
        %v2343 = vrot.slane %v2342, 4
        %v2345 = vadd.f32 %v2337, %v2343
        %s2346 = sld [smem:[#allocation6 + $0x99]]
        %v2347 = vstv %s2346
        %v2348 = vmul.f32 %v2347, %v2306
        %v2350 = vrot.slane %v2348, 6
        %v2351 = vrot.slane %v2350, 4
        %v2353 = vadd.f32 %v2345, %v2351
        %s2354 = sld [smem:[#allocation6 + $0xb2]]
        %v2355 = vstv %s2354
        %v2356 = vmul.f32 %v2355, %v2306
        %v2358 = vrot.slane %v2356, 7
        %v2359 = vrot.slane %v2358, 4
        %v2361 = vadd.f32 %v2353, %v2359
        %v2362 = vadd.f32 %v2237, %v2361
        %s2363 = sld [smem:[#allocation6 + $0xcb]]
        %v2364 = vstv %s2363
        %v2365 = vmul.f32 %v2364, %v2306
        %s2366 = sld [smem:[#allocation6 + $0xe4]]
        %v2367 = vstv %s2366
        %v2368 = vmul.f32 %v2367, %v2306
        %v2370 = vrot.slane %v2368, 5
        %v2371 = vrot.slane %v2370, 4
        %v2373 = vadd.f32 %v2365, %v2371
        %s2374 = sld [smem:[#allocation6 + $0xfd]]
        %v2375 = vstv %s2374
        %v2376 = vmul.f32 %v2375, %v2306
        %v2378 = vrot.slane %v2376, 6
        %v2379 = vrot.slane %v2378, 4
        %v2381 = vadd.f32 %v2373, %v2379
        %s2382 = sld [smem:[#allocation6 + $0x116]]
        %v2383 = vstv %s2382
        %v2384 = vmul.f32 %v2383, %v2306
        %v2386 = vrot.slane %v2384, 7
        %v2387 = vrot.slane %v2386, 4
        %v2389 = vadd.f32 %v2381, %v2387
        %v2390 = vadd.f32 %v2265, %v2389
        %s2391 = sld [smem:[#allocation6 + $0x12f]]
        %v2392 = vstv %s2391
        %v2393 = vmul.f32 %v2392, %v2306
        %s2394 = sld [smem:[#allocation6 + $0x148]]
        %v2395 = vstv %s2394
        %v2396 = vmul.f32 %v2395, %v2306
        %v2398 = vrot.slane %v2396, 5
        %v2399 = vrot.slane %v2398, 4
        %v2401 = vadd.f32 %v2393, %v2399
        %s2402 = sld [smem:[#allocation6 + $0x161]]
        %v2403 = vstv %s2402
        %v2404 = vmul.f32 %v2403, %v2306
        %v2406 = vrot.slane %v2404, 6
        %v2407 = vrot.slane %v2406, 4
        %v2409 = vadd.f32 %v2401, %v2407
        %s2410 = sld [smem:[#allocation6 + $0x17a]]
        %v2411 = vstv %s2410
        %v2412 = vmul.f32 %v2411, %v2306
        %v2414 = vrot.slane %v2412, 7
        %v2415 = vrot.slane %v2414, 4
        %v2417 = vadd.f32 %v2409, %v2415
        %v2418 = vadd.f32 %v2293, %v2417
        %2419 = vrot.lane.b32.xlu0 %v1918, 30
        %v2420 = vpop.permute.xlu0 %2419
        %2421 = vrot.lane.b32.xlu0 %v1920, 30
        %v2422 = vpop.permute.xlu0 %2421
        %vm2423 = vcmp.lt.s32.totalorder %v709, 30
        %v2424 = vsel %vm2423, %v2420, %v2422
        %v2425 = vsel %vm2423, %v2422, %v2420
        %vm2426 = vcmp.lt.s32.totalorder %v454, 14
        %vm2427 = vmand %vm1929, %vm2426
        %v2430 = vcombine.low %v2425, %v2424
        %v2432 = vsel %vm2427, %v2430, 0.0
        %s2433 = sld [smem:[#allocation6 + $0x4]]
        %v2434 = vstv %s2433
        %v2435 = vmul.f32 %v2434, %v2432
        %s2436 = sld [smem:[#allocation6 + $0x1d]]
        %v2437 = vstv %s2436
        %v2438 = vmul.f32 %v2437, %v2432
        %v2440 = vrot.slane %v2438, 5
        %v2441 = vrot.slane %v2440, 4
        %v2443 = vadd.f32 %v2435, %v2441
        %s2444 = sld [smem:[#allocation6 + $0x36]]
        %v2445 = vstv %s2444
        %v2446 = vmul.f32 %v2445, %v2432
        %v2448 = vrot.slane %v2446, 6
        %v2449 = vrot.slane %v2448, 4
        %v2451 = vadd.f32 %v2443, %v2449
        %s2452 = sld [smem:[#allocation6 + $0x4f]]
        %v2453 = vstv %s2452
        %v2454 = vmul.f32 %v2453, %v2432
        %v2456 = vrot.slane %v2454, 7
        %v2457 = vrot.slane %v2456, 4
        %v2459 = vadd.f32 %v2451, %v2457
        %v2460 = vadd.f32 %v2334, %v2459
        %s2461 = sld [smem:[#allocation6 + $0x68]]
        %v2462 = vstv %s2461
        %v2463 = vmul.f32 %v2462, %v2432
        %s2464 = sld [smem:[#allocation6 + $0x81]]
        %v2465 = vstv %s2464
        %v2466 = vmul.f32 %v2465, %v2432
        %v2468 = vrot.slane %v2466, 5
        %v2469 = vrot.slane %v2468, 4
        %v2471 = vadd.f32 %v2463, %v2469
        %s2472 = sld [smem:[#allocation6 + $0x9a]]
        %v2473 = vstv %s2472
        %v2474 = vmul.f32 %v2473, %v2432
        %v2476 = vrot.slane %v2474, 6
        %v2477 = vrot.slane %v2476, 4
        %v2479 = vadd.f32 %v2471, %v2477
        %s2480 = sld [smem:[#allocation6 + $0xb3]]
        %v2481 = vstv %s2480
        %v2482 = vmul.f32 %v2481, %v2432
        %v2484 = vrot.slane %v2482, 7
        %v2485 = vrot.slane %v2484, 4
        %v2487 = vadd.f32 %v2479, %v2485
        %v2488 = vadd.f32 %v2362, %v2487
        %s2489 = sld [smem:[#allocation6 + $0xcc]]
        %v2490 = vstv %s2489
        %v2491 = vmul.f32 %v2490, %v2432
        %s2492 = sld [smem:[#allocation6 + $0xe5]]
        %v2493 = vstv %s2492
        %v2494 = vmul.f32 %v2493, %v2432
        %v2496 = vrot.slane %v2494, 5
        %v2497 = vrot.slane %v2496, 4
        %v2499 = vadd.f32 %v2491, %v2497
        %s2500 = sld [smem:[#allocation6 + $0xfe]]
        %v2501 = vstv %s2500
        %v2502 = vmul.f32 %v2501, %v2432
        %v2504 = vrot.slane %v2502, 6
        %v2505 = vrot.slane %v2504, 4
        %v2507 = vadd.f32 %v2499, %v2505
        %s2508 = sld [smem:[#allocation6 + $0x117]]
        %v2509 = vstv %s2508
        %v2510 = vmul.f32 %v2509, %v2432
        %v2512 = vrot.slane %v2510, 7
        %v2513 = vrot.slane %v2512, 4
        %v2515 = vadd.f32 %v2507, %v2513
        %v2516 = vadd.f32 %v2390, %v2515
        %s2517 = sld [smem:[#allocation6 + $0x130]]
        %v2518 = vstv %s2517
        %v2519 = vmul.f32 %v2518, %v2432
        %s2520 = sld [smem:[#allocation6 + $0x149]]
        %v2521 = vstv %s2520
        %v2522 = vmul.f32 %v2521, %v2432
        %v2524 = vrot.slane %v2522, 5
        %v2525 = vrot.slane %v2524, 4
        %v2527 = vadd.f32 %v2519, %v2525
        %s2528 = sld [smem:[#allocation6 + $0x162]]
        %v2529 = vstv %s2528
        %v2530 = vmul.f32 %v2529, %v2432
        %v2532 = vrot.slane %v2530, 6
        %v2533 = vrot.slane %v2532, 4
        %v2535 = vadd.f32 %v2527, %v2533
        %s2536 = sld [smem:[#allocation6 + $0x17b]]
        %v2537 = vstv %s2536
        %v2538 = vmul.f32 %v2537, %v2432
        %v2540 = vrot.slane %v2538, 7
        %v2541 = vrot.slane %v2540, 4
        %v2543 = vadd.f32 %v2535, %v2541
        %v2544 = vadd.f32 %v2418, %v2543
        %2545 = vrot.lane.b32.xlu0 %v1918, 18
        %v2546 = vpop.permute.xlu0 %2545
        %2547 = vrot.lane.b32.xlu0 %v1920, 18
        %v2548 = vpop.permute.xlu0 %2547
        %vm2549 = vcmp.lt.s32.totalorder %v709, 18
        %v2550 = vsel %vm2549, %v2546, %v2548
        %v2551 = vsel %vm2549, %v2548, %v2546
        %vm2552 = vmand %vm713, %vm1930
        %v2555 = vcombine.low %v2551, %v2550
        %v2557 = vsel %vm2552, %v2555, 0.0
        %s2558 = sld [smem:[#allocation6 + $0x5]]
        %v2559 = vstv %s2558
        %v2560 = vmul.f32 %v2559, %v2557
        %s2561 = sld [smem:[#allocation6 + $0x1e]]
        %v2562 = vstv %s2561
        %v2563 = vmul.f32 %v2562, %v2557
        %v2565 = vrot.slane %v2563, 5
        %v2566 = vrot.slane %v2565, 4
        %v2568 = vadd.f32 %v2560, %v2566
        %s2569 = sld [smem:[#allocation6 + $0x37]]
        %v2570 = vstv %s2569
        %v2571 = vmul.f32 %v2570, %v2557
        %v2573 = vrot.slane %v2571, 6
        %v2574 = vrot.slane %v2573, 4
        %v2576 = vadd.f32 %v2568, %v2574
        %s2577 = sld [smem:[#allocation6 + $0x50]]
        %v2578 = vstv %s2577
        %v2579 = vmul.f32 %v2578, %v2557
        %v2581 = vrot.slane %v2579, 7
        %v2582 = vrot.slane %v2581, 4
        %v2584 = vadd.f32 %v2576, %v2582
        %v2585 = vadd.f32 %v2460, %v2584
        %s2586 = sld [smem:[#allocation6 + $0x69]]
        %v2587 = vstv %s2586
        %v2588 = vmul.f32 %v2587, %v2557
        %s2589 = sld [smem:[#allocation6 + $0x82]]
        %v2590 = vstv %s2589
        %v2591 = vmul.f32 %v2590, %v2557
        %v2593 = vrot.slane %v2591, 5
        %v2594 = vrot.slane %v2593, 4
        %v2596 = vadd.f32 %v2588, %v2594
        %s2597 = sld [smem:[#allocation6 + $0x9b]]
        %v2598 = vstv %s2597
        %v2599 = vmul.f32 %v2598, %v2557
        %v2601 = vrot.slane %v2599, 6
        %v2602 = vrot.slane %v2601, 4
        %v2604 = vadd.f32 %v2596, %v2602
        %s2605 = sld [smem:[#allocation6 + $0xb4]]
        %v2606 = vstv %s2605
        %v2607 = vmul.f32 %v2606, %v2557
        %v2609 = vrot.slane %v2607, 7
        %v2610 = vrot.slane %v2609, 4
        %v2612 = vadd.f32 %v2604, %v2610
        %v2613 = vadd.f32 %v2488, %v2612
        %s2614 = sld [smem:[#allocation6 + $0xcd]]
        %v2615 = vstv %s2614
        %v2616 = vmul.f32 %v2615, %v2557
        %s2617 = sld [smem:[#allocation6 + $0xe6]]
        %v2618 = vstv %s2617
        %v2619 = vmul.f32 %v2618, %v2557
        %v2621 = vrot.slane %v2619, 5
        %v2622 = vrot.slane %v2621, 4
        %v2624 = vadd.f32 %v2616, %v2622
        %s2625 = sld [smem:[#allocation6 + $0xff]]
        %v2626 = vstv %s2625
        %v2627 = vmul.f32 %v2626, %v2557
        %v2629 = vrot.slane %v2627, 6
        %v2630 = vrot.slane %v2629, 4
        %v2632 = vadd.f32 %v2624, %v2630
        %s2633 = sld [smem:[#allocation6 + $0x118]]
        %v2634 = vstv %s2633
        %v2635 = vmul.f32 %v2634, %v2557
        %v2637 = vrot.slane %v2635, 7
        %v2638 = vrot.slane %v2637, 4
        %v2640 = vadd.f32 %v2632, %v2638
        %v2641 = vadd.f32 %v2516, %v2640
        %s2642 = sld [smem:[#allocation6 + $0x131]]
        %v2643 = vstv %s2642
        %v2644 = vmul.f32 %v2643, %v2557
        %s2645 = sld [smem:[#allocation6 + $0x14a]]
        %v2646 = vstv %s2645
        %v2647 = vmul.f32 %v2646, %v2557
        %v2649 = vrot.slane %v2647, 5
        %v2650 = vrot.slane %v2649, 4
        %v2652 = vadd.f32 %v2644, %v2650
        %s2653 = sld [smem:[#allocation6 + $0x163]]
        %v2654 = vstv %s2653
        %v2655 = vmul.f32 %v2654, %v2557
        %v2657 = vrot.slane %v2655, 6
        %v2658 = vrot.slane %v2657, 4
        %v2660 = vadd.f32 %v2652, %v2658
        %s2661 = sld [smem:[#allocation6 + $0x17c]]
        %v2662 = vstv %s2661
        %v2663 = vmul.f32 %v2662, %v2557
        %v2665 = vrot.slane %v2663, 7
        %v2666 = vrot.slane %v2665, 4
        %v2668 = vadd.f32 %v2660, %v2666
        %v2669 = vadd.f32 %v2544, %v2668
        %2670 = vrot.lane.b32.xlu0 %v1918, 17
        %v2671 = vpop.permute.xlu0 %2670
        %2672 = vrot.lane.b32.xlu0 %v1920, 17
        %v2673 = vpop.permute.xlu0 %2672
        %v2674 = vsel %vm710, %v2671, %v2673
        %v2675 = vsel %vm710, %v2673, %v2671
        %v2678 = vcombine.low %v2675, %v2674
        %v2680 = vsel %vm715, %v2678, 0.0
        %s2681 = sld [smem:[#allocation6 + $0x6]]
        %v2682 = vstv %s2681
        %v2683 = vmul.f32 %v2682, %v2680
        %s2684 = sld [smem:[#allocation6 + $0x1f]]
        %v2685 = vstv %s2684
        %v2686 = vmul.f32 %v2685, %v2680
        %v2688 = vrot.slane %v2686, 5
        %v2689 = vrot.slane %v2688, 4
        %v2691 = vadd.f32 %v2683, %v2689
        %s2692 = sld [smem:[#allocation6 + $0x38]]
        %v2693 = vstv %s2692
        %v2694 = vmul.f32 %v2693, %v2680
        %v2696 = vrot.slane %v2694, 6
        %v2697 = vrot.slane %v2696, 4
        %v2699 = vadd.f32 %v2691, %v2697
        %s2700 = sld [smem:[#allocation6 + $0x51]]
        %v2701 = vstv %s2700
        %v2702 = vmul.f32 %v2701, %v2680
        %v2704 = vrot.slane %v2702, 7
        %v2705 = vrot.slane %v2704, 4
        %v2707 = vadd.f32 %v2699, %v2705
        %v2708 = vadd.f32 %v2585, %v2707
        %s2709 = sld [smem:[#allocation6 + $0x6a]]
        %v2710 = vstv %s2709
        %v2711 = vmul.f32 %v2710, %v2680
        %s2712 = sld [smem:[#allocation6 + $0x83]]
        %v2713 = vstv %s2712
        %v2714 = vmul.f32 %v2713, %v2680
        %v2716 = vrot.slane %v2714, 5
        %v2717 = vrot.slane %v2716, 4
        %v2719 = vadd.f32 %v2711, %v2717
        %s2720 = sld [smem:[#allocation6 + $0x9c]]
        %v2721 = vstv %s2720
        %v2722 = vmul.f32 %v2721, %v2680
        %v2724 = vrot.slane %v2722, 6
        %v2725 = vrot.slane %v2724, 4
        %v2727 = vadd.f32 %v2719, %v2725
        %s2728 = sld [smem:[#allocation6 + $0xb5]]
        %v2729 = vstv %s2728
        %v2730 = vmul.f32 %v2729, %v2680
        %v2732 = vrot.slane %v2730, 7
        %v2733 = vrot.slane %v2732, 4
        %v2735 = vadd.f32 %v2727, %v2733
        %v2736 = vadd.f32 %v2613, %v2735
        %s2737 = sld [smem:[#allocation6 + $0xce]]
        %v2738 = vstv %s2737
        %v2739 = vmul.f32 %v2738, %v2680
        %s2740 = sld [smem:[#allocation6 + $0xe7]]
        %v2741 = vstv %s2740
        %v2742 = vmul.f32 %v2741, %v2680
        %v2744 = vrot.slane %v2742, 5
        %v2745 = vrot.slane %v2744, 4
        %v2747 = vadd.f32 %v2739, %v2745
        %s2748 = sld [smem:[#allocation6 + $0x100]]
        %v2749 = vstv %s2748
        %v2750 = vmul.f32 %v2749, %v2680
        %v2752 = vrot.slane %v2750, 6
        %v2753 = vrot.slane %v2752, 4
        %v2755 = vadd.f32 %v2747, %v2753
        %s2756 = sld [smem:[#allocation6 + $0x119]]
        %v2757 = vstv %s2756
        %v2758 = vmul.f32 %v2757, %v2680
        %v2760 = vrot.slane %v2758, 7
        %v2761 = vrot.slane %v2760, 4
        %v2763 = vadd.f32 %v2755, %v2761
        %v2764 = vadd.f32 %v2641, %v2763
        %s2765 = sld [smem:[#allocation6 + $0x132]]
        %v2766 = vstv %s2765
        %v2767 = vmul.f32 %v2766, %v2680
        %s2768 = sld [smem:[#allocation6 + $0x14b]]
        %v2769 = vstv %s2768
        %v2770 = vmul.f32 %v2769, %v2680
        %v2772 = vrot.slane %v2770, 5
        %v2773 = vrot.slane %v2772, 4
        %v2775 = vadd.f32 %v2767, %v2773
        %s2776 = sld [smem:[#allocation6 + $0x164]]
        %v2777 = vstv %s2776
        %v2778 = vmul.f32 %v2777, %v2680
        %v2780 = vrot.slane %v2778, 6
        %v2781 = vrot.slane %v2780, 4
        %v2783 = vadd.f32 %v2775, %v2781
        %s2784 = sld [smem:[#allocation6 + $0x17d]]
        %v2785 = vstv %s2784
        %v2786 = vmul.f32 %v2785, %v2680
        %v2788 = vrot.slane %v2786, 7
        %v2789 = vrot.slane %v2788, 4
        %v2791 = vadd.f32 %v2783, %v2789
        %v2792 = vadd.f32 %v2669, %v2791
        %2793 = vrot.lane.b32.xlu0 %v1918, 16
        %v2794 = vpop.permute.xlu0 %2793
        %2795 = vrot.lane.b32.xlu0 %v1920, 16
        %v2796 = vpop.permute.xlu0 %2795
        %v2797 = vsel %vm833, %v2794, %v2796
        %v2798 = vsel %vm833, %v2796, %v2794
        %v2801 = vcombine.low %v2798, %v2797
        %v2803 = vsel %vm713, %v2801, 0.0
        %s2804 = sld [smem:[#allocation6 + $0x7]]
        %v2805 = vstv %s2804
        %v2806 = vmul.f32 %v2805, %v2803
        %s2807 = sld [smem:[#allocation6 + $0x20]]
        %v2808 = vstv %s2807
        %v2809 = vmul.f32 %v2808, %v2803
        %v2811 = vrot.slane %v2809, 5
        %v2812 = vrot.slane %v2811, 4
        %v2814 = vadd.f32 %v2806, %v2812
        %s2815 = sld [smem:[#allocation6 + $0x39]]
        %v2816 = vstv %s2815
        %v2817 = vmul.f32 %v2816, %v2803
        %v2819 = vrot.slane %v2817, 6
        %v2820 = vrot.slane %v2819, 4
        %v2822 = vadd.f32 %v2814, %v2820
        %s2823 = sld [smem:[#allocation6 + $0x52]]
        %v2824 = vstv %s2823
        %v2825 = vmul.f32 %v2824, %v2803
        %v2827 = vrot.slane %v2825, 7
        %v2828 = vrot.slane %v2827, 4
        %v2830 = vadd.f32 %v2822, %v2828
        %v2831 = vadd.f32 %v2708, %v2830
        %s2832 = sld [smem:[#allocation6 + $0x6b]]
        %v2833 = vstv %s2832
        %v2834 = vmul.f32 %v2833, %v2803
        %s2835 = sld [smem:[#allocation6 + $0x84]]
        %v2836 = vstv %s2835
        %v2837 = vmul.f32 %v2836, %v2803
        %v2839 = vrot.slane %v2837, 5
        %v2840 = vrot.slane %v2839, 4
        %v2842 = vadd.f32 %v2834, %v2840
        %s2843 = sld [smem:[#allocation6 + $0x9d]]
        %v2844 = vstv %s2843
        %v2845 = vmul.f32 %v2844, %v2803
        %v2847 = vrot.slane %v2845, 6
        %v2848 = vrot.slane %v2847, 4
        %v2850 = vadd.f32 %v2842, %v2848
        %s2851 = sld [smem:[#allocation6 + $0xb6]]
        %v2852 = vstv %s2851
        %v2853 = vmul.f32 %v2852, %v2803
        %v2855 = vrot.slane %v2853, 7
        %v2856 = vrot.slane %v2855, 4
        %v2858 = vadd.f32 %v2850, %v2856
        %v2859 = vadd.f32 %v2736, %v2858
        %s2860 = sld [smem:[#allocation6 + $0xcf]]
        %v2861 = vstv %s2860
        %v2862 = vmul.f32 %v2861, %v2803
        %s2863 = sld [smem:[#allocation6 + $0xe8]]
        %v2864 = vstv %s2863
        %v2865 = vmul.f32 %v2864, %v2803
        %v2867 = vrot.slane %v2865, 5
        %v2868 = vrot.slane %v2867, 4
        %v2870 = vadd.f32 %v2862, %v2868
        %s2871 = sld [smem:[#allocation6 + $0x101]]
        %v2872 = vstv %s2871
        %v2873 = vmul.f32 %v2872, %v2803
        %v2875 = vrot.slane %v2873, 6
        %v2876 = vrot.slane %v2875, 4
        %v2878 = vadd.f32 %v2870, %v2876
        %s2879 = sld [smem:[#allocation6 + $0x11a]]
        %v2880 = vstv %s2879
        %v2881 = vmul.f32 %v2880, %v2803
        %v2883 = vrot.slane %v2881, 7
        %v2884 = vrot.slane %v2883, 4
        %v2886 = vadd.f32 %v2878, %v2884
        %v2887 = vadd.f32 %v2764, %v2886
        %s2888 = sld [smem:[#allocation6 + $0x133]]
        %v2889 = vstv %s2888
        %v2890 = vmul.f32 %v2889, %v2803
        %s2891 = sld [smem:[#allocation6 + $0x14c]]
        %v2892 = vstv %s2891
        %v2893 = vmul.f32 %v2892, %v2803
        %v2895 = vrot.slane %v2893, 5
        %v2896 = vrot.slane %v2895, 4
        %v2898 = vadd.f32 %v2890, %v2896
        %s2899 = sld [smem:[#allocation6 + $0x165]]
        %v2900 = vstv %s2899
        %v2901 = vmul.f32 %v2900, %v2803
        %v2903 = vrot.slane %v2901, 6
        %v2904 = vrot.slane %v2903, 4
        %v2906 = vadd.f32 %v2898, %v2904
        %s2907 = sld [smem:[#allocation6 + $0x17e]]
        %v2908 = vstv %s2907
        %v2909 = vmul.f32 %v2908, %v2803
        %v2911 = vrot.slane %v2909, 7
        %v2912 = vrot.slane %v2911, 4
        %v2914 = vadd.f32 %v2906, %v2912
        %v2915 = vadd.f32 %v2792, %v2914
        %2916 = vrot.lane.b32.xlu0 %v1918, 15
        %v2917 = vpop.permute.xlu0 %2916
        %2918 = vrot.lane.b32.xlu0 %v1920, 15
        %v2919 = vpop.permute.xlu0 %2918
        %v2920 = vsel %vm957, %v2917, %v2919
        %v2921 = vsel %vm957, %v2919, %v2917
        %v2924 = vcombine.low %v2921, %v2920
        %v2926 = vsel %vm961, %v2924, 0.0
        %s2927 = sld [smem:[#allocation6 + $0x8]]
        %v2928 = vstv %s2927
        %v2929 = vmul.f32 %v2928, %v2926
        %s2930 = sld [smem:[#allocation6 + $0x21]]
        %v2931 = vstv %s2930
        %v2932 = vmul.f32 %v2931, %v2926
        %v2934 = vrot.slane %v2932, 5
        %v2935 = vrot.slane %v2934, 4
        %v2937 = vadd.f32 %v2929, %v2935
        %s2938 = sld [smem:[#allocation6 + $0x3a]]
        %v2939 = vstv %s2938
        %v2940 = vmul.f32 %v2939, %v2926
        %v2942 = vrot.slane %v2940, 6
        %v2943 = vrot.slane %v2942, 4
        %v2945 = vadd.f32 %v2937, %v2943
        %s2946 = sld [smem:[#allocation6 + $0x53]]
        %v2947 = vstv %s2946
        %v2948 = vmul.f32 %v2947, %v2926
        %v2950 = vrot.slane %v2948, 7
        %v2951 = vrot.slane %v2950, 4
        %v2953 = vadd.f32 %v2945, %v2951
        %v2954 = vadd.f32 %v2831, %v2953
        %s2955 = sld [smem:[#allocation6 + $0x6c]]
        %v2956 = vstv %s2955
        %v2957 = vmul.f32 %v2956, %v2926
        %s2958 = sld [smem:[#allocation6 + $0x85]]
        %v2959 = vstv %s2958
        %v2960 = vmul.f32 %v2959, %v2926
        %v2962 = vrot.slane %v2960, 5
        %v2963 = vrot.slane %v2962, 4
        %v2965 = vadd.f32 %v2957, %v2963
        %s2966 = sld [smem:[#allocation6 + $0x9e]]
        %v2967 = vstv %s2966
        %v2968 = vmul.f32 %v2967, %v2926
        %v2970 = vrot.slane %v2968, 6
        %v2971 = vrot.slane %v2970, 4
        %v2973 = vadd.f32 %v2965, %v2971
        %s2974 = sld [smem:[#allocation6 + $0xb7]]
        %v2975 = vstv %s2974
        %v2976 = vmul.f32 %v2975, %v2926
        %v2978 = vrot.slane %v2976, 7
        %v2979 = vrot.slane %v2978, 4
        %v2981 = vadd.f32 %v2973, %v2979
        %v2982 = vadd.f32 %v2859, %v2981
        %s2983 = sld [smem:[#allocation6 + $0xd0]]
        %v2984 = vstv %s2983
        %v2985 = vmul.f32 %v2984, %v2926
        %s2986 = sld [smem:[#allocation6 + $0xe9]]
        %v2987 = vstv %s2986
        %v2988 = vmul.f32 %v2987, %v2926
        %v2990 = vrot.slane %v2988, 5
        %v2991 = vrot.slane %v2990, 4
        %v2993 = vadd.f32 %v2985, %v2991
        %s2994 = sld [smem:[#allocation6 + $0x102]]
        %v2995 = vstv %s2994
        %v2996 = vmul.f32 %v2995, %v2926
        %v2998 = vrot.slane %v2996, 6
        %v2999 = vrot.slane %v2998, 4
        %v3001 = vadd.f32 %v2993, %v2999
        %s3002 = sld [smem:[#allocation6 + $0x11b]]
        %v3003 = vstv %s3002
        %v3004 = vmul.f32 %v3003, %v2926
        %v3006 = vrot.slane %v3004, 7
        %v3007 = vrot.slane %v3006, 4
        %v3009 = vadd.f32 %v3001, %v3007
        %v3010 = vadd.f32 %v2887, %v3009
        %s3011 = sld [smem:[#allocation6 + $0x134]]
        %v3012 = vstv %s3011
        %v3013 = vmul.f32 %v3012, %v2926
        %s3014 = sld [smem:[#allocation6 + $0x14d]]
        %v3015 = vstv %s3014
        %v3016 = vmul.f32 %v3015, %v2926
        %v3018 = vrot.slane %v3016, 5
        %v3019 = vrot.slane %v3018, 4
        %v3021 = vadd.f32 %v3013, %v3019
        %s3022 = sld [smem:[#allocation6 + $0x166]]
        %v3023 = vstv %s3022
        %v3024 = vmul.f32 %v3023, %v2926
        %v3026 = vrot.slane %v3024, 6
        %v3027 = vrot.slane %v3026, 4
        %v3029 = vadd.f32 %v3021, %v3027
        %s3030 = sld [smem:[#allocation6 + $0x17f]]
        %v3031 = vstv %s3030
        %v3032 = vmul.f32 %v3031, %v2926
        %v3034 = vrot.slane %v3032, 7
        %v3035 = vrot.slane %v3034, 4
        %v3037 = vadd.f32 %v3029, %v3035
        %v3038 = vadd.f32 %v2915, %v3037
        %3039 = vrot.lane.b32.xlu0 %v1918, 14
        %v3040 = vpop.permute.xlu0 %3039
        %3041 = vrot.lane.b32.xlu0 %v1920, 14
        %v3042 = vpop.permute.xlu0 %3041
        %vm3043 = vcmp.lt.s32.totalorder %v709, 14
        %v3044 = vsel %vm3043, %v3040, %v3042
        %v3045 = vsel %vm3043, %v3042, %v3040
        %vm3046 = vmand %vm713, %vm2426
        %v3049 = vcombine.low %v3045, %v3044
        %v3051 = vsel %vm3046, %v3049, 0.0
        %s3052 = sld [smem:[#allocation6 + $0x9]]
        %v3053 = vstv %s3052
        %v3054 = vmul.f32 %v3053, %v3051
        %s3055 = sld [smem:[#allocation6 + $0x22]]
        %v3056 = vstv %s3055
        %v3057 = vmul.f32 %v3056, %v3051
        %v3059 = vrot.slane %v3057, 5
        %v3060 = vrot.slane %v3059, 4
        %v3062 = vadd.f32 %v3054, %v3060
        %s3063 = sld [smem:[#allocation6 + $0x3b]]
        %v3064 = vstv %s3063
        %v3065 = vmul.f32 %v3064, %v3051
        %v3067 = vrot.slane %v3065, 6
        %v3068 = vrot.slane %v3067, 4
        %v3070 = vadd.f32 %v3062, %v3068
        %s3071 = sld [smem:[#allocation6 + $0x54]]
        %v3072 = vstv %s3071
        %v3073 = vmul.f32 %v3072, %v3051
        %v3075 = vrot.slane %v3073, 7
        %v3076 = vrot.slane %v3075, 4
        %v3078 = vadd.f32 %v3070, %v3076
        %v3079 = vadd.f32 %v2954, %v3078
        %s3080 = sld [smem:[#allocation6 + $0x6d]]
        %v3081 = vstv %s3080
        %v3082 = vmul.f32 %v3081, %v3051
        %s3083 = sld [smem:[#allocation6 + $0x86]]
        %v3084 = vstv %s3083
        %v3085 = vmul.f32 %v3084, %v3051
        %v3087 = vrot.slane %v3085, 5
        %v3088 = vrot.slane %v3087, 4
        %v3090 = vadd.f32 %v3082, %v3088
        %s3091 = sld [smem:[#allocation6 + $0x9f]]
        %v3092 = vstv %s3091
        %v3093 = vmul.f32 %v3092, %v3051
        %v3095 = vrot.slane %v3093, 6
        %v3096 = vrot.slane %v3095, 4
        %v3098 = vadd.f32 %v3090, %v3096
        %s3099 = sld [smem:[#allocation6 + $0xb8]]
        %v3100 = vstv %s3099
        %v3101 = vmul.f32 %v3100, %v3051
        %v3103 = vrot.slane %v3101, 7
        %v3104 = vrot.slane %v3103, 4
        %v3106 = vadd.f32 %v3098, %v3104
        %v3107 = vadd.f32 %v2982, %v3106
        %s3108 = sld [smem:[#allocation6 + $0xd1]]
        %v3109 = vstv %s3108
        %v3110 = vmul.f32 %v3109, %v3051
        %s3111 = sld [smem:[#allocation6 + $0xea]]
        %v3112 = vstv %s3111
        %v3113 = vmul.f32 %v3112, %v3051
        %v3115 = vrot.slane %v3113, 5
        %v3116 = vrot.slane %v3115, 4
        %v3118 = vadd.f32 %v3110, %v3116
        %s3119 = sld [smem:[#allocation6 + $0x103]]
        %v3120 = vstv %s3119
        %v3121 = vmul.f32 %v3120, %v3051
        %v3123 = vrot.slane %v3121, 6
        %v3124 = vrot.slane %v3123, 4
        %v3126 = vadd.f32 %v3118, %v3124
        %s3127 = sld [smem:[#allocation6 + $0x11c]]
        %v3128 = vstv %s3127
        %v3129 = vmul.f32 %v3128, %v3051
        %v3131 = vrot.slane %v3129, 7
        %v3132 = vrot.slane %v3131, 4
        %v3134 = vadd.f32 %v3126, %v3132
        %v3135 = vadd.f32 %v3010, %v3134
        %s3136 = sld [smem:[#allocation6 + $0x135]]
        %v3137 = vstv %s3136
        %v3138 = vmul.f32 %v3137, %v3051
        %s3139 = sld [smem:[#allocation6 + $0x14e]]
        %v3140 = vstv %s3139
        %v3141 = vmul.f32 %v3140, %v3051
        %v3143 = vrot.slane %v3141, 5
        %v3144 = vrot.slane %v3143, 4
        %v3146 = vadd.f32 %v3138, %v3144
        %s3147 = sld [smem:[#allocation6 + $0x167]]
        %v3148 = vstv %s3147
        %v3149 = vmul.f32 %v3148, %v3051
        %v3151 = vrot.slane %v3149, 6
        %v3152 = vrot.slane %v3151, 4
        %v3154 = vadd.f32 %v3146, %v3152
        %s3155 = sld [smem:[#allocation6 + $0x180]]
        %v3156 = vstv %s3155
        %v3157 = vmul.f32 %v3156, %v3051
        %v3159 = vrot.slane %v3157, 7
        %v3160 = vrot.slane %v3159, 4
        %v3162 = vadd.f32 %v3154, %v3160
        %v3163 = vadd.f32 %v3038, %v3162
        %3164 = vrot.lane.b32.xlu0 %v1918, 2
        %v3165 = vpop.permute.xlu0 %3164
        %3166 = vrot.lane.b32.xlu0 %v1920, 2
        %v3167 = vpop.permute.xlu0 %3166
        %vm3168 = vcmp.lt.s32.totalorder %v709, 2
        %v3169 = vsel %vm3168, %v3165, %v3167
        %v3170 = vsel %vm3168, %v3167, %v3165
        %v3173 = vcombine.low %v3170, %v3169
        %v3175 = vsel %vm1930, %v3173, 0.0
        %s3176 = sld [smem:[#allocation6 + $0xa]]
        %v3177 = vstv %s3176
        %v3178 = vmul.f32 %v3177, %v3175
        %s3179 = sld [smem:[#allocation6 + $0x23]]
        %v3180 = vstv %s3179
        %v3181 = vmul.f32 %v3180, %v3175
        %v3183 = vrot.slane %v3181, 5
        %v3184 = vrot.slane %v3183, 4
        %v3186 = vadd.f32 %v3178, %v3184
        %s3187 = sld [smem:[#allocation6 + $0x3c]]
        %v3188 = vstv %s3187
        %v3189 = vmul.f32 %v3188, %v3175
        %v3191 = vrot.slane %v3189, 6
        %v3192 = vrot.slane %v3191, 4
        %v3194 = vadd.f32 %v3186, %v3192
        %s3195 = sld [smem:[#allocation6 + $0x55]]
        %v3196 = vstv %s3195
        %v3197 = vmul.f32 %v3196, %v3175
        %v3199 = vrot.slane %v3197, 7
        %v3200 = vrot.slane %v3199, 4
        %v3202 = vadd.f32 %v3194, %v3200
        %v3203 = vadd.f32 %v3079, %v3202
        %s3204 = sld [smem:[#allocation6 + $0x6e]]
        %v3205 = vstv %s3204
        %v3206 = vmul.f32 %v3205, %v3175
        %s3207 = sld [smem:[#allocation6 + $0x87]]
        %v3208 = vstv %s3207
        %v3209 = vmul.f32 %v3208, %v3175
        %v3211 = vrot.slane %v3209, 5
        %v3212 = vrot.slane %v3211, 4
        %v3214 = vadd.f32 %v3206, %v3212
        %s3215 = sld [smem:[#allocation6 + $0xa0]]
        %v3216 = vstv %s3215
        %v3217 = vmul.f32 %v3216, %v3175
        %v3219 = vrot.slane %v3217, 6
        %v3220 = vrot.slane %v3219, 4
        %v3222 = vadd.f32 %v3214, %v3220
        %s3223 = sld [smem:[#allocation6 + $0xb9]]
        %v3224 = vstv %s3223
        %v3225 = vmul.f32 %v3224, %v3175
        %v3227 = vrot.slane %v3225, 7
        %v3228 = vrot.slane %v3227, 4
        %v3230 = vadd.f32 %v3222, %v3228
        %v3231 = vadd.f32 %v3107, %v3230
        %s3232 = sld [smem:[#allocation6 + $0xd2]]
        %v3233 = vstv %s3232
        %v3234 = vmul.f32 %v3233, %v3175
        %s3235 = sld [smem:[#allocation6 + $0xeb]]
        %v3236 = vstv %s3235
        %v3237 = vmul.f32 %v3236, %v3175
        %v3239 = vrot.slane %v3237, 5
        %v3240 = vrot.slane %v3239, 4
        %v3242 = vadd.f32 %v3234, %v3240
        %s3243 = sld [smem:[#allocation6 + $0x104]]
        %v3244 = vstv %s3243
        %v3245 = vmul.f32 %v3244, %v3175
        %v3247 = vrot.slane %v3245, 6
        %v3248 = vrot.slane %v3247, 4
        %v3250 = vadd.f32 %v3242, %v3248
        %s3251 = sld [smem:[#allocation6 + $0x11d]]
        %v3252 = vstv %s3251
        %v3253 = vmul.f32 %v3252, %v3175
        %v3255 = vrot.slane %v3253, 7
        %v3256 = vrot.slane %v3255, 4
        %v3258 = vadd.f32 %v3250, %v3256
        %v3259 = vadd.f32 %v3135, %v3258
        %s3260 = sld [smem:[#allocation6 + $0x136]]
        %v3261 = vstv %s3260
        %v3262 = vmul.f32 %v3261, %v3175
        %s3263 = sld [smem:[#allocation6 + $0x14f]]
        %v3264 = vstv %s3263
        %v3265 = vmul.f32 %v3264, %v3175
        %v3267 = vrot.slane %v3265, 5
        %v3268 = vrot.slane %v3267, 4
        %v3270 = vadd.f32 %v3262, %v3268
        %s3271 = sld [smem:[#allocation6 + $0x168]]
        %v3272 = vstv %s3271
        %v3273 = vmul.f32 %v3272, %v3175
        %v3275 = vrot.slane %v3273, 6
        %v3276 = vrot.slane %v3275, 4
        %v3278 = vadd.f32 %v3270, %v3276
        %s3279 = sld [smem:[#allocation6 + $0x181]]
        %v3280 = vstv %s3279
        %v3281 = vmul.f32 %v3280, %v3175
        %v3283 = vrot.slane %v3281, 7
        %v3284 = vrot.slane %v3283, 4
        %v3286 = vadd.f32 %v3278, %v3284
        %v3287 = vadd.f32 %v3163, %v3286
        %3288 = vrot.lane.b32.xlu0 %v1918, 1
        %v3289 = vpop.permute.xlu0 %3288
        %3290 = vrot.lane.b32.xlu0 %v1920, 1
        %v3291 = vpop.permute.xlu0 %3290
        %v3292 = vsel %vm1083, %v3289, %v3291
        %v3293 = vsel %vm1083, %v3291, %v3289
        %v3296 = vcombine.low %v3293, %v3292
        %v3298 = vsel %vm714, %v3296, 0.0
        %s3299 = sld [smem:[#allocation6 + $0xb]]
        %v3300 = vstv %s3299
        %v3301 = vmul.f32 %v3300, %v3298
        %s3302 = sld [smem:[#allocation6 + $0x24]]
        %v3303 = vstv %s3302
        %v3304 = vmul.f32 %v3303, %v3298
        %v3306 = vrot.slane %v3304, 5
        %v3307 = vrot.slane %v3306, 4
        %v3309 = vadd.f32 %v3301, %v3307
        %s3310 = sld [smem:[#allocation6 + $0x3d]]
        %v3311 = vstv %s3310
        %v3312 = vmul.f32 %v3311, %v3298
        %v3314 = vrot.slane %v3312, 6
        %v3315 = vrot.slane %v3314, 4
        %v3317 = vadd.f32 %v3309, %v3315
        %s3318 = sld [smem:[#allocation6 + $0x56]]
        %v3319 = vstv %s3318
        %v3320 = vmul.f32 %v3319, %v3298
        %v3322 = vrot.slane %v3320, 7
        %v3323 = vrot.slane %v3322, 4
        %v3325 = vadd.f32 %v3317, %v3323
        %v3326 = vadd.f32 %v3203, %v3325
        %s3327 = sld [smem:[#allocation6 + $0x6f]]
        %v3328 = vstv %s3327
        %v3329 = vmul.f32 %v3328, %v3298
        %s3330 = sld [smem:[#allocation6 + $0x88]]
        %v3331 = vstv %s3330
        %v3332 = vmul.f32 %v3331, %v3298
        %v3334 = vrot.slane %v3332, 5
        %v3335 = vrot.slane %v3334, 4
        %v3337 = vadd.f32 %v3329, %v3335
        %s3338 = sld [smem:[#allocation6 + $0xa1]]
        %v3339 = vstv %s3338
        %v3340 = vmul.f32 %v3339, %v3298
        %v3342 = vrot.slane %v3340, 6
        %v3343 = vrot.slane %v3342, 4
        %v3345 = vadd.f32 %v3337, %v3343
        %s3346 = sld [smem:[#allocation6 + $0xba]]
        %v3347 = vstv %s3346
        %v3348 = vmul.f32 %v3347, %v3298
        %v3350 = vrot.slane %v3348, 7
        %v3351 = vrot.slane %v3350, 4
        %v3353 = vadd.f32 %v3345, %v3351
        %v3354 = vadd.f32 %v3231, %v3353
        %s3355 = sld [smem:[#allocation6 + $0xd3]]
        %v3356 = vstv %s3355
        %v3357 = vmul.f32 %v3356, %v3298
        %s3358 = sld [smem:[#allocation6 + $0xec]]
        %v3359 = vstv %s3358
        %v3360 = vmul.f32 %v3359, %v3298
        %v3362 = vrot.slane %v3360, 5
        %v3363 = vrot.slane %v3362, 4
        %v3365 = vadd.f32 %v3357, %v3363
        %s3366 = sld [smem:[#allocation6 + $0x105]]
        %v3367 = vstv %s3366
        %v3368 = vmul.f32 %v3367, %v3298
        %v3370 = vrot.slane %v3368, 6
        %v3371 = vrot.slane %v3370, 4
        %v3373 = vadd.f32 %v3365, %v3371
        %s3374 = sld [smem:[#allocation6 + $0x11e]]
        %v3375 = vstv %s3374
        %v3376 = vmul.f32 %v3375, %v3298
        %v3378 = vrot.slane %v3376, 7
        %v3379 = vrot.slane %v3378, 4
        %v3381 = vadd.f32 %v3373, %v3379
        %v3382 = vadd.f32 %v3259, %v3381
        %s3383 = sld [smem:[#allocation6 + $0x137]]
        %v3384 = vstv %s3383
        %v3385 = vmul.f32 %v3384, %v3298
        %s3386 = sld [smem:[#allocation6 + $0x150]]
        %v3387 = vstv %s3386
        %v3388 = vmul.f32 %v3387, %v3298
        %v3390 = vrot.slane %v3388, 5
        %v3391 = vrot.slane %v3390, 4
        %v3393 = vadd.f32 %v3385, %v3391
        %s3394 = sld [smem:[#allocation6 + $0x169]]
        %v3395 = vstv %s3394
        %v3396 = vmul.f32 %v3395, %v3298
        %v3398 = vrot.slane %v3396, 6
        %v3399 = vrot.slane %v3398, 4
        %v3401 = vadd.f32 %v3393, %v3399
        %s3402 = sld [smem:[#allocation6 + $0x182]]
        %v3403 = vstv %s3402
        %v3404 = vmul.f32 %v3403, %v3298
        %v3406 = vrot.slane %v3404, 7
        %v3407 = vrot.slane %v3406, 4
        %v3409 = vadd.f32 %v3401, %v3407
        %v3410 = vadd.f32 %v3287, %v3409
        %s3411 = sld [smem:[#allocation6 + $0xc]]
        %v3412 = vstv %s3411
        %v3413 = vmul.f32 %v3412, %v1918
        %s3414 = sld [smem:[#allocation6 + $0x25]]
        %v3415 = vstv %s3414
        %v3416 = vmul.f32 %v3415, %v1918
        %v3418 = vrot.slane %v3416, 5
        %v3419 = vrot.slane %v3418, 4
        %v3421 = vadd.f32 %v3413, %v3419
        %s3422 = sld [smem:[#allocation6 + $0x3e]]
        %v3423 = vstv %s3422
        %v3424 = vmul.f32 %v3423, %v1918
        %v3426 = vrot.slane %v3424, 6
        %v3427 = vrot.slane %v3426, 4
        %v3429 = vadd.f32 %v3421, %v3427
        %s3430 = sld [smem:[#allocation6 + $0x57]]
        %v3431 = vstv %s3430
        %v3432 = vmul.f32 %v3431, %v1918
        %v3434 = vrot.slane %v3432, 7
        %v3435 = vrot.slane %v3434, 4
        %v3437 = vadd.f32 %v3429, %v3435
        %v3438 = vadd.f32 %v3326, %v3437
        %s3439 = sld [smem:[#allocation6 + $0x70]]
        %v3440 = vstv %s3439
        %v3441 = vmul.f32 %v3440, %v1918
        %s3442 = sld [smem:[#allocation6 + $0x89]]
        %v3443 = vstv %s3442
        %v3444 = vmul.f32 %v3443, %v1918
        %v3446 = vrot.slane %v3444, 5
        %v3447 = vrot.slane %v3446, 4
        %v3449 = vadd.f32 %v3441, %v3447
        %s3450 = sld [smem:[#allocation6 + $0xa2]]
        %v3451 = vstv %s3450
        %v3452 = vmul.f32 %v3451, %v1918
        %v3454 = vrot.slane %v3452, 6
        %v3455 = vrot.slane %v3454, 4
        %v3457 = vadd.f32 %v3449, %v3455
        %s3458 = sld [smem:[#allocation6 + $0xbb]]
        %v3459 = vstv %s3458
        %v3460 = vmul.f32 %v3459, %v1918
        %v3462 = vrot.slane %v3460, 7
        %v3463 = vrot.slane %v3462, 4
        %v3465 = vadd.f32 %v3457, %v3463
        %v3466 = vadd.f32 %v3354, %v3465
        %s3467 = sld [smem:[#allocation6 + $0xd4]]
        %v3468 = vstv %s3467
        %v3469 = vmul.f32 %v3468, %v1918
        %s3470 = sld [smem:[#allocation6 + $0xed]]
        %v3471 = vstv %s3470
        %v3472 = vmul.f32 %v3471, %v1918
        %v3474 = vrot.slane %v3472, 5
        %v3475 = vrot.slane %v3474, 4
        %v3477 = vadd.f32 %v3469, %v3475
        %s3478 = sld [smem:[#allocation6 + $0x106]]
        %v3479 = vstv %s3478
        %v3480 = vmul.f32 %v3479, %v1918
        %v3482 = vrot.slane %v3480, 6
        %v3483 = vrot.slane %v3482, 4
        %v3485 = vadd.f32 %v3477, %v3483
        %s3486 = sld [smem:[#allocation6 + $0x11f]]
        %v3487 = vstv %s3486
        %v3488 = vmul.f32 %v3487, %v1918
        %v3490 = vrot.slane %v3488, 7
        %v3491 = vrot.slane %v3490, 4
        %v3493 = vadd.f32 %v3485, %v3491
        %v3494 = vadd.f32 %v3382, %v3493
        %s3495 = sld [smem:[#allocation6 + $0x138]]
        %v3496 = vstv %s3495
        %v3497 = vmul.f32 %v3496, %v1918
        %s3498 = sld [smem:[#allocation6 + $0x151]]
        %v3499 = vstv %s3498
        %v3500 = vmul.f32 %v3499, %v1918
        %v3502 = vrot.slane %v3500, 5
        %v3503 = vrot.slane %v3502, 4
        %v3505 = vadd.f32 %v3497, %v3503
        %s3506 = sld [smem:[#allocation6 + $0x16a]]
        %v3507 = vstv %s3506
        %v3508 = vmul.f32 %v3507, %v1918
        %v3510 = vrot.slane %v3508, 6
        %v3511 = vrot.slane %v3510, 4
        %v3513 = vadd.f32 %v3505, %v3511
        %s3514 = sld [smem:[#allocation6 + $0x183]]
        %v3515 = vstv %s3514
        %v3516 = vmul.f32 %v3515, %v1918
        %v3518 = vrot.slane %v3516, 7
        %v3519 = vrot.slane %v3518, 4
        %v3521 = vadd.f32 %v3513, %v3519
        %v3522 = vadd.f32 %v3410, %v3521
        %3523 = vrot.lane.b32.xlu0 %v1918, 127
        %v3524 = vpop.permute.xlu0 %3523
        %3525 = vrot.lane.b32.xlu0 %v1920, 127
        %v3526 = vpop.permute.xlu0 %3525
        %v3527 = vsel %vm1319, %v3524, %v3526
        %v3528 = vsel %vm1319, %v3526, %v3524
        %v3531 = vcombine.low %v3527, %v3528
        %v3533 = vsel %vm960, %v3531, 0.0
        %s3534 = sld [smem:[#allocation6 + $0xd]]
        %v3535 = vstv %s3534
        %v3536 = vmul.f32 %v3535, %v3533
        %s3537 = sld [smem:[#allocation6 + $0x26]]
        %v3538 = vstv %s3537
        %v3539 = vmul.f32 %v3538, %v3533
        %v3541 = vrot.slane %v3539, 5
        %v3542 = vrot.slane %v3541, 4
        %v3544 = vadd.f32 %v3536, %v3542
        %s3545 = sld [smem:[#allocation6 + $0x3f]]
        %v3546 = vstv %s3545
        %v3547 = vmul.f32 %v3546, %v3533
        %v3549 = vrot.slane %v3547, 6
        %v3550 = vrot.slane %v3549, 4
        %v3552 = vadd.f32 %v3544, %v3550
        %s3553 = sld [smem:[#allocation6 + $0x58]]
        %v3554 = vstv %s3553
        %v3555 = vmul.f32 %v3554, %v3533
        %v3557 = vrot.slane %v3555, 7
        %v3558 = vrot.slane %v3557, 4
        %v3560 = vadd.f32 %v3552, %v3558
        %v3561 = vadd.f32 %v3438, %v3560
        %s3562 = sld [smem:[#allocation6 + $0x71]]
        %v3563 = vstv %s3562
        %v3564 = vmul.f32 %v3563, %v3533
        %s3565 = sld [smem:[#allocation6 + $0x8a]]
        %v3566 = vstv %s3565
        %v3567 = vmul.f32 %v3566, %v3533
        %v3569 = vrot.slane %v3567, 5
        %v3570 = vrot.slane %v3569, 4
        %v3572 = vadd.f32 %v3564, %v3570
        %s3573 = sld [smem:[#allocation6 + $0xa3]]
        %v3574 = vstv %s3573
        %v3575 = vmul.f32 %v3574, %v3533
        %v3577 = vrot.slane %v3575, 6
        %v3578 = vrot.slane %v3577, 4
        %v3580 = vadd.f32 %v3572, %v3578
        %s3581 = sld [smem:[#allocation6 + $0xbc]]
        %v3582 = vstv %s3581
        %v3583 = vmul.f32 %v3582, %v3533
        %v3585 = vrot.slane %v3583, 7
        %v3586 = vrot.slane %v3585, 4
        %v3588 = vadd.f32 %v3580, %v3586
        %v3589 = vadd.f32 %v3466, %v3588
        %s3590 = sld [smem:[#allocation6 + $0xd5]]
        %v3591 = vstv %s3590
        %v3592 = vmul.f32 %v3591, %v3533
        %s3593 = sld [smem:[#allocation6 + $0xee]]
        %v3594 = vstv %s3593
        %v3595 = vmul.f32 %v3594, %v3533
        %v3597 = vrot.slane %v3595, 5
        %v3598 = vrot.slane %v3597, 4
        %v3600 = vadd.f32 %v3592, %v3598
        %s3601 = sld [smem:[#allocation6 + $0x107]]
        %v3602 = vstv %s3601
        %v3603 = vmul.f32 %v3602, %v3533
        %v3605 = vrot.slane %v3603, 6
        %v3606 = vrot.slane %v3605, 4
        %v3608 = vadd.f32 %v3600, %v3606
        %s3609 = sld [smem:[#allocation6 + $0x120]]
        %v3610 = vstv %s3609
        %v3611 = vmul.f32 %v3610, %v3533
        %v3613 = vrot.slane %v3611, 7
        %v3614 = vrot.slane %v3613, 4
        %v3616 = vadd.f32 %v3608, %v3614
        %v3617 = vadd.f32 %v3494, %v3616
        %s3618 = sld [smem:[#allocation6 + $0x139]]
        %v3619 = vstv %s3618
        %v3620 = vmul.f32 %v3619, %v3533
        %s3621 = sld [smem:[#allocation6 + $0x152]]
        %v3622 = vstv %s3621
        %v3623 = vmul.f32 %v3622, %v3533
        %v3625 = vrot.slane %v3623, 5
        %v3626 = vrot.slane %v3625, 4
        %v3628 = vadd.f32 %v3620, %v3626
        %s3629 = sld [smem:[#allocation6 + $0x16b]]
        %v3630 = vstv %s3629
        %v3631 = vmul.f32 %v3630, %v3533
        %v3633 = vrot.slane %v3631, 6
        %v3634 = vrot.slane %v3633, 4
        %v3636 = vadd.f32 %v3628, %v3634
        %s3637 = sld [smem:[#allocation6 + $0x184]]
        %v3638 = vstv %s3637
        %v3639 = vmul.f32 %v3638, %v3533
        %v3641 = vrot.slane %v3639, 7
        %v3642 = vrot.slane %v3641, 4
        %v3644 = vadd.f32 %v3636, %v3642
        %v3645 = vadd.f32 %v3522, %v3644
        %3646 = vrot.lane.b32.xlu0 %v1918, 126
        %v3647 = vpop.permute.xlu0 %3646
        %3648 = vrot.lane.b32.xlu0 %v1920, 126
        %v3649 = vpop.permute.xlu0 %3648
        %vm3650 = vcmp.lt.s32.totalorder %v709, 126
        %v3651 = vsel %vm3650, %v3647, %v3649
        %v3652 = vsel %vm3650, %v3649, %v3647
        %v3655 = vcombine.low %v3651, %v3652
        %v3657 = vsel %vm2426, %v3655, 0.0
        %s3658 = sld [smem:[#allocation6 + $0xe]]
        %v3659 = vstv %s3658
        %v3660 = vmul.f32 %v3659, %v3657
        %s3661 = sld [smem:[#allocation6 + $0x27]]
        %v3662 = vstv %s3661
        %v3663 = vmul.f32 %v3662, %v3657
        %v3665 = vrot.slane %v3663, 5
        %v3666 = vrot.slane %v3665, 4
        %v3668 = vadd.f32 %v3660, %v3666
        %s3669 = sld [smem:[#allocation6 + $0x40]]
        %v3670 = vstv %s3669
        %v3671 = vmul.f32 %v3670, %v3657
        %v3673 = vrot.slane %v3671, 6
        %v3674 = vrot.slane %v3673, 4
        %v3676 = vadd.f32 %v3668, %v3674
        %s3677 = sld [smem:[#allocation6 + $0x59]]
        %v3678 = vstv %s3677
        %v3679 = vmul.f32 %v3678, %v3657
        %v3681 = vrot.slane %v3679, 7
        %v3682 = vrot.slane %v3681, 4
        %v3684 = vadd.f32 %v3676, %v3682
        %v3685 = vadd.f32 %v3561, %v3684
        %s3686 = sld [smem:[#allocation6 + $0x72]]
        %v3687 = vstv %s3686
        %v3688 = vmul.f32 %v3687, %v3657
        %s3689 = sld [smem:[#allocation6 + $0x8b]]
        %v3690 = vstv %s3689
        %v3691 = vmul.f32 %v3690, %v3657
        %v3693 = vrot.slane %v3691, 5
        %v3694 = vrot.slane %v3693, 4
        %v3696 = vadd.f32 %v3688, %v3694
        %s3697 = sld [smem:[#allocation6 + $0xa4]]
        %v3698 = vstv %s3697
        %v3699 = vmul.f32 %v3698, %v3657
        %v3701 = vrot.slane %v3699, 6
        %v3702 = vrot.slane %v3701, 4
        %v3704 = vadd.f32 %v3696, %v3702
        %s3705 = sld [smem:[#allocation6 + $0xbd]]
        %v3706 = vstv %s3705
        %v3707 = vmul.f32 %v3706, %v3657
        %v3709 = vrot.slane %v3707, 7
        %v3710 = vrot.slane %v3709, 4
        %v3712 = vadd.f32 %v3704, %v3710
        %v3713 = vadd.f32 %v3589, %v3712
        %s3714 = sld [smem:[#allocation6 + $0xd6]]
        %v3715 = vstv %s3714
        %v3716 = vmul.f32 %v3715, %v3657
        %s3717 = sld [smem:[#allocation6 + $0xef]]
        %v3718 = vstv %s3717
        %v3719 = vmul.f32 %v3718, %v3657
        %v3721 = vrot.slane %v3719, 5
        %v3722 = vrot.slane %v3721, 4
        %v3724 = vadd.f32 %v3716, %v3722
        %s3725 = sld [smem:[#allocation6 + $0x108]]
        %v3726 = vstv %s3725
        %v3727 = vmul.f32 %v3726, %v3657
        %v3729 = vrot.slane %v3727, 6
        %v3730 = vrot.slane %v3729, 4
        %v3732 = vadd.f32 %v3724, %v3730
        %s3733 = sld [smem:[#allocation6 + $0x121]]
        %v3734 = vstv %s3733
        %v3735 = vmul.f32 %v3734, %v3657
        %v3737 = vrot.slane %v3735, 7
        %v3738 = vrot.slane %v3737, 4
        %v3740 = vadd.f32 %v3732, %v3738
        %v3741 = vadd.f32 %v3617, %v3740
        %s3742 = sld [smem:[#allocation6 + $0x13a]]
        %v3743 = vstv %s3742
        %v3744 = vmul.f32 %v3743, %v3657
        %s3745 = sld [smem:[#allocation6 + $0x153]]
        %v3746 = vstv %s3745
        %v3747 = vmul.f32 %v3746, %v3657
        %v3749 = vrot.slane %v3747, 5
        %v3750 = vrot.slane %v3749, 4
        %v3752 = vadd.f32 %v3744, %v3750
        %s3753 = sld [smem:[#allocation6 + $0x16c]]
        %v3754 = vstv %s3753
        %v3755 = vmul.f32 %v3754, %v3657
        %v3757 = vrot.slane %v3755, 6
        %v3758 = vrot.slane %v3757, 4
        %v3760 = vadd.f32 %v3752, %v3758
        %s3761 = sld [smem:[#allocation6 + $0x185]]
        %v3762 = vstv %s3761
        %v3763 = vmul.f32 %v3762, %v3657
        %v3765 = vrot.slane %v3763, 7
        %v3766 = vrot.slane %v3765, 4
        %v3768 = vadd.f32 %v3760, %v3766
        %v3769 = vadd.f32 %v3645, %v3768
        %3770 = vrot.lane.b32.xlu0 %v1918, 114
        %v3771 = vpop.permute.xlu0 %3770
        %3772 = vrot.lane.b32.xlu0 %v1920, 114
        %v3773 = vpop.permute.xlu0 %3772
        %vm3774 = vcmp.lt.s32.totalorder %v709, 114
        %v3775 = vsel %vm3774, %v3771, %v3773
        %v3776 = vsel %vm3774, %v3773, %v3771
        %vm3777 = vmand %vm1446, %vm1930
        %v3780 = vcombine.low %v3775, %v3776
        %v3782 = vsel %vm3777, %v3780, 0.0
        %s3783 = sld [smem:[#allocation6 + $0xf]]
        %v3784 = vstv %s3783
        %v3785 = vmul.f32 %v3784, %v3782
        %s3786 = sld [smem:[#allocation6 + $0x28]]
        %v3787 = vstv %s3786
        %v3788 = vmul.f32 %v3787, %v3782
        %v3790 = vrot.slane %v3788, 5
        %v3791 = vrot.slane %v3790, 4
        %v3793 = vadd.f32 %v3785, %v3791
        %s3794 = sld [smem:[#allocation6 + $0x41]]
        %v3795 = vstv %s3794
        %v3796 = vmul.f32 %v3795, %v3782
        %v3798 = vrot.slane %v3796, 6
        %v3799 = vrot.slane %v3798, 4
        %v3801 = vadd.f32 %v3793, %v3799
        %s3802 = sld [smem:[#allocation6 + $0x5a]]
        %v3803 = vstv %s3802
        %v3804 = vmul.f32 %v3803, %v3782
        %v3806 = vrot.slane %v3804, 7
        %v3807 = vrot.slane %v3806, 4
        %v3809 = vadd.f32 %v3801, %v3807
        %v3810 = vadd.f32 %v3685, %v3809
        %s3811 = sld [smem:[#allocation6 + $0x73]]
        %v3812 = vstv %s3811
        %v3813 = vmul.f32 %v3812, %v3782
        %s3814 = sld [smem:[#allocation6 + $0x8c]]
        %v3815 = vstv %s3814
        %v3816 = vmul.f32 %v3815, %v3782
        %v3818 = vrot.slane %v3816, 5
        %v3819 = vrot.slane %v3818, 4
        %v3821 = vadd.f32 %v3813, %v3819
        %s3822 = sld [smem:[#allocation6 + $0xa5]]
        %v3823 = vstv %s3822
        %v3824 = vmul.f32 %v3823, %v3782
        %v3826 = vrot.slane %v3824, 6
        %v3827 = vrot.slane %v3826, 4
        %v3829 = vadd.f32 %v3821, %v3827
        %s3830 = sld [smem:[#allocation6 + $0xbe]]
        %v3831 = vstv %s3830
        %v3832 = vmul.f32 %v3831, %v3782
        %v3834 = vrot.slane %v3832, 7
        %v3835 = vrot.slane %v3834, 4
        %v3837 = vadd.f32 %v3829, %v3835
        %v3838 = vadd.f32 %v3713, %v3837
        %s3839 = sld [smem:[#allocation6 + $0xd7]]
        %v3840 = vstv %s3839
        %v3841 = vmul.f32 %v3840, %v3782
        %s3842 = sld [smem:[#allocation6 + $0xf0]]
        %v3843 = vstv %s3842
        %v3844 = vmul.f32 %v3843, %v3782
        %v3846 = vrot.slane %v3844, 5
        %v3847 = vrot.slane %v3846, 4
        %v3849 = vadd.f32 %v3841, %v3847
        %s3850 = sld [smem:[#allocation6 + $0x109]]
        %v3851 = vstv %s3850
        %v3852 = vmul.f32 %v3851, %v3782
        %v3854 = vrot.slane %v3852, 6
        %v3855 = vrot.slane %v3854, 4
        %v3857 = vadd.f32 %v3849, %v3855
        %s3858 = sld [smem:[#allocation6 + $0x122]]
        %v3859 = vstv %s3858
        %v3860 = vmul.f32 %v3859, %v3782
        %v3862 = vrot.slane %v3860, 7
        %v3863 = vrot.slane %v3862, 4
        %v3865 = vadd.f32 %v3857, %v3863
        %v3866 = vadd.f32 %v3741, %v3865
        %s3867 = sld [smem:[#allocation6 + $0x13b]]
        %v3868 = vstv %s3867
        %v3869 = vmul.f32 %v3868, %v3782
        %s3870 = sld [smem:[#allocation6 + $0x154]]
        %v3871 = vstv %s3870
        %v3872 = vmul.f32 %v3871, %v3782
        %v3874 = vrot.slane %v3872, 5
        %v3875 = vrot.slane %v3874, 4
        %v3877 = vadd.f32 %v3869, %v3875
        %s3878 = sld [smem:[#allocation6 + $0x16d]]
        %v3879 = vstv %s3878
        %v3880 = vmul.f32 %v3879, %v3782
        %v3882 = vrot.slane %v3880, 6
        %v3883 = vrot.slane %v3882, 4
        %v3885 = vadd.f32 %v3877, %v3883
        %s3886 = sld [smem:[#allocation6 + $0x186]]
        %v3887 = vstv %s3886
        %v3888 = vmul.f32 %v3887, %v3782
        %v3890 = vrot.slane %v3888, 7
        %v3891 = vrot.slane %v3890, 4
        %v3893 = vadd.f32 %v3885, %v3891
        %v3894 = vadd.f32 %v3769, %v3893
        %3895 = vrot.lane.b32.xlu0 %v1918, 113
        %v3896 = vpop.permute.xlu0 %3895
        %3897 = vrot.lane.b32.xlu0 %v1920, 113
        %v3898 = vpop.permute.xlu0 %3897
        %v3899 = vsel %vm1443, %v3896, %v3898
        %v3900 = vsel %vm1443, %v3898, %v3896
        %v3903 = vcombine.low %v3899, %v3900
        %v3905 = vsel %vm1447, %v3903, 0.0
        %s3906 = sld [smem:[#allocation6 + $0x10]]
        %v3907 = vstv %s3906
        %v3908 = vmul.f32 %v3907, %v3905
        %s3909 = sld [smem:[#allocation6 + $0x29]]
        %v3910 = vstv %s3909
        %v3911 = vmul.f32 %v3910, %v3905
        %v3913 = vrot.slane %v3911, 5
        %v3914 = vrot.slane %v3913, 4
        %v3916 = vadd.f32 %v3908, %v3914
        %s3917 = sld [smem:[#allocation6 + $0x42]]
        %v3918 = vstv %s3917
        %v3919 = vmul.f32 %v3918, %v3905
        %v3921 = vrot.slane %v3919, 6
        %v3922 = vrot.slane %v3921, 4
        %v3924 = vadd.f32 %v3916, %v3922
        %s3925 = sld [smem:[#allocation6 + $0x5b]]
        %v3926 = vstv %s3925
        %v3927 = vmul.f32 %v3926, %v3905
        %v3929 = vrot.slane %v3927, 7
        %v3930 = vrot.slane %v3929, 4
        %v3932 = vadd.f32 %v3924, %v3930
        %v3933 = vadd.f32 %v3810, %v3932
        %s3934 = sld [smem:[#allocation6 + $0x74]]
        %v3935 = vstv %s3934
        %v3936 = vmul.f32 %v3935, %v3905
        %s3937 = sld [smem:[#allocation6 + $0x8d]]
        %v3938 = vstv %s3937
        %v3939 = vmul.f32 %v3938, %v3905
        %v3941 = vrot.slane %v3939, 5
        %v3942 = vrot.slane %v3941, 4
        %v3944 = vadd.f32 %v3936, %v3942
        %s3945 = sld [smem:[#allocation6 + $0xa6]]
        %v3946 = vstv %s3945
        %v3947 = vmul.f32 %v3946, %v3905
        %v3949 = vrot.slane %v3947, 6
        %v3950 = vrot.slane %v3949, 4
        %v3952 = vadd.f32 %v3944, %v3950
        %s3953 = sld [smem:[#allocation6 + $0xbf]]
        %v3954 = vstv %s3953
        %v3955 = vmul.f32 %v3954, %v3905
        %v3957 = vrot.slane %v3955, 7
        %v3958 = vrot.slane %v3957, 4
        %v3960 = vadd.f32 %v3952, %v3958
        %v3961 = vadd.f32 %v3838, %v3960
        %s3962 = sld [smem:[#allocation6 + $0xd8]]
        %v3963 = vstv %s3962
        %v3964 = vmul.f32 %v3963, %v3905
        %s3965 = sld [smem:[#allocation6 + $0xf1]]
        %v3966 = vstv %s3965
        %v3967 = vmul.f32 %v3966, %v3905
        %v3969 = vrot.slane %v3967, 5
        %v3970 = vrot.slane %v3969, 4
        %v3972 = vadd.f32 %v3964, %v3970
        %s3973 = sld [smem:[#allocation6 + $0x10a]]
        %v3974 = vstv %s3973
        %v3975 = vmul.f32 %v3974, %v3905
        %v3977 = vrot.slane %v3975, 6
        %v3978 = vrot.slane %v3977, 4
        %v3980 = vadd.f32 %v3972, %v3978
        %s3981 = sld [smem:[#allocation6 + $0x123]]
        %v3982 = vstv %s3981
        %v3983 = vmul.f32 %v3982, %v3905
        %v3985 = vrot.slane %v3983, 7
        %v3986 = vrot.slane %v3985, 4
        %v3988 = vadd.f32 %v3980, %v3986
        %v3989 = vadd.f32 %v3866, %v3988
        %s3990 = sld [smem:[#allocation6 + $0x13c]]
        %v3991 = vstv %s3990
        %v3992 = vmul.f32 %v3991, %v3905
        %s3993 = sld [smem:[#allocation6 + $0x155]]
        %v3994 = vstv %s3993
        %v3995 = vmul.f32 %v3994, %v3905
        %v3997 = vrot.slane %v3995, 5
        %v3998 = vrot.slane %v3997, 4
        %v4000 = vadd.f32 %v3992, %v3998
        %s4001 = sld [smem:[#allocation6 + $0x16e]]
        %v4002 = vstv %s4001
        %v4003 = vmul.f32 %v4002, %v3905
        %v4005 = vrot.slane %v4003, 6
        %v4006 = vrot.slane %v4005, 4
        %v4008 = vadd.f32 %v4000, %v4006
        %s4009 = sld [smem:[#allocation6 + $0x187]]
        %v4010 = vstv %s4009
        %v4011 = vmul.f32 %v4010, %v3905
        %v4013 = vrot.slane %v4011, 7
        %v4014 = vrot.slane %v4013, 4
        %v4016 = vadd.f32 %v4008, %v4014
        %v4017 = vadd.f32 %v3894, %v4016
        %4018 = vrot.lane.b32.xlu0 %v1918, 112
        %v4019 = vpop.permute.xlu0 %4018
        %4020 = vrot.lane.b32.xlu0 %v1920, 112
        %v4021 = vpop.permute.xlu0 %4020
        %v4022 = vsel %vm1569, %v4019, %v4021
        %v4023 = vsel %vm1569, %v4021, %v4019
        %v4026 = vcombine.low %v4022, %v4023
        %v4028 = vsel %vm1446, %v4026, 0.0
        %s4029 = sld [smem:[#allocation6 + $0x11]]
        %v4030 = vstv %s4029
        %v4031 = vmul.f32 %v4030, %v4028
        %s4032 = sld [smem:[#allocation6 + $0x2a]]
        %v4033 = vstv %s4032
        %v4034 = vmul.f32 %v4033, %v4028
        %v4036 = vrot.slane %v4034, 5
        %v4037 = vrot.slane %v4036, 4
        %v4039 = vadd.f32 %v4031, %v4037
        %s4040 = sld [smem:[#allocation6 + $0x43]]
        %v4041 = vstv %s4040
        %v4042 = vmul.f32 %v4041, %v4028
        %v4044 = vrot.slane %v4042, 6
        %v4045 = vrot.slane %v4044, 4
        %v4047 = vadd.f32 %v4039, %v4045
        %s4048 = sld [smem:[#allocation6 + $0x5c]]
        %v4049 = vstv %s4048
        %v4050 = vmul.f32 %v4049, %v4028
        %v4052 = vrot.slane %v4050, 7
        %v4053 = vrot.slane %v4052, 4
        %v4055 = vadd.f32 %v4047, %v4053
        %v4056 = vadd.f32 %v3933, %v4055
        %s4057 = sld [smem:[#allocation6 + $0x75]]
        %v4058 = vstv %s4057
        %v4059 = vmul.f32 %v4058, %v4028
        %s4060 = sld [smem:[#allocation6 + $0x8e]]
        %v4061 = vstv %s4060
        %v4062 = vmul.f32 %v4061, %v4028
        %v4064 = vrot.slane %v4062, 5
        %v4065 = vrot.slane %v4064, 4
        %v4067 = vadd.f32 %v4059, %v4065
        %s4068 = sld [smem:[#allocation6 + $0xa7]]
        %v4069 = vstv %s4068
        %v4070 = vmul.f32 %v4069, %v4028
        %v4072 = vrot.slane %v4070, 6
        %v4073 = vrot.slane %v4072, 4
        %v4075 = vadd.f32 %v4067, %v4073
        %s4076 = sld [smem:[#allocation6 + $0xc0]]
        %v4077 = vstv %s4076
        %v4078 = vmul.f32 %v4077, %v4028
        %v4080 = vrot.slane %v4078, 7
        %v4081 = vrot.slane %v4080, 4
        %v4083 = vadd.f32 %v4075, %v4081
        %v4084 = vadd.f32 %v3961, %v4083
        %s4085 = sld [smem:[#allocation6 + $0xd9]]
        %v4086 = vstv %s4085
        %v4087 = vmul.f32 %v4086, %v4028
        %s4088 = sld [smem:[#allocation6 + $0xf2]]
        %v4089 = vstv %s4088
        %v4090 = vmul.f32 %v4089, %v4028
        %v4092 = vrot.slane %v4090, 5
        %v4093 = vrot.slane %v4092, 4
        %v4095 = vadd.f32 %v4087, %v4093
        %s4096 = sld [smem:[#allocation6 + $0x10b]]
        %v4097 = vstv %s4096
        %v4098 = vmul.f32 %v4097, %v4028
        %v4100 = vrot.slane %v4098, 6
        %v4101 = vrot.slane %v4100, 4
        %v4103 = vadd.f32 %v4095, %v4101
        %s4104 = sld [smem:[#allocation6 + $0x124]]
        %v4105 = vstv %s4104
        %v4106 = vmul.f32 %v4105, %v4028
        %v4108 = vrot.slane %v4106, 7
        %v4109 = vrot.slane %v4108, 4
        %v4111 = vadd.f32 %v4103, %v4109
        %v4112 = vadd.f32 %v3989, %v4111
        %s4113 = sld [smem:[#allocation6 + $0x13d]]
        %v4114 = vstv %s4113
        %v4115 = vmul.f32 %v4114, %v4028
        %s4116 = sld [smem:[#allocation6 + $0x156]]
        %v4117 = vstv %s4116
        %v4118 = vmul.f32 %v4117, %v4028
        %v4120 = vrot.slane %v4118, 5
        %v4121 = vrot.slane %v4120, 4
        %v4123 = vadd.f32 %v4115, %v4121
        %s4124 = sld [smem:[#allocation6 + $0x16f]]
        %v4125 = vstv %s4124
        %v4126 = vmul.f32 %v4125, %v4028
        %v4128 = vrot.slane %v4126, 6
        %v4129 = vrot.slane %v4128, 4
        %v4131 = vadd.f32 %v4123, %v4129
        %s4132 = sld [smem:[#allocation6 + $0x188]]
        %v4133 = vstv %s4132
        %v4134 = vmul.f32 %v4133, %v4028
        %v4136 = vrot.slane %v4134, 7
        %v4137 = vrot.slane %v4136, 4
        %v4139 = vadd.f32 %v4131, %v4137
        %v4140 = vadd.f32 %v4017, %v4139
        %4141 = vrot.lane.b32.xlu0 %v1918, 111
        %v4142 = vpop.permute.xlu0 %4141
        %4143 = vrot.lane.b32.xlu0 %v1920, 111
        %v4144 = vpop.permute.xlu0 %4143
        %v4145 = vsel %vm1693, %v4142, %v4144
        %v4146 = vsel %vm1693, %v4144, %v4142
        %v4149 = vcombine.low %v4145, %v4146
        %v4151 = vsel %vm1696, %v4149, 0.0
        %s4152 = sld [smem:[#allocation6 + $0x12]]
        %v4153 = vstv %s4152
        %v4154 = vmul.f32 %v4153, %v4151
        %s4155 = sld [smem:[#allocation6 + $0x2b]]
        %v4156 = vstv %s4155
        %v4157 = vmul.f32 %v4156, %v4151
        %v4159 = vrot.slane %v4157, 5
        %v4160 = vrot.slane %v4159, 4
        %v4162 = vadd.f32 %v4154, %v4160
        %s4163 = sld [smem:[#allocation6 + $0x44]]
        %v4164 = vstv %s4163
        %v4165 = vmul.f32 %v4164, %v4151
        %v4167 = vrot.slane %v4165, 6
        %v4168 = vrot.slane %v4167, 4
        %v4170 = vadd.f32 %v4162, %v4168
        %s4171 = sld [smem:[#allocation6 + $0x5d]]
        %v4172 = vstv %s4171
        %v4173 = vmul.f32 %v4172, %v4151
        %v4175 = vrot.slane %v4173, 7
        %v4176 = vrot.slane %v4175, 4
        %v4178 = vadd.f32 %v4170, %v4176
        %v4179 = vadd.f32 %v4056, %v4178
        %s4180 = sld [smem:[#allocation6 + $0x76]]
        %v4181 = vstv %s4180
        %v4182 = vmul.f32 %v4181, %v4151
        %s4183 = sld [smem:[#allocation6 + $0x8f]]
        %v4184 = vstv %s4183
        %v4185 = vmul.f32 %v4184, %v4151
        %v4187 = vrot.slane %v4185, 5
        %v4188 = vrot.slane %v4187, 4
        %v4190 = vadd.f32 %v4182, %v4188
        %s4191 = sld [smem:[#allocation6 + $0xa8]]
        %v4192 = vstv %s4191
        %v4193 = vmul.f32 %v4192, %v4151
        %v4195 = vrot.slane %v4193, 6
        %v4196 = vrot.slane %v4195, 4
        %v4198 = vadd.f32 %v4190, %v4196
        %s4199 = sld [smem:[#allocation6 + $0xc1]]
        %v4200 = vstv %s4199
        %v4201 = vmul.f32 %v4200, %v4151
        %v4203 = vrot.slane %v4201, 7
        %v4204 = vrot.slane %v4203, 4
        %v4206 = vadd.f32 %v4198, %v4204
        %v4207 = vadd.f32 %v4084, %v4206
        %s4208 = sld [smem:[#allocation6 + $0xda]]
        %v4209 = vstv %s4208
        %v4210 = vmul.f32 %v4209, %v4151
        %s4211 = sld [smem:[#allocation6 + $0xf3]]
        %v4212 = vstv %s4211
        %v4213 = vmul.f32 %v4212, %v4151
        %v4215 = vrot.slane %v4213, 5
        %v4216 = vrot.slane %v4215, 4
        %v4218 = vadd.f32 %v4210, %v4216
        %s4219 = sld [smem:[#allocation6 + $0x10c]]
        %v4220 = vstv %s4219
        %v4221 = vmul.f32 %v4220, %v4151
        %v4223 = vrot.slane %v4221, 6
        %v4224 = vrot.slane %v4223, 4
        %v4226 = vadd.f32 %v4218, %v4224
        %s4227 = sld [smem:[#allocation6 + $0x125]]
        %v4228 = vstv %s4227
        %v4229 = vmul.f32 %v4228, %v4151
        %v4231 = vrot.slane %v4229, 7
        %v4232 = vrot.slane %v4231, 4
        %v4234 = vadd.f32 %v4226, %v4232
        %v4235 = vadd.f32 %v4112, %v4234
        %s4236 = sld [smem:[#allocation6 + $0x13e]]
        %v4237 = vstv %s4236
        %v4238 = vmul.f32 %v4237, %v4151
        %s4239 = sld [smem:[#allocation6 + $0x157]]
        %v4240 = vstv %s4239
        %v4241 = vmul.f32 %v4240, %v4151
        %v4243 = vrot.slane %v4241, 5
        %v4244 = vrot.slane %v4243, 4
        %v4246 = vadd.f32 %v4238, %v4244
        %s4247 = sld [smem:[#allocation6 + $0x170]]
        %v4248 = vstv %s4247
        %v4249 = vmul.f32 %v4248, %v4151
        %v4251 = vrot.slane %v4249, 6
        %v4252 = vrot.slane %v4251, 4
        %v4254 = vadd.f32 %v4246, %v4252
        %s4255 = sld [smem:[#allocation6 + $0x189]]
        %v4256 = vstv %s4255
        %v4257 = vmul.f32 %v4256, %v4151
        %v4259 = vrot.slane %v4257, 7
        %v4260 = vrot.slane %v4259, 4
        %v4262 = vadd.f32 %v4254, %v4260
        %v4263 = vadd.f32 %v4140, %v4262
        %4264 = vrot.lane.b32.xlu0 %v1918, 110
        %v4265 = vpop.permute.xlu0 %4264
        %4266 = vrot.lane.b32.xlu0 %v1920, 110
        %v4267 = vpop.permute.xlu0 %4266
        %vm4268 = vcmp.lt.s32.totalorder %v709, 110
        %v4269 = vsel %vm4268, %v4265, %v4267
        %v4270 = vsel %vm4268, %v4267, %v4265
        %vm4271 = vmand %vm1446, %vm2426
        %v4274 = vcombine.low %v4269, %v4270
        %v4276 = vsel %vm4271, %v4274, 0.0
        %s4277 = sld [smem:[#allocation6 + $0x13]]
        %v4278 = vstv %s4277
        %v4279 = vmul.f32 %v4278, %v4276
        %s4280 = sld [smem:[#allocation6 + $0x2c]]
        %v4281 = vstv %s4280
        %v4282 = vmul.f32 %v4281, %v4276
        %v4284 = vrot.slane %v4282, 5
        %v4285 = vrot.slane %v4284, 4
        %v4287 = vadd.f32 %v4279, %v4285
        %s4288 = sld [smem:[#allocation6 + $0x45]]
        %v4289 = vstv %s4288
        %v4290 = vmul.f32 %v4289, %v4276
        %v4292 = vrot.slane %v4290, 6
        %v4293 = vrot.slane %v4292, 4
        %v4295 = vadd.f32 %v4287, %v4293
        %s4296 = sld [smem:[#allocation6 + $0x5e]]
        %v4297 = vstv %s4296
        %v4298 = vmul.f32 %v4297, %v4276
        %v4300 = vrot.slane %v4298, 7
        %v4301 = vrot.slane %v4300, 4
        %v4303 = vadd.f32 %v4295, %v4301
        %v4304 = vadd.f32 %v4179, %v4303
        %s4305 = sld [smem:[#allocation6 + $0x77]]
        %v4306 = vstv %s4305
        %v4307 = vmul.f32 %v4306, %v4276
        %s4308 = sld [smem:[#allocation6 + $0x90]]
        %v4309 = vstv %s4308
        %v4310 = vmul.f32 %v4309, %v4276
        %v4312 = vrot.slane %v4310, 5
        %v4313 = vrot.slane %v4312, 4
        %v4315 = vadd.f32 %v4307, %v4313
        %s4316 = sld [smem:[#allocation6 + $0xa9]]
        %v4317 = vstv %s4316
        %v4318 = vmul.f32 %v4317, %v4276
        %v4320 = vrot.slane %v4318, 6
        %v4321 = vrot.slane %v4320, 4
        %v4323 = vadd.f32 %v4315, %v4321
        %s4324 = sld [smem:[#allocation6 + $0xc2]]
        %v4325 = vstv %s4324
        %v4326 = vmul.f32 %v4325, %v4276
        %v4328 = vrot.slane %v4326, 7
        %v4329 = vrot.slane %v4328, 4
        %v4331 = vadd.f32 %v4323, %v4329
        %v4332 = vadd.f32 %v4207, %v4331
        %s4333 = sld [smem:[#allocation6 + $0xdb]]
        %v4334 = vstv %s4333
        %v4335 = vmul.f32 %v4334, %v4276
        %s4336 = sld [smem:[#allocation6 + $0xf4]]
        %v4337 = vstv %s4336
        %v4338 = vmul.f32 %v4337, %v4276
        %v4340 = vrot.slane %v4338, 5
        %v4341 = vrot.slane %v4340, 4
        %v4343 = vadd.f32 %v4335, %v4341
        %s4344 = sld [smem:[#allocation6 + $0x10d]]
        %v4345 = vstv %s4344
        %v4346 = vmul.f32 %v4345, %v4276
        %v4348 = vrot.slane %v4346, 6
        %v4349 = vrot.slane %v4348, 4
        %v4351 = vadd.f32 %v4343, %v4349
        %s4352 = sld [smem:[#allocation6 + $0x126]]
        %v4353 = vstv %s4352
        %v4354 = vmul.f32 %v4353, %v4276
        %v4356 = vrot.slane %v4354, 7
        %v4357 = vrot.slane %v4356, 4
        %v4359 = vadd.f32 %v4351, %v4357
        %v4360 = vadd.f32 %v4235, %v4359
        %s4361 = sld [smem:[#allocation6 + $0x13f]]
        %v4362 = vstv %s4361
        %v4363 = vmul.f32 %v4362, %v4276
        %s4364 = sld [smem:[#allocation6 + $0x158]]
        %v4365 = vstv %s4364
        %v4366 = vmul.f32 %v4365, %v4276
        %v4368 = vrot.slane %v4366, 5
        %v4369 = vrot.slane %v4368, 4
        %v4371 = vadd.f32 %v4363, %v4369
        %s4372 = sld [smem:[#allocation6 + $0x171]]
        %v4373 = vstv %s4372
        %v4374 = vmul.f32 %v4373, %v4276
        %v4376 = vrot.slane %v4374, 6
        %v4377 = vrot.slane %v4376, 4
        %v4379 = vadd.f32 %v4371, %v4377
        %s4380 = sld [smem:[#allocation6 + $0x18a]]
        %v4381 = vstv %s4380
        %v4382 = vmul.f32 %v4381, %v4276
        %v4384 = vrot.slane %v4382, 7
        %v4385 = vrot.slane %v4384, 4
        %v4387 = vadd.f32 %v4379, %v4385
        %v4388 = vadd.f32 %v4263, %v4387
        %4389 = vrot.lane.b32.xlu0 %v1918, 98
        %v4390 = vpop.permute.xlu0 %4389
        %4391 = vrot.lane.b32.xlu0 %v1920, 98
        %v4392 = vpop.permute.xlu0 %4391
        %vm4393 = vcmp.lt.s32.totalorder %v709, 98
        %v4394 = vsel %vm4393, %v4390, %v4392
        %v4395 = vsel %vm4393, %v4392, %v4390
        %vm4396 = vcmp.lt.s32.totalorder %v453, 14
        %vm4397 = vmand %vm4396, %vm1930
        %v4400 = vcombine.low %v4394, %v4395
        %v4402 = vsel %vm4397, %v4400, 0.0
        %s4403 = sld [smem:[#allocation6 + $0x14]]
        %v4404 = vstv %s4403
        %v4405 = vmul.f32 %v4404, %v4402
        %s4406 = sld [smem:[#allocation6 + $0x2d]]
        %v4407 = vstv %s4406
        %v4408 = vmul.f32 %v4407, %v4402
        %v4410 = vrot.slane %v4408, 5
        %v4411 = vrot.slane %v4410, 4
        %v4413 = vadd.f32 %v4405, %v4411
        %s4414 = sld [smem:[#allocation6 + $0x46]]
        %v4415 = vstv %s4414
        %v4416 = vmul.f32 %v4415, %v4402
        %v4418 = vrot.slane %v4416, 6
        %v4419 = vrot.slane %v4418, 4
        %v4421 = vadd.f32 %v4413, %v4419
        %s4422 = sld [smem:[#allocation6 + $0x5f]]
        %v4423 = vstv %s4422
        %v4424 = vmul.f32 %v4423, %v4402
        %v4426 = vrot.slane %v4424, 7
        %v4427 = vrot.slane %v4426, 4
        %v4429 = vadd.f32 %v4421, %v4427
        %v4430 = vadd.f32 %v4304, %v4429
        %s4431 = sld [smem:[#allocation6 + $0x78]]
        %v4432 = vstv %s4431
        %v4433 = vmul.f32 %v4432, %v4402
        %s4434 = sld [smem:[#allocation6 + $0x91]]
        %v4435 = vstv %s4434
        %v4436 = vmul.f32 %v4435, %v4402
        %v4438 = vrot.slane %v4436, 5
        %v4439 = vrot.slane %v4438, 4
        %v4441 = vadd.f32 %v4433, %v4439
        %s4442 = sld [smem:[#allocation6 + $0xaa]]
        %v4443 = vstv %s4442
        %v4444 = vmul.f32 %v4443, %v4402
        %v4446 = vrot.slane %v4444, 6
        %v4447 = vrot.slane %v4446, 4
        %v4449 = vadd.f32 %v4441, %v4447
        %s4450 = sld [smem:[#allocation6 + $0xc3]]
        %v4451 = vstv %s4450
        %v4452 = vmul.f32 %v4451, %v4402
        %v4454 = vrot.slane %v4452, 7
        %v4455 = vrot.slane %v4454, 4
        %v4457 = vadd.f32 %v4449, %v4455
        %v4458 = vadd.f32 %v4332, %v4457
        %s4459 = sld [smem:[#allocation6 + $0xdc]]
        %v4460 = vstv %s4459
        %v4461 = vmul.f32 %v4460, %v4402
        %s4462 = sld [smem:[#allocation6 + $0xf5]]
        %v4463 = vstv %s4462
        %v4464 = vmul.f32 %v4463, %v4402
        %v4466 = vrot.slane %v4464, 5
        %v4467 = vrot.slane %v4466, 4
        %v4469 = vadd.f32 %v4461, %v4467
        %s4470 = sld [smem:[#allocation6 + $0x10e]]
        %v4471 = vstv %s4470
        %v4472 = vmul.f32 %v4471, %v4402
        %v4474 = vrot.slane %v4472, 6
        %v4475 = vrot.slane %v4474, 4
        %v4477 = vadd.f32 %v4469, %v4475
        %s4478 = sld [smem:[#allocation6 + $0x127]]
        %v4479 = vstv %s4478
        %v4480 = vmul.f32 %v4479, %v4402
        %v4482 = vrot.slane %v4480, 7
        %v4483 = vrot.slane %v4482, 4
        %v4485 = vadd.f32 %v4477, %v4483
        %v4486 = vadd.f32 %v4360, %v4485
        %s4487 = sld [smem:[#allocation6 + $0x140]]
        %v4488 = vstv %s4487
        %v4489 = vmul.f32 %v4488, %v4402
        %s4490 = sld [smem:[#allocation6 + $0x159]]
        %v4491 = vstv %s4490
        %v4492 = vmul.f32 %v4491, %v4402
        %v4494 = vrot.slane %v4492, 5
        %v4495 = vrot.slane %v4494, 4
        %v4497 = vadd.f32 %v4489, %v4495
        %s4498 = sld [smem:[#allocation6 + $0x172]]
        %v4499 = vstv %s4498
        %v4500 = vmul.f32 %v4499, %v4402
        %v4502 = vrot.slane %v4500, 6
        %v4503 = vrot.slane %v4502, 4
        %v4505 = vadd.f32 %v4497, %v4503
        %s4506 = sld [smem:[#allocation6 + $0x18b]]
        %v4507 = vstv %s4506
        %v4508 = vmul.f32 %v4507, %v4402
        %v4510 = vrot.slane %v4508, 7
        %v4511 = vrot.slane %v4510, 4
        %v4513 = vadd.f32 %v4505, %v4511
        %v4514 = vadd.f32 %v4388, %v4513
        %4515 = vrot.lane.b32.xlu0 %v1918, 97
        %v4516 = vpop.permute.xlu0 %4515
        %4517 = vrot.lane.b32.xlu0 %v1920, 97
        %v4518 = vpop.permute.xlu0 %4517
        %vm4519 = vcmp.lt.s32.totalorder %v709, 97
        %v4520 = vsel %vm4519, %v4516, %v4518
        %v4521 = vsel %vm4519, %v4518, %v4516
        %vm4522 = vmand %vm4396, %vm714
        %v4525 = vcombine.low %v4520, %v4521
        %v4527 = vsel %vm4522, %v4525, 0.0
        %s4528 = sld [smem:[#allocation6 + $0x15]]
        %v4529 = vstv %s4528
        %v4530 = vmul.f32 %v4529, %v4527
        %s4531 = sld [smem:[#allocation6 + $0x2e]]
        %v4532 = vstv %s4531
        %v4533 = vmul.f32 %v4532, %v4527
        %v4535 = vrot.slane %v4533, 5
        %v4536 = vrot.slane %v4535, 4
        %v4538 = vadd.f32 %v4530, %v4536
        %s4539 = sld [smem:[#allocation6 + $0x47]]
        %v4540 = vstv %s4539
        %v4541 = vmul.f32 %v4540, %v4527
        %v4543 = vrot.slane %v4541, 6
        %v4544 = vrot.slane %v4543, 4
        %v4546 = vadd.f32 %v4538, %v4544
        %s4547 = sld [smem:[#allocation6 + $0x60]]
        %v4548 = vstv %s4547
        %v4549 = vmul.f32 %v4548, %v4527
        %v4551 = vrot.slane %v4549, 7
        %v4552 = vrot.slane %v4551, 4
        %v4554 = vadd.f32 %v4546, %v4552
        %v4555 = vadd.f32 %v4430, %v4554
        %s4556 = sld [smem:[#allocation6 + $0x79]]
        %v4557 = vstv %s4556
        %v4558 = vmul.f32 %v4557, %v4527
        %s4559 = sld [smem:[#allocation6 + $0x92]]
        %v4560 = vstv %s4559
        %v4561 = vmul.f32 %v4560, %v4527
        %v4563 = vrot.slane %v4561, 5
        %v4564 = vrot.slane %v4563, 4
        %v4566 = vadd.f32 %v4558, %v4564
        %s4567 = sld [smem:[#allocation6 + $0xab]]
        %v4568 = vstv %s4567
        %v4569 = vmul.f32 %v4568, %v4527
        %v4571 = vrot.slane %v4569, 6
        %v4572 = vrot.slane %v4571, 4
        %v4574 = vadd.f32 %v4566, %v4572
        %s4575 = sld [smem:[#allocation6 + $0xc4]]
        %v4576 = vstv %s4575
        %v4577 = vmul.f32 %v4576, %v4527
        %v4579 = vrot.slane %v4577, 7
        %v4580 = vrot.slane %v4579, 4
        %v4582 = vadd.f32 %v4574, %v4580
        %v4583 = vadd.f32 %v4458, %v4582
        %s4584 = sld [smem:[#allocation6 + $0xdd]]
        %v4585 = vstv %s4584
        %v4586 = vmul.f32 %v4585, %v4527
        %s4587 = sld [smem:[#allocation6 + $0xf6]]
        %v4588 = vstv %s4587
        %v4589 = vmul.f32 %v4588, %v4527
        %v4591 = vrot.slane %v4589, 5
        %v4592 = vrot.slane %v4591, 4
        %v4594 = vadd.f32 %v4586, %v4592
        %s4595 = sld [smem:[#allocation6 + $0x10f]]
        %v4596 = vstv %s4595
        %v4597 = vmul.f32 %v4596, %v4527
        %v4599 = vrot.slane %v4597, 6
        %v4600 = vrot.slane %v4599, 4
        %v4602 = vadd.f32 %v4594, %v4600
        %s4603 = sld [smem:[#allocation6 + $0x128]]
        %v4604 = vstv %s4603
        %v4605 = vmul.f32 %v4604, %v4527
        %v4607 = vrot.slane %v4605, 7
        %v4608 = vrot.slane %v4607, 4
        %v4610 = vadd.f32 %v4602, %v4608
        %v4611 = vadd.f32 %v4486, %v4610
        %s4612 = sld [smem:[#allocation6 + $0x141]]
        %v4613 = vstv %s4612
        %v4614 = vmul.f32 %v4613, %v4527
        %s4615 = sld [smem:[#allocation6 + $0x15a]]
        %v4616 = vstv %s4615
        %v4617 = vmul.f32 %v4616, %v4527
        %v4619 = vrot.slane %v4617, 5
        %v4620 = vrot.slane %v4619, 4
        %v4622 = vadd.f32 %v4614, %v4620
        %s4623 = sld [smem:[#allocation6 + $0x173]]
        %v4624 = vstv %s4623
        %v4625 = vmul.f32 %v4624, %v4527
        %v4627 = vrot.slane %v4625, 6
        %v4628 = vrot.slane %v4627, 4
        %v4630 = vadd.f32 %v4622, %v4628
        %s4631 = sld [smem:[#allocation6 + $0x18c]]
        %v4632 = vstv %s4631
        %v4633 = vmul.f32 %v4632, %v4527
        %v4635 = vrot.slane %v4633, 7
        %v4636 = vrot.slane %v4635, 4
        %v4638 = vadd.f32 %v4630, %v4636
        %v4639 = vadd.f32 %v4514, %v4638
        %4640 = vrot.lane.b32.xlu0 %v1918, 96
        %v4641 = vpop.permute.xlu0 %4640
        %4642 = vrot.lane.b32.xlu0 %v1920, 96
        %v4643 = vpop.permute.xlu0 %4642
        %vm4644 = vcmp.lt.s32.totalorder %v709, 96
        %v4645 = vsel %vm4644, %v4641, %v4643
        %v4646 = vsel %vm4644, %v4643, %v4641
        %v4649 = vcombine.low %v4645, %v4646
        %v4651 = vsel %vm4396, %v4649, 0.0
        %s4652 = sld [smem:[#allocation6 + $0x16]]
        %v4653 = vstv %s4652
        %v4654 = vmul.f32 %v4653, %v4651
        %s4655 = sld [smem:[#allocation6 + $0x2f]]
        %v4656 = vstv %s4655
        %v4657 = vmul.f32 %v4656, %v4651
        %v4659 = vrot.slane %v4657, 5
        %v4660 = vrot.slane %v4659, 4
        %v4662 = vadd.f32 %v4654, %v4660
        %s4663 = sld [smem:[#allocation6 + $0x48]]
        %v4664 = vstv %s4663
        %v4665 = vmul.f32 %v4664, %v4651
        %v4667 = vrot.slane %v4665, 6
        %v4668 = vrot.slane %v4667, 4
        %v4670 = vadd.f32 %v4662, %v4668
        %s4671 = sld [smem:[#allocation6 + $0x61]]
        %v4672 = vstv %s4671
        %v4673 = vmul.f32 %v4672, %v4651
        %v4675 = vrot.slane %v4673, 7
        %v4676 = vrot.slane %v4675, 4
        %v4678 = vadd.f32 %v4670, %v4676
        %v4679 = vadd.f32 %v4555, %v4678
        %s4680 = sld [smem:[#allocation6 + $0x7a]]
        %v4681 = vstv %s4680
        %v4682 = vmul.f32 %v4681, %v4651
        %s4683 = sld [smem:[#allocation6 + $0x93]]
        %v4684 = vstv %s4683
        %v4685 = vmul.f32 %v4684, %v4651
        %v4687 = vrot.slane %v4685, 5
        %v4688 = vrot.slane %v4687, 4
        %v4690 = vadd.f32 %v4682, %v4688
        %s4691 = sld [smem:[#allocation6 + $0xac]]
        %v4692 = vstv %s4691
        %v4693 = vmul.f32 %v4692, %v4651
        %v4695 = vrot.slane %v4693, 6
        %v4696 = vrot.slane %v4695, 4
        %v4698 = vadd.f32 %v4690, %v4696
        %s4699 = sld [smem:[#allocation6 + $0xc5]]
        %v4700 = vstv %s4699
        %v4701 = vmul.f32 %v4700, %v4651
        %v4703 = vrot.slane %v4701, 7
        %v4704 = vrot.slane %v4703, 4
        %v4706 = vadd.f32 %v4698, %v4704
        %v4707 = vadd.f32 %v4583, %v4706
        %s4708 = sld [smem:[#allocation6 + $0xde]]
        %v4709 = vstv %s4708
        %v4710 = vmul.f32 %v4709, %v4651
        %s4711 = sld [smem:[#allocation6 + $0xf7]]
        %v4712 = vstv %s4711
        %v4713 = vmul.f32 %v4712, %v4651
        %v4715 = vrot.slane %v4713, 5
        %v4716 = vrot.slane %v4715, 4
        %v4718 = vadd.f32 %v4710, %v4716
        %s4719 = sld [smem:[#allocation6 + $0x110]]
        %v4720 = vstv %s4719
        %v4721 = vmul.f32 %v4720, %v4651
        %v4723 = vrot.slane %v4721, 6
        %v4724 = vrot.slane %v4723, 4
        %v4726 = vadd.f32 %v4718, %v4724
        %s4727 = sld [smem:[#allocation6 + $0x129]]
        %v4728 = vstv %s4727
        %v4729 = vmul.f32 %v4728, %v4651
        %v4731 = vrot.slane %v4729, 7
        %v4732 = vrot.slane %v4731, 4
        %v4734 = vadd.f32 %v4726, %v4732
        %v4735 = vadd.f32 %v4611, %v4734
        %s4736 = sld [smem:[#allocation6 + $0x142]]
        %v4737 = vstv %s4736
        %v4738 = vmul.f32 %v4737, %v4651
        %s4739 = sld [smem:[#allocation6 + $0x15b]]
        %v4740 = vstv %s4739
        %v4741 = vmul.f32 %v4740, %v4651
        %v4743 = vrot.slane %v4741, 5
        %v4744 = vrot.slane %v4743, 4
        %v4746 = vadd.f32 %v4738, %v4744
        %s4747 = sld [smem:[#allocation6 + $0x174]]
        %v4748 = vstv %s4747
        %v4749 = vmul.f32 %v4748, %v4651
        %v4751 = vrot.slane %v4749, 6
        %v4752 = vrot.slane %v4751, 4
        %v4754 = vadd.f32 %v4746, %v4752
        %s4755 = sld [smem:[#allocation6 + $0x18d]]
        %v4756 = vstv %s4755
        %v4757 = vmul.f32 %v4756, %v4651
        %v4759 = vrot.slane %v4757, 7
        %v4760 = vrot.slane %v4759, 4
        %v4762 = vadd.f32 %v4754, %v4760
        %v4763 = vadd.f32 %v4639, %v4762
        %4764 = vrot.lane.b32.xlu0 %v1918, 95
        %v4765 = vpop.permute.xlu0 %4764
        %4766 = vrot.lane.b32.xlu0 %v1920, 95
        %v4767 = vpop.permute.xlu0 %4766
        %vm4768 = vcmp.lt.s32.totalorder %v709, 95
        %v4769 = vsel %vm4768, %v4765, %v4767
        %v4770 = vsel %vm4768, %v4767, %v4765
        %vm4771 = vmand %vm4396, %vm960
        %v4774 = vcombine.low %v4769, %v4770
        %v4776 = vsel %vm4771, %v4774, 0.0
        %s4777 = sld [smem:[#allocation6 + $0x17]]
        %v4778 = vstv %s4777
        %v4779 = vmul.f32 %v4778, %v4776
        %s4780 = sld [smem:[#allocation6 + $0x30]]
        %v4781 = vstv %s4780
        %v4782 = vmul.f32 %v4781, %v4776
        %v4784 = vrot.slane %v4782, 5
        %v4785 = vrot.slane %v4784, 4
        %v4787 = vadd.f32 %v4779, %v4785
        %s4788 = sld [smem:[#allocation6 + $0x49]]
        %v4789 = vstv %s4788
        %v4790 = vmul.f32 %v4789, %v4776
        %v4792 = vrot.slane %v4790, 6
        %v4793 = vrot.slane %v4792, 4
        %v4795 = vadd.f32 %v4787, %v4793
        %s4796 = sld [smem:[#allocation6 + $0x62]]
        %v4797 = vstv %s4796
        %v4798 = vmul.f32 %v4797, %v4776
        %v4800 = vrot.slane %v4798, 7
        %v4801 = vrot.slane %v4800, 4
        %v4803 = vadd.f32 %v4795, %v4801
        %v4804 = vadd.f32 %v4679, %v4803
        %s4805 = sld [smem:[#allocation6 + $0x7b]]
        %v4806 = vstv %s4805
        %v4807 = vmul.f32 %v4806, %v4776
        %s4808 = sld [smem:[#allocation6 + $0x94]]
        %v4809 = vstv %s4808
        %v4810 = vmul.f32 %v4809, %v4776
        %v4812 = vrot.slane %v4810, 5
        %v4813 = vrot.slane %v4812, 4
        %v4815 = vadd.f32 %v4807, %v4813
        %s4816 = sld [smem:[#allocation6 + $0xad]]
        %v4817 = vstv %s4816
        %v4818 = vmul.f32 %v4817, %v4776
        %v4820 = vrot.slane %v4818, 6
        %v4821 = vrot.slane %v4820, 4
        %v4823 = vadd.f32 %v4815, %v4821
        %s4824 = sld [smem:[#allocation6 + $0xc6]]
        %v4825 = vstv %s4824
        %v4826 = vmul.f32 %v4825, %v4776
        %v4828 = vrot.slane %v4826, 7
        %v4829 = vrot.slane %v4828, 4
        %v4831 = vadd.f32 %v4823, %v4829
        %v4832 = vadd.f32 %v4707, %v4831
        %s4833 = sld [smem:[#allocation6 + $0xdf]]
        %v4834 = vstv %s4833
        %v4835 = vmul.f32 %v4834, %v4776
        %s4836 = sld [smem:[#allocation6 + $0xf8]]
        %v4837 = vstv %s4836
        %v4838 = vmul.f32 %v4837, %v4776
        %v4840 = vrot.slane %v4838, 5
        %v4841 = vrot.slane %v4840, 4
        %v4843 = vadd.f32 %v4835, %v4841
        %s4844 = sld [smem:[#allocation6 + $0x111]]
        %v4845 = vstv %s4844
        %v4846 = vmul.f32 %v4845, %v4776
        %v4848 = vrot.slane %v4846, 6
        %v4849 = vrot.slane %v4848, 4
        %v4851 = vadd.f32 %v4843, %v4849
        %s4852 = sld [smem:[#allocation6 + $0x12a]]
        %v4853 = vstv %s4852
        %v4854 = vmul.f32 %v4853, %v4776
        %v4856 = vrot.slane %v4854, 7
        %v4857 = vrot.slane %v4856, 4
        %v4859 = vadd.f32 %v4851, %v4857
        %v4860 = vadd.f32 %v4735, %v4859
        %s4861 = sld [smem:[#allocation6 + $0x143]]
        %v4862 = vstv %s4861
        %v4863 = vmul.f32 %v4862, %v4776
        %s4864 = sld [smem:[#allocation6 + $0x15c]]
        %v4865 = vstv %s4864
        %v4866 = vmul.f32 %v4865, %v4776
        %v4868 = vrot.slane %v4866, 5
        %v4869 = vrot.slane %v4868, 4
        %v4871 = vadd.f32 %v4863, %v4869
        %s4872 = sld [smem:[#allocation6 + $0x175]]
        %v4873 = vstv %s4872
        %v4874 = vmul.f32 %v4873, %v4776
        %v4876 = vrot.slane %v4874, 6
        %v4877 = vrot.slane %v4876, 4
        %v4879 = vadd.f32 %v4871, %v4877
        %s4880 = sld [smem:[#allocation6 + $0x18e]]
        %v4881 = vstv %s4880
        %v4882 = vmul.f32 %v4881, %v4776
        %v4884 = vrot.slane %v4882, 7
        %v4885 = vrot.slane %v4884, 4
        %v4887 = vadd.f32 %v4879, %v4885
        %v4888 = vadd.f32 %v4763, %v4887
        %4889 = vrot.lane.b32.xlu0 %v1918, 94
        %v4890 = vpop.permute.xlu0 %4889
        %4891 = vrot.lane.b32.xlu0 %v1920, 94
        %v4892 = vpop.permute.xlu0 %4891
        %vm4893 = vcmp.lt.s32.totalorder %v709, 94
        %v4894 = vsel %vm4893, %v4890, %v4892
        %v4895 = vsel %vm4893, %v4892, %v4890
        %vm4896 = vmand %vm4396, %vm2426
        %v4899 = vcombine.low %v4894, %v4895
        %v4901 = vsel %vm4896, %v4899, 0.0
        %s4902 = sld [smem:[#allocation6 + $0x18]]
        %v4903 = vstv %s4902
        %v4904 = vmul.f32 %v4903, %v4901
        %s4905 = sld [smem:[#allocation6 + $0x31]]
        %v4906 = vstv %s4905
        %v4907 = vmul.f32 %v4906, %v4901
        %v4909 = vrot.slane %v4907, 5
        %v4910 = vrot.slane %v4909, 4
        %v4912 = vadd.f32 %v4904, %v4910
        %s4913 = sld [smem:[#allocation6 + $0x4a]]
        %v4914 = vstv %s4913
        %v4915 = vmul.f32 %v4914, %v4901
        %v4917 = vrot.slane %v4915, 6
        %v4918 = vrot.slane %v4917, 4
        %v4920 = vadd.f32 %v4912, %v4918
        %s4921 = sld [smem:[#allocation6 + $0x63]]
        %v4922 = vstv %s4921
        %v4923 = vmul.f32 %v4922, %v4901
        %v4925 = vrot.slane %v4923, 7
        %v4926 = vrot.slane %v4925, 4
        %v4928 = vadd.f32 %v4920, %v4926
        %v4929 = vadd.f32 %v4804, %v4928
        %s4930 = sld [smem:[#allocation6 + $0x7c]]
        %v4931 = vstv %s4930
        %v4932 = vmul.f32 %v4931, %v4901
        %s4933 = sld [smem:[#allocation6 + $0x95]]
        %v4934 = vstv %s4933
        %v4935 = vmul.f32 %v4934, %v4901
        %v4937 = vrot.slane %v4935, 5
        %v4938 = vrot.slane %v4937, 4
        %v4940 = vadd.f32 %v4932, %v4938
        %s4941 = sld [smem:[#allocation6 + $0xae]]
        %v4942 = vstv %s4941
        %v4943 = vmul.f32 %v4942, %v4901
        %v4945 = vrot.slane %v4943, 6
        %v4946 = vrot.slane %v4945, 4
        %v4948 = vadd.f32 %v4940, %v4946
        %s4949 = sld [smem:[#allocation6 + $0xc7]]
        %v4950 = vstv %s4949
        %v4951 = vmul.f32 %v4950, %v4901
        %v4953 = vrot.slane %v4951, 7
        %v4954 = vrot.slane %v4953, 4
        %v4956 = vadd.f32 %v4948, %v4954
        %v4957 = vadd.f32 %v4832, %v4956
        %s4958 = sld [smem:[#allocation6 + $0xe0]]
        %v4959 = vstv %s4958
        %v4960 = vmul.f32 %v4959, %v4901
        %s4961 = sld [smem:[#allocation6 + $0xf9]]
        %v4962 = vstv %s4961
        %v4963 = vmul.f32 %v4962, %v4901
        %v4965 = vrot.slane %v4963, 5
        %v4966 = vrot.slane %v4965, 4
        %v4968 = vadd.f32 %v4960, %v4966
        %s4969 = sld [smem:[#allocation6 + $0x112]]
        %v4970 = vstv %s4969
        %v4971 = vmul.f32 %v4970, %v4901
        %v4973 = vrot.slane %v4971, 6
        %v4974 = vrot.slane %v4973, 4
        %v4976 = vadd.f32 %v4968, %v4974
        %s4977 = sld [smem:[#allocation6 + $0x12b]]
        %v4978 = vstv %s4977
        %v4979 = vmul.f32 %v4978, %v4901
        %v4981 = vrot.slane %v4979, 7
        %v4982 = vrot.slane %v4981, 4
        %v4984 = vadd.f32 %v4976, %v4982
        %v4985 = vadd.f32 %v4860, %v4984
        %s4986 = sld [smem:[#allocation6 + $0x144]]
        %v4987 = vstv %s4986
        %v4988 = vmul.f32 %v4987, %v4901
        %s4989 = sld [smem:[#allocation6 + $0x15d]]
        %v4990 = vstv %s4989
        %v4991 = vmul.f32 %v4990, %v4901
        %v4993 = vrot.slane %v4991, 5
        %v4994 = vrot.slane %v4993, 4
        %v4996 = vadd.f32 %v4988, %v4994
        %s4997 = sld [smem:[#allocation6 + $0x176]]
        %v4998 = vstv %s4997
        %v4999 = vmul.f32 %v4998, %v4901
        %v5001 = vrot.slane %v4999, 6
        %v5002 = vrot.slane %v5001, 4
        %v5004 = vadd.f32 %v4996, %v5002
        %s5005 = sld [smem:[#allocation6 + $0x18f]]
        %v5006 = vstv %s5005
        %v5007 = vmul.f32 %v5006, %v4901
        %v5009 = vrot.slane %v5007, 7
        %v5010 = vrot.slane %v5009, 4
        %v5012 = vadd.f32 %v5004, %v5010
        %v5013 = vadd.f32 %v4888, %v5012
        %v5016 = vunpack.c.l.s4 1966171168
        %v5017 = vunpack.c.0.s8 %v5016
        %v5018 = vlaneseq
        %v5019 = vshrl.u32 %v5018, 7
        %v5020 = vsub.s32 %v5017, %v5019
        %v5021 = vrot.slane %v4929, %v5020
        %v5023 = vunpack.c.l.s4 1966171168
        %v5024 = vunpack.c.0.s8 %v5023
        %v5025 = vlaneseq
        %v5026 = vshrl.u32 %v5025, 7
        %v5027 = vsub.s32 %v5024, %v5026
        %v5028 = vrot.slane %v5021, %v5027
        %s5030 = scalar_lea.vmem %s452, 16
        %5031 = vst.msk [vmem:[%s5030] ss:$8 sm:$0x3] %vm612, %v5028
        %5032 = vst.msk [vmem:[%s5030] ss:$8 sm:$0x0] %vm612, %v5028
        %v5035 = vunpack.c.l.s4 1966171168
        %v5036 = vunpack.c.0.s8 %v5035
        %v5037 = vlaneseq
        %v5038 = vshrl.u32 %v5037, 7
        %v5039 = vsub.s32 %v5036, %v5038
        %v5040 = vrot.slane %v4957, %v5039
        %v5042 = vunpack.c.l.s4 1966171168
        %v5043 = vunpack.c.0.s8 %v5042
        %v5044 = vlaneseq
        %v5045 = vshrl.u32 %v5044, 7
        %v5046 = vsub.s32 %v5043, %v5045
        %v5047 = vrot.slane %v5040, %v5046
        %s5049 = scalar_lea.vmem %s452, 17
        %5050 = vst.msk [vmem:[%s5049] ss:$8 sm:$0x3] %vm612, %v5047
        %5051 = vst.msk [vmem:[%s5049] ss:$8 sm:$0x0] %vm612, %v5047
        %v5054 = vunpack.c.l.s4 1966171168
        %v5055 = vunpack.c.0.s8 %v5054
        %v5056 = vlaneseq
        %v5057 = vshrl.u32 %v5056, 7
        %v5058 = vsub.s32 %v5055, %v5057
        %v5059 = vrot.slane %v4985, %v5058
        %v5061 = vunpack.c.l.s4 1966171168
        %v5062 = vunpack.c.0.s8 %v5061
        %v5063 = vlaneseq
        %v5064 = vshrl.u32 %v5063, 7
        %v5065 = vsub.s32 %v5062, %v5064
        %v5066 = vrot.slane %v5059, %v5065
        %s5068 = scalar_lea.vmem %s452, 18
        %5069 = vst.msk [vmem:[%s5068] ss:$8 sm:$0x3] %vm612, %v5066
        %5070 = vst.msk [vmem:[%s5068] ss:$8 sm:$0x0] %vm612, %v5066
        %v5073 = vunpack.c.l.s4 1966171168
        %v5074 = vunpack.c.0.s8 %v5073
        %v5075 = vlaneseq
        %v5076 = vshrl.u32 %v5075, 7
        %v5077 = vsub.s32 %v5074, %v5076
        %v5078 = vrot.slane %v5013, %v5077
        %v5080 = vunpack.c.l.s4 1966171168
        %v5081 = vunpack.c.0.s8 %v5080
        %v5082 = vlaneseq
        %v5083 = vshrl.u32 %v5082, 7
        %v5084 = vsub.s32 %v5081, %v5083
        %v5085 = vrot.slane %v5078, %v5084
        %s5087 = scalar_lea.vmem %s452, 19
        %5088 = vst.msk [vmem:[%s5087] ss:$8 sm:$0x3] %vm612, %v5085
        %5089 = vst.msk [vmem:[%s5087] ss:$8 sm:$0x0] %vm612, %v5085
        %p5090 = scmp.lt.s32.totalorder %s25, 1
        %s5091 = scalar_select %p5090, %s25, 1
        %s5092 = smul.addr %s5091, 4
        %s5093 = smul.addr %s5092, 8
        %s5094 = scalar_lea.vmem %s12, %s5093
        // Predicated region
        $region81: #{tpu_custom_call.1} parent=67 // pred_check
          %p5095 = pneg %p300
        $region82: #{tpu_custom_call.1} parent=67 // pred_check_branch
          %5097 = sbr.rel (%p5095) target = $region84
        $region83: #{tpu_custom_call.1} parent=67 // pred_region
          _
        $region84: #{tpu_custom_call.1} parent=67 // pred_fallthru
          _
      $region68: #{tpu_custom_call.1} parent=5 // pred_fallthru
        _
      %p5098 = scmp.le.s32.totalorder 2, %s20
      // Predicated region
      $region85: #{tpu_custom_call.1} parent=5 // pred_check
        %p5099 = pneg %p5098
      $region86: #{tpu_custom_call.1} parent=5 // pred_check_branch
        %5101 = sbr.rel (%p5099) target = $region88
      $region87: #{tpu_custom_call.1} parent=5 // pred_region
        %s5102 = ssub.s32 %s20, 2
        // Predicated region
        $region89: #{tpu_custom_call.1} parent=87 // pred_check
          %p5103 = pneg %p306
        $region90: #{tpu_custom_call.1} parent=87 // pred_check_branch
          %5105 = sbr.rel (%p5103) target = $region92
        $region91: #{tpu_custom_call.1} parent=87 // pred_region
          %p5106 = scmp.lt.s32.totalorder %s26, 1
          %s5107 = scalar_select %p5106, %s26, 1
          %s5108 = smul.addr %s5107, 4
          %s5109 = smul.addr %s5108, 8
          %s5110 = scalar_lea.vmem %s12, %s5109
        $region92: #{tpu_custom_call.1} parent=87 // pred_fallthru
          _
      $region88: #{tpu_custom_call.1} parent=5 // pred_fallthru
        _
    $region6: #{tpu_custom_call.1} parent=1 // loop_footer
      %s24 = sadd.s32 1, %s20
    $region7: #{tpu_custom_call.1} parent=1 // loop_footer_branch
      %19 = sbr.rel target = $region3
    $region8: #{tpu_custom_call.1} parent=1 // loop_exit
      _
    %5111 = vsyncpa [#allocation3], 1
    %s5112 = scalar_lea.sflag [#allocation3], 1
    %5113 = vsyncpa %s5112, 1
    %5114 = vsyncpa [#allocation5], 1

</llo_original>
